<compile_context>
chip_gen: v7x
topology: tpu7x:2x2x1
jax: 0.10.0
libtpu: 0.0.40
codegen_flags: <defaults>
</compile_context>

<pallas_src>
import functools

import jax
import jax.numpy as jnp
import numpy as np
from jax import lax
from jax.experimental import pallas as pl
from jax.experimental.pallas import tpu as pltpu


def _round_up(x, m):
    return (x + m - 1) // m * m


def _ei_fusion_kernel(col_ref, x1_ref, x2_ref, w1_ref, b1_ref, w2_ref, b2_ref,
                      wo1_ref, wo2_ref, bo_ref, o_ref,
                      c1pad_ref, c2pad_ref, *, W, pad0):
    # col:   (HW, 1) int32  column index (p % W), precomputed in the wrapper
    # x1/x2: (1, HW, Cin) bf16         o: (1, HW, Cin) out dtype
    # w1/w2: (Cin, Cmid) bf16          b1/b2: (1, Cmid) f32
    # wo1/wo2: (3, 3, Cmid, Cin) bf16  bo: (1, Cin) f32
    # c1pad/c2pad: (HWpad, Cmid) bf16 scratch, zero halo rows around [pad0, pad0+HW)
    HW = x1_ref.shape[1]
    Cin = x1_ref.shape[2]
    HWpad = c1pad_ref.shape[0]
    Cmid = c1pad_ref.shape[1]
    bot = pad0 + HW                      # start of the bottom halo strip

    # Re-zero only the halo strips every step (interior is fully overwritten
    # below).  Doing it per-step (instead of program_id==0) keeps the scratch
    # free of cross-iteration state, so the batch axis can be megacore-parallel.
    zdt = c1pad_ref.dtype
    c1pad_ref[0:pad0, :] = jnp.zeros((pad0, Cmid), zdt)
    c2pad_ref[0:pad0, :] = jnp.zeros((pad0, Cmid), zdt)
    c1pad_ref[bot:HWpad, :] = jnp.zeros((HWpad - bot, Cmid), zdt)
    c2pad_ref[bot:HWpad, :] = jnp.zeros((HWpad - bot, Cmid), zdt)

    x1 = x1_ref[0]                      # (HW, Cin) bf16
    x2 = x2_ref[0]

    # ---- 1x1 convs + ReLU: channel matmuls on the MXU, f32 accumulation ----
    c1 = jnp.maximum(
        jnp.dot(x1, w1_ref[...], preferred_element_type=jnp.float32)
        + b1_ref[...], 0.0)
    c2 = jnp.maximum(
        jnp.dot(x2, w2_ref[...], preferred_element_type=jnp.float32)
        + b2_ref[...], 0.0)

    # Single aligned, full-lane-width store per branch into its flat halo slab.
    c1pad_ref[pad0:pad0 + HW, :] = c1.astype(zdt)
    c2pad_ref[pad0:pad0 + HW, :] = c2.astype(zdt)

    # Column-edge masks (row edges are covered by the zero halo rows).
    # Broadcast once (JAX does not CSE broadcast_in_dim inside the tap loop).
    col = col_ref[...]                  # (HW, 1) int32
    mask_l = jnp.broadcast_to(col >= 1, (HW, Cin))      # left-neighbour valid
    mask_r = jnp.broadcast_to(col <= W - 2, (HW, Cin))  # right-neighbour valid

    # ---- 3x3 conv (padding=1) as 9 shifted flat matmuls per branch ----
    # Fold the output bias into the accumulator init.
    acc = jnp.broadcast_to(bo_ref[...], (HW, Cin)).astype(jnp.float32)
    for kh in range(3):
        for kw in range(3):
            s = (kh - 1) * W + (kw - 1)          # flat offset of this tap
            a1 = c1pad_ref[pad0 + s:pad0 + s + HW, :]
            a2 = c2pad_ref[pad0 + s:pad0 + s + HW, :]
            contrib = (jnp.dot(a1, wo1_ref[kh, kw],
                               preferred_element_type=jnp.float32)
                       + jnp.dot(a2, wo2_ref[kh, kw],
                                 preferred_element_type=jnp.float32))
            if kw == 0:
                contrib = jnp.where(mask_l, contrib, 0.0)
            elif kw == 2:
                contrib = jnp.where(mask_r, contrib, 0.0)
            acc = acc + contrib

    out = jnp.maximum(acc, 0.0) + x1.astype(jnp.float32)
    o_ref[0] = out.astype(o_ref.dtype)


def ei_fusion(x1, x2, w1, b1, w2, b2, wo, bo):
    """NHWC inputs; wo is HWIO (3, 3, 2*Cmid, Cin)."""
    N, H, W, Cin = x1.shape
    Cmid = w1.shape[1]
    HW = H * W
    pad0 = _round_up(W + 1, 16)                      # bf16 sublane-aligned interior
    HWpad = _round_up(pad0 + HW + W + 1, 16)
    out_dtype = x1.dtype
    bf = jnp.bfloat16

    # Flatten spatial dims and cast at the XLA boundary; split convo's weight.
    x1f = x1.reshape(N, HW, Cin).astype(bf)
    x2f = x2.reshape(N, HW, Cin).astype(bf)
    w1b, w2b = w1.astype(bf), w2.astype(bf)
    wo1 = wo[:, :, :Cmid, :].astype(bf)
    wo2 = wo[:, :, Cmid:, :].astype(bf)
    b1f, b2f, bof = (b1.astype(jnp.float32), b2.astype(jnp.float32),
                     bo.astype(jnp.float32))
    col = (jnp.arange(HW, dtype=jnp.int32) % W).reshape(HW, 1)

    kernel = functools.partial(_ei_fusion_kernel, W=W, pad0=pad0)
    outf = pl.pallas_call(
        kernel,
        out_shape=jax.ShapeDtypeStruct((N, HW, Cin), out_dtype),
        grid=(N,),
        in_specs=[
            pl.BlockSpec((HW, 1), lambda n: (0, 0)),                 # col idx
            pl.BlockSpec((1, HW, Cin), lambda n: (n, 0, 0)),         # x1
            pl.BlockSpec((1, HW, Cin), lambda n: (n, 0, 0)),         # x2
            pl.BlockSpec((Cin, Cmid), lambda n: (0, 0)),             # w1
            pl.BlockSpec((1, Cmid), lambda n: (0, 0)),               # b1
            pl.BlockSpec((Cin, Cmid), lambda n: (0, 0)),             # w2
            pl.BlockSpec((1, Cmid), lambda n: (0, 0)),               # b2
            pl.BlockSpec((3, 3, Cmid, Cin), lambda n: (0, 0, 0, 0)), # wo1
            pl.BlockSpec((3, 3, Cmid, Cin), lambda n: (0, 0, 0, 0)), # wo2
            pl.BlockSpec((1, Cin), lambda n: (0, 0)),                # bo
        ],
        out_specs=pl.BlockSpec((1, HW, Cin), lambda n: (n, 0, 0)),
        scratch_shapes=[pltpu.VMEM((HWpad, Cmid), bf),
                        pltpu.VMEM((HWpad, Cmid), bf)],
        compiler_params=pltpu.CompilerParams(
            dimension_semantics=("parallel",)),
    )(col, x1f, x2f, w1b, b1f, w2b, b2f, wo1, wo2, bof)
    return outf.reshape(N, H, W, Cin)


def ref_forward(x1, x2, w1, b1, w2, b2, wo, bo):
    """Pure-JAX reference (NHWC, f32, highest precision), mirrors the module."""
    hp = lax.Precision.HIGHEST
    c1 = jax.nn.relu(jnp.einsum('nhwc,cd->nhwd', x1, w1, precision=hp) + b1[0])
    c2 = jax.nn.relu(jnp.einsum('nhwc,cd->nhwd', x2, w2, precision=hp) + b2[0])
    cat = jnp.concatenate([c1, c2], axis=-1)
    out = lax.conv_general_dilated(
        cat, wo, window_strides=(1, 1), padding='SAME',
        dimension_numbers=('NHWC', 'HWIO', 'NHWC'), precision=hp)
    out = jax.nn.relu(out + bo[0])
    return out + x1


if __name__ == "__main__":
    # Small shapes consistent with the module (input_dim shrunk; mid=192 fixed).
    N, H, W = 2, 16, 16
    Cin = 128      # module default 256, shrunk but kept a full 128-lane multiple
    Cmid = 192     # fixed by the module

    key = jax.random.PRNGKey(0)
    k = jax.random.split(key, 8)
    x1 = jax.random.normal(k[0], (N, H, W, Cin), jnp.float32)
    x2 = jax.random.normal(k[1], (N, H, W, Cin), jnp.float32)

    w1 = jax.random.normal(k[2], (Cin, Cmid), jnp.float32) / np.sqrt(Cin)
    b1 = jax.random.normal(k[3], (1, Cmid), jnp.float32) * 0.01
    w2 = jax.random.normal(k[4], (Cin, Cmid), jnp.float32) / np.sqrt(Cin)
    b2 = jax.random.normal(k[5], (1, Cmid), jnp.float32) * 0.01
    wo = jax.random.normal(k[6], (3, 3, 2 * Cmid, Cin), jnp.float32) / np.sqrt(9 * 2 * Cmid)
    bo = jax.random.normal(k[7], (1, Cin), jnp.float32) * 0.01

    out = jax.block_until_ready(ei_fusion(x1, x2, w1, b1, w2, b2, wo, bo))

    # Reference on the same bf16-quantized activations/weights (f32 math), so
    # the comparison only measures the kernel's structural correctness.
    rq = lambda a: a.astype(jnp.bfloat16).astype(jnp.float32)
    ref = jax.block_until_ready(
        ref_forward(rq(x1), rq(x2), rq(w1), b1, rq(w2), b2, rq(wo), bo))

    assert out.shape == (N, H, W, Cin)
    np.testing.assert_allclose(np.asarray(out), np.asarray(ref), rtol=3e-2, atol=3e-2)

    print("KERNEL_OK")
</pallas_src>

<mosaic_0001>
module attributes {stable_mosaic.version = 11 : i64} {
  func.func @_ei_fusion_kernel(%arg0: i32, %arg1: memref<256x1xi32, #tpu.memory_space<vmem>>, %arg2: memref<1x256x128xbf16, #tpu.memory_space<vmem>>, %arg3: memref<1x256x128xbf16, #tpu.memory_space<vmem>>, %arg4: memref<128x192xbf16, #tpu.memory_space<vmem>>, %arg5: memref<1x192xf32, #tpu.memory_space<vmem>>, %arg6: memref<128x192xbf16, #tpu.memory_space<vmem>>, %arg7: memref<1x192xf32, #tpu.memory_space<vmem>>, %arg8: memref<3x3x192x128xbf16, #tpu.memory_space<vmem>>, %arg9: memref<3x3x192x128xbf16, #tpu.memory_space<vmem>>, %arg10: memref<1x128xf32, #tpu.memory_space<vmem>>, %arg11: memref<1x256x128xf32, #tpu.memory_space<vmem>>, %arg12: memref<320x192xbf16, #tpu.memory_space<vmem>>, %arg13: memref<320x192xbf16, #tpu.memory_space<vmem>>) attributes {dimension_semantics = [#tpu.dimension_semantics<parallel>], iteration_bounds = array<i64: 2>, scalar_prefetch = 0 : i64, scratch_operands = 2 : i64, tpu.core_type = #tpu.core_type<tc>, window_params = [{pipeline_mode = #tpu.pipeline_mode<synchronous>, transform_indices = @transform_0, window_bounds = array<i64: 256, 1>}, {transform_indices = @transform_1, window_bounds = array<i64: 1, 256, 128>}, {transform_indices = @transform_2, window_bounds = array<i64: 1, 256, 128>}, {pipeline_mode = #tpu.pipeline_mode<synchronous>, transform_indices = @transform_3, window_bounds = array<i64: 128, 192>}, {pipeline_mode = #tpu.pipeline_mode<synchronous>, transform_indices = @transform_4, window_bounds = array<i64: 1, 192>}, {pipeline_mode = #tpu.pipeline_mode<synchronous>, transform_indices = @transform_5, window_bounds = array<i64: 128, 192>}, {pipeline_mode = #tpu.pipeline_mode<synchronous>, transform_indices = @transform_6, window_bounds = array<i64: 1, 192>}, {pipeline_mode = #tpu.pipeline_mode<synchronous>, transform_indices = @transform_7, window_bounds = array<i64: 3, 3, 192, 128>}, {pipeline_mode = #tpu.pipeline_mode<synchronous>, transform_indices = @transform_8, window_bounds = array<i64: 3, 3, 192, 128>}, {pipeline_mode = #tpu.pipeline_mode<synchronous>, transform_indices = @transform_9, window_bounds = array<i64: 1, 128>}, {transform_indices = @transform_10, window_bounds = array<i64: 1, 256, 128>}]} {
    %cst = arith.constant 0.000000e+00 : bf16
    %0 = vector.broadcast %cst : bf16 to vector<32x192xbf16>
    %c0 = arith.constant 0 : index
    %c0_0 = arith.constant 0 : index
    %1 = vector.load %arg12[%c0, %c0_0] : memref<320x192xbf16, #tpu.memory_space<vmem>>, vector<32x192xbf16>
    tpu.vector_store %arg12[%c0, %c0_0], %0 {strides = array<i32>} : memref<320x192xbf16, #tpu.memory_space<vmem>>, vector<32x192xbf16>,
    %cst_1 = arith.constant 0.000000e+00 : bf16
    %2 = vector.broadcast %cst_1 : bf16 to vector<32x192xbf16>
    %c0_2 = arith.constant 0 : index
    %c0_3 = arith.constant 0 : index
    %3 = vector.load %arg13[%c0_2, %c0_3] : memref<320x192xbf16, #tpu.memory_space<vmem>>, vector<32x192xbf16>
    tpu.vector_store %arg13[%c0_2, %c0_3], %2 {strides = array<i32>} : memref<320x192xbf16, #tpu.memory_space<vmem>>, vector<32x192xbf16>,
    %cst_4 = arith.constant 0.000000e+00 : bf16
    %4 = vector.broadcast %cst_4 : bf16 to vector<32x192xbf16>
    %c288 = arith.constant 288 : index
    %c0_5 = arith.constant 0 : index
    %5 = vector.load %arg12[%c288, %c0_5] : memref<320x192xbf16, #tpu.memory_space<vmem>>, vector<32x192xbf16>
    tpu.vector_store %arg12[%c288, %c0_5], %4 {strides = array<i32>} : memref<320x192xbf16, #tpu.memory_space<vmem>>, vector<32x192xbf16>,
    %cst_6 = arith.constant 0.000000e+00 : bf16
    %6 = vector.broadcast %cst_6 : bf16 to vector<32x192xbf16>
    %c288_7 = arith.constant 288 : index
    %c0_8 = arith.constant 0 : index
    %7 = vector.load %arg13[%c288_7, %c0_8] : memref<320x192xbf16, #tpu.memory_space<vmem>>, vector<32x192xbf16>
    tpu.vector_store %arg13[%c288_7, %c0_8], %6 {strides = array<i32>} : memref<320x192xbf16, #tpu.memory_space<vmem>>, vector<32x192xbf16>,
    %c0_9 = arith.constant 0 : index
    %c0_10 = arith.constant 0 : index
    %c0_11 = arith.constant 0 : index
    %8 = vector.load %arg2[%c0_9, %c0_10, %c0_11] : memref<1x256x128xbf16, #tpu.memory_space<vmem>>, vector<1x256x128xbf16>
    %9 = vector.shape_cast %8 : vector<1x256x128xbf16> to vector<256x128xbf16>
    %c0_12 = arith.constant 0 : index
    %c0_13 = arith.constant 0 : index
    %c0_14 = arith.constant 0 : index
    %10 = vector.load %arg3[%c0_12, %c0_13, %c0_14] : memref<1x256x128xbf16, #tpu.memory_space<vmem>>, vector<1x256x128xbf16>
    %11 = vector.shape_cast %10 : vector<1x256x128xbf16> to vector<256x128xbf16>
    %c0_15 = arith.constant 0 : index
    %c0_16 = arith.constant 0 : index
    %12 = vector.load %arg4[%c0_15, %c0_16] : memref<128x192xbf16, #tpu.memory_space<vmem>>, vector<128x192xbf16>
    %cst_17 = arith.constant dense<0.000000e+00> : vector<256x192xf32>
    %13 = tpu.matmul %9, %12, %cst_17 {dimension_numbers = #tpu.dot_dimension_numbers<[1], [0], [0], [1], [0, 0, 1, 1], [], []>} : vector<256x128xbf16>, vector<128x192xbf16>, vector<256x192xf32> -> vector<256x192xf32>
    %c0_18 = arith.constant 0 : index
    %c0_19 = arith.constant 0 : index
    %14 = vector.load %arg5[%c0_18, %c0_19] : memref<1x192xf32, #tpu.memory_space<vmem>>, vector<1x192xf32>
    %15 = vector.broadcast %14 : vector<1x192xf32> to vector<256x192xf32>
    %16 = arith.addf %13, %15 : vector<256x192xf32>
    %cst_20 = arith.constant 0.000000e+00 : f32
    %17 = vector.broadcast %cst_20 : f32 to vector<256x192xf32>
    %18 = arith.maximumf %16, %17 : vector<256x192xf32>
    %c0_21 = arith.constant 0 : index
    %c0_22 = arith.constant 0 : index
    %19 = vector.load %arg6[%c0_21, %c0_22] : memref<128x192xbf16, #tpu.memory_space<vmem>>, vector<128x192xbf16>
    %cst_23 = arith.constant dense<0.000000e+00> : vector<256x192xf32>
    %20 = tpu.matmul %11, %19, %cst_23 {dimension_numbers = #tpu.dot_dimension_numbers<[1], [0], [0], [1], [0, 0, 1, 1], [], []>} : vector<256x128xbf16>, vector<128x192xbf16>, vector<256x192xf32> -> vector<256x192xf32>
    %c0_24 = arith.constant 0 : index
    %c0_25 = arith.constant 0 : index
    %21 = vector.load %arg7[%c0_24, %c0_25] : memref<1x192xf32, #tpu.memory_space<vmem>>, vector<1x192xf32>
    %22 = vector.broadcast %21 : vector<1x192xf32> to vector<256x192xf32>
    %23 = arith.addf %20, %22 : vector<256x192xf32>
    %cst_26 = arith.constant 0.000000e+00 : f32
    %24 = vector.broadcast %cst_26 : f32 to vector<256x192xf32>
    %25 = arith.maximumf %23, %24 : vector<256x192xf32>
    %26 = arith.truncf %18 : vector<256x192xf32> to vector<256x192xbf16>
    %c32 = arith.constant 32 : index
    %c0_27 = arith.constant 0 : index
    %27 = vector.load %arg12[%c32, %c0_27] : memref<320x192xbf16, #tpu.memory_space<vmem>>, vector<256x192xbf16>
    tpu.vector_store %arg12[%c32, %c0_27], %26 {strides = array<i32>} : memref<320x192xbf16, #tpu.memory_space<vmem>>, vector<256x192xbf16>,
    %28 = arith.truncf %25 : vector<256x192xf32> to vector<256x192xbf16>
    %c32_28 = arith.constant 32 : index
    %c0_29 = arith.constant 0 : index
    %29 = vector.load %arg13[%c32_28, %c0_29] : memref<320x192xbf16, #tpu.memory_space<vmem>>, vector<256x192xbf16>
    tpu.vector_store %arg13[%c32_28, %c0_29], %28 {strides = array<i32>} : memref<320x192xbf16, #tpu.memory_space<vmem>>, vector<256x192xbf16>,
    %c0_30 = arith.constant 0 : index
    %c0_31 = arith.constant 0 : index
    %30 = vector.load %arg1[%c0_30, %c0_31] : memref<256x1xi32, #tpu.memory_space<vmem>>, vector<256x1xi32>
    %c1_i32 = arith.constant 1 : i32
    %31 = vector.broadcast %c1_i32 : i32 to vector<256x1xi32>
    %32 = arith.cmpi sge, %30, %31 : vector<256x1xi32>
    %33 = vector.shape_cast %32 : vector<256x1xi1> to vector<256x1xi1>
    %34 = vector.broadcast %33 : vector<256x1xi1> to vector<256x128xi1>
    %c14_i32 = arith.constant 14 : i32
    %35 = vector.broadcast %c14_i32 : i32 to vector<256x1xi32>
    %36 = arith.cmpi sle, %30, %35 : vector<256x1xi32>
    %37 = vector.shape_cast %36 : vector<256x1xi1> to vector<256x1xi1>
    %38 = vector.broadcast %37 : vector<256x1xi1> to vector<256x128xi1>
    %c0_32 = arith.constant 0 : index
    %c0_33 = arith.constant 0 : index
    %39 = vector.load %arg10[%c0_32, %c0_33] : memref<1x128xf32, #tpu.memory_space<vmem>>, vector<1x128xf32>
    %40 = vector.shape_cast %39 : vector<1x128xf32> to vector<1x128xf32>
    %41 = vector.broadcast %40 : vector<1x128xf32> to vector<256x128xf32>
    %c15 = arith.constant 15 : index
    %c0_34 = arith.constant 0 : index
    %42 = vector.load %arg12[%c15, %c0_34] : memref<320x192xbf16, #tpu.memory_space<vmem>>, vector<256x192xbf16>
    %c15_35 = arith.constant 15 : index
    %c0_36 = arith.constant 0 : index
    %43 = vector.load %arg13[%c15_35, %c0_36] : memref<320x192xbf16, #tpu.memory_space<vmem>>, vector<256x192xbf16>
    %c0_37 = arith.constant 0 : index
    %c0_38 = arith.constant 0 : index
    %c0_39 = arith.constant 0 : index
    %c0_40 = arith.constant 0 : index
    %44 = vector.load %arg8[%c0_37, %c0_38, %c0_39, %c0_40] : memref<3x3x192x128xbf16, #tpu.memory_space<vmem>>, vector<1x1x192x128xbf16>
    %45 = vector.shape_cast %44 : vector<1x1x192x128xbf16> to vector<192x128xbf16>
    %cst_41 = arith.constant dense<0.000000e+00> : vector<256x128xf32>
    %46 = tpu.matmul %42, %45, %cst_41 {dimension_numbers = #tpu.dot_dimension_numbers<[1], [0], [0], [1], [0, 0, 1, 1], [], []>} : vector<256x192xbf16>, vector<192x128xbf16>, vector<256x128xf32> -> vector<256x128xf32>
    %c0_42 = arith.constant 0 : index
    %c0_43 = arith.constant 0 : index
    %c0_44 = arith.constant 0 : index
    %c0_45 = arith.constant 0 : index
    %47 = vector.load %arg9[%c0_42, %c0_43, %c0_44, %c0_45] : memref<3x3x192x128xbf16, #tpu.memory_space<vmem>>, vector<1x1x192x128xbf16>
    %48 = vector.shape_cast %47 : vector<1x1x192x128xbf16> to vector<192x128xbf16>
    %cst_46 = arith.constant dense<0.000000e+00> : vector<256x128xf32>
    %49 = tpu.matmul %43, %48, %cst_46 {dimension_numbers = #tpu.dot_dimension_numbers<[1], [0], [0], [1], [0, 0, 1, 1], [], []>} : vector<256x192xbf16>, vector<192x128xbf16>, vector<256x128xf32> -> vector<256x128xf32>
    %50 = arith.addf %46, %49 : vector<256x128xf32>
    %cst_47 = arith.constant 0.000000e+00 : f32
    %51 = vector.broadcast %cst_47 : f32 to vector<256x128xf32>
    %52 = arith.select %34, %50, %51 : vector<256x128xi1>, vector<256x128xf32>
    %53 = arith.addf %41, %52 : vector<256x128xf32>
    %c16 = arith.constant 16 : index
    %c0_48 = arith.constant 0 : index
    %54 = vector.load %arg12[%c16, %c0_48] : memref<320x192xbf16, #tpu.memory_space<vmem>>, vector<256x192xbf16>
    %c16_49 = arith.constant 16 : index
    %c0_50 = arith.constant 0 : index
    %55 = vector.load %arg13[%c16_49, %c0_50] : memref<320x192xbf16, #tpu.memory_space<vmem>>, vector<256x192xbf16>
    %c0_51 = arith.constant 0 : index
    %c1 = arith.constant 1 : index
    %c0_52 = arith.constant 0 : index
    %c0_53 = arith.constant 0 : index
    %56 = vector.load %arg8[%c0_51, %c1, %c0_52, %c0_53] : memref<3x3x192x128xbf16, #tpu.memory_space<vmem>>, vector<1x1x192x128xbf16>
    %57 = vector.shape_cast %56 : vector<1x1x192x128xbf16> to vector<192x128xbf16>
    %cst_54 = arith.constant dense<0.000000e+00> : vector<256x128xf32>
    %58 = tpu.matmul %54, %57, %cst_54 {dimension_numbers = #tpu.dot_dimension_numbers<[1], [0], [0], [1], [0, 0, 1, 1], [], []>} : vector<256x192xbf16>, vector<192x128xbf16>, vector<256x128xf32> -> vector<256x128xf32>
    %c0_55 = arith.constant 0 : index
    %c1_56 = arith.constant 1 : index
    %c0_57 = arith.constant 0 : index
    %c0_58 = arith.constant 0 : index
    %59 = vector.load %arg9[%c0_55, %c1_56, %c0_57, %c0_58] : memref<3x3x192x128xbf16, #tpu.memory_space<vmem>>, vector<1x1x192x128xbf16>
    %60 = vector.shape_cast %59 : vector<1x1x192x128xbf16> to vector<192x128xbf16>
    %cst_59 = arith.constant dense<0.000000e+00> : vector<256x128xf32>
    %61 = tpu.matmul %55, %60, %cst_59 {dimension_numbers = #tpu.dot_dimension_numbers<[1], [0], [0], [1], [0, 0, 1, 1], [], []>} : vector<256x192xbf16>, vector<192x128xbf16>, vector<256x128xf32> -> vector<256x128xf32>
    %62 = arith.addf %58, %61 : vector<256x128xf32>
    %63 = arith.addf %53, %62 : vector<256x128xf32>
    %c17 = arith.constant 17 : index
    %c0_60 = arith.constant 0 : index
    %64 = vector.load %arg12[%c17, %c0_60] : memref<320x192xbf16, #tpu.memory_space<vmem>>, vector<256x192xbf16>
    %c17_61 = arith.constant 17 : index
    %c0_62 = arith.constant 0 : index
    %65 = vector.load %arg13[%c17_61, %c0_62] : memref<320x192xbf16, #tpu.memory_space<vmem>>, vector<256x192xbf16>
    %c0_63 = arith.constant 0 : index
    %c2 = arith.constant 2 : index
    %c0_64 = arith.constant 0 : index
    %c0_65 = arith.constant 0 : index
    %66 = vector.load %arg8[%c0_63, %c2, %c0_64, %c0_65] : memref<3x3x192x128xbf16, #tpu.memory_space<vmem>>, vector<1x1x192x128xbf16>
    %67 = vector.shape_cast %66 : vector<1x1x192x128xbf16> to vector<192x128xbf16>
    %cst_66 = arith.constant dense<0.000000e+00> : vector<256x128xf32>
    %68 = tpu.matmul %64, %67, %cst_66 {dimension_numbers = #tpu.dot_dimension_numbers<[1], [0], [0], [1], [0, 0, 1, 1], [], []>} : vector<256x192xbf16>, vector<192x128xbf16>, vector<256x128xf32> -> vector<256x128xf32>
    %c0_67 = arith.constant 0 : index
    %c2_68 = arith.constant 2 : index
    %c0_69 = arith.constant 0 : index
    %c0_70 = arith.constant 0 : index
    %69 = vector.load %arg9[%c0_67, %c2_68, %c0_69, %c0_70] : memref<3x3x192x128xbf16, #tpu.memory_space<vmem>>, vector<1x1x192x128xbf16>
    %70 = vector.shape_cast %69 : vector<1x1x192x128xbf16> to vector<192x128xbf16>
    %cst_71 = arith.constant dense<0.000000e+00> : vector<256x128xf32>
    %71 = tpu.matmul %65, %70, %cst_71 {dimension_numbers = #tpu.dot_dimension_numbers<[1], [0], [0], [1], [0, 0, 1, 1], [], []>} : vector<256x192xbf16>, vector<192x128xbf16>, vector<256x128xf32> -> vector<256x128xf32>
    %72 = arith.addf %68, %71 : vector<256x128xf32>
    %cst_72 = arith.constant 0.000000e+00 : f32
    %73 = vector.broadcast %cst_72 : f32 to vector<256x128xf32>
    %74 = arith.select %38, %72, %73 : vector<256x128xi1>, vector<256x128xf32>
    %75 = arith.addf %63, %74 : vector<256x128xf32>
    %c31 = arith.constant 31 : index
    %c0_73 = arith.constant 0 : index
    %76 = vector.load %arg12[%c31, %c0_73] : memref<320x192xbf16, #tpu.memory_space<vmem>>, vector<256x192xbf16>
    %c31_74 = arith.constant 31 : index
    %c0_75 = arith.constant 0 : index
    %77 = vector.load %arg13[%c31_74, %c0_75] : memref<320x192xbf16, #tpu.memory_space<vmem>>, vector<256x192xbf16>
    %c1_76 = arith.constant 1 : index
    %c0_77 = arith.constant 0 : index
    %c0_78 = arith.constant 0 : index
    %c0_79 = arith.constant 0 : index
    %78 = vector.load %arg8[%c1_76, %c0_77, %c0_78, %c0_79] : memref<3x3x192x128xbf16, #tpu.memory_space<vmem>>, vector<1x1x192x128xbf16>
    %79 = vector.shape_cast %78 : vector<1x1x192x128xbf16> to vector<192x128xbf16>
    %cst_80 = arith.constant dense<0.000000e+00> : vector<256x128xf32>
    %80 = tpu.matmul %76, %79, %cst_80 {dimension_numbers = #tpu.dot_dimension_numbers<[1], [0], [0], [1], [0, 0, 1, 1], [], []>} : vector<256x192xbf16>, vector<192x128xbf16>, vector<256x128xf32> -> vector<256x128xf32>
    %c1_81 = arith.constant 1 : index
    %c0_82 = arith.constant 0 : index
    %c0_83 = arith.constant 0 : index
    %c0_84 = arith.constant 0 : index
    %81 = vector.load %arg9[%c1_81, %c0_82, %c0_83, %c0_84] : memref<3x3x192x128xbf16, #tpu.memory_space<vmem>>, vector<1x1x192x128xbf16>
    %82 = vector.shape_cast %81 : vector<1x1x192x128xbf16> to vector<192x128xbf16>
    %cst_85 = arith.constant dense<0.000000e+00> : vector<256x128xf32>
    %83 = tpu.matmul %77, %82, %cst_85 {dimension_numbers = #tpu.dot_dimension_numbers<[1], [0], [0], [1], [0, 0, 1, 1], [], []>} : vector<256x192xbf16>, vector<192x128xbf16>, vector<256x128xf32> -> vector<256x128xf32>
    %84 = arith.addf %80, %83 : vector<256x128xf32>
    %cst_86 = arith.constant 0.000000e+00 : f32
    %85 = vector.broadcast %cst_86 : f32 to vector<256x128xf32>
    %86 = arith.select %34, %84, %85 : vector<256x128xi1>, vector<256x128xf32>
    %87 = arith.addf %75, %86 : vector<256x128xf32>
    %c32_87 = arith.constant 32 : index
    %c0_88 = arith.constant 0 : index
    %88 = vector.load %arg12[%c32_87, %c0_88] : memref<320x192xbf16, #tpu.memory_space<vmem>>, vector<256x192xbf16>
    %c32_89 = arith.constant 32 : index
    %c0_90 = arith.constant 0 : index
    %89 = vector.load %arg13[%c32_89, %c0_90] : memref<320x192xbf16, #tpu.memory_space<vmem>>, vector<256x192xbf16>
    %c1_91 = arith.constant 1 : index
    %c1_92 = arith.constant 1 : index
    %c0_93 = arith.constant 0 : index
    %c0_94 = arith.constant 0 : index
    %90 = vector.load %arg8[%c1_91, %c1_92, %c0_93, %c0_94] : memref<3x3x192x128xbf16, #tpu.memory_space<vmem>>, vector<1x1x192x128xbf16>
    %91 = vector.shape_cast %90 : vector<1x1x192x128xbf16> to vector<192x128xbf16>
    %cst_95 = arith.constant dense<0.000000e+00> : vector<256x128xf32>
    %92 = tpu.matmul %88, %91, %cst_95 {dimension_numbers = #tpu.dot_dimension_numbers<[1], [0], [0], [1], [0, 0, 1, 1], [], []>} : vector<256x192xbf16>, vector<192x128xbf16>, vector<256x128xf32> -> vector<256x128xf32>
    %c1_96 = arith.constant 1 : index
    %c1_97 = arith.constant 1 : index
    %c0_98 = arith.constant 0 : index
    %c0_99 = arith.constant 0 : index
    %93 = vector.load %arg9[%c1_96, %c1_97, %c0_98, %c0_99] : memref<3x3x192x128xbf16, #tpu.memory_space<vmem>>, vector<1x1x192x128xbf16>
    %94 = vector.shape_cast %93 : vector<1x1x192x128xbf16> to vector<192x128xbf16>
    %cst_100 = arith.constant dense<0.000000e+00> : vector<256x128xf32>
    %95 = tpu.matmul %89, %94, %cst_100 {dimension_numbers = #tpu.dot_dimension_numbers<[1], [0], [0], [1], [0, 0, 1, 1], [], []>} : vector<256x192xbf16>, vector<192x128xbf16>, vector<256x128xf32> -> vector<256x128xf32>
    %96 = arith.addf %92, %95 : vector<256x128xf32>
    %97 = arith.addf %87, %96 : vector<256x128xf32>
    %c33 = arith.constant 33 : index
    %c0_101 = arith.constant 0 : index
    %98 = vector.load %arg12[%c33, %c0_101] : memref<320x192xbf16, #tpu.memory_space<vmem>>, vector<256x192xbf16>
    %c33_102 = arith.constant 33 : index
    %c0_103 = arith.constant 0 : index
    %99 = vector.load %arg13[%c33_102, %c0_103] : memref<320x192xbf16, #tpu.memory_space<vmem>>, vector<256x192xbf16>
    %c1_104 = arith.constant 1 : index
    %c2_105 = arith.constant 2 : index
    %c0_106 = arith.constant 0 : index
    %c0_107 = arith.constant 0 : index
    %100 = vector.load %arg8[%c1_104, %c2_105, %c0_106, %c0_107] : memref<3x3x192x128xbf16, #tpu.memory_space<vmem>>, vector<1x1x192x128xbf16>
    %101 = vector.shape_cast %100 : vector<1x1x192x128xbf16> to vector<192x128xbf16>
    %cst_108 = arith.constant dense<0.000000e+00> : vector<256x128xf32>
    %102 = tpu.matmul %98, %101, %cst_108 {dimension_numbers = #tpu.dot_dimension_numbers<[1], [0], [0], [1], [0, 0, 1, 1], [], []>} : vector<256x192xbf16>, vector<192x128xbf16>, vector<256x128xf32> -> vector<256x128xf32>
    %c1_109 = arith.constant 1 : index
    %c2_110 = arith.constant 2 : index
    %c0_111 = arith.constant 0 : index
    %c0_112 = arith.constant 0 : index
    %103 = vector.load %arg9[%c1_109, %c2_110, %c0_111, %c0_112] : memref<3x3x192x128xbf16, #tpu.memory_space<vmem>>, vector<1x1x192x128xbf16>
    %104 = vector.shape_cast %103 : vector<1x1x192x128xbf16> to vector<192x128xbf16>
    %cst_113 = arith.constant dense<0.000000e+00> : vector<256x128xf32>
    %105 = tpu.matmul %99, %104, %cst_113 {dimension_numbers = #tpu.dot_dimension_numbers<[1], [0], [0], [1], [0, 0, 1, 1], [], []>} : vector<256x192xbf16>, vector<192x128xbf16>, vector<256x128xf32> -> vector<256x128xf32>
    %106 = arith.addf %102, %105 : vector<256x128xf32>
    %cst_114 = arith.constant 0.000000e+00 : f32
    %107 = vector.broadcast %cst_114 : f32 to vector<256x128xf32>
    %108 = arith.select %38, %106, %107 : vector<256x128xi1>, vector<256x128xf32>
    %109 = arith.addf %97, %108 : vector<256x128xf32>
    %c47 = arith.constant 47 : index
    %c0_115 = arith.constant 0 : index
    %110 = vector.load %arg12[%c47, %c0_115] : memref<320x192xbf16, #tpu.memory_space<vmem>>, vector<256x192xbf16>
    %c47_116 = arith.constant 47 : index
    %c0_117 = arith.constant 0 : index
    %111 = vector.load %arg13[%c47_116, %c0_117] : memref<320x192xbf16, #tpu.memory_space<vmem>>, vector<256x192xbf16>
    %c2_118 = arith.constant 2 : index
    %c0_119 = arith.constant 0 : index
    %c0_120 = arith.constant 0 : index
    %c0_121 = arith.constant 0 : index
    %112 = vector.load %arg8[%c2_118, %c0_119, %c0_120, %c0_121] : memref<3x3x192x128xbf16, #tpu.memory_space<vmem>>, vector<1x1x192x128xbf16>
    %113 = vector.shape_cast %112 : vector<1x1x192x128xbf16> to vector<192x128xbf16>
    %cst_122 = arith.constant dense<0.000000e+00> : vector<256x128xf32>
    %114 = tpu.matmul %110, %113, %cst_122 {dimension_numbers = #tpu.dot_dimension_numbers<[1], [0], [0], [1], [0, 0, 1, 1], [], []>} : vector<256x192xbf16>, vector<192x128xbf16>, vector<256x128xf32> -> vector<256x128xf32>
    %c2_123 = arith.constant 2 : index
    %c0_124 = arith.constant 0 : index
    %c0_125 = arith.constant 0 : index
    %c0_126 = arith.constant 0 : index
    %115 = vector.load %arg9[%c2_123, %c0_124, %c0_125, %c0_126] : memref<3x3x192x128xbf16, #tpu.memory_space<vmem>>, vector<1x1x192x128xbf16>
    %116 = vector.shape_cast %115 : vector<1x1x192x128xbf16> to vector<192x128xbf16>
    %cst_127 = arith.constant dense<0.000000e+00> : vector<256x128xf32>
    %117 = tpu.matmul %111, %116, %cst_127 {dimension_numbers = #tpu.dot_dimension_numbers<[1], [0], [0], [1], [0, 0, 1, 1], [], []>} : vector<256x192xbf16>, vector<192x128xbf16>, vector<256x128xf32> -> vector<256x128xf32>
    %118 = arith.addf %114, %117 : vector<256x128xf32>
    %cst_128 = arith.constant 0.000000e+00 : f32
    %119 = vector.broadcast %cst_128 : f32 to vector<256x128xf32>
    %120 = arith.select %34, %118, %119 : vector<256x128xi1>, vector<256x128xf32>
    %121 = arith.addf %109, %120 : vector<256x128xf32>
    %c48 = arith.constant 48 : index
    %c0_129 = arith.constant 0 : index
    %122 = vector.load %arg12[%c48, %c0_129] : memref<320x192xbf16, #tpu.memory_space<vmem>>, vector<256x192xbf16>
    %c48_130 = arith.constant 48 : index
    %c0_131 = arith.constant 0 : index
    %123 = vector.load %arg13[%c48_130, %c0_131] : memref<320x192xbf16, #tpu.memory_space<vmem>>, vector<256x192xbf16>
    %c2_132 = arith.constant 2 : index
    %c1_133 = arith.constant 1 : index
    %c0_134 = arith.constant 0 : index
    %c0_135 = arith.constant 0 : index
    %124 = vector.load %arg8[%c2_132, %c1_133, %c0_134, %c0_135] : memref<3x3x192x128xbf16, #tpu.memory_space<vmem>>, vector<1x1x192x128xbf16>
    %125 = vector.shape_cast %124 : vector<1x1x192x128xbf16> to vector<192x128xbf16>
    %cst_136 = arith.constant dense<0.000000e+00> : vector<256x128xf32>
    %126 = tpu.matmul %122, %125, %cst_136 {dimension_numbers = #tpu.dot_dimension_numbers<[1], [0], [0], [1], [0, 0, 1, 1], [], []>} : vector<256x192xbf16>, vector<192x128xbf16>, vector<256x128xf32> -> vector<256x128xf32>
    %c2_137 = arith.constant 2 : index
    %c1_138 = arith.constant 1 : index
    %c0_139 = arith.constant 0 : index
    %c0_140 = arith.constant 0 : index
    %127 = vector.load %arg9[%c2_137, %c1_138, %c0_139, %c0_140] : memref<3x3x192x128xbf16, #tpu.memory_space<vmem>>, vector<1x1x192x128xbf16>
    %128 = vector.shape_cast %127 : vector<1x1x192x128xbf16> to vector<192x128xbf16>
    %cst_141 = arith.constant dense<0.000000e+00> : vector<256x128xf32>
    %129 = tpu.matmul %123, %128, %cst_141 {dimension_numbers = #tpu.dot_dimension_numbers<[1], [0], [0], [1], [0, 0, 1, 1], [], []>} : vector<256x192xbf16>, vector<192x128xbf16>, vector<256x128xf32> -> vector<256x128xf32>
    %130 = arith.addf %126, %129 : vector<256x128xf32>
    %131 = arith.addf %121, %130 : vector<256x128xf32>
    %c49 = arith.constant 49 : index
    %c0_142 = arith.constant 0 : index
    %132 = vector.load %arg12[%c49, %c0_142] : memref<320x192xbf16, #tpu.memory_space<vmem>>, vector<256x192xbf16>
    %c49_143 = arith.constant 49 : index
    %c0_144 = arith.constant 0 : index
    %133 = vector.load %arg13[%c49_143, %c0_144] : memref<320x192xbf16, #tpu.memory_space<vmem>>, vector<256x192xbf16>
    %c2_145 = arith.constant 2 : index
    %c2_146 = arith.constant 2 : index
    %c0_147 = arith.constant 0 : index
    %c0_148 = arith.constant 0 : index
    %134 = vector.load %arg8[%c2_145, %c2_146, %c0_147, %c0_148] : memref<3x3x192x128xbf16, #tpu.memory_space<vmem>>, vector<1x1x192x128xbf16>
    %135 = vector.shape_cast %134 : vector<1x1x192x128xbf16> to vector<192x128xbf16>
    %cst_149 = arith.constant dense<0.000000e+00> : vector<256x128xf32>
    %136 = tpu.matmul %132, %135, %cst_149 {dimension_numbers = #tpu.dot_dimension_numbers<[1], [0], [0], [1], [0, 0, 1, 1], [], []>} : vector<256x192xbf16>, vector<192x128xbf16>, vector<256x128xf32> -> vector<256x128xf32>
    %c2_150 = arith.constant 2 : index
    %c2_151 = arith.constant 2 : index
    %c0_152 = arith.constant 0 : index
    %c0_153 = arith.constant 0 : index
    %137 = vector.load %arg9[%c2_150, %c2_151, %c0_152, %c0_153] : memref<3x3x192x128xbf16, #tpu.memory_space<vmem>>, vector<1x1x192x128xbf16>
    %138 = vector.shape_cast %137 : vector<1x1x192x128xbf16> to vector<192x128xbf16>
    %cst_154 = arith.constant dense<0.000000e+00> : vector<256x128xf32>
    %139 = tpu.matmul %133, %138, %cst_154 {dimension_numbers = #tpu.dot_dimension_numbers<[1], [0], [0], [1], [0, 0, 1, 1], [], []>} : vector<256x192xbf16>, vector<192x128xbf16>, vector<256x128xf32> -> vector<256x128xf32>
    %140 = arith.addf %136, %139 : vector<256x128xf32>
    %cst_155 = arith.constant 0.000000e+00 : f32
    %141 = vector.broadcast %cst_155 : f32 to vector<256x128xf32>
    %142 = arith.select %38, %140, %141 : vector<256x128xi1>, vector<256x128xf32>
    %143 = arith.addf %131, %142 : vector<256x128xf32>
    %cst_156 = arith.constant 0.000000e+00 : f32
    %144 = vector.broadcast %cst_156 : f32 to vector<256x128xf32>
    %145 = arith.maximumf %143, %144 : vector<256x128xf32>
    %146 = arith.extf %9 : vector<256x128xbf16> to vector<256x128xf32>
    %147 = arith.addf %145, %146 : vector<256x128xf32>
    %c0_157 = arith.constant 0 : index
    %c0_158 = arith.constant 0 : index
    %c0_159 = arith.constant 0 : index
    %148 = vector.load %arg11[%c0_157, %c0_158, %c0_159] : memref<1x256x128xf32, #tpu.memory_space<vmem>>, vector<1x256x128xf32>
    %149 = vector.shape_cast %148 : vector<1x256x128xf32> to vector<256x128xf32>
    %150 = vector.shape_cast %147 : vector<256x128xf32> to vector<1x256x128xf32>
    tpu.vector_store %arg11[%c0_157, %c0_158, %c0_159], %150 {strides = array<i32>} : memref<1x256x128xf32, #tpu.memory_space<vmem>>, vector<1x256x128xf32>,
    return
  }
  func.func @transform_0(%arg0: i32) -> (i32, i32) {
    %c0_i32 = arith.constant 0 : i32
    %c0_i32_0 = arith.constant 0 : i32
    %c0_i32_1 = arith.constant 0 : i32
    return %c0_i32, %c0_i32_0 : i32, i32
  }
  func.func @transform_1(%arg0: i32) -> (i32, i32, i32) {
    %c0_i32 = arith.constant 0 : i32
    %c0_i32_0 = arith.constant 0 : i32
    %c0_i32_1 = arith.constant 0 : i32
    return %arg0, %c0_i32, %c0_i32_0 : i32, i32, i32
  }
  func.func @transform_2(%arg0: i32) -> (i32, i32, i32) {
    %c0_i32 = arith.constant 0 : i32
    %c0_i32_0 = arith.constant 0 : i32
    %c0_i32_1 = arith.constant 0 : i32
    return %arg0, %c0_i32, %c0_i32_0 : i32, i32, i32
  }
  func.func @transform_3(%arg0: i32) -> (i32, i32) {
    %c0_i32 = arith.constant 0 : i32
    %c0_i32_0 = arith.constant 0 : i32
    %c0_i32_1 = arith.constant 0 : i32
    return %c0_i32, %c0_i32_0 : i32, i32
  }
  func.func @transform_4(%arg0: i32) -> (i32, i32) {
    %c0_i32 = arith.constant 0 : i32
    %c0_i32_0 = arith.constant 0 : i32
    %c0_i32_1 = arith.constant 0 : i32
    return %c0_i32, %c0_i32_0 : i32, i32
  }
  func.func @transform_5(%arg0: i32) -> (i32, i32) {
    %c0_i32 = arith.constant 0 : i32
    %c0_i32_0 = arith.constant 0 : i32
    %c0_i32_1 = arith.constant 0 : i32
    return %c0_i32, %c0_i32_0 : i32, i32
  }
  func.func @transform_6(%arg0: i32) -> (i32, i32) {
    %c0_i32 = arith.constant 0 : i32
    %c0_i32_0 = arith.constant 0 : i32
    %c0_i32_1 = arith.constant 0 : i32
    return %c0_i32, %c0_i32_0 : i32, i32
  }
  func.func @transform_7(%arg0: i32) -> (i32, i32, i32, i32) {
    %c0_i32 = arith.constant 0 : i32
    %c0_i32_0 = arith.constant 0 : i32
    %c0_i32_1 = arith.constant 0 : i32
    %c0_i32_2 = arith.constant 0 : i32
    %c0_i32_3 = arith.constant 0 : i32
    return %c0_i32, %c0_i32_0, %c0_i32_1, %c0_i32_2 : i32, i32, i32, i32
  }
  func.func @transform_8(%arg0: i32) -> (i32, i32, i32, i32) {
    %c0_i32 = arith.constant 0 : i32
    %c0_i32_0 = arith.constant 0 : i32
    %c0_i32_1 = arith.constant 0 : i32
    %c0_i32_2 = arith.constant 0 : i32
    %c0_i32_3 = arith.constant 0 : i32
    return %c0_i32, %c0_i32_0, %c0_i32_1, %c0_i32_2 : i32, i32, i32, i32
  }
  func.func @transform_9(%arg0: i32) -> (i32, i32) {
    %c0_i32 = arith.constant 0 : i32
    %c0_i32_0 = arith.constant 0 : i32
    %c0_i32_1 = arith.constant 0 : i32
    return %c0_i32, %c0_i32_0 : i32, i32
  }
  func.func @transform_10(%arg0: i32) -> (i32, i32, i32) {
    %c0_i32 = arith.constant 0 : i32
    %c0_i32_0 = arith.constant 0 : i32
    %c0_i32_1 = arith.constant 0 : i32
    return %arg0, %c0_i32, %c0_i32_0 : i32, i32, i32
  }
}

</mosaic_0001>

<llo_original>
// kernel: tpu_custom_call.1
$region0: #{tpu_custom_call.1}
  #allocation0 [shape = 'u32[]', space=smem, size = 0x4, offset = 0x4, fixed_abs, tag = 'smem constant byte address 0x4 - core index']
  #allocation1 [shape = 'u32[144,128]{1,0:T(1,128)}', space=vmem, size = 0x12000, scoped, tag = 'internal scratch']
  #allocation2 [shape = 'bf16[320,192]{1,0:T(16,128)(2,1)}', space=vmem, size = 0x28000, scoped, tag = 'scratch operand']
  #allocation3 [shape = 'bf16[320,192]{1,0:T(16,128)(2,1)}', space=vmem, size = 0x28000, scoped, tag = 'scratch operand']
  %s0 = inlined_call_operand.vmem [shape: s32[256,1], index: 0, kind: input, shape index: {}]
  %s1 = inlined_call_operand.vmem [shape: bf16[2,256,128], index: 1, kind: input, shape index: {}]
  %s2 = inlined_call_operand.vmem [shape: bf16[2,256,128], index: 2, kind: input, shape index: {}]
  %s3 = inlined_call_operand.vmem [shape: bf16[128,192], index: 3, kind: input, shape index: {}]
  %s4 = inlined_call_operand.vmem [shape: f32[1,192], index: 4, kind: input, shape index: {}]
  %s5 = inlined_call_operand.vmem [shape: bf16[128,192], index: 5, kind: input, shape index: {}]
  %s6 = inlined_call_operand.vmem [shape: f32[1,192], index: 6, kind: input, shape index: {}]
  %s7 = inlined_call_operand.hbm [shape: bf16[3,3,192,128], index: 7, kind: input, shape index: {}]
  %s8 = inlined_call_operand.hbm [shape: bf16[3,3,192,128], index: 8, kind: input, shape index: {}]
  %s9 = inlined_call_operand.vmem [shape: f32[1,128], index: 9, kind: input, shape index: {}]
  %s10 = inlined_call_operand.hbm [shape: f32[2,256,128], index: 10, kind: output, shape index: {}]
  %s11 = sld [smem:[#allocation0]]
  $region81: #{tpu_custom_call.1} parent=0
    _
  %s13 = ssub.s32 1, %s11
  %s14 = scalar_select 0, %s13, %s11
  $region1: #{tpu_custom_call.1} parent=0
    #allocation4 [shape = 'u8[442368]{0}', space=vmem, size = 0x6c000, scoped, tag = 'input window, operand 7, single buffered']
    #allocation5 [shape = 's32[2]{0}', space=sflag, size = 0x8, scoped, tag = 'scoped memory for tpu_custom_call.1']
    #allocation6 [shape = 's32[2]{0}', space=sflag, size = 0x8, scoped, tag = 'scoped memory for tpu_custom_call.1']
    #allocation7 [shape = 'u8[442368]{0}', space=vmem, size = 0x6c000, scoped, tag = 'input window, operand 8, single buffered']
    #allocation8 [shape = 's32[1]{0}', space=sflag, size = 0x4, scoped, tag = 'scoped memory for tpu_custom_call.1']
    #allocation9 [shape = 'u8[262144]{0}', space=vmem, size = 0x40000, scoped, tag = 'output window, operand 0']
    %15 = vsyncpa [#allocation5], 0
    %16 = vsyncpa [#allocation8], 0
    %17 = vsyncpa [#allocation6], 0
    %s18 = scalar_lea.sflag [#allocation6], 1
    %19 = vsyncpa %s18, 0
    loop: start=0, step=1, limit=4
    $region2: #{tpu_custom_call.1} parent=1 // loop_pre_header
      _
    $region3: #{tpu_custom_call.1} parent=1 // loop_header
      %s21 = sphi 0, %s25
      %p22 = scmp.ge.s32.totalorder %s21, 4
      %s29 = sphi 0, %s29
      %s31 = sphi 0, %s29
      %s32 = sphi 0, %s31
      %s46 = sphi 0, %s32
      %s52 = sphi 0, %s54
      %s55 = sphi 0, %s52
      %s56 = sphi 0, %s55
      %s72 = sphi 0, %s56
      %s78 = sphi 0, %s80
      %s81 = sphi 0, %s78
      %s82 = sphi 0, %s81
      %s98 = sphi 0, %s82
      %s102 = sphi 0, %s102
      %s104 = sphi 0, %s102
      %s105 = sphi 0, %s104
      %s119 = sphi 0, %s105
      %s123 = sphi 0, %s123
      %s125 = sphi 0, %s123
      %s126 = sphi 0, %s125
      %s140 = sphi 0, %s126
      %s144 = sphi 0, %s144
      %s146 = sphi 0, %s144
      %s147 = sphi 0, %s146
      %s161 = sphi 0, %s147
      %s165 = sphi 0, %s165
      %s167 = sphi 0, %s165
      %s168 = sphi 0, %s167
      %s182 = sphi 0, %s168
      %s186 = sphi 0, %s186
      %s188 = sphi 0, %s186
      %s189 = sphi 0, %s188
      %s203 = sphi 0, %s189
      %s207 = sphi 0, %s207
      %s209 = sphi 0, %s207
      %s210 = sphi 0, %s209
      %s224 = sphi 0, %s210
      %s228 = sphi 0, %s228
      %s230 = sphi 0, %s228
      %s231 = sphi 0, %s230
      %s245 = sphi 0, %s231
      %s251 = sphi 0, %s253
      %s254 = sphi 0, %s251
      %s255 = sphi 0, %s254
      %s271 = sphi 0, %s255
    $region4: #{tpu_custom_call.1} parent=1 // loop_header_branch
      %24 = sbr.rel (%p22) target = $region8
    $region5: #{tpu_custom_call.1} parent=1 // loop_body
      %s26 = ssub.s32 %s21, 1
      %s27 = ssub.s32 %s21, 2
      %s28 = sadd.s32 %s21, 1
      %s30 = sadd.s32 %s29, 1
      %p33 = scmp.eq.s32.totalorder %s21, 1
      %p34 = scmp.ne.s32.totalorder %s29, %s31
      %p35 = scmp.eq.s32.totalorder %s21, 0
      %p36 = por %p34, %p35
      %p37 = scmp.ne.s32.totalorder %s29, %s31
      %p38 = scmp.eq.s32.totalorder %s26, 1
      %p39 = por %p37, %p38
      %p40 = scmp.ne.s32.totalorder %s31, %s32
      %p41 = scmp.eq.s32.totalorder %s26, 0
      %p42 = por %p40, %p41
      %p43 = scmp.ne.s32.totalorder %s31, %s32
      %p44 = scmp.eq.s32.totalorder %s27, 1
      %p45 = por %p43, %p44
      %p47 = scmp.ne.s32.totalorder %s32, %s46
      %p48 = scmp.eq.s32.totalorder %s27, 0
      %p49 = por %p47, %p48
      %s50 = ssub.s32 %s21, %s28
      %p51 = scmp.eq.s32.totalorder %s50, 0
      %s53 = sadd.s32 %s52, 1
      %s54 = scalar_select %p51, %s52, %s53
      %p57 = pneg %p51
      %p58 = scmp.eq.s32.totalorder %s21, 1
      %p59 = por %p57, %p58
      %p60 = scmp.ne.s32.totalorder %s52, %s55
      %p61 = scmp.eq.s32.totalorder %s21, 0
      %p62 = por %p60, %p61
      %p63 = scmp.ne.s32.totalorder %s52, %s55
      %p64 = scmp.eq.s32.totalorder %s26, 1
      %p65 = por %p63, %p64
      %p66 = scmp.ne.s32.totalorder %s55, %s56
      %p67 = scmp.eq.s32.totalorder %s26, 0
      %p68 = por %p66, %p67
      %p69 = scmp.ne.s32.totalorder %s55, %s56
      %p70 = scmp.eq.s32.totalorder %s27, 1
      %p71 = por %p69, %p70
      %p73 = scmp.ne.s32.totalorder %s56, %s72
      %p74 = scmp.eq.s32.totalorder %s27, 0
      %p75 = por %p73, %p74
      %s76 = ssub.s32 %s21, %s28
      %p77 = scmp.eq.s32.totalorder %s76, 0
      %s79 = sadd.s32 %s78, 1
      %s80 = scalar_select %p77, %s78, %s79
      %p83 = pneg %p77
      %p84 = scmp.eq.s32.totalorder %s21, 1
      %p85 = por %p83, %p84
      %p86 = scmp.ne.s32.totalorder %s78, %s81
      %p87 = scmp.eq.s32.totalorder %s21, 0
      %p88 = por %p86, %p87
      %p89 = scmp.ne.s32.totalorder %s78, %s81
      %p90 = scmp.eq.s32.totalorder %s26, 1
      %p91 = por %p89, %p90
      %p92 = scmp.ne.s32.totalorder %s81, %s82
      %p93 = scmp.eq.s32.totalorder %s26, 0
      %p94 = por %p92, %p93
      %p95 = scmp.ne.s32.totalorder %s81, %s82
      %p96 = scmp.eq.s32.totalorder %s27, 1
      %p97 = por %p95, %p96
      %p99 = scmp.ne.s32.totalorder %s82, %s98
      %p100 = scmp.eq.s32.totalorder %s27, 0
      %p101 = por %p99, %p100
      %s103 = sadd.s32 %s102, 1
      %p106 = scmp.eq.s32.totalorder %s21, 1
      %p107 = scmp.ne.s32.totalorder %s102, %s104
      %p108 = scmp.eq.s32.totalorder %s21, 0
      %p109 = por %p107, %p108
      %p110 = scmp.ne.s32.totalorder %s102, %s104
      %p111 = scmp.eq.s32.totalorder %s26, 1
      %p112 = por %p110, %p111
      %p113 = scmp.ne.s32.totalorder %s104, %s105
      %p114 = scmp.eq.s32.totalorder %s26, 0
      %p115 = por %p113, %p114
      %p116 = scmp.ne.s32.totalorder %s104, %s105
      %p117 = scmp.eq.s32.totalorder %s27, 1
      %p118 = por %p116, %p117
      %p120 = scmp.ne.s32.totalorder %s105, %s119
      %p121 = scmp.eq.s32.totalorder %s27, 0
      %p122 = por %p120, %p121
      %s124 = sadd.s32 %s123, 1
      %p127 = scmp.eq.s32.totalorder %s21, 1
      %p128 = scmp.ne.s32.totalorder %s123, %s125
      %p129 = scmp.eq.s32.totalorder %s21, 0
      %p130 = por %p128, %p129
      %p131 = scmp.ne.s32.totalorder %s123, %s125
      %p132 = scmp.eq.s32.totalorder %s26, 1
      %p133 = por %p131, %p132
      %p134 = scmp.ne.s32.totalorder %s125, %s126
      %p135 = scmp.eq.s32.totalorder %s26, 0
      %p136 = por %p134, %p135
      %p137 = scmp.ne.s32.totalorder %s125, %s126
      %p138 = scmp.eq.s32.totalorder %s27, 1
      %p139 = por %p137, %p138
      %p141 = scmp.ne.s32.totalorder %s126, %s140
      %p142 = scmp.eq.s32.totalorder %s27, 0
      %p143 = por %p141, %p142
      %s145 = sadd.s32 %s144, 1
      %p148 = scmp.eq.s32.totalorder %s21, 1
      %p149 = scmp.ne.s32.totalorder %s144, %s146
      %p150 = scmp.eq.s32.totalorder %s21, 0
      %p151 = por %p149, %p150
      %p152 = scmp.ne.s32.totalorder %s144, %s146
      %p153 = scmp.eq.s32.totalorder %s26, 1
      %p154 = por %p152, %p153
      %p155 = scmp.ne.s32.totalorder %s146, %s147
      %p156 = scmp.eq.s32.totalorder %s26, 0
      %p157 = por %p155, %p156
      %p158 = scmp.ne.s32.totalorder %s146, %s147
      %p159 = scmp.eq.s32.totalorder %s27, 1
      %p160 = por %p158, %p159
      %p162 = scmp.ne.s32.totalorder %s147, %s161
      %p163 = scmp.eq.s32.totalorder %s27, 0
      %p164 = por %p162, %p163
      %s166 = sadd.s32 %s165, 1
      %p169 = scmp.eq.s32.totalorder %s21, 1
      %p170 = scmp.ne.s32.totalorder %s165, %s167
      %p171 = scmp.eq.s32.totalorder %s21, 0
      %p172 = por %p170, %p171
      %p173 = scmp.ne.s32.totalorder %s165, %s167
      %p174 = scmp.eq.s32.totalorder %s26, 1
      %p175 = por %p173, %p174
      %p176 = scmp.ne.s32.totalorder %s167, %s168
      %p177 = scmp.eq.s32.totalorder %s26, 0
      %p178 = por %p176, %p177
      %p179 = scmp.ne.s32.totalorder %s167, %s168
      %p180 = scmp.eq.s32.totalorder %s27, 1
      %p181 = por %p179, %p180
      %p183 = scmp.ne.s32.totalorder %s168, %s182
      %p184 = scmp.eq.s32.totalorder %s27, 0
      %p185 = por %p183, %p184
      %s187 = sadd.s32 %s186, 1
      %p190 = scmp.eq.s32.totalorder %s21, 1
      %p191 = scmp.ne.s32.totalorder %s186, %s188
      %p192 = scmp.eq.s32.totalorder %s21, 0
      %p193 = por %p191, %p192
      %p194 = scmp.ne.s32.totalorder %s186, %s188
      %p195 = scmp.eq.s32.totalorder %s26, 1
      %p196 = por %p194, %p195
      %p197 = scmp.ne.s32.totalorder %s188, %s189
      %p198 = scmp.eq.s32.totalorder %s26, 0
      %p199 = por %p197, %p198
      %p200 = scmp.ne.s32.totalorder %s188, %s189
      %p201 = scmp.eq.s32.totalorder %s27, 1
      %p202 = por %p200, %p201
      %p204 = scmp.ne.s32.totalorder %s189, %s203
      %p205 = scmp.eq.s32.totalorder %s27, 0
      %p206 = por %p204, %p205
      %s208 = sadd.s32 %s207, 1
      %p211 = scmp.eq.s32.totalorder %s21, 1
      %p212 = scmp.ne.s32.totalorder %s207, %s209
      %p213 = scmp.eq.s32.totalorder %s21, 0
      %p214 = por %p212, %p213
      %p215 = scmp.ne.s32.totalorder %s207, %s209
      %p216 = scmp.eq.s32.totalorder %s26, 1
      %p217 = por %p215, %p216
      %p218 = scmp.ne.s32.totalorder %s209, %s210
      %p219 = scmp.eq.s32.totalorder %s26, 0
      %p220 = por %p218, %p219
      %p221 = scmp.ne.s32.totalorder %s209, %s210
      %p222 = scmp.eq.s32.totalorder %s27, 1
      %p223 = por %p221, %p222
      %p225 = scmp.ne.s32.totalorder %s210, %s224
      %p226 = scmp.eq.s32.totalorder %s27, 0
      %p227 = por %p225, %p226
      %s229 = sadd.s32 %s228, 1
      %p232 = scmp.eq.s32.totalorder %s21, 1
      %p233 = scmp.ne.s32.totalorder %s228, %s230
      %p234 = scmp.eq.s32.totalorder %s21, 0
      %p235 = por %p233, %p234
      %p236 = scmp.ne.s32.totalorder %s228, %s230
      %p237 = scmp.eq.s32.totalorder %s26, 1
      %p238 = por %p236, %p237
      %p239 = scmp.ne.s32.totalorder %s230, %s231
      %p240 = scmp.eq.s32.totalorder %s26, 0
      %p241 = por %p239, %p240
      %p242 = scmp.ne.s32.totalorder %s230, %s231
      %p243 = scmp.eq.s32.totalorder %s27, 1
      %p244 = por %p242, %p243
      %p246 = scmp.ne.s32.totalorder %s231, %s245
      %p247 = scmp.eq.s32.totalorder %s27, 0
      %p248 = por %p246, %p247
      %s249 = ssub.s32 %s21, %s28
      %p250 = scmp.eq.s32.totalorder %s249, 0
      %s252 = sadd.s32 %s251, 1
      %s253 = scalar_select %p250, %s251, %s252
      %p256 = pneg %p250
      %p257 = scmp.eq.s32.totalorder %s21, 1
      %p258 = por %p256, %p257
      %p259 = scmp.ne.s32.totalorder %s251, %s254
      %p260 = scmp.eq.s32.totalorder %s21, 0
      %p261 = por %p259, %p260
      %p262 = scmp.ne.s32.totalorder %s251, %s254
      %p263 = scmp.eq.s32.totalorder %s26, 1
      %p264 = por %p262, %p263
      %p265 = scmp.ne.s32.totalorder %s254, %s255
      %p266 = scmp.eq.s32.totalorder %s26, 0
      %p267 = por %p265, %p266
      %p268 = scmp.ne.s32.totalorder %s254, %s255
      %p269 = scmp.eq.s32.totalorder %s27, 1
      %p270 = por %p268, %p269
      %p272 = scmp.ne.s32.totalorder %s255, %s271
      %p273 = scmp.eq.s32.totalorder %s27, 0
      %p274 = por %p272, %p273
      %p275 = scmp.le.s32.totalorder 1, %s21
      %p276 = scmp.lt.s32.totalorder %s21, 3
      %p277 = pnand %p275, %p276
      %p278 = pneg %p277
      // Predicated region
      $region9: #{tpu_custom_call.1} parent=5 // pred_check
        _
      $region10: #{tpu_custom_call.1} parent=5 // pred_check_branch
        %280 = sbr.rel (%p277) target = $region12
      $region11: #{tpu_custom_call.1} parent=5 // pred_region
        %s281 = ssub.s32 %s21, 1
        // Predicated region
        $region13: #{tpu_custom_call.1} parent=11 // pred_check
          %p282 = pneg %p42
        $region14: #{tpu_custom_call.1} parent=11 // pred_check_branch
          %284 = sbr.rel (%p282) target = $region16
        $region15: #{tpu_custom_call.1} parent=11 // pred_region
          _
        $region16: #{tpu_custom_call.1} parent=11 // pred_fallthru
          _
        // Predicated region
        $region17: #{tpu_custom_call.1} parent=11 // pred_check
          %p285 = pneg %p115
        $region18: #{tpu_custom_call.1} parent=11 // pred_check_branch
          %287 = sbr.rel (%p285) target = $region20
        $region19: #{tpu_custom_call.1} parent=11 // pred_region
          _
        $region20: #{tpu_custom_call.1} parent=11 // pred_fallthru
          _
        // Predicated region
        $region21: #{tpu_custom_call.1} parent=11 // pred_check
          %p288 = pneg %p136
        $region22: #{tpu_custom_call.1} parent=11 // pred_check_branch
          %290 = sbr.rel (%p288) target = $region24
        $region23: #{tpu_custom_call.1} parent=11 // pred_region
          _
        $region24: #{tpu_custom_call.1} parent=11 // pred_fallthru
          _
        // Predicated region
        $region25: #{tpu_custom_call.1} parent=11 // pred_check
          %p291 = pneg %p157
        $region26: #{tpu_custom_call.1} parent=11 // pred_check_branch
          %293 = sbr.rel (%p291) target = $region28
        $region27: #{tpu_custom_call.1} parent=11 // pred_region
          _
        $region28: #{tpu_custom_call.1} parent=11 // pred_fallthru
          _
        // Predicated region
        $region29: #{tpu_custom_call.1} parent=11 // pred_check
          %p294 = pneg %p178
        $region30: #{tpu_custom_call.1} parent=11 // pred_check_branch
          %296 = sbr.rel (%p294) target = $region32
        $region31: #{tpu_custom_call.1} parent=11 // pred_region
          _
        $region32: #{tpu_custom_call.1} parent=11 // pred_fallthru
          _
        // Predicated region
        $region33: #{tpu_custom_call.1} parent=11 // pred_check
          %p297 = pneg %p199
        $region34: #{tpu_custom_call.1} parent=11 // pred_check_branch
          %299 = sbr.rel (%p297) target = $region36
        $region35: #{tpu_custom_call.1} parent=11 // pred_region
          %s301 = ssub.s32 13824, 13824
          %302 = vsyncadd [#allocation5], %s301
          %s303 = sshll.u32 [#allocation4], 4
          %s304 = int_to_ptr.vmem [resolvable:$true] %s303
          %309 = dma.hbm_to_vmem [thread:$0]  %s7, 13824, %s304, [#allocation5], 64, 64, 4
        $region36: #{tpu_custom_call.1} parent=11 // pred_fallthru
          _
        // Predicated region
        $region37: #{tpu_custom_call.1} parent=11 // pred_check
          %p310 = pneg %p220
        $region38: #{tpu_custom_call.1} parent=11 // pred_check_branch
          %312 = sbr.rel (%p310) target = $region40
        $region39: #{tpu_custom_call.1} parent=11 // pred_region
          %s314 = ssub.s32 13824, 13824
          %315 = vsyncadd [#allocation8], %s314
          %s316 = sshll.u32 [#allocation7], 4
          %s317 = int_to_ptr.vmem [resolvable:$true] %s316
          %322 = dma.hbm_to_vmem [thread:$0]  %s8, 13824, %s317, [#allocation8], 64, 64, 4
        $region40: #{tpu_custom_call.1} parent=11 // pred_fallthru
          _
        // Predicated region
        $region41: #{tpu_custom_call.1} parent=11 // pred_check
          %p323 = pneg %p241
        $region42: #{tpu_custom_call.1} parent=11 // pred_check_branch
          %325 = sbr.rel (%p323) target = $region44
        $region43: #{tpu_custom_call.1} parent=11 // pred_region
          _
        $region44: #{tpu_custom_call.1} parent=11 // pred_fallthru
          _
      $region12: #{tpu_custom_call.1} parent=5 // pred_fallthru
        _
      %p326 = scmp.lt.s32.totalorder %s21, 2
      // Predicated region
      $region45: #{tpu_custom_call.1} parent=5 // pred_check
        %p327 = pneg %p326
      $region46: #{tpu_custom_call.1} parent=5 // pred_check_branch
        %329 = sbr.rel (%p327) target = $region48
      $region47: #{tpu_custom_call.1} parent=5 // pred_region
        // Predicated region
        $region49: #{tpu_custom_call.1} parent=47 // pred_check
          %p330 = pneg %p62
        $region50: #{tpu_custom_call.1} parent=47 // pred_check_branch
          %332 = sbr.rel (%p330) target = $region52
        $region51: #{tpu_custom_call.1} parent=47 // pred_region
          %p333 = scmp.lt.s32.totalorder %s21, 1
          %s334 = scalar_select %p333, %s21, 1
          %s335 = smul.addr %s334, 32
          %s336 = smul.addr %s335, 4
          %s337 = scalar_lea.vmem %s1, %s336
        $region52: #{tpu_custom_call.1} parent=47 // pred_fallthru
          _
        // Predicated region
        $region53: #{tpu_custom_call.1} parent=47 // pred_check
          %p338 = pneg %p88
        $region54: #{tpu_custom_call.1} parent=47 // pred_check_branch
          %340 = sbr.rel (%p338) target = $region56
        $region55: #{tpu_custom_call.1} parent=47 // pred_region
          %p341 = scmp.lt.s32.totalorder %s21, 1
          %s342 = scalar_select %p341, %s21, 1
          %s343 = smul.addr %s342, 32
          %s344 = smul.addr %s343, 4
          %s345 = scalar_lea.vmem %s2, %s344
        $region56: #{tpu_custom_call.1} parent=47 // pred_fallthru
          _
      $region48: #{tpu_custom_call.1} parent=5 // pred_fallthru
        _
      %p346 = scmp.le.s32.totalorder 1, %s21
      %p347 = scmp.lt.s32.totalorder %s21, 3
      %p348 = pnand %p346, %p347
      %p349 = pneg %p348
      // Predicated region
      $region57: #{tpu_custom_call.1} parent=5 // pred_check
        _
      $region58: #{tpu_custom_call.1} parent=5 // pred_check_branch
        %351 = sbr.rel (%p348) target = $region60
      $region59: #{tpu_custom_call.1} parent=5 // pred_region
        %s352 = ssub.s32 %s21, 1
        // Predicated region
        $region61: #{tpu_custom_call.1} parent=59 // pred_check
          %p353 = pneg %p199
        $region62: #{tpu_custom_call.1} parent=59 // pred_check_branch
          %355 = sbr.rel (%p353) target = $region64
        $region63: #{tpu_custom_call.1} parent=59 // pred_region
          %356 = dma.done [#allocation5], 13824
        $region64: #{tpu_custom_call.1} parent=59 // pred_fallthru
          _
        // Predicated region
        $region65: #{tpu_custom_call.1} parent=59 // pred_check
          %p357 = pneg %p220
        $region66: #{tpu_custom_call.1} parent=59 // pred_check_branch
          %359 = sbr.rel (%p357) target = $region68
        $region67: #{tpu_custom_call.1} parent=59 // pred_region
          %360 = dma.done [#allocation8], 13824
        $region68: #{tpu_custom_call.1} parent=59 // pred_fallthru
          _
        %p361 = pneg %p42
        %p362 = pneg %p39
        %p363 = scmp.lt.s32.totalorder %s26, 1
        %s364 = scalar_select %p363, %s26, 1
        %s365 = smul.addr %s364, 32
        %s366 = smul.addr %s365, 4
        %s367 = scalar_lea.vmem %s1, %s366
        %p368 = pneg %p68
        %p369 = pneg %p65
        %p370 = scmp.lt.s32.totalorder %s26, 1
        %s371 = scalar_select %p370, %s26, 1
        %s372 = smul.addr %s371, 32
        %s373 = smul.addr %s372, 4
        %s374 = scalar_lea.vmem %s2, %s373
        %p375 = pneg %p94
        %p376 = pneg %p91
        %p377 = pneg %p115
        %p378 = pneg %p112
        %p379 = pneg %p136
        %p380 = pneg %p133
        %p381 = pneg %p157
        %p382 = pneg %p154
        %p383 = pneg %p178
        %p384 = pneg %p175
        %p385 = pneg %p199
        %p386 = pneg %p196
        %p387 = pneg %p220
        %p388 = pneg %p217
        %p389 = pneg %p241
        %p390 = pneg %p238
        %p391 = pneg %p267
        %p392 = pneg %p264
        %s393 = sand.u32 %s254, 1
        %s394 = scalar_lea.sflag [#allocation6], %s393
        %s395 = sand.u32 %s254, 1
        %s396 = smul.addr %s395, 256
        %s397 = scalar_lea.vmem [#allocation9], %s396
        %p398 = scmp.lt.s32.totalorder %s26, 1
        %s399 = scalar_select %p398, %s26, 1
        %s400 = smul.addr %s399, 32
        %s401 = smul.addr %s400, 4
        %s402 = scalar_lea.vmem %s1, %s401
        %p403 = scmp.lt.s32.totalorder %s26, 1
        %s404 = scalar_select %p403, %s26, 1
        %s405 = smul.addr %s404, 32
        %s406 = smul.addr %s405, 4
        %s407 = scalar_lea.vmem %s2, %s406
        %409 = vst [vmem:[#allocation2] sm:$0xff] 0
        %vm410 = vcmask 523264
        %411 = vst.msk [vmem:[#allocation2 + $0x8] sm:$0xff] %vm410, 0
        %412 = vst [vmem:[#allocation2 + $0x10] sm:$0xff] 0
        %413 = vst.msk [vmem:[#allocation2 + $0x18] sm:$0xff] %vm410, 0
        %414 = vst [vmem:[#allocation3] sm:$0xff] 0
        %415 = vst.msk [vmem:[#allocation3 + $0x8] sm:$0xff] %vm410, 0
        %416 = vst [vmem:[#allocation3 + $0x10] sm:$0xff] 0
        %417 = vst.msk [vmem:[#allocation3 + $0x18] sm:$0xff] %vm410, 0
        %418 = vst [vmem:[#allocation2 + $0x120] sm:$0xff] 0
        %419 = vst.msk [vmem:[#allocation2 + $0x128] sm:$0xff] %vm410, 0
        %420 = vst [vmem:[#allocation2 + $0x130] sm:$0xff] 0
        %421 = vst.msk [vmem:[#allocation2 + $0x138] sm:$0xff] %vm410, 0
        %422 = vst [vmem:[#allocation3 + $0x120] sm:$0xff] 0
        %423 = vst.msk [vmem:[#allocation3 + $0x128] sm:$0xff] %vm410, 0
        %424 = vst [vmem:[#allocation3 + $0x130] sm:$0xff] 0
        %425 = vst.msk [vmem:[#allocation3 + $0x138] sm:$0xff] %vm410, 0
        %v426 = vld [vmem:[%s402] sm:$0xf]
        %v427 = vld [vmem:[%s402 + $0x4] sm:$0xf]
        %v428 = vld [vmem:[%s402 + $0x8] sm:$0xf]
        %v429 = vld [vmem:[%s402 + $0xc] sm:$0xf]
        %v430 = vld [vmem:[%s402 + $0x10] sm:$0xf]
        %v431 = vld [vmem:[%s402 + $0x14] sm:$0xf]
        %v432 = vld [vmem:[%s402 + $0x18] sm:$0xf]
        %v433 = vld [vmem:[%s402 + $0x1c] sm:$0xf]
        %v434 = vld [vmem:[%s402 + $0x20] sm:$0xf]
        %v435 = vld [vmem:[%s402 + $0x24] sm:$0xf]
        %v436 = vld [vmem:[%s402 + $0x28] sm:$0xf]
        %v437 = vld [vmem:[%s402 + $0x2c] sm:$0xf]
        %v438 = vld [vmem:[%s402 + $0x30] sm:$0xf]
        %v439 = vld [vmem:[%s402 + $0x34] sm:$0xf]
        %v440 = vld [vmem:[%s402 + $0x38] sm:$0xf]
        %v441 = vld [vmem:[%s402 + $0x3c] sm:$0xf]
        %v442 = vld [vmem:[%s402 + $0x40] sm:$0xf]
        %v443 = vld [vmem:[%s402 + $0x44] sm:$0xf]
        %v444 = vld [vmem:[%s402 + $0x48] sm:$0xf]
        %v445 = vld [vmem:[%s402 + $0x4c] sm:$0xf]
        %v446 = vld [vmem:[%s402 + $0x50] sm:$0xf]
        %v447 = vld [vmem:[%s402 + $0x54] sm:$0xf]
        %v448 = vld [vmem:[%s402 + $0x58] sm:$0xf]
        %v449 = vld [vmem:[%s402 + $0x5c] sm:$0xf]
        %v450 = vld [vmem:[%s402 + $0x60] sm:$0xf]
        %v451 = vld [vmem:[%s402 + $0x64] sm:$0xf]
        %v452 = vld [vmem:[%s402 + $0x68] sm:$0xf]
        %v453 = vld [vmem:[%s402 + $0x6c] sm:$0xf]
        %v454 = vld [vmem:[%s402 + $0x70] sm:$0xf]
        %v455 = vld [vmem:[%s402 + $0x74] sm:$0xf]
        %v456 = vld [vmem:[%s402 + $0x78] sm:$0xf]
        %v457 = vld [vmem:[%s402 + $0x7c] sm:$0xf]
        %v458 = vld [vmem:[%s407] sm:$0xf]
        %v459 = vld [vmem:[%s407 + $0x4] sm:$0xf]
        %v460 = vld [vmem:[%s407 + $0x8] sm:$0xf]
        %v461 = vld [vmem:[%s407 + $0xc] sm:$0xf]
        %v462 = vld [vmem:[%s407 + $0x10] sm:$0xf]
        %v463 = vld [vmem:[%s407 + $0x14] sm:$0xf]
        %v464 = vld [vmem:[%s407 + $0x18] sm:$0xf]
        %v465 = vld [vmem:[%s407 + $0x1c] sm:$0xf]
        %v466 = vld [vmem:[%s407 + $0x20] sm:$0xf]
        %v467 = vld [vmem:[%s407 + $0x24] sm:$0xf]
        %v468 = vld [vmem:[%s407 + $0x28] sm:$0xf]
        %v469 = vld [vmem:[%s407 + $0x2c] sm:$0xf]
        %v470 = vld [vmem:[%s407 + $0x30] sm:$0xf]
        %v471 = vld [vmem:[%s407 + $0x34] sm:$0xf]
        %v472 = vld [vmem:[%s407 + $0x38] sm:$0xf]
        %v473 = vld [vmem:[%s407 + $0x3c] sm:$0xf]
        %v474 = vld [vmem:[%s407 + $0x40] sm:$0xf]
        %v475 = vld [vmem:[%s407 + $0x44] sm:$0xf]
        %v476 = vld [vmem:[%s407 + $0x48] sm:$0xf]
        %v477 = vld [vmem:[%s407 + $0x4c] sm:$0xf]
        %v478 = vld [vmem:[%s407 + $0x50] sm:$0xf]
        %v479 = vld [vmem:[%s407 + $0x54] sm:$0xf]
        %v480 = vld [vmem:[%s407 + $0x58] sm:$0xf]
        %v481 = vld [vmem:[%s407 + $0x5c] sm:$0xf]
        %v482 = vld [vmem:[%s407 + $0x60] sm:$0xf]
        %v483 = vld [vmem:[%s407 + $0x64] sm:$0xf]
        %v484 = vld [vmem:[%s407 + $0x68] sm:$0xf]
        %v485 = vld [vmem:[%s407 + $0x6c] sm:$0xf]
        %v486 = vld [vmem:[%s407 + $0x70] sm:$0xf]
        %v487 = vld [vmem:[%s407 + $0x74] sm:$0xf]
        %v488 = vld [vmem:[%s407 + $0x78] sm:$0xf]
        %v489 = vld [vmem:[%s407 + $0x7c] sm:$0xf]
        %v490 = vld [vmem:[%s3] sm:$0xff]
        %v491 = vld [vmem:[%s3 + $0x8] sm:$0xff]
        %v492 = vld [vmem:[%s3 + $0x10] sm:$0xff]
        %v493 = vld [vmem:[%s3 + $0x18] sm:$0xff]
        %v494 = vld [vmem:[%s3 + $0x20] sm:$0xff]
        %v495 = vld [vmem:[%s3 + $0x28] sm:$0xff]
        %v496 = vld [vmem:[%s3 + $0x30] sm:$0xff]
        %v497 = vld [vmem:[%s3 + $0x38] sm:$0xff]
        %v498 = vld [vmem:[%s3 + $0x40] sm:$0xff]
        %v499 = vld [vmem:[%s3 + $0x48] sm:$0xff]
        %v500 = vld [vmem:[%s3 + $0x50] sm:$0xff]
        %v501 = vld [vmem:[%s3 + $0x58] sm:$0xff]
        %v502 = vld [vmem:[%s3 + $0x60] sm:$0xff]
        %v503 = vld [vmem:[%s3 + $0x68] sm:$0xff]
        %v504 = vld [vmem:[%s3 + $0x70] sm:$0xff]
        %v505 = vld [vmem:[%s3 + $0x78] sm:$0xff]
        %v506 = vld [vmem:[%s4] sm:$0x3]
        %v508 = vlaneseq
        %v509 = vshrl.u32 %v508, 7
        %v510 = vsub.s32 0, %v509
        %v511 = vrot.slane %v506, %v510
        %v512 = vlaneseq
        %v513 = vshrl.u32 %v512, 7
        %v514 = vsub.s32 1, %v513
        %v515 = vrot.slane %v506, %v514
        %v550 = vunpack.c.l.b16 %v426
        %v551 = vunpack.c.l.b16 %v427
        %v552 = vunpack.c.l.b16 %v428
        %v553 = vunpack.c.l.b16 %v429
        %v554 = vunpack.c.l.b16 %v430
        %v555 = vunpack.c.l.b16 %v431
        %v556 = vunpack.c.l.b16 %v432
        %v557 = vunpack.c.l.b16 %v433
        %v558 = vunpack.c.l.b16 %v434
        %v559 = vunpack.c.l.b16 %v435
        %v560 = vunpack.c.l.b16 %v436
        %v561 = vunpack.c.l.b16 %v437
        %v562 = vunpack.c.l.b16 %v438
        %v563 = vunpack.c.l.b16 %v439
        %v564 = vunpack.c.l.b16 %v440
        %v565 = vunpack.c.l.b16 %v441
        %v566 = vunpack.c.l.b16 %v442
        %v567 = vunpack.c.l.b16 %v443
        %v568 = vunpack.c.l.b16 %v444
        %v569 = vunpack.c.l.b16 %v445
        %v570 = vunpack.c.l.b16 %v446
        %v571 = vunpack.c.l.b16 %v447
        %v572 = vunpack.c.l.b16 %v448
        %v573 = vunpack.c.l.b16 %v449
        %v574 = vunpack.c.l.b16 %v450
        %v575 = vunpack.c.l.b16 %v451
        %v576 = vunpack.c.l.b16 %v452
        %v577 = vunpack.c.l.b16 %v453
        %v578 = vunpack.c.l.b16 %v454
        %v579 = vunpack.c.l.b16 %v455
        %v580 = vunpack.c.l.b16 %v456
        %v581 = vunpack.c.l.b16 %v457
        %v582 = vpack.c.b16 %v551, %v550
        %v583 = vpack.c.b16 %v553, %v552
        %v584 = vpack.c.b16 %v555, %v554
        %v585 = vpack.c.b16 %v557, %v556
        %v586 = vpack.c.b16 %v559, %v558
        %v587 = vpack.c.b16 %v561, %v560
        %v588 = vpack.c.b16 %v563, %v562
        %v589 = vpack.c.b16 %v565, %v564
        %v590 = vpack.c.b16 %v567, %v566
        %v591 = vpack.c.b16 %v569, %v568
        %v592 = vpack.c.b16 %v571, %v570
        %v593 = vpack.c.b16 %v573, %v572
        %v594 = vpack.c.b16 %v575, %v574
        %v595 = vpack.c.b16 %v577, %v576
        %v596 = vpack.c.b16 %v579, %v578
        %v597 = vpack.c.b16 %v581, %v580
        %v630 = vunpack.c.l.b16 %v490
        %v631 = vunpack.c.h.b16 %v490
        %v632 = vunpack.c.l.b16 %v491
        %v633 = vunpack.c.h.b16 %v491
        %v634 = vunpack.c.l.b16 %v492
        %v635 = vunpack.c.h.b16 %v492
        %v636 = vunpack.c.l.b16 %v493
        %v637 = vunpack.c.h.b16 %v493
        %v638 = vunpack.c.l.b16 %v494
        %v639 = vunpack.c.h.b16 %v494
        %v640 = vunpack.c.l.b16 %v495
        %v641 = vunpack.c.h.b16 %v495
        %v642 = vunpack.c.l.b16 %v496
        %v643 = vunpack.c.h.b16 %v496
        %v644 = vunpack.c.l.b16 %v497
        %v645 = vunpack.c.h.b16 %v497
        %v646 = vunpack.c.l.b16 %v498
        %v647 = vunpack.c.h.b16 %v498
        %v648 = vunpack.c.l.b16 %v499
        %v649 = vunpack.c.h.b16 %v499
        %v650 = vunpack.c.l.b16 %v500
        %v651 = vunpack.c.h.b16 %v500
        %v652 = vunpack.c.l.b16 %v501
        %v653 = vunpack.c.h.b16 %v501
        %v654 = vunpack.c.l.b16 %v502
        %v655 = vunpack.c.h.b16 %v502
        %v656 = vunpack.c.l.b16 %v503
        %v657 = vunpack.c.h.b16 %v503
        %v658 = vunpack.c.l.b16 %v504
        %v659 = vunpack.c.h.b16 %v504
        %v660 = vunpack.c.l.b16 %v505
        %v661 = vunpack.c.h.b16 %v505
        %v662 = vpack.c.b16 %v632, %v630
        %v663 = vpack.c.b16 %v633, %v631
        %v664 = vpack.c.b16 %v636, %v634
        %v665 = vpack.c.b16 %v637, %v635
        %v666 = vpack.c.b16 %v640, %v638
        %v667 = vpack.c.b16 %v641, %v639
        %v668 = vpack.c.b16 %v644, %v642
        %v669 = vpack.c.b16 %v645, %v643
        %v670 = vpack.c.b16 %v648, %v646
        %v671 = vpack.c.b16 %v649, %v647
        %v672 = vpack.c.b16 %v652, %v650
        %v673 = vpack.c.b16 %v653, %v651
        %v674 = vpack.c.b16 %v656, %v654
        %v675 = vpack.c.b16 %v657, %v655
        %v676 = vpack.c.b16 %v660, %v658
        %v677 = vpack.c.b16 %v661, %v659
        %694 = vmatprep.subr.bf16.mxu0 %v663
        %695 = vmatpush1.bf16.msra.mxu0 %v662
        %696 = vmatprep.subr.bf16.mxu0 %v665
        %697 = vmatpush1.bf16.msra.mxu0 %v664
        %698 = vmatprep.subr.bf16.mxu0 %v667
        %699 = vmatpush1.bf16.msra.mxu0 %v666
        %700 = vmatprep.subr.bf16.mxu0 %v669
        %701 = vmatpush1.bf16.msra.mxu0 %v668
        %702 = vmatprep.subr.bf16.mxu0 %v671
        %703 = vmatpush1.bf16.msra.mxu0 %v670
        %704 = vmatprep.subr.bf16.mxu0 %v673
        %705 = vmatpush1.bf16.msra.mxu0 %v672
        %706 = vmatprep.subr.bf16.mxu0 %v675
        %707 = vmatpush1.bf16.msra.mxu0 %v674
        %708 = vmatprep.subr.bf16.mxu0 %v677
        %709 = vmatpush1.bf16.msra.mxu0 %v676
        %710 = vmatprep.subr.bf16.mxu0 0
        %711 = vmatpush1.bf16.msra.mxu0 0
        %712 = vmatprep.subr.bf16.mxu0 0
        %713 = vmatpush1.bf16.msra.mxu0 0
        %714 = vmatprep.subr.bf16.mxu0 0
        %715 = vmatpush1.bf16.msra.mxu0 0
        %716 = vmatprep.subr.bf16.mxu0 0
        %717 = vmatpush1.bf16.msra.mxu0 0
        %718 = vmatprep.subr.bf16.mxu0 0
        %719 = vmatpush1.bf16.msra.mxu0 0
        %720 = vmatprep.subr.bf16.mxu0 0
        %721 = vmatpush1.bf16.msra.mxu0 0
        %722 = vmatprep.subr.bf16.mxu0 0
        %723 = vmatpush1.bf16.msra.mxu0 0
        %724 = vmatprep.subr.bf16.mxu0 0
        %725 = vmatpush1.bf16.msra.mxu0 0
        %726 = vmatprep.mubr.bf16.mxu0 0
        %727 = vmatmul.mubr.bf16.gmra.mrb[0].mxu0 %v582
        %v728 = vpop.f32.mrb[0].mxu0
        %v729 = vadd.f32 %v511, %v728
        %v730 = vpop.f32.mrb[0].mxu0
        %v731 = vadd.f32 %v515, %v730
        %v732 = vpop.f32.mrb[0].mxu0
        %v733 = vadd.f32 %v511, %v732
        %v734 = vpop.f32.mrb[0].mxu0
        %v735 = vadd.f32 %v515, %v734
        %736 = vmatprep.mubr.bf16.mxu0 0
        %737 = vmatmul.mubr.bf16.gmra.mrb[0].mxu0 %v583
        %v738 = vpop.f32.mrb[0].mxu0
        %v739 = vadd.f32 %v511, %v738
        %v740 = vpop.f32.mrb[0].mxu0
        %v741 = vadd.f32 %v515, %v740
        %v742 = vpop.f32.mrb[0].mxu0
        %v743 = vadd.f32 %v511, %v742
        %v744 = vpop.f32.mrb[0].mxu0
        %v745 = vadd.f32 %v515, %v744
        %746 = vmatprep.mubr.bf16.mxu0 0
        %747 = vmatmul.mubr.bf16.gmra.mrb[0].mxu0 %v584
        %v748 = vpop.f32.mrb[0].mxu0
        %v749 = vadd.f32 %v511, %v748
        %v750 = vpop.f32.mrb[0].mxu0
        %v751 = vadd.f32 %v515, %v750
        %v752 = vpop.f32.mrb[0].mxu0
        %v753 = vadd.f32 %v511, %v752
        %v754 = vpop.f32.mrb[0].mxu0
        %v755 = vadd.f32 %v515, %v754
        %756 = vmatprep.mubr.bf16.mxu0 0
        %757 = vmatmul.mubr.bf16.gmra.mrb[0].mxu0 %v585
        %v758 = vpop.f32.mrb[0].mxu0
        %v759 = vadd.f32 %v511, %v758
        %v760 = vpop.f32.mrb[0].mxu0
        %v761 = vadd.f32 %v515, %v760
        %v762 = vpop.f32.mrb[0].mxu0
        %v763 = vadd.f32 %v511, %v762
        %v764 = vpop.f32.mrb[0].mxu0
        %v765 = vadd.f32 %v515, %v764
        %766 = vmatprep.mubr.bf16.mxu0 0
        %767 = vmatmul.mubr.bf16.gmra.mrb[0].mxu0 %v586
        %v768 = vpop.f32.mrb[0].mxu0
        %v769 = vadd.f32 %v511, %v768
        %v770 = vpop.f32.mrb[0].mxu0
        %v771 = vadd.f32 %v515, %v770
        %v772 = vpop.f32.mrb[0].mxu0
        %v773 = vadd.f32 %v511, %v772
        %v774 = vpop.f32.mrb[0].mxu0
        %v775 = vadd.f32 %v515, %v774
        %776 = vmatprep.mubr.bf16.mxu0 0
        %777 = vmatmul.mubr.bf16.gmra.mrb[0].mxu0 %v587
        %v778 = vpop.f32.mrb[0].mxu0
        %v779 = vadd.f32 %v511, %v778
        %v780 = vpop.f32.mrb[0].mxu0
        %v781 = vadd.f32 %v515, %v780
        %v782 = vpop.f32.mrb[0].mxu0
        %v783 = vadd.f32 %v511, %v782
        %v784 = vpop.f32.mrb[0].mxu0
        %v785 = vadd.f32 %v515, %v784
        %786 = vmatprep.mubr.bf16.mxu0 0
        %787 = vmatmul.mubr.bf16.gmra.mrb[0].mxu0 %v588
        %v788 = vpop.f32.mrb[0].mxu0
        %v789 = vadd.f32 %v511, %v788
        %v790 = vpop.f32.mrb[0].mxu0
        %v791 = vadd.f32 %v515, %v790
        %v792 = vpop.f32.mrb[0].mxu0
        %v793 = vadd.f32 %v511, %v792
        %v794 = vpop.f32.mrb[0].mxu0
        %v795 = vadd.f32 %v515, %v794
        %796 = vmatprep.mubr.bf16.mxu0 0
        %797 = vmatmul.mubr.bf16.gmra.mrb[0].mxu0 %v589
        %v798 = vpop.f32.mrb[0].mxu0
        %v799 = vadd.f32 %v511, %v798
        %v800 = vpop.f32.mrb[0].mxu0
        %v801 = vadd.f32 %v515, %v800
        %v802 = vpop.f32.mrb[0].mxu0
        %v803 = vadd.f32 %v511, %v802
        %v804 = vpop.f32.mrb[0].mxu0
        %v805 = vadd.f32 %v515, %v804
        %806 = vmatprep.mubr.bf16.mxu0 0
        %807 = vmatmul.mubr.bf16.gmra.mrb[0].mxu0 %v590
        %v808 = vpop.f32.mrb[0].mxu0
        %v809 = vadd.f32 %v511, %v808
        %v810 = vpop.f32.mrb[0].mxu0
        %v811 = vadd.f32 %v515, %v810
        %v812 = vpop.f32.mrb[0].mxu0
        %v813 = vadd.f32 %v511, %v812
        %v814 = vpop.f32.mrb[0].mxu0
        %v815 = vadd.f32 %v515, %v814
        %816 = vmatprep.mubr.bf16.mxu0 0
        %817 = vmatmul.mubr.bf16.gmra.mrb[0].mxu0 %v591
        %v818 = vpop.f32.mrb[0].mxu0
        %v819 = vadd.f32 %v511, %v818
        %v820 = vpop.f32.mrb[0].mxu0
        %v821 = vadd.f32 %v515, %v820
        %v822 = vpop.f32.mrb[0].mxu0
        %v823 = vadd.f32 %v511, %v822
        %v824 = vpop.f32.mrb[0].mxu0
        %v825 = vadd.f32 %v515, %v824
        %826 = vmatprep.mubr.bf16.mxu0 0
        %827 = vmatmul.mubr.bf16.gmra.mrb[0].mxu0 %v592
        %v828 = vpop.f32.mrb[0].mxu0
        %v829 = vadd.f32 %v511, %v828
        %v830 = vpop.f32.mrb[0].mxu0
        %v831 = vadd.f32 %v515, %v830
        %v832 = vpop.f32.mrb[0].mxu0
        %v833 = vadd.f32 %v511, %v832
        %v834 = vpop.f32.mrb[0].mxu0
        %v835 = vadd.f32 %v515, %v834
        %836 = vmatprep.mubr.bf16.mxu0 0
        %837 = vmatmul.mubr.bf16.gmra.mrb[0].mxu0 %v593
        %v838 = vpop.f32.mrb[0].mxu0
        %v839 = vadd.f32 %v511, %v838
        %v840 = vpop.f32.mrb[0].mxu0
        %v841 = vadd.f32 %v515, %v840
        %v842 = vpop.f32.mrb[0].mxu0
        %v843 = vadd.f32 %v511, %v842
        %v844 = vpop.f32.mrb[0].mxu0
        %v845 = vadd.f32 %v515, %v844
        %846 = vmatprep.mubr.bf16.mxu0 0
        %847 = vmatmul.mubr.bf16.gmra.mrb[0].mxu0 %v594
        %v848 = vpop.f32.mrb[0].mxu0
        %v849 = vadd.f32 %v511, %v848
        %v850 = vpop.f32.mrb[0].mxu0
        %v851 = vadd.f32 %v515, %v850
        %v852 = vpop.f32.mrb[0].mxu0
        %v853 = vadd.f32 %v511, %v852
        %v854 = vpop.f32.mrb[0].mxu0
        %v855 = vadd.f32 %v515, %v854
        %856 = vmatprep.mubr.bf16.mxu0 0
        %857 = vmatmul.mubr.bf16.gmra.mrb[0].mxu0 %v595
        %v858 = vpop.f32.mrb[0].mxu0
        %v859 = vadd.f32 %v511, %v858
        %v860 = vpop.f32.mrb[0].mxu0
        %v861 = vadd.f32 %v515, %v860
        %v862 = vpop.f32.mrb[0].mxu0
        %v863 = vadd.f32 %v511, %v862
        %v864 = vpop.f32.mrb[0].mxu0
        %v865 = vadd.f32 %v515, %v864
        %866 = vmatprep.mubr.bf16.mxu0 0
        %867 = vmatmul.mubr.bf16.gmra.mrb[0].mxu0 %v596
        %v868 = vpop.f32.mrb[0].mxu0
        %v869 = vadd.f32 %v511, %v868
        %v870 = vpop.f32.mrb[0].mxu0
        %v871 = vadd.f32 %v515, %v870
        %v872 = vpop.f32.mrb[0].mxu0
        %v873 = vadd.f32 %v511, %v872
        %v874 = vpop.f32.mrb[0].mxu0
        %v875 = vadd.f32 %v515, %v874
        %876 = vmatprep.mubr.bf16.mxu0 0
        %877 = vmatmul.mubr.bf16.gmra.mrb[0].mxu0 %v597
        %v878 = vpop.f32.mrb[0].mxu0
        %v879 = vadd.f32 %v511, %v878
        %v880 = vpop.f32.mrb[0].mxu0
        %v881 = vadd.f32 %v515, %v880
        %v882 = vpop.f32.mrb[0].mxu0
        %v883 = vadd.f32 %v511, %v882
        %v884 = vpop.f32.mrb[0].mxu0
        %v885 = vadd.f32 %v515, %v884
        %886 = vdwg.mxu0
        %v887 = vmax.f32 %v729, 0.0
        %v888 = vmax.f32 %v731, 0.0
        %v889 = vmax.f32 %v733, 0.0
        %v890 = vmax.f32 %v735, 0.0
        %v891 = vmax.f32 %v739, 0.0
        %v892 = vmax.f32 %v741, 0.0
        %v893 = vmax.f32 %v743, 0.0
        %v894 = vmax.f32 %v745, 0.0
        %v895 = vmax.f32 %v749, 0.0
        %v896 = vmax.f32 %v751, 0.0
        %v897 = vmax.f32 %v753, 0.0
        %v898 = vmax.f32 %v755, 0.0
        %v899 = vmax.f32 %v759, 0.0
        %v900 = vmax.f32 %v761, 0.0
        %v901 = vmax.f32 %v763, 0.0
        %v902 = vmax.f32 %v765, 0.0
        %v903 = vmax.f32 %v769, 0.0
        %v904 = vmax.f32 %v771, 0.0
        %v905 = vmax.f32 %v773, 0.0
        %v906 = vmax.f32 %v775, 0.0
        %v907 = vmax.f32 %v779, 0.0
        %v908 = vmax.f32 %v781, 0.0
        %v909 = vmax.f32 %v783, 0.0
        %v910 = vmax.f32 %v785, 0.0
        %v911 = vmax.f32 %v789, 0.0
        %v912 = vmax.f32 %v791, 0.0
        %v913 = vmax.f32 %v793, 0.0
        %v914 = vmax.f32 %v795, 0.0
        %v915 = vmax.f32 %v799, 0.0
        %v916 = vmax.f32 %v801, 0.0
        %v917 = vmax.f32 %v803, 0.0
        %v918 = vmax.f32 %v805, 0.0
        %v919 = vmax.f32 %v809, 0.0
        %v920 = vmax.f32 %v811, 0.0
        %v921 = vmax.f32 %v813, 0.0
        %v922 = vmax.f32 %v815, 0.0
        %v923 = vmax.f32 %v819, 0.0
        %v924 = vmax.f32 %v821, 0.0
        %v925 = vmax.f32 %v823, 0.0
        %v926 = vmax.f32 %v825, 0.0
        %v927 = vmax.f32 %v829, 0.0
        %v928 = vmax.f32 %v831, 0.0
        %v929 = vmax.f32 %v833, 0.0
        %v930 = vmax.f32 %v835, 0.0
        %v931 = vmax.f32 %v839, 0.0
        %v932 = vmax.f32 %v841, 0.0
        %v933 = vmax.f32 %v843, 0.0
        %v934 = vmax.f32 %v845, 0.0
        %v935 = vmax.f32 %v849, 0.0
        %v936 = vmax.f32 %v851, 0.0
        %v937 = vmax.f32 %v853, 0.0
        %v938 = vmax.f32 %v855, 0.0
        %v939 = vmax.f32 %v859, 0.0
        %v940 = vmax.f32 %v861, 0.0
        %v941 = vmax.f32 %v863, 0.0
        %v942 = vmax.f32 %v865, 0.0
        %v943 = vmax.f32 %v869, 0.0
        %v944 = vmax.f32 %v871, 0.0
        %v945 = vmax.f32 %v873, 0.0
        %v946 = vmax.f32 %v875, 0.0
        %v947 = vmax.f32 %v879, 0.0
        %v948 = vmax.f32 %v881, 0.0
        %v949 = vmax.f32 %v883, 0.0
        %v950 = vmax.f32 %v885, 0.0
        %v951 = vld [vmem:[%s5] sm:$0xff]
        %v952 = vld [vmem:[%s5 + $0x8] sm:$0xff]
        %v953 = vld [vmem:[%s5 + $0x10] sm:$0xff]
        %v954 = vld [vmem:[%s5 + $0x18] sm:$0xff]
        %v955 = vld [vmem:[%s5 + $0x20] sm:$0xff]
        %v956 = vld [vmem:[%s5 + $0x28] sm:$0xff]
        %v957 = vld [vmem:[%s5 + $0x30] sm:$0xff]
        %v958 = vld [vmem:[%s5 + $0x38] sm:$0xff]
        %v959 = vld [vmem:[%s5 + $0x40] sm:$0xff]
        %v960 = vld [vmem:[%s5 + $0x48] sm:$0xff]
        %v961 = vld [vmem:[%s5 + $0x50] sm:$0xff]
        %v962 = vld [vmem:[%s5 + $0x58] sm:$0xff]
        %v963 = vld [vmem:[%s5 + $0x60] sm:$0xff]
        %v964 = vld [vmem:[%s5 + $0x68] sm:$0xff]
        %v965 = vld [vmem:[%s5 + $0x70] sm:$0xff]
        %v966 = vld [vmem:[%s5 + $0x78] sm:$0xff]
        %v967 = vld [vmem:[%s6] sm:$0x3]
        %v969 = vlaneseq
        %v970 = vshrl.u32 %v969, 7
        %v971 = vsub.s32 0, %v970
        %v972 = vrot.slane %v967, %v971
        %v973 = vlaneseq
        %v974 = vshrl.u32 %v973, 7
        %v975 = vsub.s32 1, %v974
        %v976 = vrot.slane %v967, %v975
        %v1011 = vunpack.c.l.b16 %v458
        %v1012 = vunpack.c.l.b16 %v459
        %v1013 = vunpack.c.l.b16 %v460
        %v1014 = vunpack.c.l.b16 %v461
        %v1015 = vunpack.c.l.b16 %v462
        %v1016 = vunpack.c.l.b16 %v463
        %v1017 = vunpack.c.l.b16 %v464
        %v1018 = vunpack.c.l.b16 %v465
        %v1019 = vunpack.c.l.b16 %v466
        %v1020 = vunpack.c.l.b16 %v467
        %v1021 = vunpack.c.l.b16 %v468
        %v1022 = vunpack.c.l.b16 %v469
        %v1023 = vunpack.c.l.b16 %v470
        %v1024 = vunpack.c.l.b16 %v471
        %v1025 = vunpack.c.l.b16 %v472
        %v1026 = vunpack.c.l.b16 %v473
        %v1027 = vunpack.c.l.b16 %v474
        %v1028 = vunpack.c.l.b16 %v475
        %v1029 = vunpack.c.l.b16 %v476
        %v1030 = vunpack.c.l.b16 %v477
        %v1031 = vunpack.c.l.b16 %v478
        %v1032 = vunpack.c.l.b16 %v479
        %v1033 = vunpack.c.l.b16 %v480
        %v1034 = vunpack.c.l.b16 %v481
        %v1035 = vunpack.c.l.b16 %v482
        %v1036 = vunpack.c.l.b16 %v483
        %v1037 = vunpack.c.l.b16 %v484
        %v1038 = vunpack.c.l.b16 %v485
        %v1039 = vunpack.c.l.b16 %v486
        %v1040 = vunpack.c.l.b16 %v487
        %v1041 = vunpack.c.l.b16 %v488
        %v1042 = vunpack.c.l.b16 %v489
        %v1043 = vpack.c.b16 %v1012, %v1011
        %v1044 = vpack.c.b16 %v1014, %v1013
        %v1045 = vpack.c.b16 %v1016, %v1015
        %v1046 = vpack.c.b16 %v1018, %v1017
        %v1047 = vpack.c.b16 %v1020, %v1019
        %v1048 = vpack.c.b16 %v1022, %v1021
        %v1049 = vpack.c.b16 %v1024, %v1023
        %v1050 = vpack.c.b16 %v1026, %v1025
        %v1051 = vpack.c.b16 %v1028, %v1027
        %v1052 = vpack.c.b16 %v1030, %v1029
        %v1053 = vpack.c.b16 %v1032, %v1031
        %v1054 = vpack.c.b16 %v1034, %v1033
        %v1055 = vpack.c.b16 %v1036, %v1035
        %v1056 = vpack.c.b16 %v1038, %v1037
        %v1057 = vpack.c.b16 %v1040, %v1039
        %v1058 = vpack.c.b16 %v1042, %v1041
        %v1091 = vunpack.c.l.b16 %v951
        %v1092 = vunpack.c.h.b16 %v951
        %v1093 = vunpack.c.l.b16 %v952
        %v1094 = vunpack.c.h.b16 %v952
        %v1095 = vunpack.c.l.b16 %v953
        %v1096 = vunpack.c.h.b16 %v953
        %v1097 = vunpack.c.l.b16 %v954
        %v1098 = vunpack.c.h.b16 %v954
        %v1099 = vunpack.c.l.b16 %v955
        %v1100 = vunpack.c.h.b16 %v955
        %v1101 = vunpack.c.l.b16 %v956
        %v1102 = vunpack.c.h.b16 %v956
        %v1103 = vunpack.c.l.b16 %v957
        %v1104 = vunpack.c.h.b16 %v957
        %v1105 = vunpack.c.l.b16 %v958
        %v1106 = vunpack.c.h.b16 %v958
        %v1107 = vunpack.c.l.b16 %v959
        %v1108 = vunpack.c.h.b16 %v959
        %v1109 = vunpack.c.l.b16 %v960
        %v1110 = vunpack.c.h.b16 %v960
        %v1111 = vunpack.c.l.b16 %v961
        %v1112 = vunpack.c.h.b16 %v961
        %v1113 = vunpack.c.l.b16 %v962
        %v1114 = vunpack.c.h.b16 %v962
        %v1115 = vunpack.c.l.b16 %v963
        %v1116 = vunpack.c.h.b16 %v963
        %v1117 = vunpack.c.l.b16 %v964
        %v1118 = vunpack.c.h.b16 %v964
        %v1119 = vunpack.c.l.b16 %v965
        %v1120 = vunpack.c.h.b16 %v965
        %v1121 = vunpack.c.l.b16 %v966
        %v1122 = vunpack.c.h.b16 %v966
        %v1123 = vpack.c.b16 %v1093, %v1091
        %v1124 = vpack.c.b16 %v1094, %v1092
        %v1125 = vpack.c.b16 %v1097, %v1095
        %v1126 = vpack.c.b16 %v1098, %v1096
        %v1127 = vpack.c.b16 %v1101, %v1099
        %v1128 = vpack.c.b16 %v1102, %v1100
        %v1129 = vpack.c.b16 %v1105, %v1103
        %v1130 = vpack.c.b16 %v1106, %v1104
        %v1131 = vpack.c.b16 %v1109, %v1107
        %v1132 = vpack.c.b16 %v1110, %v1108
        %v1133 = vpack.c.b16 %v1113, %v1111
        %v1134 = vpack.c.b16 %v1114, %v1112
        %v1135 = vpack.c.b16 %v1117, %v1115
        %v1136 = vpack.c.b16 %v1118, %v1116
        %v1137 = vpack.c.b16 %v1121, %v1119
        %v1138 = vpack.c.b16 %v1122, %v1120
        %1155 = vmatprep.subr.bf16.mxu0 %v1124
        %1156 = vmatpush1.bf16.msra.mxu0 %v1123
        %1157 = vmatprep.subr.bf16.mxu0 %v1126
        %1158 = vmatpush1.bf16.msra.mxu0 %v1125
        %1159 = vmatprep.subr.bf16.mxu0 %v1128
        %1160 = vmatpush1.bf16.msra.mxu0 %v1127
        %1161 = vmatprep.subr.bf16.mxu0 %v1130
        %1162 = vmatpush1.bf16.msra.mxu0 %v1129
        %1163 = vmatprep.subr.bf16.mxu0 %v1132
        %1164 = vmatpush1.bf16.msra.mxu0 %v1131
        %1165 = vmatprep.subr.bf16.mxu0 %v1134
        %1166 = vmatpush1.bf16.msra.mxu0 %v1133
        %1167 = vmatprep.subr.bf16.mxu0 %v1136
        %1168 = vmatpush1.bf16.msra.mxu0 %v1135
        %1169 = vmatprep.subr.bf16.mxu0 %v1138
        %1170 = vmatpush1.bf16.msra.mxu0 %v1137
        %1171 = vmatprep.subr.bf16.mxu0 0
        %1172 = vmatpush1.bf16.msra.mxu0 0
        %1173 = vmatprep.subr.bf16.mxu0 0
        %1174 = vmatpush1.bf16.msra.mxu0 0
        %1175 = vmatprep.subr.bf16.mxu0 0
        %1176 = vmatpush1.bf16.msra.mxu0 0
        %1177 = vmatprep.subr.bf16.mxu0 0
        %1178 = vmatpush1.bf16.msra.mxu0 0
        %1179 = vmatprep.subr.bf16.mxu0 0
        %1180 = vmatpush1.bf16.msra.mxu0 0
        %1181 = vmatprep.subr.bf16.mxu0 0
        %1182 = vmatpush1.bf16.msra.mxu0 0
        %1183 = vmatprep.subr.bf16.mxu0 0
        %1184 = vmatpush1.bf16.msra.mxu0 0
        %1185 = vmatprep.subr.bf16.mxu0 0
        %1186 = vmatpush1.bf16.msra.mxu0 0
        %1187 = vmatprep.mubr.bf16.mxu0 0
        %1188 = vmatmul.mubr.bf16.gmra.mrb[0].mxu0 %v1043
        %v1189 = vpop.f32.mrb[0].mxu0
        %v1190 = vadd.f32 %v972, %v1189
        %v1191 = vpop.f32.mrb[0].mxu0
        %v1192 = vadd.f32 %v976, %v1191
        %v1193 = vpop.f32.mrb[0].mxu0
        %v1194 = vadd.f32 %v972, %v1193
        %v1195 = vpop.f32.mrb[0].mxu0
        %v1196 = vadd.f32 %v976, %v1195
        %1197 = vmatprep.mubr.bf16.mxu0 0
        %1198 = vmatmul.mubr.bf16.gmra.mrb[0].mxu0 %v1044
        %v1199 = vpop.f32.mrb[0].mxu0
        %v1200 = vadd.f32 %v972, %v1199
        %v1201 = vpop.f32.mrb[0].mxu0
        %v1202 = vadd.f32 %v976, %v1201
        %v1203 = vpop.f32.mrb[0].mxu0
        %v1204 = vadd.f32 %v972, %v1203
        %v1205 = vpop.f32.mrb[0].mxu0
        %v1206 = vadd.f32 %v976, %v1205
        %1207 = vmatprep.mubr.bf16.mxu0 0
        %1208 = vmatmul.mubr.bf16.gmra.mrb[0].mxu0 %v1045
        %v1209 = vpop.f32.mrb[0].mxu0
        %v1210 = vadd.f32 %v972, %v1209
        %v1211 = vpop.f32.mrb[0].mxu0
        %v1212 = vadd.f32 %v976, %v1211
        %v1213 = vpop.f32.mrb[0].mxu0
        %v1214 = vadd.f32 %v972, %v1213
        %v1215 = vpop.f32.mrb[0].mxu0
        %v1216 = vadd.f32 %v976, %v1215
        %1217 = vmatprep.mubr.bf16.mxu0 0
        %1218 = vmatmul.mubr.bf16.gmra.mrb[0].mxu0 %v1046
        %v1219 = vpop.f32.mrb[0].mxu0
        %v1220 = vadd.f32 %v972, %v1219
        %v1221 = vpop.f32.mrb[0].mxu0
        %v1222 = vadd.f32 %v976, %v1221
        %v1223 = vpop.f32.mrb[0].mxu0
        %v1224 = vadd.f32 %v972, %v1223
        %v1225 = vpop.f32.mrb[0].mxu0
        %v1226 = vadd.f32 %v976, %v1225
        %1227 = vmatprep.mubr.bf16.mxu0 0
        %1228 = vmatmul.mubr.bf16.gmra.mrb[0].mxu0 %v1047
        %v1229 = vpop.f32.mrb[0].mxu0
        %v1230 = vadd.f32 %v972, %v1229
        %v1231 = vpop.f32.mrb[0].mxu0
        %v1232 = vadd.f32 %v976, %v1231
        %v1233 = vpop.f32.mrb[0].mxu0
        %v1234 = vadd.f32 %v972, %v1233
        %v1235 = vpop.f32.mrb[0].mxu0
        %v1236 = vadd.f32 %v976, %v1235
        %1237 = vmatprep.mubr.bf16.mxu0 0
        %1238 = vmatmul.mubr.bf16.gmra.mrb[0].mxu0 %v1048
        %v1239 = vpop.f32.mrb[0].mxu0
        %v1240 = vadd.f32 %v972, %v1239
        %v1241 = vpop.f32.mrb[0].mxu0
        %v1242 = vadd.f32 %v976, %v1241
        %v1243 = vpop.f32.mrb[0].mxu0
        %v1244 = vadd.f32 %v972, %v1243
        %v1245 = vpop.f32.mrb[0].mxu0
        %v1246 = vadd.f32 %v976, %v1245
        %1247 = vmatprep.mubr.bf16.mxu0 0
        %1248 = vmatmul.mubr.bf16.gmra.mrb[0].mxu0 %v1049
        %v1249 = vpop.f32.mrb[0].mxu0
        %v1250 = vadd.f32 %v972, %v1249
        %v1251 = vpop.f32.mrb[0].mxu0
        %v1252 = vadd.f32 %v976, %v1251
        %v1253 = vpop.f32.mrb[0].mxu0
        %v1254 = vadd.f32 %v972, %v1253
        %v1255 = vpop.f32.mrb[0].mxu0
        %v1256 = vadd.f32 %v976, %v1255
        %1257 = vmatprep.mubr.bf16.mxu0 0
        %1258 = vmatmul.mubr.bf16.gmra.mrb[0].mxu0 %v1050
        %v1259 = vpop.f32.mrb[0].mxu0
        %v1260 = vadd.f32 %v972, %v1259
        %v1261 = vpop.f32.mrb[0].mxu0
        %v1262 = vadd.f32 %v976, %v1261
        %v1263 = vpop.f32.mrb[0].mxu0
        %v1264 = vadd.f32 %v972, %v1263
        %v1265 = vpop.f32.mrb[0].mxu0
        %v1266 = vadd.f32 %v976, %v1265
        %1267 = vmatprep.mubr.bf16.mxu0 0
        %1268 = vmatmul.mubr.bf16.gmra.mrb[0].mxu0 %v1051
        %v1269 = vpop.f32.mrb[0].mxu0
        %v1270 = vadd.f32 %v972, %v1269
        %v1271 = vpop.f32.mrb[0].mxu0
        %v1272 = vadd.f32 %v976, %v1271
        %v1273 = vpop.f32.mrb[0].mxu0
        %v1274 = vadd.f32 %v972, %v1273
        %v1275 = vpop.f32.mrb[0].mxu0
        %v1276 = vadd.f32 %v976, %v1275
        %1277 = vmatprep.mubr.bf16.mxu0 0
        %1278 = vmatmul.mubr.bf16.gmra.mrb[0].mxu0 %v1052
        %v1279 = vpop.f32.mrb[0].mxu0
        %v1280 = vadd.f32 %v972, %v1279
        %v1281 = vpop.f32.mrb[0].mxu0
        %v1282 = vadd.f32 %v976, %v1281
        %v1283 = vpop.f32.mrb[0].mxu0
        %v1284 = vadd.f32 %v972, %v1283
        %v1285 = vpop.f32.mrb[0].mxu0
        %v1286 = vadd.f32 %v976, %v1285
        %1287 = vmatprep.mubr.bf16.mxu0 0
        %1288 = vmatmul.mubr.bf16.gmra.mrb[0].mxu0 %v1053
        %v1289 = vpop.f32.mrb[0].mxu0
        %v1290 = vadd.f32 %v972, %v1289
        %v1291 = vpop.f32.mrb[0].mxu0
        %v1292 = vadd.f32 %v976, %v1291
        %v1293 = vpop.f32.mrb[0].mxu0
        %v1294 = vadd.f32 %v972, %v1293
        %v1295 = vpop.f32.mrb[0].mxu0
        %v1296 = vadd.f32 %v976, %v1295
        %1297 = vmatprep.mubr.bf16.mxu0 0
        %1298 = vmatmul.mubr.bf16.gmra.mrb[0].mxu0 %v1054
        %v1299 = vpop.f32.mrb[0].mxu0
        %v1300 = vadd.f32 %v972, %v1299
        %v1301 = vpop.f32.mrb[0].mxu0
        %v1302 = vadd.f32 %v976, %v1301
        %v1303 = vpop.f32.mrb[0].mxu0
        %v1304 = vadd.f32 %v972, %v1303
        %v1305 = vpop.f32.mrb[0].mxu0
        %v1306 = vadd.f32 %v976, %v1305
        %1307 = vmatprep.mubr.bf16.mxu0 0
        %1308 = vmatmul.mubr.bf16.gmra.mrb[0].mxu0 %v1055
        %v1309 = vpop.f32.mrb[0].mxu0
        %v1310 = vadd.f32 %v972, %v1309
        %v1311 = vpop.f32.mrb[0].mxu0
        %v1312 = vadd.f32 %v976, %v1311
        %v1313 = vpop.f32.mrb[0].mxu0
        %v1314 = vadd.f32 %v972, %v1313
        %v1315 = vpop.f32.mrb[0].mxu0
        %v1316 = vadd.f32 %v976, %v1315
        %1317 = vmatprep.mubr.bf16.mxu0 0
        %1318 = vmatmul.mubr.bf16.gmra.mrb[0].mxu0 %v1056
        %v1319 = vpop.f32.mrb[0].mxu0
        %v1320 = vadd.f32 %v972, %v1319
        %v1321 = vpop.f32.mrb[0].mxu0
        %v1322 = vadd.f32 %v976, %v1321
        %v1323 = vpop.f32.mrb[0].mxu0
        %v1324 = vadd.f32 %v972, %v1323
        %v1325 = vpop.f32.mrb[0].mxu0
        %v1326 = vadd.f32 %v976, %v1325
        %1327 = vmatprep.mubr.bf16.mxu0 0
        %1328 = vmatmul.mubr.bf16.gmra.mrb[0].mxu0 %v1057
        %v1329 = vpop.f32.mrb[0].mxu0
        %v1330 = vadd.f32 %v972, %v1329
        %v1331 = vpop.f32.mrb[0].mxu0
        %v1332 = vadd.f32 %v976, %v1331
        %v1333 = vpop.f32.mrb[0].mxu0
        %v1334 = vadd.f32 %v972, %v1333
        %v1335 = vpop.f32.mrb[0].mxu0
        %v1336 = vadd.f32 %v976, %v1335
        %1337 = vmatprep.mubr.bf16.mxu0 0
        %1338 = vmatmul.mubr.bf16.gmra.mrb[0].mxu0 %v1058
        %v1339 = vpop.f32.mrb[0].mxu0
        %v1340 = vadd.f32 %v972, %v1339
        %v1341 = vpop.f32.mrb[0].mxu0
        %v1342 = vadd.f32 %v976, %v1341
        %v1343 = vpop.f32.mrb[0].mxu0
        %v1344 = vadd.f32 %v972, %v1343
        %v1345 = vpop.f32.mrb[0].mxu0
        %v1346 = vadd.f32 %v976, %v1345
        %1347 = vdwg.mxu0
        %v1348 = vmax.f32 %v1190, 0.0
        %v1349 = vmax.f32 %v1192, 0.0
        %v1350 = vmax.f32 %v1194, 0.0
        %v1351 = vmax.f32 %v1196, 0.0
        %v1352 = vmax.f32 %v1200, 0.0
        %v1353 = vmax.f32 %v1202, 0.0
        %v1354 = vmax.f32 %v1204, 0.0
        %v1355 = vmax.f32 %v1206, 0.0
        %v1356 = vmax.f32 %v1210, 0.0
        %v1357 = vmax.f32 %v1212, 0.0
        %v1358 = vmax.f32 %v1214, 0.0
        %v1359 = vmax.f32 %v1216, 0.0
        %v1360 = vmax.f32 %v1220, 0.0
        %v1361 = vmax.f32 %v1222, 0.0
        %v1362 = vmax.f32 %v1224, 0.0
        %v1363 = vmax.f32 %v1226, 0.0
        %v1364 = vmax.f32 %v1230, 0.0
        %v1365 = vmax.f32 %v1232, 0.0
        %v1366 = vmax.f32 %v1234, 0.0
        %v1367 = vmax.f32 %v1236, 0.0
        %v1368 = vmax.f32 %v1240, 0.0
        %v1369 = vmax.f32 %v1242, 0.0
        %v1370 = vmax.f32 %v1244, 0.0
        %v1371 = vmax.f32 %v1246, 0.0
        %v1372 = vmax.f32 %v1250, 0.0
        %v1373 = vmax.f32 %v1252, 0.0
        %v1374 = vmax.f32 %v1254, 0.0
        %v1375 = vmax.f32 %v1256, 0.0
        %v1376 = vmax.f32 %v1260, 0.0
        %v1377 = vmax.f32 %v1262, 0.0
        %v1378 = vmax.f32 %v1264, 0.0
        %v1379 = vmax.f32 %v1266, 0.0
        %v1380 = vmax.f32 %v1270, 0.0
        %v1381 = vmax.f32 %v1272, 0.0
        %v1382 = vmax.f32 %v1274, 0.0
        %v1383 = vmax.f32 %v1276, 0.0
        %v1384 = vmax.f32 %v1280, 0.0
        %v1385 = vmax.f32 %v1282, 0.0
        %v1386 = vmax.f32 %v1284, 0.0
        %v1387 = vmax.f32 %v1286, 0.0
        %v1388 = vmax.f32 %v1290, 0.0
        %v1389 = vmax.f32 %v1292, 0.0
        %v1390 = vmax.f32 %v1294, 0.0
        %v1391 = vmax.f32 %v1296, 0.0
        %v1392 = vmax.f32 %v1300, 0.0
        %v1393 = vmax.f32 %v1302, 0.0
        %v1394 = vmax.f32 %v1304, 0.0
        %v1395 = vmax.f32 %v1306, 0.0
        %v1396 = vmax.f32 %v1310, 0.0
        %v1397 = vmax.f32 %v1312, 0.0
        %v1398 = vmax.f32 %v1314, 0.0
        %v1399 = vmax.f32 %v1316, 0.0
        %v1400 = vmax.f32 %v1320, 0.0
        %v1401 = vmax.f32 %v1322, 0.0
        %v1402 = vmax.f32 %v1324, 0.0
        %v1403 = vmax.f32 %v1326, 0.0
        %v1404 = vmax.f32 %v1330, 0.0
        %v1405 = vmax.f32 %v1332, 0.0
        %v1406 = vmax.f32 %v1334, 0.0
        %v1407 = vmax.f32 %v1336, 0.0
        %v1408 = vmax.f32 %v1340, 0.0
        %v1409 = vmax.f32 %v1342, 0.0
        %v1410 = vmax.f32 %v1344, 0.0
        %v1411 = vmax.f32 %v1346, 0.0
        %v1412 = vpack.c.bf16 %v889, %v887
        %v1413 = vpack.c.bf16 %v890, %v888
        %v1414 = vpack.c.bf16 %v893, %v891
        %v1415 = vpack.c.bf16 %v894, %v892
        %v1416 = vpack.c.bf16 %v897, %v895
        %v1417 = vpack.c.bf16 %v898, %v896
        %v1418 = vpack.c.bf16 %v901, %v899
        %v1419 = vpack.c.bf16 %v902, %v900
        %v1420 = vpack.c.bf16 %v905, %v903
        %v1421 = vpack.c.bf16 %v906, %v904
        %v1422 = vpack.c.bf16 %v909, %v907
        %v1423 = vpack.c.bf16 %v910, %v908
        %v1424 = vpack.c.bf16 %v913, %v911
        %v1425 = vpack.c.bf16 %v914, %v912
        %v1426 = vpack.c.bf16 %v917, %v915
        %v1427 = vpack.c.bf16 %v918, %v916
        %v1428 = vpack.c.bf16 %v921, %v919
        %v1429 = vpack.c.bf16 %v922, %v920
        %v1430 = vpack.c.bf16 %v925, %v923
        %v1431 = vpack.c.bf16 %v926, %v924
        %v1432 = vpack.c.bf16 %v929, %v927
        %v1433 = vpack.c.bf16 %v930, %v928
        %v1434 = vpack.c.bf16 %v933, %v931
        %v1435 = vpack.c.bf16 %v934, %v932
        %v1436 = vpack.c.bf16 %v937, %v935
        %v1437 = vpack.c.bf16 %v938, %v936
        %v1438 = vpack.c.bf16 %v941, %v939
        %v1439 = vpack.c.bf16 %v942, %v940
        %v1440 = vpack.c.bf16 %v945, %v943
        %v1441 = vpack.c.bf16 %v946, %v944
        %v1442 = vpack.c.bf16 %v949, %v947
        %v1443 = vpack.c.bf16 %v950, %v948
        %1444 = vst [vmem:[#allocation2 + $0x20] sm:$0xff] %v1412
        %1445 = vst.msk [vmem:[#allocation2 + $0x28] sm:$0xff] %vm410, %v1413
        %1446 = vst [vmem:[#allocation2 + $0x30] sm:$0xff] %v1414
        %1447 = vst.msk [vmem:[#allocation2 + $0x38] sm:$0xff] %vm410, %v1415
        %1448 = vst [vmem:[#allocation2 + $0x40] sm:$0xff] %v1416
        %1449 = vst.msk [vmem:[#allocation2 + $0x48] sm:$0xff] %vm410, %v1417
        %1450 = vst [vmem:[#allocation2 + $0x50] sm:$0xff] %v1418
        %1451 = vst.msk [vmem:[#allocation2 + $0x58] sm:$0xff] %vm410, %v1419
        %1452 = vst [vmem:[#allocation2 + $0x60] sm:$0xff] %v1420
        %1453 = vst.msk [vmem:[#allocation2 + $0x68] sm:$0xff] %vm410, %v1421
        %1454 = vst [vmem:[#allocation2 + $0x70] sm:$0xff] %v1422
        %1455 = vst.msk [vmem:[#allocation2 + $0x78] sm:$0xff] %vm410, %v1423
        %1456 = vst [vmem:[#allocation2 + $0x80] sm:$0xff] %v1424
        %1457 = vst.msk [vmem:[#allocation2 + $0x88] sm:$0xff] %vm410, %v1425
        %1458 = vst [vmem:[#allocation2 + $0x90] sm:$0xff] %v1426
        %1459 = vst.msk [vmem:[#allocation2 + $0x98] sm:$0xff] %vm410, %v1427
        %1460 = vst [vmem:[#allocation2 + $0xa0] sm:$0xff] %v1428
        %1461 = vst.msk [vmem:[#allocation2 + $0xa8] sm:$0xff] %vm410, %v1429
        %1462 = vst [vmem:[#allocation2 + $0xb0] sm:$0xff] %v1430
        %1463 = vst.msk [vmem:[#allocation2 + $0xb8] sm:$0xff] %vm410, %v1431
        %1464 = vst [vmem:[#allocation2 + $0xc0] sm:$0xff] %v1432
        %1465 = vst.msk [vmem:[#allocation2 + $0xc8] sm:$0xff] %vm410, %v1433
        %1466 = vst [vmem:[#allocation2 + $0xd0] sm:$0xff] %v1434
        %1467 = vst.msk [vmem:[#allocation2 + $0xd8] sm:$0xff] %vm410, %v1435
        %1468 = vst [vmem:[#allocation2 + $0xe0] sm:$0xff] %v1436
        %1469 = vst.msk [vmem:[#allocation2 + $0xe8] sm:$0xff] %vm410, %v1437
        %1470 = vst [vmem:[#allocation2 + $0xf0] sm:$0xff] %v1438
        %1471 = vst.msk [vmem:[#allocation2 + $0xf8] sm:$0xff] %vm410, %v1439
        %1472 = vst [vmem:[#allocation2 + $0x100] sm:$0xff] %v1440
        %1473 = vst.msk [vmem:[#allocation2 + $0x108] sm:$0xff] %vm410, %v1441
        %1474 = vst [vmem:[#allocation2 + $0x110] sm:$0xff] %v1442
        %1475 = vst.msk [vmem:[#allocation2 + $0x118] sm:$0xff] %vm410, %v1443
        %v1476 = vpack.c.bf16 %v1350, %v1348
        %v1477 = vpack.c.bf16 %v1351, %v1349
        %v1478 = vpack.c.bf16 %v1354, %v1352
        %v1479 = vpack.c.bf16 %v1355, %v1353
        %v1480 = vpack.c.bf16 %v1358, %v1356
        %v1481 = vpack.c.bf16 %v1359, %v1357
        %v1482 = vpack.c.bf16 %v1362, %v1360
        %v1483 = vpack.c.bf16 %v1363, %v1361
        %v1484 = vpack.c.bf16 %v1366, %v1364
        %v1485 = vpack.c.bf16 %v1367, %v1365
        %v1486 = vpack.c.bf16 %v1370, %v1368
        %v1487 = vpack.c.bf16 %v1371, %v1369
        %v1488 = vpack.c.bf16 %v1374, %v1372
        %v1489 = vpack.c.bf16 %v1375, %v1373
        %v1490 = vpack.c.bf16 %v1378, %v1376
        %v1491 = vpack.c.bf16 %v1379, %v1377
        %v1492 = vpack.c.bf16 %v1382, %v1380
        %v1493 = vpack.c.bf16 %v1383, %v1381
        %v1494 = vpack.c.bf16 %v1386, %v1384
        %v1495 = vpack.c.bf16 %v1387, %v1385
        %v1496 = vpack.c.bf16 %v1390, %v1388
        %v1497 = vpack.c.bf16 %v1391, %v1389
        %v1498 = vpack.c.bf16 %v1394, %v1392
        %v1499 = vpack.c.bf16 %v1395, %v1393
        %v1500 = vpack.c.bf16 %v1398, %v1396
        %v1501 = vpack.c.bf16 %v1399, %v1397
        %v1502 = vpack.c.bf16 %v1402, %v1400
        %v1503 = vpack.c.bf16 %v1403, %v1401
        %v1504 = vpack.c.bf16 %v1406, %v1404
        %v1505 = vpack.c.bf16 %v1407, %v1405
        %v1506 = vpack.c.bf16 %v1410, %v1408
        %v1507 = vpack.c.bf16 %v1411, %v1409
        %1508 = vst [vmem:[#allocation3 + $0x20] sm:$0xff] %v1476
        %1509 = vst.msk [vmem:[#allocation3 + $0x28] sm:$0xff] %vm410, %v1477
        %1510 = vst [vmem:[#allocation3 + $0x30] sm:$0xff] %v1478
        %1511 = vst.msk [vmem:[#allocation3 + $0x38] sm:$0xff] %vm410, %v1479
        %1512 = vst [vmem:[#allocation3 + $0x40] sm:$0xff] %v1480
        %1513 = vst.msk [vmem:[#allocation3 + $0x48] sm:$0xff] %vm410, %v1481
        %1514 = vst [vmem:[#allocation3 + $0x50] sm:$0xff] %v1482
        %1515 = vst.msk [vmem:[#allocation3 + $0x58] sm:$0xff] %vm410, %v1483
        %1516 = vst [vmem:[#allocation3 + $0x60] sm:$0xff] %v1484
        %1517 = vst.msk [vmem:[#allocation3 + $0x68] sm:$0xff] %vm410, %v1485
        %1518 = vst [vmem:[#allocation3 + $0x70] sm:$0xff] %v1486
        %1519 = vst.msk [vmem:[#allocation3 + $0x78] sm:$0xff] %vm410, %v1487
        %1520 = vst [vmem:[#allocation3 + $0x80] sm:$0xff] %v1488
        %1521 = vst.msk [vmem:[#allocation3 + $0x88] sm:$0xff] %vm410, %v1489
        %1522 = vst [vmem:[#allocation3 + $0x90] sm:$0xff] %v1490
        %1523 = vst.msk [vmem:[#allocation3 + $0x98] sm:$0xff] %vm410, %v1491
        %1524 = vst [vmem:[#allocation3 + $0xa0] sm:$0xff] %v1492
        %1525 = vst.msk [vmem:[#allocation3 + $0xa8] sm:$0xff] %vm410, %v1493
        %1526 = vst [vmem:[#allocation3 + $0xb0] sm:$0xff] %v1494
        %1527 = vst.msk [vmem:[#allocation3 + $0xb8] sm:$0xff] %vm410, %v1495
        %1528 = vst [vmem:[#allocation3 + $0xc0] sm:$0xff] %v1496
        %1529 = vst.msk [vmem:[#allocation3 + $0xc8] sm:$0xff] %vm410, %v1497
        %1530 = vst [vmem:[#allocation3 + $0xd0] sm:$0xff] %v1498
        %1531 = vst.msk [vmem:[#allocation3 + $0xd8] sm:$0xff] %vm410, %v1499
        %1532 = vst [vmem:[#allocation3 + $0xe0] sm:$0xff] %v1500
        %1533 = vst.msk [vmem:[#allocation3 + $0xe8] sm:$0xff] %vm410, %v1501
        %1534 = vst [vmem:[#allocation3 + $0xf0] sm:$0xff] %v1502
        %1535 = vst.msk [vmem:[#allocation3 + $0xf8] sm:$0xff] %vm410, %v1503
        %1536 = vst [vmem:[#allocation3 + $0x100] sm:$0xff] %v1504
        %1537 = vst.msk [vmem:[#allocation3 + $0x108] sm:$0xff] %vm410, %v1505
        %1538 = vst [vmem:[#allocation3 + $0x110] sm:$0xff] %v1506
        %1539 = vst.msk [vmem:[#allocation3 + $0x118] sm:$0xff] %vm410, %v1507
        %v1540 = vld [vmem:[%s0] sm:$0xff]
        %v1541 = vld [vmem:[%s0 + $0x8] sm:$0xff]
        %v1542 = vld [vmem:[%s0 + $0x10] sm:$0xff]
        %v1543 = vld [vmem:[%s0 + $0x18] sm:$0xff]
        %v1544 = vld [vmem:[%s0 + $0x20] sm:$0xff]
        %v1545 = vld [vmem:[%s0 + $0x28] sm:$0xff]
        %v1546 = vld [vmem:[%s0 + $0x30] sm:$0xff]
        %v1547 = vld [vmem:[%s0 + $0x38] sm:$0xff]
        %v1548 = vld [vmem:[%s0 + $0x40] sm:$0xff]
        %v1549 = vld [vmem:[%s0 + $0x48] sm:$0xff]
        %v1550 = vld [vmem:[%s0 + $0x50] sm:$0xff]
        %v1551 = vld [vmem:[%s0 + $0x58] sm:$0xff]
        %v1552 = vld [vmem:[%s0 + $0x60] sm:$0xff]
        %v1553 = vld [vmem:[%s0 + $0x68] sm:$0xff]
        %v1554 = vld [vmem:[%s0 + $0x70] sm:$0xff]
        %v1555 = vld [vmem:[%s0 + $0x78] sm:$0xff]
        %v1556 = vld [vmem:[%s0 + $0x80] sm:$0xff]
        %v1557 = vld [vmem:[%s0 + $0x88] sm:$0xff]
        %v1558 = vld [vmem:[%s0 + $0x90] sm:$0xff]
        %v1559 = vld [vmem:[%s0 + $0x98] sm:$0xff]
        %v1560 = vld [vmem:[%s0 + $0xa0] sm:$0xff]
        %v1561 = vld [vmem:[%s0 + $0xa8] sm:$0xff]
        %v1562 = vld [vmem:[%s0 + $0xb0] sm:$0xff]
        %v1563 = vld [vmem:[%s0 + $0xb8] sm:$0xff]
        %v1564 = vld [vmem:[%s0 + $0xc0] sm:$0xff]
        %v1565 = vld [vmem:[%s0 + $0xc8] sm:$0xff]
        %v1566 = vld [vmem:[%s0 + $0xd0] sm:$0xff]
        %v1567 = vld [vmem:[%s0 + $0xd8] sm:$0xff]
        %v1568 = vld [vmem:[%s0 + $0xe0] sm:$0xff]
        %v1569 = vld [vmem:[%s0 + $0xe8] sm:$0xff]
        %v1570 = vld [vmem:[%s0 + $0xf0] sm:$0xff]
        %v1571 = vld [vmem:[%s0 + $0xf8] sm:$0xff]
        %vm1572 = vcmp.ge.s32.totalorder %v1540, 1
        %vm1573 = vcmp.ge.s32.totalorder %v1541, 1
        %vm1574 = vcmp.ge.s32.totalorder %v1542, 1
        %vm1575 = vcmp.ge.s32.totalorder %v1543, 1
        %vm1576 = vcmp.ge.s32.totalorder %v1544, 1
        %vm1577 = vcmp.ge.s32.totalorder %v1545, 1
        %vm1578 = vcmp.ge.s32.totalorder %v1546, 1
        %vm1579 = vcmp.ge.s32.totalorder %v1547, 1
        %vm1580 = vcmp.ge.s32.totalorder %v1548, 1
        %vm1581 = vcmp.ge.s32.totalorder %v1549, 1
        %vm1582 = vcmp.ge.s32.totalorder %v1550, 1
        %vm1583 = vcmp.ge.s32.totalorder %v1551, 1
        %vm1584 = vcmp.ge.s32.totalorder %v1552, 1
        %vm1585 = vcmp.ge.s32.totalorder %v1553, 1
        %vm1586 = vcmp.ge.s32.totalorder %v1554, 1
        %vm1587 = vcmp.ge.s32.totalorder %v1555, 1
        %vm1588 = vcmp.ge.s32.totalorder %v1556, 1
        %vm1589 = vcmp.ge.s32.totalorder %v1557, 1
        %vm1590 = vcmp.ge.s32.totalorder %v1558, 1
        %vm1591 = vcmp.ge.s32.totalorder %v1559, 1
        %vm1592 = vcmp.ge.s32.totalorder %v1560, 1
        %vm1593 = vcmp.ge.s32.totalorder %v1561, 1
        %vm1594 = vcmp.ge.s32.totalorder %v1562, 1
        %vm1595 = vcmp.ge.s32.totalorder %v1563, 1
        %vm1596 = vcmp.ge.s32.totalorder %v1564, 1
        %vm1597 = vcmp.ge.s32.totalorder %v1565, 1
        %vm1598 = vcmp.ge.s32.totalorder %v1566, 1
        %vm1599 = vcmp.ge.s32.totalorder %v1567, 1
        %vm1600 = vcmp.ge.s32.totalorder %v1568, 1
        %vm1601 = vcmp.ge.s32.totalorder %v1569, 1
        %vm1602 = vcmp.ge.s32.totalorder %v1570, 1
        %vm1603 = vcmp.ge.s32.totalorder %v1571, 1
        %v1604 = vsel %vm1572, 1, 0
        %v1605 = vsel %vm1573, 1, 0
        %v1606 = vsel %vm1574, 1, 0
        %v1607 = vsel %vm1575, 1, 0
        %v1608 = vsel %vm1576, 1, 0
        %v1609 = vsel %vm1577, 1, 0
        %v1610 = vsel %vm1578, 1, 0
        %v1611 = vsel %vm1579, 1, 0
        %v1612 = vsel %vm1580, 1, 0
        %v1613 = vsel %vm1581, 1, 0
        %v1614 = vsel %vm1582, 1, 0
        %v1615 = vsel %vm1583, 1, 0
        %v1616 = vsel %vm1584, 1, 0
        %v1617 = vsel %vm1585, 1, 0
        %v1618 = vsel %vm1586, 1, 0
        %v1619 = vsel %vm1587, 1, 0
        %v1620 = vsel %vm1588, 1, 0
        %v1621 = vsel %vm1589, 1, 0
        %v1622 = vsel %vm1590, 1, 0
        %v1623 = vsel %vm1591, 1, 0
        %v1624 = vsel %vm1592, 1, 0
        %v1625 = vsel %vm1593, 1, 0
        %v1626 = vsel %vm1594, 1, 0
        %v1627 = vsel %vm1595, 1, 0
        %v1628 = vsel %vm1596, 1, 0
        %v1629 = vsel %vm1597, 1, 0
        %v1630 = vsel %vm1598, 1, 0
        %v1631 = vsel %vm1599, 1, 0
        %v1632 = vsel %vm1600, 1, 0
        %v1633 = vsel %vm1601, 1, 0
        %v1634 = vsel %vm1602, 1, 0
        %v1635 = vsel %vm1603, 1, 0
        %1636 = vset.pattern.permute.xlu0 0
        %1637 = vperm.xlu0 %1636, %v1604
        %v1638 = vpop.permute.xlu0 %1637
        %1639 = vset.pattern.permute.xlu0 0
        %1640 = vperm.xlu0 %1639, %v1605
        %v1641 = vpop.permute.xlu0 %1640
        %1642 = vset.pattern.permute.xlu0 0
        %1643 = vperm.xlu0 %1642, %v1606
        %v1644 = vpop.permute.xlu0 %1643
        %1645 = vset.pattern.permute.xlu0 0
        %1646 = vperm.xlu0 %1645, %v1607
        %v1647 = vpop.permute.xlu0 %1646
        %1648 = vset.pattern.permute.xlu0 0
        %1649 = vperm.xlu0 %1648, %v1608
        %v1650 = vpop.permute.xlu0 %1649
        %1651 = vset.pattern.permute.xlu0 0
        %1652 = vperm.xlu0 %1651, %v1609
        %v1653 = vpop.permute.xlu0 %1652
        %1654 = vset.pattern.permute.xlu0 0
        %1655 = vperm.xlu0 %1654, %v1610
        %v1656 = vpop.permute.xlu0 %1655
        %1657 = vset.pattern.permute.xlu0 0
        %1658 = vperm.xlu0 %1657, %v1611
        %v1659 = vpop.permute.xlu0 %1658
        %1660 = vset.pattern.permute.xlu0 0
        %1661 = vperm.xlu0 %1660, %v1612
        %v1662 = vpop.permute.xlu0 %1661
        %1663 = vset.pattern.permute.xlu0 0
        %1664 = vperm.xlu0 %1663, %v1613
        %v1665 = vpop.permute.xlu0 %1664
        %1666 = vset.pattern.permute.xlu0 0
        %1667 = vperm.xlu0 %1666, %v1614
        %v1668 = vpop.permute.xlu0 %1667
        %1669 = vset.pattern.permute.xlu0 0
        %1670 = vperm.xlu0 %1669, %v1615
        %v1671 = vpop.permute.xlu0 %1670
        %1672 = vset.pattern.permute.xlu0 0
        %1673 = vperm.xlu0 %1672, %v1616
        %v1674 = vpop.permute.xlu0 %1673
        %1675 = vset.pattern.permute.xlu0 0
        %1676 = vperm.xlu0 %1675, %v1617
        %v1677 = vpop.permute.xlu0 %1676
        %1678 = vset.pattern.permute.xlu0 0
        %1679 = vperm.xlu0 %1678, %v1618
        %v1680 = vpop.permute.xlu0 %1679
        %1681 = vset.pattern.permute.xlu0 0
        %1682 = vperm.xlu0 %1681, %v1619
        %v1683 = vpop.permute.xlu0 %1682
        %1684 = vset.pattern.permute.xlu0 0
        %1685 = vperm.xlu0 %1684, %v1620
        %v1686 = vpop.permute.xlu0 %1685
        %1687 = vset.pattern.permute.xlu0 0
        %1688 = vperm.xlu0 %1687, %v1621
        %v1689 = vpop.permute.xlu0 %1688
        %1690 = vset.pattern.permute.xlu0 0
        %1691 = vperm.xlu0 %1690, %v1622
        %v1692 = vpop.permute.xlu0 %1691
        %1693 = vset.pattern.permute.xlu0 0
        %1694 = vperm.xlu0 %1693, %v1623
        %v1695 = vpop.permute.xlu0 %1694
        %1696 = vset.pattern.permute.xlu0 0
        %1697 = vperm.xlu0 %1696, %v1624
        %v1698 = vpop.permute.xlu0 %1697
        %1699 = vset.pattern.permute.xlu0 0
        %1700 = vperm.xlu0 %1699, %v1625
        %v1701 = vpop.permute.xlu0 %1700
        %1702 = vset.pattern.permute.xlu0 0
        %1703 = vperm.xlu0 %1702, %v1626
        %v1704 = vpop.permute.xlu0 %1703
        %1705 = vset.pattern.permute.xlu0 0
        %1706 = vperm.xlu0 %1705, %v1627
        %v1707 = vpop.permute.xlu0 %1706
        %1708 = vset.pattern.permute.xlu0 0
        %1709 = vperm.xlu0 %1708, %v1628
        %v1710 = vpop.permute.xlu0 %1709
        %1711 = vset.pattern.permute.xlu0 0
        %1712 = vperm.xlu0 %1711, %v1629
        %v1713 = vpop.permute.xlu0 %1712
        %1714 = vset.pattern.permute.xlu0 0
        %1715 = vperm.xlu0 %1714, %v1630
        %v1716 = vpop.permute.xlu0 %1715
        %1717 = vset.pattern.permute.xlu0 0
        %1718 = vperm.xlu0 %1717, %v1631
        %v1719 = vpop.permute.xlu0 %1718
        %1720 = vset.pattern.permute.xlu0 0
        %1721 = vperm.xlu0 %1720, %v1632
        %v1722 = vpop.permute.xlu0 %1721
        %1723 = vset.pattern.permute.xlu0 0
        %1724 = vperm.xlu0 %1723, %v1633
        %v1725 = vpop.permute.xlu0 %1724
        %1726 = vset.pattern.permute.xlu0 0
        %1727 = vperm.xlu0 %1726, %v1634
        %v1728 = vpop.permute.xlu0 %1727
        %1729 = vset.pattern.permute.xlu0 0
        %1730 = vperm.xlu0 %1729, %v1635
        %v1731 = vpop.permute.xlu0 %1730
        %vm1732 = vcmp.eq.s32.totalorder %v1638, 1
        %vm1733 = vcmp.eq.s32.totalorder %v1641, 1
        %vm1734 = vcmp.eq.s32.totalorder %v1644, 1
        %vm1735 = vcmp.eq.s32.totalorder %v1647, 1
        %vm1736 = vcmp.eq.s32.totalorder %v1650, 1
        %vm1737 = vcmp.eq.s32.totalorder %v1653, 1
        %vm1738 = vcmp.eq.s32.totalorder %v1656, 1
        %vm1739 = vcmp.eq.s32.totalorder %v1659, 1
        %vm1740 = vcmp.eq.s32.totalorder %v1662, 1
        %vm1741 = vcmp.eq.s32.totalorder %v1665, 1
        %vm1742 = vcmp.eq.s32.totalorder %v1668, 1
        %vm1743 = vcmp.eq.s32.totalorder %v1671, 1
        %vm1744 = vcmp.eq.s32.totalorder %v1674, 1
        %vm1745 = vcmp.eq.s32.totalorder %v1677, 1
        %vm1746 = vcmp.eq.s32.totalorder %v1680, 1
        %vm1747 = vcmp.eq.s32.totalorder %v1683, 1
        %vm1748 = vcmp.eq.s32.totalorder %v1686, 1
        %vm1749 = vcmp.eq.s32.totalorder %v1689, 1
        %vm1750 = vcmp.eq.s32.totalorder %v1692, 1
        %vm1751 = vcmp.eq.s32.totalorder %v1695, 1
        %vm1752 = vcmp.eq.s32.totalorder %v1698, 1
        %vm1753 = vcmp.eq.s32.totalorder %v1701, 1
        %vm1754 = vcmp.eq.s32.totalorder %v1704, 1
        %vm1755 = vcmp.eq.s32.totalorder %v1707, 1
        %vm1756 = vcmp.eq.s32.totalorder %v1710, 1
        %vm1757 = vcmp.eq.s32.totalorder %v1713, 1
        %vm1758 = vcmp.eq.s32.totalorder %v1716, 1
        %vm1759 = vcmp.eq.s32.totalorder %v1719, 1
        %vm1760 = vcmp.eq.s32.totalorder %v1722, 1
        %vm1761 = vcmp.eq.s32.totalorder %v1725, 1
        %vm1762 = vcmp.eq.s32.totalorder %v1728, 1
        %vm1763 = vcmp.eq.s32.totalorder %v1731, 1
        %vm1764 = vcmp.le.s32.totalorder %v1540, 14
        %vm1765 = vcmp.le.s32.totalorder %v1541, 14
        %vm1766 = vcmp.le.s32.totalorder %v1542, 14
        %vm1767 = vcmp.le.s32.totalorder %v1543, 14
        %vm1768 = vcmp.le.s32.totalorder %v1544, 14
        %vm1769 = vcmp.le.s32.totalorder %v1545, 14
        %vm1770 = vcmp.le.s32.totalorder %v1546, 14
        %vm1771 = vcmp.le.s32.totalorder %v1547, 14
        %vm1772 = vcmp.le.s32.totalorder %v1548, 14
        %vm1773 = vcmp.le.s32.totalorder %v1549, 14
        %vm1774 = vcmp.le.s32.totalorder %v1550, 14
        %vm1775 = vcmp.le.s32.totalorder %v1551, 14
        %vm1776 = vcmp.le.s32.totalorder %v1552, 14
        %vm1777 = vcmp.le.s32.totalorder %v1553, 14
        %vm1778 = vcmp.le.s32.totalorder %v1554, 14
        %vm1779 = vcmp.le.s32.totalorder %v1555, 14
        %vm1780 = vcmp.le.s32.totalorder %v1556, 14
        %vm1781 = vcmp.le.s32.totalorder %v1557, 14
        %vm1782 = vcmp.le.s32.totalorder %v1558, 14
        %vm1783 = vcmp.le.s32.totalorder %v1559, 14
        %vm1784 = vcmp.le.s32.totalorder %v1560, 14
        %vm1785 = vcmp.le.s32.totalorder %v1561, 14
        %vm1786 = vcmp.le.s32.totalorder %v1562, 14
        %vm1787 = vcmp.le.s32.totalorder %v1563, 14
        %vm1788 = vcmp.le.s32.totalorder %v1564, 14
        %vm1789 = vcmp.le.s32.totalorder %v1565, 14
        %vm1790 = vcmp.le.s32.totalorder %v1566, 14
        %vm1791 = vcmp.le.s32.totalorder %v1567, 14
        %vm1792 = vcmp.le.s32.totalorder %v1568, 14
        %vm1793 = vcmp.le.s32.totalorder %v1569, 14
        %vm1794 = vcmp.le.s32.totalorder %v1570, 14
        %vm1795 = vcmp.le.s32.totalorder %v1571, 14
        %v1796 = vsel %vm1764, 1, 0
        %v1797 = vsel %vm1765, 1, 0
        %v1798 = vsel %vm1766, 1, 0
        %v1799 = vsel %vm1767, 1, 0
        %v1800 = vsel %vm1768, 1, 0
        %v1801 = vsel %vm1769, 1, 0
        %v1802 = vsel %vm1770, 1, 0
        %v1803 = vsel %vm1771, 1, 0
        %v1804 = vsel %vm1772, 1, 0
        %v1805 = vsel %vm1773, 1, 0
        %v1806 = vsel %vm1774, 1, 0
        %v1807 = vsel %vm1775, 1, 0
        %v1808 = vsel %vm1776, 1, 0
        %v1809 = vsel %vm1777, 1, 0
        %v1810 = vsel %vm1778, 1, 0
        %v1811 = vsel %vm1779, 1, 0
        %v1812 = vsel %vm1780, 1, 0
        %v1813 = vsel %vm1781, 1, 0
        %v1814 = vsel %vm1782, 1, 0
        %v1815 = vsel %vm1783, 1, 0
        %v1816 = vsel %vm1784, 1, 0
        %v1817 = vsel %vm1785, 1, 0
        %v1818 = vsel %vm1786, 1, 0
        %v1819 = vsel %vm1787, 1, 0
        %v1820 = vsel %vm1788, 1, 0
        %v1821 = vsel %vm1789, 1, 0
        %v1822 = vsel %vm1790, 1, 0
        %v1823 = vsel %vm1791, 1, 0
        %v1824 = vsel %vm1792, 1, 0
        %v1825 = vsel %vm1793, 1, 0
        %v1826 = vsel %vm1794, 1, 0
        %v1827 = vsel %vm1795, 1, 0
        %1828 = vset.pattern.permute.xlu0 0
        %1829 = vperm.xlu0 %1828, %v1796
        %v1830 = vpop.permute.xlu0 %1829
        %1831 = vset.pattern.permute.xlu0 0
        %1832 = vperm.xlu0 %1831, %v1797
        %v1833 = vpop.permute.xlu0 %1832
        %1834 = vset.pattern.permute.xlu0 0
        %1835 = vperm.xlu0 %1834, %v1798
        %v1836 = vpop.permute.xlu0 %1835
        %1837 = vset.pattern.permute.xlu0 0
        %1838 = vperm.xlu0 %1837, %v1799
        %v1839 = vpop.permute.xlu0 %1838
        %1840 = vset.pattern.permute.xlu0 0
        %1841 = vperm.xlu0 %1840, %v1800
        %v1842 = vpop.permute.xlu0 %1841
        %1843 = vset.pattern.permute.xlu0 0
        %1844 = vperm.xlu0 %1843, %v1801
        %v1845 = vpop.permute.xlu0 %1844
        %1846 = vset.pattern.permute.xlu0 0
        %1847 = vperm.xlu0 %1846, %v1802
        %v1848 = vpop.permute.xlu0 %1847
        %1849 = vset.pattern.permute.xlu0 0
        %1850 = vperm.xlu0 %1849, %v1803
        %v1851 = vpop.permute.xlu0 %1850
        %1852 = vset.pattern.permute.xlu0 0
        %1853 = vperm.xlu0 %1852, %v1804
        %v1854 = vpop.permute.xlu0 %1853
        %1855 = vset.pattern.permute.xlu0 0
        %1856 = vperm.xlu0 %1855, %v1805
        %v1857 = vpop.permute.xlu0 %1856
        %1858 = vset.pattern.permute.xlu0 0
        %1859 = vperm.xlu0 %1858, %v1806
        %v1860 = vpop.permute.xlu0 %1859
        %1861 = vset.pattern.permute.xlu0 0
        %1862 = vperm.xlu0 %1861, %v1807
        %v1863 = vpop.permute.xlu0 %1862
        %1864 = vset.pattern.permute.xlu0 0
        %1865 = vperm.xlu0 %1864, %v1808
        %v1866 = vpop.permute.xlu0 %1865
        %1867 = vset.pattern.permute.xlu0 0
        %1868 = vperm.xlu0 %1867, %v1809
        %v1869 = vpop.permute.xlu0 %1868
        %1870 = vset.pattern.permute.xlu0 0
        %1871 = vperm.xlu0 %1870, %v1810
        %v1872 = vpop.permute.xlu0 %1871
        %1873 = vset.pattern.permute.xlu0 0
        %1874 = vperm.xlu0 %1873, %v1811
        %v1875 = vpop.permute.xlu0 %1874
        %1876 = vset.pattern.permute.xlu0 0
        %1877 = vperm.xlu0 %1876, %v1812
        %v1878 = vpop.permute.xlu0 %1877
        %1879 = vset.pattern.permute.xlu0 0
        %1880 = vperm.xlu0 %1879, %v1813
        %v1881 = vpop.permute.xlu0 %1880
        %1882 = vset.pattern.permute.xlu0 0
        %1883 = vperm.xlu0 %1882, %v1814
        %v1884 = vpop.permute.xlu0 %1883
        %1885 = vset.pattern.permute.xlu0 0
        %1886 = vperm.xlu0 %1885, %v1815
        %v1887 = vpop.permute.xlu0 %1886
        %1888 = vset.pattern.permute.xlu0 0
        %1889 = vperm.xlu0 %1888, %v1816
        %v1890 = vpop.permute.xlu0 %1889
        %1891 = vset.pattern.permute.xlu0 0
        %1892 = vperm.xlu0 %1891, %v1817
        %v1893 = vpop.permute.xlu0 %1892
        %1894 = vset.pattern.permute.xlu0 0
        %1895 = vperm.xlu0 %1894, %v1818
        %v1896 = vpop.permute.xlu0 %1895
        %1897 = vset.pattern.permute.xlu0 0
        %1898 = vperm.xlu0 %1897, %v1819
        %v1899 = vpop.permute.xlu0 %1898
        %1900 = vset.pattern.permute.xlu0 0
        %1901 = vperm.xlu0 %1900, %v1820
        %v1902 = vpop.permute.xlu0 %1901
        %1903 = vset.pattern.permute.xlu0 0
        %1904 = vperm.xlu0 %1903, %v1821
        %v1905 = vpop.permute.xlu0 %1904
        %1906 = vset.pattern.permute.xlu0 0
        %1907 = vperm.xlu0 %1906, %v1822
        %v1908 = vpop.permute.xlu0 %1907
        %1909 = vset.pattern.permute.xlu0 0
        %1910 = vperm.xlu0 %1909, %v1823
        %v1911 = vpop.permute.xlu0 %1910
        %1912 = vset.pattern.permute.xlu0 0
        %1913 = vperm.xlu0 %1912, %v1824
        %v1914 = vpop.permute.xlu0 %1913
        %1915 = vset.pattern.permute.xlu0 0
        %1916 = vperm.xlu0 %1915, %v1825
        %v1917 = vpop.permute.xlu0 %1916
        %1918 = vset.pattern.permute.xlu0 0
        %1919 = vperm.xlu0 %1918, %v1826
        %v1920 = vpop.permute.xlu0 %1919
        %1921 = vset.pattern.permute.xlu0 0
        %1922 = vperm.xlu0 %1921, %v1827
        %v1923 = vpop.permute.xlu0 %1922
        %vm1924 = vcmp.eq.s32.totalorder %v1830, 1
        %vm1925 = vcmp.eq.s32.totalorder %v1833, 1
        %vm1926 = vcmp.eq.s32.totalorder %v1836, 1
        %vm1927 = vcmp.eq.s32.totalorder %v1839, 1
        %vm1928 = vcmp.eq.s32.totalorder %v1842, 1
        %vm1929 = vcmp.eq.s32.totalorder %v1845, 1
        %vm1930 = vcmp.eq.s32.totalorder %v1848, 1
        %vm1931 = vcmp.eq.s32.totalorder %v1851, 1
        %vm1932 = vcmp.eq.s32.totalorder %v1854, 1
        %vm1933 = vcmp.eq.s32.totalorder %v1857, 1
        %vm1934 = vcmp.eq.s32.totalorder %v1860, 1
        %vm1935 = vcmp.eq.s32.totalorder %v1863, 1
        %vm1936 = vcmp.eq.s32.totalorder %v1866, 1
        %vm1937 = vcmp.eq.s32.totalorder %v1869, 1
        %vm1938 = vcmp.eq.s32.totalorder %v1872, 1
        %vm1939 = vcmp.eq.s32.totalorder %v1875, 1
        %vm1940 = vcmp.eq.s32.totalorder %v1878, 1
        %vm1941 = vcmp.eq.s32.totalorder %v1881, 1
        %vm1942 = vcmp.eq.s32.totalorder %v1884, 1
        %vm1943 = vcmp.eq.s32.totalorder %v1887, 1
        %vm1944 = vcmp.eq.s32.totalorder %v1890, 1
        %vm1945 = vcmp.eq.s32.totalorder %v1893, 1
        %vm1946 = vcmp.eq.s32.totalorder %v1896, 1
        %vm1947 = vcmp.eq.s32.totalorder %v1899, 1
        %vm1948 = vcmp.eq.s32.totalorder %v1902, 1
        %vm1949 = vcmp.eq.s32.totalorder %v1905, 1
        %vm1950 = vcmp.eq.s32.totalorder %v1908, 1
        %vm1951 = vcmp.eq.s32.totalorder %v1911, 1
        %vm1952 = vcmp.eq.s32.totalorder %v1914, 1
        %vm1953 = vcmp.eq.s32.totalorder %v1917, 1
        %vm1954 = vcmp.eq.s32.totalorder %v1920, 1
        %vm1955 = vcmp.eq.s32.totalorder %v1923, 1
        %v1956 = vld [vmem:[%s9] sm:$0x1]
        %v1958 = vlaneseq
        %v1959 = vshrl.u32 %v1958, 7
        %v1960 = vsub.s32 0, %v1959
        %v1961 = vrot.slane %v1956, %v1960
        %v1963 = vld [vmem:[#allocation2] sm:$0x80]
        %v1964 = vld [vmem:[#allocation2 + $0x8] sm:$0x80]
        %v1965 = vld [vmem:[#allocation2 + $0x10] sm:$0xff]
        %v1966 = vld [vmem:[#allocation2 + $0x18] sm:$0xff]
        %v1967 = vld [vmem:[#allocation2 + $0x20] sm:$0xff]
        %v1968 = vld [vmem:[#allocation2 + $0x28] sm:$0xff]
        %v1969 = vld [vmem:[#allocation2 + $0x30] sm:$0xff]
        %v1970 = vld [vmem:[#allocation2 + $0x38] sm:$0xff]
        %v1971 = vld [vmem:[#allocation2 + $0x40] sm:$0xff]
        %v1972 = vld [vmem:[#allocation2 + $0x48] sm:$0xff]
        %v1973 = vld [vmem:[#allocation2 + $0x50] sm:$0xff]
        %v1974 = vld [vmem:[#allocation2 + $0x58] sm:$0xff]
        %v1975 = vld [vmem:[#allocation2 + $0x60] sm:$0xff]
        %v1976 = vld [vmem:[#allocation2 + $0x68] sm:$0xff]
        %v1977 = vld [vmem:[#allocation2 + $0x70] sm:$0xff]
        %v1978 = vld [vmem:[#allocation2 + $0x78] sm:$0xff]
        %v1979 = vld [vmem:[#allocation2 + $0x80] sm:$0xff]
        %v1980 = vld [vmem:[#allocation2 + $0x88] sm:$0xff]
        %v1981 = vld [vmem:[#allocation2 + $0x90] sm:$0xff]
        %v1982 = vld [vmem:[#allocation2 + $0x98] sm:$0xff]
        %v1983 = vld [vmem:[#allocation2 + $0xa0] sm:$0xff]
        %v1984 = vld [vmem:[#allocation2 + $0xa8] sm:$0xff]
        %v1985 = vld [vmem:[#allocation2 + $0xb0] sm:$0xff]
        %v1986 = vld [vmem:[#allocation2 + $0xb8] sm:$0xff]
        %v1987 = vld [vmem:[#allocation2 + $0xc0] sm:$0xff]
        %v1988 = vld [vmem:[#allocation2 + $0xc8] sm:$0xff]
        %v1989 = vld [vmem:[#allocation2 + $0xd0] sm:$0xff]
        %v1990 = vld [vmem:[#allocation2 + $0xd8] sm:$0xff]
        %v1991 = vld [vmem:[#allocation2 + $0xe0] sm:$0xff]
        %v1992 = vld [vmem:[#allocation2 + $0xe8] sm:$0xff]
        %v1993 = vld [vmem:[#allocation2 + $0xf0] sm:$0xff]
        %v1994 = vld [vmem:[#allocation2 + $0xf8] sm:$0xff]
        %v1995 = vld [vmem:[#allocation2 + $0x100] sm:$0xff]
        %v1996 = vld [vmem:[#allocation2 + $0x108] sm:$0xff]
        %v1997 = vld [vmem:[#allocation3] sm:$0x80]
        %v1998 = vld [vmem:[#allocation3 + $0x8] sm:$0x80]
        %v1999 = vld [vmem:[#allocation3 + $0x10] sm:$0xff]
        %v2000 = vld [vmem:[#allocation3 + $0x18] sm:$0xff]
        %v2001 = vld [vmem:[#allocation3 + $0x20] sm:$0xff]
        %v2002 = vld [vmem:[#allocation3 + $0x28] sm:$0xff]
        %v2003 = vld [vmem:[#allocation3 + $0x30] sm:$0xff]
        %v2004 = vld [vmem:[#allocation3 + $0x38] sm:$0xff]
        %v2005 = vld [vmem:[#allocation3 + $0x40] sm:$0xff]
        %v2006 = vld [vmem:[#allocation3 + $0x48] sm:$0xff]
        %v2007 = vld [vmem:[#allocation3 + $0x50] sm:$0xff]
        %v2008 = vld [vmem:[#allocation3 + $0x58] sm:$0xff]
        %v2009 = vld [vmem:[#allocation3 + $0x60] sm:$0xff]
        %v2010 = vld [vmem:[#allocation3 + $0x68] sm:$0xff]
        %v2011 = vld [vmem:[#allocation3 + $0x70] sm:$0xff]
        %v2012 = vld [vmem:[#allocation3 + $0x78] sm:$0xff]
        %v2013 = vld [vmem:[#allocation3 + $0x80] sm:$0xff]
        %v2014 = vld [vmem:[#allocation3 + $0x88] sm:$0xff]
        %v2015 = vld [vmem:[#allocation3 + $0x90] sm:$0xff]
        %v2016 = vld [vmem:[#allocation3 + $0x98] sm:$0xff]
        %v2017 = vld [vmem:[#allocation3 + $0xa0] sm:$0xff]
        %v2018 = vld [vmem:[#allocation3 + $0xa8] sm:$0xff]
        %v2019 = vld [vmem:[#allocation3 + $0xb0] sm:$0xff]
        %v2020 = vld [vmem:[#allocation3 + $0xb8] sm:$0xff]
        %v2021 = vld [vmem:[#allocation3 + $0xc0] sm:$0xff]
        %v2022 = vld [vmem:[#allocation3 + $0xc8] sm:$0xff]
        %v2023 = vld [vmem:[#allocation3 + $0xd0] sm:$0xff]
        %v2024 = vld [vmem:[#allocation3 + $0xd8] sm:$0xff]
        %v2025 = vld [vmem:[#allocation3 + $0xe0] sm:$0xff]
        %v2026 = vld [vmem:[#allocation3 + $0xe8] sm:$0xff]
        %v2027 = vld [vmem:[#allocation3 + $0xf0] sm:$0xff]
        %v2028 = vld [vmem:[#allocation3 + $0xf8] sm:$0xff]
        %v2029 = vld [vmem:[#allocation3 + $0x100] sm:$0xff]
        %v2030 = vld [vmem:[#allocation3 + $0x108] sm:$0xff]
        %v2031 = vld [vmem:[#allocation4] sm:$0xf]
        %v2032 = vld [vmem:[#allocation4 + $0x4] sm:$0xf]
        %v2033 = vld [vmem:[#allocation4 + $0x8] sm:$0xf]
        %v2034 = vld [vmem:[#allocation4 + $0xc] sm:$0xf]
        %v2035 = vld [vmem:[#allocation4 + $0x10] sm:$0xf]
        %v2036 = vld [vmem:[#allocation4 + $0x14] sm:$0xf]
        %v2037 = vld [vmem:[#allocation4 + $0x18] sm:$0xf]
        %v2038 = vld [vmem:[#allocation4 + $0x1c] sm:$0xf]
        %v2039 = vld [vmem:[#allocation4 + $0x20] sm:$0xf]
        %v2040 = vld [vmem:[#allocation4 + $0x24] sm:$0xf]
        %v2041 = vld [vmem:[#allocation4 + $0x28] sm:$0xf]
        %v2042 = vld [vmem:[#allocation4 + $0x2c] sm:$0xf]
        %v2043 = vld [vmem:[#allocation4 + $0x30] sm:$0xf]
        %v2044 = vld [vmem:[#allocation4 + $0x34] sm:$0xf]
        %v2045 = vld [vmem:[#allocation4 + $0x38] sm:$0xf]
        %v2046 = vld [vmem:[#allocation4 + $0x3c] sm:$0xf]
        %v2047 = vld [vmem:[#allocation4 + $0x40] sm:$0xf]
        %v2048 = vld [vmem:[#allocation4 + $0x44] sm:$0xf]
        %v2049 = vld [vmem:[#allocation4 + $0x48] sm:$0xf]
        %v2050 = vld [vmem:[#allocation4 + $0x4c] sm:$0xf]
        %v2051 = vld [vmem:[#allocation4 + $0x50] sm:$0xf]
        %v2052 = vld [vmem:[#allocation4 + $0x54] sm:$0xf]
        %v2053 = vld [vmem:[#allocation4 + $0x58] sm:$0xf]
        %v2054 = vld [vmem:[#allocation4 + $0x5c] sm:$0xf]
        %v2055 = vld [vmem:[#allocation7] sm:$0xf]
        %v2056 = vld [vmem:[#allocation7 + $0x4] sm:$0xf]
        %v2057 = vld [vmem:[#allocation7 + $0x8] sm:$0xf]
        %v2058 = vld [vmem:[#allocation7 + $0xc] sm:$0xf]
        %v2059 = vld [vmem:[#allocation7 + $0x10] sm:$0xf]
        %v2060 = vld [vmem:[#allocation7 + $0x14] sm:$0xf]
        %v2061 = vld [vmem:[#allocation7 + $0x18] sm:$0xf]
        %v2062 = vld [vmem:[#allocation7 + $0x1c] sm:$0xf]
        %v2063 = vld [vmem:[#allocation7 + $0x20] sm:$0xf]
        %v2064 = vld [vmem:[#allocation7 + $0x24] sm:$0xf]
        %v2065 = vld [vmem:[#allocation7 + $0x28] sm:$0xf]
        %v2066 = vld [vmem:[#allocation7 + $0x2c] sm:$0xf]
        %v2067 = vld [vmem:[#allocation7 + $0x30] sm:$0xf]
        %v2068 = vld [vmem:[#allocation7 + $0x34] sm:$0xf]
        %v2069 = vld [vmem:[#allocation7 + $0x38] sm:$0xf]
        %v2070 = vld [vmem:[#allocation7 + $0x3c] sm:$0xf]
        %v2071 = vld [vmem:[#allocation7 + $0x40] sm:$0xf]
        %v2072 = vld [vmem:[#allocation7 + $0x44] sm:$0xf]
        %v2073 = vld [vmem:[#allocation7 + $0x48] sm:$0xf]
        %v2074 = vld [vmem:[#allocation7 + $0x4c] sm:$0xf]
        %v2075 = vld [vmem:[#allocation7 + $0x50] sm:$0xf]
        %v2076 = vld [vmem:[#allocation7 + $0x54] sm:$0xf]
        %v2077 = vld [vmem:[#allocation7 + $0x58] sm:$0xf]
        %v2078 = vld [vmem:[#allocation7 + $0x5c] sm:$0xf]
        %vm2079 = vsmask.f32 256
        %v2081 = vshrl.u32 %v1997, 16
        %v2083 = vrot.slane %v2081, 7
        %v2085 = vshrl.u32 %v1999, 16
        %v2087 = vrot.slane %v2085, 7
        %v2088 = vshll.u32 %v1999, 16
        %v2090 = vor.u32 %v2087, %v2088
        %v2091 = vsel %vm2079, %v2083, %v2090
        %v2093 = vshrl.u32 %v1998, 16
        %v2095 = vrot.slane %v2093, 7
        %v2097 = vshrl.u32 %v2000, 16
        %v2099 = vrot.slane %v2097, 7
        %v2100 = vshll.u32 %v2000, 16
        %v2102 = vor.u32 %v2099, %v2100
        %v2103 = vsel %vm2079, %v2095, %v2102
        %v2105 = vshrl.u32 %v2001, 16
        %v2107 = vrot.slane %v2105, 7
        %v2108 = vshll.u32 %v2001, 16
        %v2110 = vor.u32 %v2107, %v2108
        %v2111 = vsel %vm2079, %v2087, %v2110
        %v2113 = vshrl.u32 %v2002, 16
        %v2115 = vrot.slane %v2113, 7
        %v2116 = vshll.u32 %v2002, 16
        %v2118 = vor.u32 %v2115, %v2116
        %v2119 = vsel %vm2079, %v2099, %v2118
        %v2121 = vshrl.u32 %v2003, 16
        %v2123 = vrot.slane %v2121, 7
        %v2124 = vshll.u32 %v2003, 16
        %v2126 = vor.u32 %v2123, %v2124
        %v2127 = vsel %vm2079, %v2107, %v2126
        %v2129 = vshrl.u32 %v2004, 16
        %v2131 = vrot.slane %v2129, 7
        %v2132 = vshll.u32 %v2004, 16
        %v2134 = vor.u32 %v2131, %v2132
        %v2135 = vsel %vm2079, %v2115, %v2134
        %v2137 = vshrl.u32 %v2005, 16
        %v2139 = vrot.slane %v2137, 7
        %v2140 = vshll.u32 %v2005, 16
        %v2142 = vor.u32 %v2139, %v2140
        %v2143 = vsel %vm2079, %v2123, %v2142
        %v2145 = vshrl.u32 %v2006, 16
        %v2147 = vrot.slane %v2145, 7
        %v2148 = vshll.u32 %v2006, 16
        %v2150 = vor.u32 %v2147, %v2148
        %v2151 = vsel %vm2079, %v2131, %v2150
        %v2153 = vshrl.u32 %v2007, 16
        %v2155 = vrot.slane %v2153, 7
        %v2156 = vshll.u32 %v2007, 16
        %v2158 = vor.u32 %v2155, %v2156
        %v2159 = vsel %vm2079, %v2139, %v2158
        %v2161 = vshrl.u32 %v2008, 16
        %v2163 = vrot.slane %v2161, 7
        %v2164 = vshll.u32 %v2008, 16
        %v2166 = vor.u32 %v2163, %v2164
        %v2167 = vsel %vm2079, %v2147, %v2166
        %v2169 = vshrl.u32 %v2009, 16
        %v2171 = vrot.slane %v2169, 7
        %v2172 = vshll.u32 %v2009, 16
        %v2174 = vor.u32 %v2171, %v2172
        %v2175 = vsel %vm2079, %v2155, %v2174
        %v2177 = vshrl.u32 %v2010, 16
        %v2179 = vrot.slane %v2177, 7
        %v2180 = vshll.u32 %v2010, 16
        %v2182 = vor.u32 %v2179, %v2180
        %v2183 = vsel %vm2079, %v2163, %v2182
        %v2185 = vshrl.u32 %v2011, 16
        %v2187 = vrot.slane %v2185, 7
        %v2188 = vshll.u32 %v2011, 16
        %v2190 = vor.u32 %v2187, %v2188
        %v2191 = vsel %vm2079, %v2171, %v2190
        %v2193 = vshrl.u32 %v2012, 16
        %v2195 = vrot.slane %v2193, 7
        %v2196 = vshll.u32 %v2012, 16
        %v2198 = vor.u32 %v2195, %v2196
        %v2199 = vsel %vm2079, %v2179, %v2198
        %v2201 = vshrl.u32 %v2013, 16
        %v2203 = vrot.slane %v2201, 7
        %v2204 = vshll.u32 %v2013, 16
        %v2206 = vor.u32 %v2203, %v2204
        %v2207 = vsel %vm2079, %v2187, %v2206
        %v2209 = vshrl.u32 %v2014, 16
        %v2211 = vrot.slane %v2209, 7
        %v2212 = vshll.u32 %v2014, 16
        %v2214 = vor.u32 %v2211, %v2212
        %v2215 = vsel %vm2079, %v2195, %v2214
        %v2217 = vshrl.u32 %v2015, 16
        %v2219 = vrot.slane %v2217, 7
        %v2220 = vshll.u32 %v2015, 16
        %v2222 = vor.u32 %v2219, %v2220
        %v2223 = vsel %vm2079, %v2203, %v2222
        %v2225 = vshrl.u32 %v2016, 16
        %v2227 = vrot.slane %v2225, 7
        %v2228 = vshll.u32 %v2016, 16
        %v2230 = vor.u32 %v2227, %v2228
        %v2231 = vsel %vm2079, %v2211, %v2230
        %v2233 = vshrl.u32 %v2017, 16
        %v2235 = vrot.slane %v2233, 7
        %v2236 = vshll.u32 %v2017, 16
        %v2238 = vor.u32 %v2235, %v2236
        %v2239 = vsel %vm2079, %v2219, %v2238
        %v2241 = vshrl.u32 %v2018, 16
        %v2243 = vrot.slane %v2241, 7
        %v2244 = vshll.u32 %v2018, 16
        %v2246 = vor.u32 %v2243, %v2244
        %v2247 = vsel %vm2079, %v2227, %v2246
        %v2249 = vshrl.u32 %v2019, 16
        %v2251 = vrot.slane %v2249, 7
        %v2252 = vshll.u32 %v2019, 16
        %v2254 = vor.u32 %v2251, %v2252
        %v2255 = vsel %vm2079, %v2235, %v2254
        %v2257 = vshrl.u32 %v2020, 16
        %v2259 = vrot.slane %v2257, 7
        %v2260 = vshll.u32 %v2020, 16
        %v2262 = vor.u32 %v2259, %v2260
        %v2263 = vsel %vm2079, %v2243, %v2262
        %v2265 = vshrl.u32 %v2021, 16
        %v2267 = vrot.slane %v2265, 7
        %v2268 = vshll.u32 %v2021, 16
        %v2270 = vor.u32 %v2267, %v2268
        %v2271 = vsel %vm2079, %v2251, %v2270
        %v2273 = vshrl.u32 %v2022, 16
        %v2275 = vrot.slane %v2273, 7
        %v2276 = vshll.u32 %v2022, 16
        %v2278 = vor.u32 %v2275, %v2276
        %v2279 = vsel %vm2079, %v2259, %v2278
        %v2281 = vshrl.u32 %v2023, 16
        %v2283 = vrot.slane %v2281, 7
        %v2284 = vshll.u32 %v2023, 16
        %v2286 = vor.u32 %v2283, %v2284
        %v2287 = vsel %vm2079, %v2267, %v2286
        %v2289 = vshrl.u32 %v2024, 16
        %v2291 = vrot.slane %v2289, 7
        %v2292 = vshll.u32 %v2024, 16
        %v2294 = vor.u32 %v2291, %v2292
        %v2295 = vsel %vm2079, %v2275, %v2294
        %v2297 = vshrl.u32 %v2025, 16
        %v2299 = vrot.slane %v2297, 7
        %v2300 = vshll.u32 %v2025, 16
        %v2302 = vor.u32 %v2299, %v2300
        %v2303 = vsel %vm2079, %v2283, %v2302
        %v2305 = vshrl.u32 %v2026, 16
        %v2307 = vrot.slane %v2305, 7
        %v2308 = vshll.u32 %v2026, 16
        %v2310 = vor.u32 %v2307, %v2308
        %v2311 = vsel %vm2079, %v2291, %v2310
        %v2313 = vshrl.u32 %v2027, 16
        %v2315 = vrot.slane %v2313, 7
        %v2316 = vshll.u32 %v2027, 16
        %v2318 = vor.u32 %v2315, %v2316
        %v2319 = vsel %vm2079, %v2299, %v2318
        %v2321 = vshrl.u32 %v2028, 16
        %v2323 = vrot.slane %v2321, 7
        %v2324 = vshll.u32 %v2028, 16
        %v2326 = vor.u32 %v2323, %v2324
        %v2327 = vsel %vm2079, %v2307, %v2326
        %v2329 = vshrl.u32 %v2029, 16
        %v2331 = vrot.slane %v2329, 7
        %v2332 = vshll.u32 %v2029, 16
        %v2334 = vor.u32 %v2331, %v2332
        %v2335 = vsel %vm2079, %v2315, %v2334
        %v2337 = vshrl.u32 %v2030, 16
        %v2339 = vrot.slane %v2337, 7
        %v2340 = vshll.u32 %v2030, 16
        %v2342 = vor.u32 %v2339, %v2340
        %v2343 = vsel %vm2079, %v2323, %v2342
        %v2384 = vunpack.c.l.b16 %v2055
        %v2385 = vunpack.c.l.b16 %v2056
        %v2386 = vunpack.c.l.b16 %v2057
        %v2387 = vunpack.c.l.b16 %v2058
        %v2388 = vunpack.c.l.b16 %v2059
        %v2389 = vunpack.c.l.b16 %v2060
        %v2390 = vunpack.c.l.b16 %v2061
        %v2391 = vunpack.c.l.b16 %v2062
        %v2392 = vunpack.c.l.b16 %v2063
        %v2393 = vunpack.c.l.b16 %v2064
        %v2394 = vunpack.c.l.b16 %v2065
        %v2395 = vunpack.c.l.b16 %v2066
        %v2396 = vunpack.c.l.b16 %v2067
        %v2397 = vunpack.c.l.b16 %v2068
        %v2398 = vunpack.c.l.b16 %v2069
        %v2399 = vunpack.c.l.b16 %v2070
        %v2400 = vunpack.c.l.b16 %v2071
        %v2401 = vunpack.c.l.b16 %v2072
        %v2402 = vunpack.c.l.b16 %v2073
        %v2403 = vunpack.c.l.b16 %v2074
        %v2404 = vunpack.c.l.b16 %v2075
        %v2405 = vunpack.c.l.b16 %v2076
        %v2406 = vunpack.c.l.b16 %v2077
        %v2407 = vunpack.c.l.b16 %v2078
        %v2408 = vpack.c.b16 %v2385, %v2384
        %v2409 = vpack.c.b16 %v2387, %v2386
        %v2410 = vpack.c.b16 %v2389, %v2388
        %v2411 = vpack.c.b16 %v2391, %v2390
        %v2412 = vpack.c.b16 %v2393, %v2392
        %v2413 = vpack.c.b16 %v2395, %v2394
        %v2414 = vpack.c.b16 %v2397, %v2396
        %v2415 = vpack.c.b16 %v2399, %v2398
        %v2416 = vpack.c.b16 %v2401, %v2400
        %v2417 = vpack.c.b16 %v2403, %v2402
        %v2418 = vpack.c.b16 %v2405, %v2404
        %v2419 = vpack.c.b16 %v2407, %v2406
        %v2433 = vsel %vm410, %v2103, 0
        %v2436 = vsel %vm410, %v2119, 0
        %v2439 = vsel %vm410, %v2135, 0
        %v2442 = vsel %vm410, %v2151, 0
        %v2445 = vsel %vm410, %v2167, 0
        %v2448 = vsel %vm410, %v2183, 0
        %v2451 = vsel %vm410, %v2199, 0
        %v2454 = vsel %vm410, %v2215, 0
        %v2457 = vsel %vm410, %v2231, 0
        %v2460 = vsel %vm410, %v2247, 0
        %v2463 = vsel %vm410, %v2263, 0
        %v2466 = vsel %vm410, %v2279, 0
        %v2469 = vsel %vm410, %v2295, 0
        %v2472 = vsel %vm410, %v2311, 0
        %v2475 = vsel %vm410, %v2327, 0
        %v2478 = vsel %vm410, %v2343, 0
        %2480 = vmatprep.subr.bf16.mxu0 0
        %2481 = vmatpush1.bf16.msra.mxu0 %v2408
        %2482 = vmatprep.subr.bf16.mxu0 0
        %2483 = vmatpush1.bf16.msra.mxu0 %v2409
        %2484 = vmatprep.subr.bf16.mxu0 0
        %2485 = vmatpush1.bf16.msra.mxu0 %v2410
        %2486 = vmatprep.subr.bf16.mxu0 0
        %2487 = vmatpush1.bf16.msra.mxu0 %v2411
        %2488 = vmatprep.subr.bf16.mxu0 0
        %2489 = vmatpush1.bf16.msra.mxu0 %v2412
        %2490 = vmatprep.subr.bf16.mxu0 0
        %2491 = vmatpush1.bf16.msra.mxu0 %v2413
        %2492 = vmatprep.subr.bf16.mxu0 0
        %2493 = vmatpush1.bf16.msra.mxu0 %v2414
        %2494 = vmatprep.subr.bf16.mxu0 0
        %2495 = vmatpush1.bf16.msra.mxu0 %v2415
        %2496 = vmatprep.subr.bf16.mxu0 0
        %2497 = vmatpush1.bf16.msra.mxu0 %v2416
        %2498 = vmatprep.subr.bf16.mxu0 0
        %2499 = vmatpush1.bf16.msra.mxu0 %v2417
        %2500 = vmatprep.subr.bf16.mxu0 0
        %2501 = vmatpush1.bf16.msra.mxu0 %v2418
        %2502 = vmatprep.subr.bf16.mxu0 0
        %2503 = vmatpush1.bf16.msra.mxu0 %v2419
        %2504 = vmatprep.subr.bf16.mxu0 0
        %2505 = vmatpush1.bf16.msra.mxu0 0
        %2506 = vmatprep.subr.bf16.mxu0 0
        %2507 = vmatpush1.bf16.msra.mxu0 0
        %2508 = vmatprep.subr.bf16.mxu0 0
        %2509 = vmatpush1.bf16.msra.mxu0 0
        %2510 = vmatprep.subr.bf16.mxu0 0
        %2511 = vmatpush1.bf16.msra.mxu0 0
        %2512 = vmatprep.mubr.bf16.mxu0 %v2433
        %2513 = vmatmul.mubr.bf16.gmra.mrb[0].mxu0 %v2091
        %v2514 = vpop.f32.mrb[0].mxu0
        %v2515 = vadd.f32 0.0, %v2514
        %v2516 = vpop.f32.mrb[0].mxu0
        %v2517 = vpop.f32.mrb[0].mxu0
        %v2518 = vadd.f32 0.0, %v2517
        %v2519 = vpop.f32.mrb[0].mxu0
        %2520 = vmatprep.mubr.bf16.mxu0 %v2436
        %2521 = vmatmul.mubr.bf16.gmra.mrb[0].mxu0 %v2111
        %v2522 = vpop.f32.mrb[0].mxu0
        %v2523 = vadd.f32 0.0, %v2522
        %v2524 = vpop.f32.mrb[0].mxu0
        %v2525 = vpop.f32.mrb[0].mxu0
        %v2526 = vadd.f32 0.0, %v2525
        %v2527 = vpop.f32.mrb[0].mxu0
        %2528 = vmatprep.mubr.bf16.mxu0 %v2439
        %2529 = vmatmul.mubr.bf16.gmra.mrb[0].mxu0 %v2127
        %v2530 = vpop.f32.mrb[0].mxu0
        %v2531 = vadd.f32 0.0, %v2530
        %v2532 = vpop.f32.mrb[0].mxu0
        %v2533 = vpop.f32.mrb[0].mxu0
        %v2534 = vadd.f32 0.0, %v2533
        %v2535 = vpop.f32.mrb[0].mxu0
        %2536 = vmatprep.mubr.bf16.mxu0 %v2442
        %2537 = vmatmul.mubr.bf16.gmra.mrb[0].mxu0 %v2143
        %v2538 = vpop.f32.mrb[0].mxu0
        %v2539 = vadd.f32 0.0, %v2538
        %v2540 = vpop.f32.mrb[0].mxu0
        %v2541 = vpop.f32.mrb[0].mxu0
        %v2542 = vadd.f32 0.0, %v2541
        %v2543 = vpop.f32.mrb[0].mxu0
        %2544 = vmatprep.mubr.bf16.mxu0 %v2445
        %2545 = vmatmul.mubr.bf16.gmra.mrb[0].mxu0 %v2159
        %v2546 = vpop.f32.mrb[0].mxu0
        %v2547 = vadd.f32 0.0, %v2546
        %v2548 = vpop.f32.mrb[0].mxu0
        %v2549 = vpop.f32.mrb[0].mxu0
        %v2550 = vadd.f32 0.0, %v2549
        %v2551 = vpop.f32.mrb[0].mxu0
        %2552 = vmatprep.mubr.bf16.mxu0 %v2448
        %2553 = vmatmul.mubr.bf16.gmra.mrb[0].mxu0 %v2175
        %v2554 = vpop.f32.mrb[0].mxu0
        %v2555 = vadd.f32 0.0, %v2554
        %v2556 = vpop.f32.mrb[0].mxu0
        %v2557 = vpop.f32.mrb[0].mxu0
        %v2558 = vadd.f32 0.0, %v2557
        %v2559 = vpop.f32.mrb[0].mxu0
        %2560 = vmatprep.mubr.bf16.mxu0 %v2451
        %2561 = vmatmul.mubr.bf16.gmra.mrb[0].mxu0 %v2191
        %v2562 = vpop.f32.mrb[0].mxu0
        %v2563 = vadd.f32 0.0, %v2562
        %v2564 = vpop.f32.mrb[0].mxu0
        %v2565 = vpop.f32.mrb[0].mxu0
        %v2566 = vadd.f32 0.0, %v2565
        %v2567 = vpop.f32.mrb[0].mxu0
        %2568 = vmatprep.mubr.bf16.mxu0 %v2454
        %2569 = vmatmul.mubr.bf16.gmra.mrb[0].mxu0 %v2207
        %v2570 = vpop.f32.mrb[0].mxu0
        %v2571 = vadd.f32 0.0, %v2570
        %v2572 = vpop.f32.mrb[0].mxu0
        %v2573 = vpop.f32.mrb[0].mxu0
        %v2574 = vadd.f32 0.0, %v2573
        %v2575 = vpop.f32.mrb[0].mxu0
        %2576 = vmatprep.mubr.bf16.mxu0 %v2457
        %2577 = vmatmul.mubr.bf16.gmra.mrb[0].mxu0 %v2223
        %v2578 = vpop.f32.mrb[0].mxu0
        %v2579 = vadd.f32 0.0, %v2578
        %v2580 = vpop.f32.mrb[0].mxu0
        %v2581 = vpop.f32.mrb[0].mxu0
        %v2582 = vadd.f32 0.0, %v2581
        %v2583 = vpop.f32.mrb[0].mxu0
        %2584 = vmatprep.mubr.bf16.mxu0 %v2460
        %2585 = vmatmul.mubr.bf16.gmra.mrb[0].mxu0 %v2239
        %v2586 = vpop.f32.mrb[0].mxu0
        %v2587 = vadd.f32 0.0, %v2586
        %v2588 = vpop.f32.mrb[0].mxu0
        %v2589 = vpop.f32.mrb[0].mxu0
        %v2590 = vadd.f32 0.0, %v2589
        %v2591 = vpop.f32.mrb[0].mxu0
        %2592 = vmatprep.mubr.bf16.mxu0 %v2463
        %2593 = vmatmul.mubr.bf16.gmra.mrb[0].mxu0 %v2255
        %v2594 = vpop.f32.mrb[0].mxu0
        %v2595 = vadd.f32 0.0, %v2594
        %v2596 = vpop.f32.mrb[0].mxu0
        %v2597 = vpop.f32.mrb[0].mxu0
        %v2598 = vadd.f32 0.0, %v2597
        %v2599 = vpop.f32.mrb[0].mxu0
        %2600 = vmatprep.mubr.bf16.mxu0 %v2466
        %2601 = vmatmul.mubr.bf16.gmra.mrb[0].mxu0 %v2271
        %v2602 = vpop.f32.mrb[0].mxu0
        %v2603 = vadd.f32 0.0, %v2602
        %v2604 = vpop.f32.mrb[0].mxu0
        %v2605 = vpop.f32.mrb[0].mxu0
        %v2606 = vadd.f32 0.0, %v2605
        %v2607 = vpop.f32.mrb[0].mxu0
        %2608 = vmatprep.mubr.bf16.mxu0 %v2469
        %2609 = vmatmul.mubr.bf16.gmra.mrb[0].mxu0 %v2287
        %v2610 = vpop.f32.mrb[0].mxu0
        %v2611 = vadd.f32 0.0, %v2610
        %v2612 = vpop.f32.mrb[0].mxu0
        %v2613 = vpop.f32.mrb[0].mxu0
        %v2614 = vadd.f32 0.0, %v2613
        %v2615 = vpop.f32.mrb[0].mxu0
        %2616 = vmatprep.mubr.bf16.mxu0 %v2472
        %2617 = vmatmul.mubr.bf16.gmra.mrb[0].mxu0 %v2303
        %v2618 = vpop.f32.mrb[0].mxu0
        %v2619 = vadd.f32 0.0, %v2618
        %v2620 = vpop.f32.mrb[0].mxu0
        %v2621 = vpop.f32.mrb[0].mxu0
        %v2622 = vadd.f32 0.0, %v2621
        %v2623 = vpop.f32.mrb[0].mxu0
        %2624 = vmatprep.mubr.bf16.mxu0 %v2475
        %2625 = vmatmul.mubr.bf16.gmra.mrb[0].mxu0 %v2319
        %v2626 = vpop.f32.mrb[0].mxu0
        %v2627 = vadd.f32 0.0, %v2626
        %v2628 = vpop.f32.mrb[0].mxu0
        %v2629 = vpop.f32.mrb[0].mxu0
        %v2630 = vadd.f32 0.0, %v2629
        %v2631 = vpop.f32.mrb[0].mxu0
        %2632 = vmatprep.mubr.bf16.mxu0 %v2478
        %2633 = vmatmul.mubr.bf16.gmra.mrb[0].mxu0 %v2335
        %v2634 = vpop.f32.mrb[0].mxu0
        %v2635 = vadd.f32 0.0, %v2634
        %v2636 = vpop.f32.mrb[0].mxu0
        %v2637 = vpop.f32.mrb[0].mxu0
        %v2638 = vadd.f32 0.0, %v2637
        %v2639 = vpop.f32.mrb[0].mxu0
        %2640 = vdwg.mxu0
        %v2642 = vshrl.u32 %v1963, 16
        %v2644 = vrot.slane %v2642, 7
        %v2646 = vshrl.u32 %v1965, 16
        %v2648 = vrot.slane %v2646, 7
        %v2649 = vshll.u32 %v1965, 16
        %v2651 = vor.u32 %v2648, %v2649
        %v2652 = vsel %vm2079, %v2644, %v2651
        %v2654 = vshrl.u32 %v1964, 16
        %v2656 = vrot.slane %v2654, 7
        %v2658 = vshrl.u32 %v1966, 16
        %v2660 = vrot.slane %v2658, 7
        %v2661 = vshll.u32 %v1966, 16
        %v2663 = vor.u32 %v2660, %v2661
        %v2664 = vsel %vm2079, %v2656, %v2663
        %v2666 = vshrl.u32 %v1967, 16
        %v2668 = vrot.slane %v2666, 7
        %v2669 = vshll.u32 %v1967, 16
        %v2671 = vor.u32 %v2668, %v2669
        %v2672 = vsel %vm2079, %v2648, %v2671
        %v2674 = vshrl.u32 %v1968, 16
        %v2676 = vrot.slane %v2674, 7
        %v2677 = vshll.u32 %v1968, 16
        %v2679 = vor.u32 %v2676, %v2677
        %v2680 = vsel %vm2079, %v2660, %v2679
        %v2682 = vshrl.u32 %v1969, 16
        %v2684 = vrot.slane %v2682, 7
        %v2685 = vshll.u32 %v1969, 16
        %v2687 = vor.u32 %v2684, %v2685
        %v2688 = vsel %vm2079, %v2668, %v2687
        %v2690 = vshrl.u32 %v1970, 16
        %v2692 = vrot.slane %v2690, 7
        %v2693 = vshll.u32 %v1970, 16
        %v2695 = vor.u32 %v2692, %v2693
        %v2696 = vsel %vm2079, %v2676, %v2695
        %v2698 = vshrl.u32 %v1971, 16
        %v2700 = vrot.slane %v2698, 7
        %v2701 = vshll.u32 %v1971, 16
        %v2703 = vor.u32 %v2700, %v2701
        %v2704 = vsel %vm2079, %v2684, %v2703
        %v2706 = vshrl.u32 %v1972, 16
        %v2708 = vrot.slane %v2706, 7
        %v2709 = vshll.u32 %v1972, 16
        %v2711 = vor.u32 %v2708, %v2709
        %v2712 = vsel %vm2079, %v2692, %v2711
        %v2714 = vshrl.u32 %v1973, 16
        %v2716 = vrot.slane %v2714, 7
        %v2717 = vshll.u32 %v1973, 16
        %v2719 = vor.u32 %v2716, %v2717
        %v2720 = vsel %vm2079, %v2700, %v2719
        %v2722 = vshrl.u32 %v1974, 16
        %v2724 = vrot.slane %v2722, 7
        %v2725 = vshll.u32 %v1974, 16
        %v2727 = vor.u32 %v2724, %v2725
        %v2728 = vsel %vm2079, %v2708, %v2727
        %v2730 = vshrl.u32 %v1975, 16
        %v2732 = vrot.slane %v2730, 7
        %v2733 = vshll.u32 %v1975, 16
        %v2735 = vor.u32 %v2732, %v2733
        %v2736 = vsel %vm2079, %v2716, %v2735
        %v2738 = vshrl.u32 %v1976, 16
        %v2740 = vrot.slane %v2738, 7
        %v2741 = vshll.u32 %v1976, 16
        %v2743 = vor.u32 %v2740, %v2741
        %v2744 = vsel %vm2079, %v2724, %v2743
        %v2746 = vshrl.u32 %v1977, 16
        %v2748 = vrot.slane %v2746, 7
        %v2749 = vshll.u32 %v1977, 16
        %v2751 = vor.u32 %v2748, %v2749
        %v2752 = vsel %vm2079, %v2732, %v2751
        %v2754 = vshrl.u32 %v1978, 16
        %v2756 = vrot.slane %v2754, 7
        %v2757 = vshll.u32 %v1978, 16
        %v2759 = vor.u32 %v2756, %v2757
        %v2760 = vsel %vm2079, %v2740, %v2759
        %v2762 = vshrl.u32 %v1979, 16
        %v2764 = vrot.slane %v2762, 7
        %v2765 = vshll.u32 %v1979, 16
        %v2767 = vor.u32 %v2764, %v2765
        %v2768 = vsel %vm2079, %v2748, %v2767
        %v2770 = vshrl.u32 %v1980, 16
        %v2772 = vrot.slane %v2770, 7
        %v2773 = vshll.u32 %v1980, 16
        %v2775 = vor.u32 %v2772, %v2773
        %v2776 = vsel %vm2079, %v2756, %v2775
        %v2778 = vshrl.u32 %v1981, 16
        %v2780 = vrot.slane %v2778, 7
        %v2781 = vshll.u32 %v1981, 16
        %v2783 = vor.u32 %v2780, %v2781
        %v2784 = vsel %vm2079, %v2764, %v2783
        %v2786 = vshrl.u32 %v1982, 16
        %v2788 = vrot.slane %v2786, 7
        %v2789 = vshll.u32 %v1982, 16
        %v2791 = vor.u32 %v2788, %v2789
        %v2792 = vsel %vm2079, %v2772, %v2791
        %v2794 = vshrl.u32 %v1983, 16
        %v2796 = vrot.slane %v2794, 7
        %v2797 = vshll.u32 %v1983, 16
        %v2799 = vor.u32 %v2796, %v2797
        %v2800 = vsel %vm2079, %v2780, %v2799
        %v2802 = vshrl.u32 %v1984, 16
        %v2804 = vrot.slane %v2802, 7
        %v2805 = vshll.u32 %v1984, 16
        %v2807 = vor.u32 %v2804, %v2805
        %v2808 = vsel %vm2079, %v2788, %v2807
        %v2810 = vshrl.u32 %v1985, 16
        %v2812 = vrot.slane %v2810, 7
        %v2813 = vshll.u32 %v1985, 16
        %v2815 = vor.u32 %v2812, %v2813
        %v2816 = vsel %vm2079, %v2796, %v2815
        %v2818 = vshrl.u32 %v1986, 16
        %v2820 = vrot.slane %v2818, 7
        %v2821 = vshll.u32 %v1986, 16
        %v2823 = vor.u32 %v2820, %v2821
        %v2824 = vsel %vm2079, %v2804, %v2823
        %v2826 = vshrl.u32 %v1987, 16
        %v2828 = vrot.slane %v2826, 7
        %v2829 = vshll.u32 %v1987, 16
        %v2831 = vor.u32 %v2828, %v2829
        %v2832 = vsel %vm2079, %v2812, %v2831
        %v2834 = vshrl.u32 %v1988, 16
        %v2836 = vrot.slane %v2834, 7
        %v2837 = vshll.u32 %v1988, 16
        %v2839 = vor.u32 %v2836, %v2837
        %v2840 = vsel %vm2079, %v2820, %v2839
        %v2842 = vshrl.u32 %v1989, 16
        %v2844 = vrot.slane %v2842, 7
        %v2845 = vshll.u32 %v1989, 16
        %v2847 = vor.u32 %v2844, %v2845
        %v2848 = vsel %vm2079, %v2828, %v2847
        %v2850 = vshrl.u32 %v1990, 16
        %v2852 = vrot.slane %v2850, 7
        %v2853 = vshll.u32 %v1990, 16
        %v2855 = vor.u32 %v2852, %v2853
        %v2856 = vsel %vm2079, %v2836, %v2855
        %v2858 = vshrl.u32 %v1991, 16
        %v2860 = vrot.slane %v2858, 7
        %v2861 = vshll.u32 %v1991, 16
        %v2863 = vor.u32 %v2860, %v2861
        %v2864 = vsel %vm2079, %v2844, %v2863
        %v2866 = vshrl.u32 %v1992, 16
        %v2868 = vrot.slane %v2866, 7
        %v2869 = vshll.u32 %v1992, 16
        %v2871 = vor.u32 %v2868, %v2869
        %v2872 = vsel %vm2079, %v2852, %v2871
        %v2874 = vshrl.u32 %v1993, 16
        %v2876 = vrot.slane %v2874, 7
        %v2877 = vshll.u32 %v1993, 16
        %v2879 = vor.u32 %v2876, %v2877
        %v2880 = vsel %vm2079, %v2860, %v2879
        %v2882 = vshrl.u32 %v1994, 16
        %v2884 = vrot.slane %v2882, 7
        %v2885 = vshll.u32 %v1994, 16
        %v2887 = vor.u32 %v2884, %v2885
        %v2888 = vsel %vm2079, %v2868, %v2887
        %v2890 = vshrl.u32 %v1995, 16
        %v2892 = vrot.slane %v2890, 7
        %v2893 = vshll.u32 %v1995, 16
        %v2895 = vor.u32 %v2892, %v2893
        %v2896 = vsel %vm2079, %v2876, %v2895
        %v2898 = vshrl.u32 %v1996, 16
        %v2900 = vrot.slane %v2898, 7
        %v2901 = vshll.u32 %v1996, 16
        %v2903 = vor.u32 %v2900, %v2901
        %v2904 = vsel %vm2079, %v2884, %v2903
        %v2945 = vunpack.c.l.b16 %v2031
        %v2946 = vunpack.c.l.b16 %v2032
        %v2947 = vunpack.c.l.b16 %v2033
        %v2948 = vunpack.c.l.b16 %v2034
        %v2949 = vunpack.c.l.b16 %v2035
        %v2950 = vunpack.c.l.b16 %v2036
        %v2951 = vunpack.c.l.b16 %v2037
        %v2952 = vunpack.c.l.b16 %v2038
        %v2953 = vunpack.c.l.b16 %v2039
        %v2954 = vunpack.c.l.b16 %v2040
        %v2955 = vunpack.c.l.b16 %v2041
        %v2956 = vunpack.c.l.b16 %v2042
        %v2957 = vunpack.c.l.b16 %v2043
        %v2958 = vunpack.c.l.b16 %v2044
        %v2959 = vunpack.c.l.b16 %v2045
        %v2960 = vunpack.c.l.b16 %v2046
        %v2961 = vunpack.c.l.b16 %v2047
        %v2962 = vunpack.c.l.b16 %v2048
        %v2963 = vunpack.c.l.b16 %v2049
        %v2964 = vunpack.c.l.b16 %v2050
        %v2965 = vunpack.c.l.b16 %v2051
        %v2966 = vunpack.c.l.b16 %v2052
        %v2967 = vunpack.c.l.b16 %v2053
        %v2968 = vunpack.c.l.b16 %v2054
        %v2969 = vpack.c.b16 %v2946, %v2945
        %v2970 = vpack.c.b16 %v2948, %v2947
        %v2971 = vpack.c.b16 %v2950, %v2949
        %v2972 = vpack.c.b16 %v2952, %v2951
        %v2973 = vpack.c.b16 %v2954, %v2953
        %v2974 = vpack.c.b16 %v2956, %v2955
        %v2975 = vpack.c.b16 %v2958, %v2957
        %v2976 = vpack.c.b16 %v2960, %v2959
        %v2977 = vpack.c.b16 %v2962, %v2961
        %v2978 = vpack.c.b16 %v2964, %v2963
        %v2979 = vpack.c.b16 %v2966, %v2965
        %v2980 = vpack.c.b16 %v2968, %v2967
        %v2994 = vsel %vm410, %v2664, 0
        %v2997 = vsel %vm410, %v2680, 0
        %v3000 = vsel %vm410, %v2696, 0
        %v3003 = vsel %vm410, %v2712, 0
        %v3006 = vsel %vm410, %v2728, 0
        %v3009 = vsel %vm410, %v2744, 0
        %v3012 = vsel %vm410, %v2760, 0
        %v3015 = vsel %vm410, %v2776, 0
        %v3018 = vsel %vm410, %v2792, 0
        %v3021 = vsel %vm410, %v2808, 0
        %v3024 = vsel %vm410, %v2824, 0
        %v3027 = vsel %vm410, %v2840, 0
        %v3030 = vsel %vm410, %v2856, 0
        %v3033 = vsel %vm410, %v2872, 0
        %v3036 = vsel %vm410, %v2888, 0
        %v3039 = vsel %vm410, %v2904, 0
        %3041 = vmatprep.subr.bf16.mxu0 0
        %3042 = vmatpush1.bf16.msra.mxu0 %v2969
        %3043 = vmatprep.subr.bf16.mxu0 0
        %3044 = vmatpush1.bf16.msra.mxu0 %v2970
        %3045 = vmatprep.subr.bf16.mxu0 0
        %3046 = vmatpush1.bf16.msra.mxu0 %v2971
        %3047 = vmatprep.subr.bf16.mxu0 0
        %3048 = vmatpush1.bf16.msra.mxu0 %v2972
        %3049 = vmatprep.subr.bf16.mxu0 0
        %3050 = vmatpush1.bf16.msra.mxu0 %v2973
        %3051 = vmatprep.subr.bf16.mxu0 0
        %3052 = vmatpush1.bf16.msra.mxu0 %v2974
        %3053 = vmatprep.subr.bf16.mxu0 0
        %3054 = vmatpush1.bf16.msra.mxu0 %v2975
        %3055 = vmatprep.subr.bf16.mxu0 0
        %3056 = vmatpush1.bf16.msra.mxu0 %v2976
        %3057 = vmatprep.subr.bf16.mxu0 0
        %3058 = vmatpush1.bf16.msra.mxu0 %v2977
        %3059 = vmatprep.subr.bf16.mxu0 0
        %3060 = vmatpush1.bf16.msra.mxu0 %v2978
        %3061 = vmatprep.subr.bf16.mxu0 0
        %3062 = vmatpush1.bf16.msra.mxu0 %v2979
        %3063 = vmatprep.subr.bf16.mxu0 0
        %3064 = vmatpush1.bf16.msra.mxu0 %v2980
        %3065 = vmatprep.subr.bf16.mxu0 0
        %3066 = vmatpush1.bf16.msra.mxu0 0
        %3067 = vmatprep.subr.bf16.mxu0 0
        %3068 = vmatpush1.bf16.msra.mxu0 0
        %3069 = vmatprep.subr.bf16.mxu0 0
        %3070 = vmatpush1.bf16.msra.mxu0 0
        %3071 = vmatprep.subr.bf16.mxu0 0
        %3072 = vmatpush1.bf16.msra.mxu0 0
        %3073 = vmatprep.mubr.bf16.mxu0 %v2994
        %3074 = vmatmul.mubr.bf16.gmra.mrb[0].mxu0 %v2652
        %v3075 = vpop.f32.mrb[0].mxu0
        %v3076 = vadd.f32 %v2515, %v3075
        %v3077 = vpop.f32.mrb[0].mxu0
        %v3078 = vpop.f32.mrb[0].mxu0
        %v3079 = vadd.f32 %v2518, %v3078
        %v3080 = vpop.f32.mrb[0].mxu0
        %3081 = vmatprep.mubr.bf16.mxu0 %v2997
        %3082 = vmatmul.mubr.bf16.gmra.mrb[0].mxu0 %v2672
        %v3083 = vpop.f32.mrb[0].mxu0
        %v3084 = vadd.f32 %v2523, %v3083
        %v3085 = vpop.f32.mrb[0].mxu0
        %v3086 = vpop.f32.mrb[0].mxu0
        %v3087 = vadd.f32 %v2526, %v3086
        %v3088 = vpop.f32.mrb[0].mxu0
        %3089 = vmatprep.mubr.bf16.mxu0 %v3000
        %3090 = vmatmul.mubr.bf16.gmra.mrb[0].mxu0 %v2688
        %v3091 = vpop.f32.mrb[0].mxu0
        %v3092 = vadd.f32 %v2531, %v3091
        %v3093 = vpop.f32.mrb[0].mxu0
        %v3094 = vpop.f32.mrb[0].mxu0
        %v3095 = vadd.f32 %v2534, %v3094
        %v3096 = vpop.f32.mrb[0].mxu0
        %3097 = vmatprep.mubr.bf16.mxu0 %v3003
        %3098 = vmatmul.mubr.bf16.gmra.mrb[0].mxu0 %v2704
        %v3099 = vpop.f32.mrb[0].mxu0
        %v3100 = vadd.f32 %v2539, %v3099
        %v3101 = vpop.f32.mrb[0].mxu0
        %v3102 = vpop.f32.mrb[0].mxu0
        %v3103 = vadd.f32 %v2542, %v3102
        %v3104 = vpop.f32.mrb[0].mxu0
        %3105 = vmatprep.mubr.bf16.mxu0 %v3006
        %3106 = vmatmul.mubr.bf16.gmra.mrb[0].mxu0 %v2720
        %v3107 = vpop.f32.mrb[0].mxu0
        %v3108 = vadd.f32 %v2547, %v3107
        %v3109 = vpop.f32.mrb[0].mxu0
        %v3110 = vpop.f32.mrb[0].mxu0
        %v3111 = vadd.f32 %v2550, %v3110
        %v3112 = vpop.f32.mrb[0].mxu0
        %3113 = vmatprep.mubr.bf16.mxu0 %v3009
        %3114 = vmatmul.mubr.bf16.gmra.mrb[0].mxu0 %v2736
        %v3115 = vpop.f32.mrb[0].mxu0
        %v3116 = vadd.f32 %v2555, %v3115
        %v3117 = vpop.f32.mrb[0].mxu0
        %v3118 = vpop.f32.mrb[0].mxu0
        %v3119 = vadd.f32 %v2558, %v3118
        %v3120 = vpop.f32.mrb[0].mxu0
        %3121 = vmatprep.mubr.bf16.mxu0 %v3012
        %3122 = vmatmul.mubr.bf16.gmra.mrb[0].mxu0 %v2752
        %v3123 = vpop.f32.mrb[0].mxu0
        %v3124 = vadd.f32 %v2563, %v3123
        %v3125 = vpop.f32.mrb[0].mxu0
        %v3126 = vpop.f32.mrb[0].mxu0
        %v3127 = vadd.f32 %v2566, %v3126
        %v3128 = vpop.f32.mrb[0].mxu0
        %3129 = vmatprep.mubr.bf16.mxu0 %v3015
        %3130 = vmatmul.mubr.bf16.gmra.mrb[0].mxu0 %v2768
        %v3131 = vpop.f32.mrb[0].mxu0
        %v3132 = vadd.f32 %v2571, %v3131
        %v3133 = vpop.f32.mrb[0].mxu0
        %v3134 = vpop.f32.mrb[0].mxu0
        %v3135 = vadd.f32 %v2574, %v3134
        %v3136 = vpop.f32.mrb[0].mxu0
        %3137 = vmatprep.mubr.bf16.mxu0 %v3018
        %3138 = vmatmul.mubr.bf16.gmra.mrb[0].mxu0 %v2784
        %v3139 = vpop.f32.mrb[0].mxu0
        %v3140 = vadd.f32 %v2579, %v3139
        %v3141 = vpop.f32.mrb[0].mxu0
        %v3142 = vpop.f32.mrb[0].mxu0
        %v3143 = vadd.f32 %v2582, %v3142
        %v3144 = vpop.f32.mrb[0].mxu0
        %3145 = vmatprep.mubr.bf16.mxu0 %v3021
        %3146 = vmatmul.mubr.bf16.gmra.mrb[0].mxu0 %v2800
        %v3147 = vpop.f32.mrb[0].mxu0
        %v3148 = vadd.f32 %v2587, %v3147
        %v3149 = vpop.f32.mrb[0].mxu0
        %v3150 = vpop.f32.mrb[0].mxu0
        %v3151 = vadd.f32 %v2590, %v3150
        %v3152 = vpop.f32.mrb[0].mxu0
        %3153 = vmatprep.mubr.bf16.mxu0 %v3024
        %3154 = vmatmul.mubr.bf16.gmra.mrb[0].mxu0 %v2816
        %v3155 = vpop.f32.mrb[0].mxu0
        %v3156 = vadd.f32 %v2595, %v3155
        %v3157 = vpop.f32.mrb[0].mxu0
        %v3158 = vpop.f32.mrb[0].mxu0
        %v3159 = vadd.f32 %v2598, %v3158
        %v3160 = vpop.f32.mrb[0].mxu0
        %3161 = vmatprep.mubr.bf16.mxu0 %v3027
        %3162 = vmatmul.mubr.bf16.gmra.mrb[0].mxu0 %v2832
        %v3163 = vpop.f32.mrb[0].mxu0
        %v3164 = vadd.f32 %v2603, %v3163
        %v3165 = vpop.f32.mrb[0].mxu0
        %v3166 = vpop.f32.mrb[0].mxu0
        %v3167 = vadd.f32 %v2606, %v3166
        %v3168 = vpop.f32.mrb[0].mxu0
        %3169 = vmatprep.mubr.bf16.mxu0 %v3030
        %3170 = vmatmul.mubr.bf16.gmra.mrb[0].mxu0 %v2848
        %v3171 = vpop.f32.mrb[0].mxu0
        %v3172 = vadd.f32 %v2611, %v3171
        %v3173 = vpop.f32.mrb[0].mxu0
        %v3174 = vpop.f32.mrb[0].mxu0
        %v3175 = vadd.f32 %v2614, %v3174
        %v3176 = vpop.f32.mrb[0].mxu0
        %3177 = vmatprep.mubr.bf16.mxu0 %v3033
        %3178 = vmatmul.mubr.bf16.gmra.mrb[0].mxu0 %v2864
        %v3179 = vpop.f32.mrb[0].mxu0
        %v3180 = vadd.f32 %v2619, %v3179
        %v3181 = vpop.f32.mrb[0].mxu0
        %v3182 = vpop.f32.mrb[0].mxu0
        %v3183 = vadd.f32 %v2622, %v3182
        %v3184 = vpop.f32.mrb[0].mxu0
        %3185 = vmatprep.mubr.bf16.mxu0 %v3036
        %3186 = vmatmul.mubr.bf16.gmra.mrb[0].mxu0 %v2880
        %v3187 = vpop.f32.mrb[0].mxu0
        %v3188 = vadd.f32 %v2627, %v3187
        %v3189 = vpop.f32.mrb[0].mxu0
        %v3190 = vpop.f32.mrb[0].mxu0
        %v3191 = vadd.f32 %v2630, %v3190
        %v3192 = vpop.f32.mrb[0].mxu0
        %3193 = vmatprep.mubr.bf16.mxu0 %v3039
        %3194 = vmatmul.mubr.bf16.gmra.mrb[0].mxu0 %v2896
        %v3195 = vpop.f32.mrb[0].mxu0
        %v3196 = vadd.f32 %v2635, %v3195
        %v3197 = vpop.f32.mrb[0].mxu0
        %v3198 = vpop.f32.mrb[0].mxu0
        %v3199 = vadd.f32 %v2638, %v3198
        %v3200 = vpop.f32.mrb[0].mxu0
        %3201 = vdwg.mxu0
        %v3202 = vsel %vm1732, %v3076, 0.0
        %v3203 = vsel %vm1733, %v3079, 0.0
        %v3204 = vsel %vm1734, %v3084, 0.0
        %v3205 = vsel %vm1735, %v3087, 0.0
        %v3206 = vsel %vm1736, %v3092, 0.0
        %v3207 = vsel %vm1737, %v3095, 0.0
        %v3208 = vsel %vm1738, %v3100, 0.0
        %v3209 = vsel %vm1739, %v3103, 0.0
        %v3210 = vsel %vm1740, %v3108, 0.0
        %v3211 = vsel %vm1741, %v3111, 0.0
        %v3212 = vsel %vm1742, %v3116, 0.0
        %v3213 = vsel %vm1743, %v3119, 0.0
        %v3214 = vsel %vm1744, %v3124, 0.0
        %v3215 = vsel %vm1745, %v3127, 0.0
        %v3216 = vsel %vm1746, %v3132, 0.0
        %v3217 = vsel %vm1747, %v3135, 0.0
        %v3218 = vsel %vm1748, %v3140, 0.0
        %v3219 = vsel %vm1749, %v3143, 0.0
        %v3220 = vsel %vm1750, %v3148, 0.0
        %v3221 = vsel %vm1751, %v3151, 0.0
        %v3222 = vsel %vm1752, %v3156, 0.0
        %v3223 = vsel %vm1753, %v3159, 0.0
        %v3224 = vsel %vm1754, %v3164, 0.0
        %v3225 = vsel %vm1755, %v3167, 0.0
        %v3226 = vsel %vm1756, %v3172, 0.0
        %v3227 = vsel %vm1757, %v3175, 0.0
        %v3228 = vsel %vm1758, %v3180, 0.0
        %v3229 = vsel %vm1759, %v3183, 0.0
        %v3230 = vsel %vm1760, %v3188, 0.0
        %v3231 = vsel %vm1761, %v3191, 0.0
        %v3232 = vsel %vm1762, %v3196, 0.0
        %v3233 = vsel %vm1763, %v3199, 0.0
        %v3234 = vadd.f32 %v1961, %v3202
        %v3235 = vadd.f32 %v1961, %v3203
        %v3236 = vadd.f32 %v1961, %v3204
        %v3237 = vadd.f32 %v1961, %v3205
        %v3238 = vadd.f32 %v1961, %v3206
        %v3239 = vadd.f32 %v1961, %v3207
        %v3240 = vadd.f32 %v1961, %v3208
        %v3241 = vadd.f32 %v1961, %v3209
        %v3242 = vadd.f32 %v1961, %v3210
        %v3243 = vadd.f32 %v1961, %v3211
        %v3244 = vadd.f32 %v1961, %v3212
        %v3245 = vadd.f32 %v1961, %v3213
        %v3246 = vadd.f32 %v1961, %v3214
        %v3247 = vadd.f32 %v1961, %v3215
        %v3248 = vadd.f32 %v1961, %v3216
        %v3249 = vadd.f32 %v1961, %v3217
        %v3250 = vadd.f32 %v1961, %v3218
        %v3251 = vadd.f32 %v1961, %v3219
        %v3252 = vadd.f32 %v1961, %v3220
        %v3253 = vadd.f32 %v1961, %v3221
        %v3254 = vadd.f32 %v1961, %v3222
        %v3255 = vadd.f32 %v1961, %v3223
        %v3256 = vadd.f32 %v1961, %v3224
        %v3257 = vadd.f32 %v1961, %v3225
        %v3258 = vadd.f32 %v1961, %v3226
        %v3259 = vadd.f32 %v1961, %v3227
        %v3260 = vadd.f32 %v1961, %v3228
        %v3261 = vadd.f32 %v1961, %v3229
        %v3262 = vadd.f32 %v1961, %v3230
        %v3263 = vadd.f32 %v1961, %v3231
        %v3264 = vadd.f32 %v1961, %v3232
        %v3265 = vadd.f32 %v1961, %v3233
        %s3266 = scalar_lea.vmem [#allocation4], 96
        %v3267 = vld [vmem:[%s3266] sm:$0xf]
        %v3268 = vld [vmem:[%s3266 + $0x4] sm:$0xf]
        %v3269 = vld [vmem:[%s3266 + $0x8] sm:$0xf]
        %v3270 = vld [vmem:[%s3266 + $0xc] sm:$0xf]
        %v3271 = vld [vmem:[%s3266 + $0x10] sm:$0xf]
        %v3272 = vld [vmem:[%s3266 + $0x14] sm:$0xf]
        %v3273 = vld [vmem:[%s3266 + $0x18] sm:$0xf]
        %v3274 = vld [vmem:[%s3266 + $0x1c] sm:$0xf]
        %v3275 = vld [vmem:[%s3266 + $0x20] sm:$0xf]
        %v3276 = vld [vmem:[%s3266 + $0x24] sm:$0xf]
        %v3277 = vld [vmem:[%s3266 + $0x28] sm:$0xf]
        %v3278 = vld [vmem:[%s3266 + $0x2c] sm:$0xf]
        %v3279 = vld [vmem:[%s3266 + $0x30] sm:$0xf]
        %v3280 = vld [vmem:[%s3266 + $0x34] sm:$0xf]
        %v3281 = vld [vmem:[%s3266 + $0x38] sm:$0xf]
        %v3282 = vld [vmem:[%s3266 + $0x3c] sm:$0xf]
        %v3283 = vld [vmem:[%s3266 + $0x40] sm:$0xf]
        %v3284 = vld [vmem:[%s3266 + $0x44] sm:$0xf]
        %v3285 = vld [vmem:[%s3266 + $0x48] sm:$0xf]
        %v3286 = vld [vmem:[%s3266 + $0x4c] sm:$0xf]
        %v3287 = vld [vmem:[%s3266 + $0x50] sm:$0xf]
        %v3288 = vld [vmem:[%s3266 + $0x54] sm:$0xf]
        %v3289 = vld [vmem:[%s3266 + $0x58] sm:$0xf]
        %v3290 = vld [vmem:[%s3266 + $0x5c] sm:$0xf]
        %s3291 = scalar_lea.vmem [#allocation7], 96
        %v3292 = vld [vmem:[%s3291] sm:$0xf]
        %v3293 = vld [vmem:[%s3291 + $0x4] sm:$0xf]
        %v3294 = vld [vmem:[%s3291 + $0x8] sm:$0xf]
        %v3295 = vld [vmem:[%s3291 + $0xc] sm:$0xf]
        %v3296 = vld [vmem:[%s3291 + $0x10] sm:$0xf]
        %v3297 = vld [vmem:[%s3291 + $0x14] sm:$0xf]
        %v3298 = vld [vmem:[%s3291 + $0x18] sm:$0xf]
        %v3299 = vld [vmem:[%s3291 + $0x1c] sm:$0xf]
        %v3300 = vld [vmem:[%s3291 + $0x20] sm:$0xf]
        %v3301 = vld [vmem:[%s3291 + $0x24] sm:$0xf]
        %v3302 = vld [vmem:[%s3291 + $0x28] sm:$0xf]
        %v3303 = vld [vmem:[%s3291 + $0x2c] sm:$0xf]
        %v3304 = vld [vmem:[%s3291 + $0x30] sm:$0xf]
        %v3305 = vld [vmem:[%s3291 + $0x34] sm:$0xf]
        %v3306 = vld [vmem:[%s3291 + $0x38] sm:$0xf]
        %v3307 = vld [vmem:[%s3291 + $0x3c] sm:$0xf]
        %v3308 = vld [vmem:[%s3291 + $0x40] sm:$0xf]
        %v3309 = vld [vmem:[%s3291 + $0x44] sm:$0xf]
        %v3310 = vld [vmem:[%s3291 + $0x48] sm:$0xf]
        %v3311 = vld [vmem:[%s3291 + $0x4c] sm:$0xf]
        %v3312 = vld [vmem:[%s3291 + $0x50] sm:$0xf]
        %v3313 = vld [vmem:[%s3291 + $0x54] sm:$0xf]
        %v3314 = vld [vmem:[%s3291 + $0x58] sm:$0xf]
        %v3315 = vld [vmem:[%s3291 + $0x5c] sm:$0xf]
        %v3340 = vunpack.c.l.b16 %v3292
        %v3341 = vunpack.c.l.b16 %v3293
        %v3342 = vunpack.c.l.b16 %v3294
        %v3343 = vunpack.c.l.b16 %v3295
        %v3344 = vunpack.c.l.b16 %v3296
        %v3345 = vunpack.c.l.b16 %v3297
        %v3346 = vunpack.c.l.b16 %v3298
        %v3347 = vunpack.c.l.b16 %v3299
        %v3348 = vunpack.c.l.b16 %v3300
        %v3349 = vunpack.c.l.b16 %v3301
        %v3350 = vunpack.c.l.b16 %v3302
        %v3351 = vunpack.c.l.b16 %v3303
        %v3352 = vunpack.c.l.b16 %v3304
        %v3353 = vunpack.c.l.b16 %v3305
        %v3354 = vunpack.c.l.b16 %v3306
        %v3355 = vunpack.c.l.b16 %v3307
        %v3356 = vunpack.c.l.b16 %v3308
        %v3357 = vunpack.c.l.b16 %v3309
        %v3358 = vunpack.c.l.b16 %v3310
        %v3359 = vunpack.c.l.b16 %v3311
        %v3360 = vunpack.c.l.b16 %v3312
        %v3361 = vunpack.c.l.b16 %v3313
        %v3362 = vunpack.c.l.b16 %v3314
        %v3363 = vunpack.c.l.b16 %v3315
        %v3364 = vpack.c.b16 %v3341, %v3340
        %v3365 = vpack.c.b16 %v3343, %v3342
        %v3366 = vpack.c.b16 %v3345, %v3344
        %v3367 = vpack.c.b16 %v3347, %v3346
        %v3368 = vpack.c.b16 %v3349, %v3348
        %v3369 = vpack.c.b16 %v3351, %v3350
        %v3370 = vpack.c.b16 %v3353, %v3352
        %v3371 = vpack.c.b16 %v3355, %v3354
        %v3372 = vpack.c.b16 %v3357, %v3356
        %v3373 = vpack.c.b16 %v3359, %v3358
        %v3374 = vpack.c.b16 %v3361, %v3360
        %v3375 = vpack.c.b16 %v3363, %v3362
        %v3388 = vsel %vm410, %v2000, 0
        %v3390 = vsel %vm410, %v2002, 0
        %v3392 = vsel %vm410, %v2004, 0
        %v3394 = vsel %vm410, %v2006, 0
        %v3396 = vsel %vm410, %v2008, 0
        %v3398 = vsel %vm410, %v2010, 0
        %v3400 = vsel %vm410, %v2012, 0
        %v3402 = vsel %vm410, %v2014, 0
        %v3404 = vsel %vm410, %v2016, 0
        %v3406 = vsel %vm410, %v2018, 0
        %v3408 = vsel %vm410, %v2020, 0
        %v3410 = vsel %vm410, %v2022, 0
        %v3412 = vsel %vm410, %v2024, 0
        %v3414 = vsel %vm410, %v2026, 0
        %v3416 = vsel %vm410, %v2028, 0
        %v3418 = vsel %vm410, %v2030, 0
        %3420 = vmatprep.subr.bf16.mxu0 0
        %3421 = vmatpush1.bf16.msra.mxu0 %v3364
        %3422 = vmatprep.subr.bf16.mxu0 0
        %3423 = vmatpush1.bf16.msra.mxu0 %v3365
        %3424 = vmatprep.subr.bf16.mxu0 0
        %3425 = vmatpush1.bf16.msra.mxu0 %v3366
        %3426 = vmatprep.subr.bf16.mxu0 0
        %3427 = vmatpush1.bf16.msra.mxu0 %v3367
        %3428 = vmatprep.subr.bf16.mxu0 0
        %3429 = vmatpush1.bf16.msra.mxu0 %v3368
        %3430 = vmatprep.subr.bf16.mxu0 0
        %3431 = vmatpush1.bf16.msra.mxu0 %v3369
        %3432 = vmatprep.subr.bf16.mxu0 0
        %3433 = vmatpush1.bf16.msra.mxu0 %v3370
        %3434 = vmatprep.subr.bf16.mxu0 0
        %3435 = vmatpush1.bf16.msra.mxu0 %v3371
        %3436 = vmatprep.subr.bf16.mxu0 0
        %3437 = vmatpush1.bf16.msra.mxu0 %v3372
        %3438 = vmatprep.subr.bf16.mxu0 0
        %3439 = vmatpush1.bf16.msra.mxu0 %v3373
        %3440 = vmatprep.subr.bf16.mxu0 0
        %3441 = vmatpush1.bf16.msra.mxu0 %v3374
        %3442 = vmatprep.subr.bf16.mxu0 0
        %3443 = vmatpush1.bf16.msra.mxu0 %v3375
        %3444 = vmatprep.subr.bf16.mxu0 0
        %3445 = vmatpush1.bf16.msra.mxu0 0
        %3446 = vmatprep.subr.bf16.mxu0 0
        %3447 = vmatpush1.bf16.msra.mxu0 0
        %3448 = vmatprep.subr.bf16.mxu0 0
        %3449 = vmatpush1.bf16.msra.mxu0 0
        %3450 = vmatprep.subr.bf16.mxu0 0
        %3451 = vmatpush1.bf16.msra.mxu0 0
        %3452 = vmatprep.mubr.bf16.mxu0 %v3388
        %3453 = vmatmul.mubr.bf16.gmra.mrb[0].mxu0 %v1999
        %v3454 = vpop.f32.mrb[0].mxu0
        %v3455 = vadd.f32 0.0, %v3454
        %v3456 = vpop.f32.mrb[0].mxu0
        %v3457 = vpop.f32.mrb[0].mxu0
        %v3458 = vadd.f32 0.0, %v3457
        %v3459 = vpop.f32.mrb[0].mxu0
        %3460 = vmatprep.mubr.bf16.mxu0 %v3390
        %3461 = vmatmul.mubr.bf16.gmra.mrb[0].mxu0 %v2001
        %v3462 = vpop.f32.mrb[0].mxu0
        %v3463 = vadd.f32 0.0, %v3462
        %v3464 = vpop.f32.mrb[0].mxu0
        %v3465 = vpop.f32.mrb[0].mxu0
        %v3466 = vadd.f32 0.0, %v3465
        %v3467 = vpop.f32.mrb[0].mxu0
        %3468 = vmatprep.mubr.bf16.mxu0 %v3392
        %3469 = vmatmul.mubr.bf16.gmra.mrb[0].mxu0 %v2003
        %v3470 = vpop.f32.mrb[0].mxu0
        %v3471 = vadd.f32 0.0, %v3470
        %v3472 = vpop.f32.mrb[0].mxu0
        %v3473 = vpop.f32.mrb[0].mxu0
        %v3474 = vadd.f32 0.0, %v3473
        %v3475 = vpop.f32.mrb[0].mxu0
        %3476 = vmatprep.mubr.bf16.mxu0 %v3394
        %3477 = vmatmul.mubr.bf16.gmra.mrb[0].mxu0 %v2005
        %v3478 = vpop.f32.mrb[0].mxu0
        %v3479 = vadd.f32 0.0, %v3478
        %v3480 = vpop.f32.mrb[0].mxu0
        %v3481 = vpop.f32.mrb[0].mxu0
        %v3482 = vadd.f32 0.0, %v3481
        %v3483 = vpop.f32.mrb[0].mxu0
        %3484 = vmatprep.mubr.bf16.mxu0 %v3396
        %3485 = vmatmul.mubr.bf16.gmra.mrb[0].mxu0 %v2007
        %v3486 = vpop.f32.mrb[0].mxu0
        %v3487 = vadd.f32 0.0, %v3486
        %v3488 = vpop.f32.mrb[0].mxu0
        %v3489 = vpop.f32.mrb[0].mxu0
        %v3490 = vadd.f32 0.0, %v3489
        %v3491 = vpop.f32.mrb[0].mxu0
        %3492 = vmatprep.mubr.bf16.mxu0 %v3398
        %3493 = vmatmul.mubr.bf16.gmra.mrb[0].mxu0 %v2009
        %v3494 = vpop.f32.mrb[0].mxu0
        %v3495 = vadd.f32 0.0, %v3494
        %v3496 = vpop.f32.mrb[0].mxu0
        %v3497 = vpop.f32.mrb[0].mxu0
        %v3498 = vadd.f32 0.0, %v3497
        %v3499 = vpop.f32.mrb[0].mxu0
        %3500 = vmatprep.mubr.bf16.mxu0 %v3400
        %3501 = vmatmul.mubr.bf16.gmra.mrb[0].mxu0 %v2011
        %v3502 = vpop.f32.mrb[0].mxu0
        %v3503 = vadd.f32 0.0, %v3502
        %v3504 = vpop.f32.mrb[0].mxu0
        %v3505 = vpop.f32.mrb[0].mxu0
        %v3506 = vadd.f32 0.0, %v3505
        %v3507 = vpop.f32.mrb[0].mxu0
        %3508 = vmatprep.mubr.bf16.mxu0 %v3402
        %3509 = vmatmul.mubr.bf16.gmra.mrb[0].mxu0 %v2013
        %v3510 = vpop.f32.mrb[0].mxu0
        %v3511 = vadd.f32 0.0, %v3510
        %v3512 = vpop.f32.mrb[0].mxu0
        %v3513 = vpop.f32.mrb[0].mxu0
        %v3514 = vadd.f32 0.0, %v3513
        %v3515 = vpop.f32.mrb[0].mxu0
        %3516 = vmatprep.mubr.bf16.mxu0 %v3404
        %3517 = vmatmul.mubr.bf16.gmra.mrb[0].mxu0 %v2015
        %v3518 = vpop.f32.mrb[0].mxu0
        %v3519 = vadd.f32 0.0, %v3518
        %v3520 = vpop.f32.mrb[0].mxu0
        %v3521 = vpop.f32.mrb[0].mxu0
        %v3522 = vadd.f32 0.0, %v3521
        %v3523 = vpop.f32.mrb[0].mxu0
        %3524 = vmatprep.mubr.bf16.mxu0 %v3406
        %3525 = vmatmul.mubr.bf16.gmra.mrb[0].mxu0 %v2017
        %v3526 = vpop.f32.mrb[0].mxu0
        %v3527 = vadd.f32 0.0, %v3526
        %v3528 = vpop.f32.mrb[0].mxu0
        %v3529 = vpop.f32.mrb[0].mxu0
        %v3530 = vadd.f32 0.0, %v3529
        %v3531 = vpop.f32.mrb[0].mxu0
        %3532 = vmatprep.mubr.bf16.mxu0 %v3408
        %3533 = vmatmul.mubr.bf16.gmra.mrb[0].mxu0 %v2019
        %v3534 = vpop.f32.mrb[0].mxu0
        %v3535 = vadd.f32 0.0, %v3534
        %v3536 = vpop.f32.mrb[0].mxu0
        %v3537 = vpop.f32.mrb[0].mxu0
        %v3538 = vadd.f32 0.0, %v3537
        %v3539 = vpop.f32.mrb[0].mxu0
        %3540 = vmatprep.mubr.bf16.mxu0 %v3410
        %3541 = vmatmul.mubr.bf16.gmra.mrb[0].mxu0 %v2021
        %v3542 = vpop.f32.mrb[0].mxu0
        %v3543 = vadd.f32 0.0, %v3542
        %v3544 = vpop.f32.mrb[0].mxu0
        %v3545 = vpop.f32.mrb[0].mxu0
        %v3546 = vadd.f32 0.0, %v3545
        %v3547 = vpop.f32.mrb[0].mxu0
        %3548 = vmatprep.mubr.bf16.mxu0 %v3412
        %3549 = vmatmul.mubr.bf16.gmra.mrb[0].mxu0 %v2023
        %v3550 = vpop.f32.mrb[0].mxu0
        %v3551 = vadd.f32 0.0, %v3550
        %v3552 = vpop.f32.mrb[0].mxu0
        %v3553 = vpop.f32.mrb[0].mxu0
        %v3554 = vadd.f32 0.0, %v3553
        %v3555 = vpop.f32.mrb[0].mxu0
        %3556 = vmatprep.mubr.bf16.mxu0 %v3414
        %3557 = vmatmul.mubr.bf16.gmra.mrb[0].mxu0 %v2025
        %v3558 = vpop.f32.mrb[0].mxu0
        %v3559 = vadd.f32 0.0, %v3558
        %v3560 = vpop.f32.mrb[0].mxu0
        %v3561 = vpop.f32.mrb[0].mxu0
        %v3562 = vadd.f32 0.0, %v3561
        %v3563 = vpop.f32.mrb[0].mxu0
        %3564 = vmatprep.mubr.bf16.mxu0 %v3416
        %3565 = vmatmul.mubr.bf16.gmra.mrb[0].mxu0 %v2027
        %v3566 = vpop.f32.mrb[0].mxu0
        %v3567 = vadd.f32 0.0, %v3566
        %v3568 = vpop.f32.mrb[0].mxu0
        %v3569 = vpop.f32.mrb[0].mxu0
        %v3570 = vadd.f32 0.0, %v3569
        %v3571 = vpop.f32.mrb[0].mxu0
        %3572 = vmatprep.mubr.bf16.mxu0 %v3418
        %3573 = vmatmul.mubr.bf16.gmra.mrb[0].mxu0 %v2029
        %v3574 = vpop.f32.mrb[0].mxu0
        %v3575 = vadd.f32 0.0, %v3574
        %v3576 = vpop.f32.mrb[0].mxu0
        %v3577 = vpop.f32.mrb[0].mxu0
        %v3578 = vadd.f32 0.0, %v3577
        %v3579 = vpop.f32.mrb[0].mxu0
        %3580 = vdwg.mxu0
        %v3605 = vunpack.c.l.b16 %v3267
        %v3606 = vunpack.c.l.b16 %v3268
        %v3607 = vunpack.c.l.b16 %v3269
        %v3608 = vunpack.c.l.b16 %v3270
        %v3609 = vunpack.c.l.b16 %v3271
        %v3610 = vunpack.c.l.b16 %v3272
        %v3611 = vunpack.c.l.b16 %v3273
        %v3612 = vunpack.c.l.b16 %v3274
        %v3613 = vunpack.c.l.b16 %v3275
        %v3614 = vunpack.c.l.b16 %v3276
        %v3615 = vunpack.c.l.b16 %v3277
        %v3616 = vunpack.c.l.b16 %v3278
        %v3617 = vunpack.c.l.b16 %v3279
        %v3618 = vunpack.c.l.b16 %v3280
        %v3619 = vunpack.c.l.b16 %v3281
        %v3620 = vunpack.c.l.b16 %v3282
        %v3621 = vunpack.c.l.b16 %v3283
        %v3622 = vunpack.c.l.b16 %v3284
        %v3623 = vunpack.c.l.b16 %v3285
        %v3624 = vunpack.c.l.b16 %v3286
        %v3625 = vunpack.c.l.b16 %v3287
        %v3626 = vunpack.c.l.b16 %v3288
        %v3627 = vunpack.c.l.b16 %v3289
        %v3628 = vunpack.c.l.b16 %v3290
        %v3629 = vpack.c.b16 %v3606, %v3605
        %v3630 = vpack.c.b16 %v3608, %v3607
        %v3631 = vpack.c.b16 %v3610, %v3609
        %v3632 = vpack.c.b16 %v3612, %v3611
        %v3633 = vpack.c.b16 %v3614, %v3613
        %v3634 = vpack.c.b16 %v3616, %v3615
        %v3635 = vpack.c.b16 %v3618, %v3617
        %v3636 = vpack.c.b16 %v3620, %v3619
        %v3637 = vpack.c.b16 %v3622, %v3621
        %v3638 = vpack.c.b16 %v3624, %v3623
        %v3639 = vpack.c.b16 %v3626, %v3625
        %v3640 = vpack.c.b16 %v3628, %v3627
        %v3653 = vsel %vm410, %v1966, 0
        %v3655 = vsel %vm410, %v1968, 0
        %v3657 = vsel %vm410, %v1970, 0
        %v3659 = vsel %vm410, %v1972, 0
        %v3661 = vsel %vm410, %v1974, 0
        %v3663 = vsel %vm410, %v1976, 0
        %v3665 = vsel %vm410, %v1978, 0
        %v3667 = vsel %vm410, %v1980, 0
        %v3669 = vsel %vm410, %v1982, 0
        %v3671 = vsel %vm410, %v1984, 0
        %v3673 = vsel %vm410, %v1986, 0
        %v3675 = vsel %vm410, %v1988, 0
        %v3677 = vsel %vm410, %v1990, 0
        %v3679 = vsel %vm410, %v1992, 0
        %v3681 = vsel %vm410, %v1994, 0
        %v3683 = vsel %vm410, %v1996, 0
        %3685 = vmatprep.subr.bf16.mxu0 0
        %3686 = vmatpush1.bf16.msra.mxu0 %v3629
        %3687 = vmatprep.subr.bf16.mxu0 0
        %3688 = vmatpush1.bf16.msra.mxu0 %v3630
        %3689 = vmatprep.subr.bf16.mxu0 0
        %3690 = vmatpush1.bf16.msra.mxu0 %v3631
        %3691 = vmatprep.subr.bf16.mxu0 0
        %3692 = vmatpush1.bf16.msra.mxu0 %v3632
        %3693 = vmatprep.subr.bf16.mxu0 0
        %3694 = vmatpush1.bf16.msra.mxu0 %v3633
        %3695 = vmatprep.subr.bf16.mxu0 0
        %3696 = vmatpush1.bf16.msra.mxu0 %v3634
        %3697 = vmatprep.subr.bf16.mxu0 0
        %3698 = vmatpush1.bf16.msra.mxu0 %v3635
        %3699 = vmatprep.subr.bf16.mxu0 0
        %3700 = vmatpush1.bf16.msra.mxu0 %v3636
        %3701 = vmatprep.subr.bf16.mxu0 0
        %3702 = vmatpush1.bf16.msra.mxu0 %v3637
        %3703 = vmatprep.subr.bf16.mxu0 0
        %3704 = vmatpush1.bf16.msra.mxu0 %v3638
        %3705 = vmatprep.subr.bf16.mxu0 0
        %3706 = vmatpush1.bf16.msra.mxu0 %v3639
        %3707 = vmatprep.subr.bf16.mxu0 0
        %3708 = vmatpush1.bf16.msra.mxu0 %v3640
        %3709 = vmatprep.subr.bf16.mxu0 0
        %3710 = vmatpush1.bf16.msra.mxu0 0
        %3711 = vmatprep.subr.bf16.mxu0 0
        %3712 = vmatpush1.bf16.msra.mxu0 0
        %3713 = vmatprep.subr.bf16.mxu0 0
        %3714 = vmatpush1.bf16.msra.mxu0 0
        %3715 = vmatprep.subr.bf16.mxu0 0
        %3716 = vmatpush1.bf16.msra.mxu0 0
        %3717 = vmatprep.mubr.bf16.mxu0 %v3653
        %3718 = vmatmul.mubr.bf16.gmra.mrb[0].mxu0 %v1965
        %v3719 = vpop.f32.mrb[0].mxu0
        %v3720 = vadd.f32 %v3455, %v3719
        %v3721 = vpop.f32.mrb[0].mxu0
        %v3722 = vpop.f32.mrb[0].mxu0
        %v3723 = vadd.f32 %v3458, %v3722
        %v3724 = vpop.f32.mrb[0].mxu0
        %3725 = vmatprep.mubr.bf16.mxu0 %v3655
        %3726 = vmatmul.mubr.bf16.gmra.mrb[0].mxu0 %v1967
        %v3727 = vpop.f32.mrb[0].mxu0
        %v3728 = vadd.f32 %v3463, %v3727
        %v3729 = vpop.f32.mrb[0].mxu0
        %v3730 = vpop.f32.mrb[0].mxu0
        %v3731 = vadd.f32 %v3466, %v3730
        %v3732 = vpop.f32.mrb[0].mxu0
        %3733 = vmatprep.mubr.bf16.mxu0 %v3657
        %3734 = vmatmul.mubr.bf16.gmra.mrb[0].mxu0 %v1969
        %v3735 = vpop.f32.mrb[0].mxu0
        %v3736 = vadd.f32 %v3471, %v3735
        %v3737 = vpop.f32.mrb[0].mxu0
        %v3738 = vpop.f32.mrb[0].mxu0
        %v3739 = vadd.f32 %v3474, %v3738
        %v3740 = vpop.f32.mrb[0].mxu0
        %3741 = vmatprep.mubr.bf16.mxu0 %v3659
        %3742 = vmatmul.mubr.bf16.gmra.mrb[0].mxu0 %v1971
        %v3743 = vpop.f32.mrb[0].mxu0
        %v3744 = vadd.f32 %v3479, %v3743
        %v3745 = vpop.f32.mrb[0].mxu0
        %v3746 = vpop.f32.mrb[0].mxu0
        %v3747 = vadd.f32 %v3482, %v3746
        %v3748 = vpop.f32.mrb[0].mxu0
        %3749 = vmatprep.mubr.bf16.mxu0 %v3661
        %3750 = vmatmul.mubr.bf16.gmra.mrb[0].mxu0 %v1973
        %v3751 = vpop.f32.mrb[0].mxu0
        %v3752 = vadd.f32 %v3487, %v3751
        %v3753 = vpop.f32.mrb[0].mxu0
        %v3754 = vpop.f32.mrb[0].mxu0
        %v3755 = vadd.f32 %v3490, %v3754
        %v3756 = vpop.f32.mrb[0].mxu0
        %3757 = vmatprep.mubr.bf16.mxu0 %v3663
        %3758 = vmatmul.mubr.bf16.gmra.mrb[0].mxu0 %v1975
        %v3759 = vpop.f32.mrb[0].mxu0
        %v3760 = vadd.f32 %v3495, %v3759
        %v3761 = vpop.f32.mrb[0].mxu0
        %v3762 = vpop.f32.mrb[0].mxu0
        %v3763 = vadd.f32 %v3498, %v3762
        %v3764 = vpop.f32.mrb[0].mxu0
        %3765 = vmatprep.mubr.bf16.mxu0 %v3665
        %3766 = vmatmul.mubr.bf16.gmra.mrb[0].mxu0 %v1977
        %v3767 = vpop.f32.mrb[0].mxu0
        %v3768 = vadd.f32 %v3503, %v3767
        %v3769 = vpop.f32.mrb[0].mxu0
        %v3770 = vpop.f32.mrb[0].mxu0
        %v3771 = vadd.f32 %v3506, %v3770
        %v3772 = vpop.f32.mrb[0].mxu0
        %3773 = vmatprep.mubr.bf16.mxu0 %v3667
        %3774 = vmatmul.mubr.bf16.gmra.mrb[0].mxu0 %v1979
        %v3775 = vpop.f32.mrb[0].mxu0
        %v3776 = vadd.f32 %v3511, %v3775
        %v3777 = vpop.f32.mrb[0].mxu0
        %v3778 = vpop.f32.mrb[0].mxu0
        %v3779 = vadd.f32 %v3514, %v3778
        %v3780 = vpop.f32.mrb[0].mxu0
        %3781 = vmatprep.mubr.bf16.mxu0 %v3669
        %3782 = vmatmul.mubr.bf16.gmra.mrb[0].mxu0 %v1981
        %v3783 = vpop.f32.mrb[0].mxu0
        %v3784 = vadd.f32 %v3519, %v3783
        %v3785 = vpop.f32.mrb[0].mxu0
        %v3786 = vpop.f32.mrb[0].mxu0
        %v3787 = vadd.f32 %v3522, %v3786
        %v3788 = vpop.f32.mrb[0].mxu0
        %3789 = vmatprep.mubr.bf16.mxu0 %v3671
        %3790 = vmatmul.mubr.bf16.gmra.mrb[0].mxu0 %v1983
        %v3791 = vpop.f32.mrb[0].mxu0
        %v3792 = vadd.f32 %v3527, %v3791
        %v3793 = vpop.f32.mrb[0].mxu0
        %v3794 = vpop.f32.mrb[0].mxu0
        %v3795 = vadd.f32 %v3530, %v3794
        %v3796 = vpop.f32.mrb[0].mxu0
        %3797 = vmatprep.mubr.bf16.mxu0 %v3673
        %3798 = vmatmul.mubr.bf16.gmra.mrb[0].mxu0 %v1985
        %v3799 = vpop.f32.mrb[0].mxu0
        %v3800 = vadd.f32 %v3535, %v3799
        %v3801 = vpop.f32.mrb[0].mxu0
        %v3802 = vpop.f32.mrb[0].mxu0
        %v3803 = vadd.f32 %v3538, %v3802
        %v3804 = vpop.f32.mrb[0].mxu0
        %3805 = vmatprep.mubr.bf16.mxu0 %v3675
        %3806 = vmatmul.mubr.bf16.gmra.mrb[0].mxu0 %v1987
        %v3807 = vpop.f32.mrb[0].mxu0
        %v3808 = vadd.f32 %v3543, %v3807
        %v3809 = vpop.f32.mrb[0].mxu0
        %v3810 = vpop.f32.mrb[0].mxu0
        %v3811 = vadd.f32 %v3546, %v3810
        %v3812 = vpop.f32.mrb[0].mxu0
        %3813 = vmatprep.mubr.bf16.mxu0 %v3677
        %3814 = vmatmul.mubr.bf16.gmra.mrb[0].mxu0 %v1989
        %v3815 = vpop.f32.mrb[0].mxu0
        %v3816 = vadd.f32 %v3551, %v3815
        %v3817 = vpop.f32.mrb[0].mxu0
        %v3818 = vpop.f32.mrb[0].mxu0
        %v3819 = vadd.f32 %v3554, %v3818
        %v3820 = vpop.f32.mrb[0].mxu0
        %3821 = vmatprep.mubr.bf16.mxu0 %v3679
        %3822 = vmatmul.mubr.bf16.gmra.mrb[0].mxu0 %v1991
        %v3823 = vpop.f32.mrb[0].mxu0
        %v3824 = vadd.f32 %v3559, %v3823
        %v3825 = vpop.f32.mrb[0].mxu0
        %v3826 = vpop.f32.mrb[0].mxu0
        %v3827 = vadd.f32 %v3562, %v3826
        %v3828 = vpop.f32.mrb[0].mxu0
        %3829 = vmatprep.mubr.bf16.mxu0 %v3681
        %3830 = vmatmul.mubr.bf16.gmra.mrb[0].mxu0 %v1993
        %v3831 = vpop.f32.mrb[0].mxu0
        %v3832 = vadd.f32 %v3567, %v3831
        %v3833 = vpop.f32.mrb[0].mxu0
        %v3834 = vpop.f32.mrb[0].mxu0
        %v3835 = vadd.f32 %v3570, %v3834
        %v3836 = vpop.f32.mrb[0].mxu0
        %3837 = vmatprep.mubr.bf16.mxu0 %v3683
        %3838 = vmatmul.mubr.bf16.gmra.mrb[0].mxu0 %v1995
        %v3839 = vpop.f32.mrb[0].mxu0
        %v3840 = vadd.f32 %v3575, %v3839
        %v3841 = vpop.f32.mrb[0].mxu0
        %v3842 = vpop.f32.mrb[0].mxu0
        %v3843 = vadd.f32 %v3578, %v3842
        %v3844 = vpop.f32.mrb[0].mxu0
        %3845 = vdwg.mxu0
        %v3846 = vadd.f32 %v3234, %v3720
        %v3847 = vadd.f32 %v3235, %v3723
        %v3848 = vadd.f32 %v3236, %v3728
        %v3849 = vadd.f32 %v3237, %v3731
        %v3850 = vadd.f32 %v3238, %v3736
        %v3851 = vadd.f32 %v3239, %v3739
        %v3852 = vadd.f32 %v3240, %v3744
        %v3853 = vadd.f32 %v3241, %v3747
        %v3854 = vadd.f32 %v3242, %v3752
        %v3855 = vadd.f32 %v3243, %v3755
        %v3856 = vadd.f32 %v3244, %v3760
        %v3857 = vadd.f32 %v3245, %v3763
        %v3858 = vadd.f32 %v3246, %v3768
        %v3859 = vadd.f32 %v3247, %v3771
        %v3860 = vadd.f32 %v3248, %v3776
        %v3861 = vadd.f32 %v3249, %v3779
        %v3862 = vadd.f32 %v3250, %v3784
        %v3863 = vadd.f32 %v3251, %v3787
        %v3864 = vadd.f32 %v3252, %v3792
        %v3865 = vadd.f32 %v3253, %v3795
        %v3866 = vadd.f32 %v3254, %v3800
        %v3867 = vadd.f32 %v3255, %v3803
        %v3868 = vadd.f32 %v3256, %v3808
        %v3869 = vadd.f32 %v3257, %v3811
        %v3870 = vadd.f32 %v3258, %v3816
        %v3871 = vadd.f32 %v3259, %v3819
        %v3872 = vadd.f32 %v3260, %v3824
        %v3873 = vadd.f32 %v3261, %v3827
        %v3874 = vadd.f32 %v3262, %v3832
        %v3875 = vadd.f32 %v3263, %v3835
        %v3876 = vadd.f32 %v3264, %v3840
        %v3877 = vadd.f32 %v3265, %v3843
        %v3878 = vld [vmem:[#allocation2 + $0x10] sm:$0xff]
        %v3879 = vld [vmem:[#allocation2 + $0x18] sm:$0xff]
        %v3880 = vld [vmem:[#allocation2 + $0x20] sm:$0xff]
        %v3881 = vld [vmem:[#allocation2 + $0x28] sm:$0xff]
        %v3882 = vld [vmem:[#allocation2 + $0x30] sm:$0xff]
        %v3883 = vld [vmem:[#allocation2 + $0x38] sm:$0xff]
        %v3884 = vld [vmem:[#allocation2 + $0x40] sm:$0xff]
        %v3885 = vld [vmem:[#allocation2 + $0x48] sm:$0xff]
        %v3886 = vld [vmem:[#allocation2 + $0x50] sm:$0xff]
        %v3887 = vld [vmem:[#allocation2 + $0x58] sm:$0xff]
        %v3888 = vld [vmem:[#allocation2 + $0x60] sm:$0xff]
        %v3889 = vld [vmem:[#allocation2 + $0x68] sm:$0xff]
        %v3890 = vld [vmem:[#allocation2 + $0x70] sm:$0xff]
        %v3891 = vld [vmem:[#allocation2 + $0x78] sm:$0xff]
        %v3892 = vld [vmem:[#allocation2 + $0x80] sm:$0xff]
        %v3893 = vld [vmem:[#allocation2 + $0x88] sm:$0xff]
        %v3894 = vld [vmem:[#allocation2 + $0x90] sm:$0xff]
        %v3895 = vld [vmem:[#allocation2 + $0x98] sm:$0xff]
        %v3896 = vld [vmem:[#allocation2 + $0xa0] sm:$0xff]
        %v3897 = vld [vmem:[#allocation2 + $0xa8] sm:$0xff]
        %v3898 = vld [vmem:[#allocation2 + $0xb0] sm:$0xff]
        %v3899 = vld [vmem:[#allocation2 + $0xb8] sm:$0xff]
        %v3900 = vld [vmem:[#allocation2 + $0xc0] sm:$0xff]
        %v3901 = vld [vmem:[#allocation2 + $0xc8] sm:$0xff]
        %v3902 = vld [vmem:[#allocation2 + $0xd0] sm:$0xff]
        %v3903 = vld [vmem:[#allocation2 + $0xd8] sm:$0xff]
        %v3904 = vld [vmem:[#allocation2 + $0xe0] sm:$0xff]
        %v3905 = vld [vmem:[#allocation2 + $0xe8] sm:$0xff]
        %v3906 = vld [vmem:[#allocation2 + $0xf0] sm:$0xff]
        %v3907 = vld [vmem:[#allocation2 + $0xf8] sm:$0xff]
        %v3908 = vld [vmem:[#allocation2 + $0x100] sm:$0xff]
        %v3909 = vld [vmem:[#allocation2 + $0x108] sm:$0xff]
        %v3910 = vld [vmem:[#allocation2 + $0x110] sm:$0x1]
        %v3911 = vld [vmem:[#allocation2 + $0x118] sm:$0x1]
        %v3912 = vld [vmem:[#allocation3 + $0x10] sm:$0xff]
        %v3913 = vld [vmem:[#allocation3 + $0x18] sm:$0xff]
        %v3914 = vld [vmem:[#allocation3 + $0x20] sm:$0xff]
        %v3915 = vld [vmem:[#allocation3 + $0x28] sm:$0xff]
        %v3916 = vld [vmem:[#allocation3 + $0x30] sm:$0xff]
        %v3917 = vld [vmem:[#allocation3 + $0x38] sm:$0xff]
        %v3918 = vld [vmem:[#allocation3 + $0x40] sm:$0xff]
        %v3919 = vld [vmem:[#allocation3 + $0x48] sm:$0xff]
        %v3920 = vld [vmem:[#allocation3 + $0x50] sm:$0xff]
        %v3921 = vld [vmem:[#allocation3 + $0x58] sm:$0xff]
        %v3922 = vld [vmem:[#allocation3 + $0x60] sm:$0xff]
        %v3923 = vld [vmem:[#allocation3 + $0x68] sm:$0xff]
        %v3924 = vld [vmem:[#allocation3 + $0x70] sm:$0xff]
        %v3925 = vld [vmem:[#allocation3 + $0x78] sm:$0xff]
        %v3926 = vld [vmem:[#allocation3 + $0x80] sm:$0xff]
        %v3927 = vld [vmem:[#allocation3 + $0x88] sm:$0xff]
        %v3928 = vld [vmem:[#allocation3 + $0x90] sm:$0xff]
        %v3929 = vld [vmem:[#allocation3 + $0x98] sm:$0xff]
        %v3930 = vld [vmem:[#allocation3 + $0xa0] sm:$0xff]
        %v3931 = vld [vmem:[#allocation3 + $0xa8] sm:$0xff]
        %v3932 = vld [vmem:[#allocation3 + $0xb0] sm:$0xff]
        %v3933 = vld [vmem:[#allocation3 + $0xb8] sm:$0xff]
        %v3934 = vld [vmem:[#allocation3 + $0xc0] sm:$0xff]
        %v3935 = vld [vmem:[#allocation3 + $0xc8] sm:$0xff]
        %v3936 = vld [vmem:[#allocation3 + $0xd0] sm:$0xff]
        %v3937 = vld [vmem:[#allocation3 + $0xd8] sm:$0xff]
        %v3938 = vld [vmem:[#allocation3 + $0xe0] sm:$0xff]
        %v3939 = vld [vmem:[#allocation3 + $0xe8] sm:$0xff]
        %v3940 = vld [vmem:[#allocation3 + $0xf0] sm:$0xff]
        %v3941 = vld [vmem:[#allocation3 + $0xf8] sm:$0xff]
        %v3942 = vld [vmem:[#allocation3 + $0x100] sm:$0xff]
        %v3943 = vld [vmem:[#allocation3 + $0x108] sm:$0xff]
        %v3944 = vld [vmem:[#allocation3 + $0x110] sm:$0x1]
        %v3945 = vld [vmem:[#allocation3 + $0x118] sm:$0x1]
        %s3946 = scalar_lea.vmem [#allocation4], 192
        %v3947 = vld [vmem:[%s3946] sm:$0xf]
        %v3948 = vld [vmem:[%s3946 + $0x4] sm:$0xf]
        %v3949 = vld [vmem:[%s3946 + $0x8] sm:$0xf]
        %v3950 = vld [vmem:[%s3946 + $0xc] sm:$0xf]
        %v3951 = vld [vmem:[%s3946 + $0x10] sm:$0xf]
        %v3952 = vld [vmem:[%s3946 + $0x14] sm:$0xf]
        %v3953 = vld [vmem:[%s3946 + $0x18] sm:$0xf]
        %v3954 = vld [vmem:[%s3946 + $0x1c] sm:$0xf]
        %v3955 = vld [vmem:[%s3946 + $0x20] sm:$0xf]
        %v3956 = vld [vmem:[%s3946 + $0x24] sm:$0xf]
        %v3957 = vld [vmem:[%s3946 + $0x28] sm:$0xf]
        %v3958 = vld [vmem:[%s3946 + $0x2c] sm:$0xf]
        %v3959 = vld [vmem:[%s3946 + $0x30] sm:$0xf]
        %v3960 = vld [vmem:[%s3946 + $0x34] sm:$0xf]
        %v3961 = vld [vmem:[%s3946 + $0x38] sm:$0xf]
        %v3962 = vld [vmem:[%s3946 + $0x3c] sm:$0xf]
        %v3963 = vld [vmem:[%s3946 + $0x40] sm:$0xf]
        %v3964 = vld [vmem:[%s3946 + $0x44] sm:$0xf]
        %v3965 = vld [vmem:[%s3946 + $0x48] sm:$0xf]
        %v3966 = vld [vmem:[%s3946 + $0x4c] sm:$0xf]
        %v3967 = vld [vmem:[%s3946 + $0x50] sm:$0xf]
        %v3968 = vld [vmem:[%s3946 + $0x54] sm:$0xf]
        %v3969 = vld [vmem:[%s3946 + $0x58] sm:$0xf]
        %v3970 = vld [vmem:[%s3946 + $0x5c] sm:$0xf]
        %s3971 = scalar_lea.vmem [#allocation7], 192
        %v3972 = vld [vmem:[%s3971] sm:$0xf]
        %v3973 = vld [vmem:[%s3971 + $0x4] sm:$0xf]
        %v3974 = vld [vmem:[%s3971 + $0x8] sm:$0xf]
        %v3975 = vld [vmem:[%s3971 + $0xc] sm:$0xf]
        %v3976 = vld [vmem:[%s3971 + $0x10] sm:$0xf]
        %v3977 = vld [vmem:[%s3971 + $0x14] sm:$0xf]
        %v3978 = vld [vmem:[%s3971 + $0x18] sm:$0xf]
        %v3979 = vld [vmem:[%s3971 + $0x1c] sm:$0xf]
        %v3980 = vld [vmem:[%s3971 + $0x20] sm:$0xf]
        %v3981 = vld [vmem:[%s3971 + $0x24] sm:$0xf]
        %v3982 = vld [vmem:[%s3971 + $0x28] sm:$0xf]
        %v3983 = vld [vmem:[%s3971 + $0x2c] sm:$0xf]
        %v3984 = vld [vmem:[%s3971 + $0x30] sm:$0xf]
        %v3985 = vld [vmem:[%s3971 + $0x34] sm:$0xf]
        %v3986 = vld [vmem:[%s3971 + $0x38] sm:$0xf]
        %v3987 = vld [vmem:[%s3971 + $0x3c] sm:$0xf]
        %v3988 = vld [vmem:[%s3971 + $0x40] sm:$0xf]
        %v3989 = vld [vmem:[%s3971 + $0x44] sm:$0xf]
        %v3990 = vld [vmem:[%s3971 + $0x48] sm:$0xf]
        %v3991 = vld [vmem:[%s3971 + $0x4c] sm:$0xf]
        %v3992 = vld [vmem:[%s3971 + $0x50] sm:$0xf]
        %v3993 = vld [vmem:[%s3971 + $0x54] sm:$0xf]
        %v3994 = vld [vmem:[%s3971 + $0x58] sm:$0xf]
        %v3995 = vld [vmem:[%s3971 + $0x5c] sm:$0xf]
        %vm3996 = vsmask.f32 7424
        %v3998 = vshrl.u32 %v3912, 16
        %v4000 = vshll.u32 %v3912, 16
        %v4002 = vrot.slane %v4000, 1
        %v4003 = vor.u32 %v3998, %v4002
        %v4005 = vshll.u32 %v3914, 16
        %v4007 = vrot.slane %v4005, 1
        %v4008 = vsel %vm3996, %v4003, %v4007
        %v4010 = vshrl.u32 %v3913, 16
        %v4012 = vshll.u32 %v3913, 16
        %v4014 = vrot.slane %v4012, 1
        %v4015 = vor.u32 %v4010, %v4014
        %v4017 = vshll.u32 %v3915, 16
        %v4019 = vrot.slane %v4017, 1
        %v4020 = vsel %vm3996, %v4015, %v4019
        %v4021 = vshrl.u32 %v3914, 16
        %v4023 = vor.u32 %v4021, %v4007
        %v4025 = vshll.u32 %v3916, 16
        %v4027 = vrot.slane %v4025, 1
        %v4028 = vsel %vm3996, %v4023, %v4027
        %v4029 = vshrl.u32 %v3915, 16
        %v4031 = vor.u32 %v4029, %v4019
        %v4033 = vshll.u32 %v3917, 16
        %v4035 = vrot.slane %v4033, 1
        %v4036 = vsel %vm3996, %v4031, %v4035
        %v4037 = vshrl.u32 %v3916, 16
        %v4039 = vor.u32 %v4037, %v4027
        %v4041 = vshll.u32 %v3918, 16
        %v4043 = vrot.slane %v4041, 1
        %v4044 = vsel %vm3996, %v4039, %v4043
        %v4045 = vshrl.u32 %v3917, 16
        %v4047 = vor.u32 %v4045, %v4035
        %v4049 = vshll.u32 %v3919, 16
        %v4051 = vrot.slane %v4049, 1
        %v4052 = vsel %vm3996, %v4047, %v4051
        %v4053 = vshrl.u32 %v3918, 16
        %v4055 = vor.u32 %v4053, %v4043
        %v4057 = vshll.u32 %v3920, 16
        %v4059 = vrot.slane %v4057, 1
        %v4060 = vsel %vm3996, %v4055, %v4059
        %v4061 = vshrl.u32 %v3919, 16
        %v4063 = vor.u32 %v4061, %v4051
        %v4065 = vshll.u32 %v3921, 16
        %v4067 = vrot.slane %v4065, 1
        %v4068 = vsel %vm3996, %v4063, %v4067
        %v4069 = vshrl.u32 %v3920, 16
        %v4071 = vor.u32 %v4069, %v4059
        %v4073 = vshll.u32 %v3922, 16
        %v4075 = vrot.slane %v4073, 1
        %v4076 = vsel %vm3996, %v4071, %v4075
        %v4077 = vshrl.u32 %v3921, 16
        %v4079 = vor.u32 %v4077, %v4067
        %v4081 = vshll.u32 %v3923, 16
        %v4083 = vrot.slane %v4081, 1
        %v4084 = vsel %vm3996, %v4079, %v4083
        %v4085 = vshrl.u32 %v3922, 16
        %v4087 = vor.u32 %v4085, %v4075
        %v4089 = vshll.u32 %v3924, 16
        %v4091 = vrot.slane %v4089, 1
        %v4092 = vsel %vm3996, %v4087, %v4091
        %v4093 = vshrl.u32 %v3923, 16
        %v4095 = vor.u32 %v4093, %v4083
        %v4097 = vshll.u32 %v3925, 16
        %v4099 = vrot.slane %v4097, 1
        %v4100 = vsel %vm3996, %v4095, %v4099
        %v4101 = vshrl.u32 %v3924, 16
        %v4103 = vor.u32 %v4101, %v4091
        %v4105 = vshll.u32 %v3926, 16
        %v4107 = vrot.slane %v4105, 1
        %v4108 = vsel %vm3996, %v4103, %v4107
        %v4109 = vshrl.u32 %v3925, 16
        %v4111 = vor.u32 %v4109, %v4099
        %v4113 = vshll.u32 %v3927, 16
        %v4115 = vrot.slane %v4113, 1
        %v4116 = vsel %vm3996, %v4111, %v4115
        %v4117 = vshrl.u32 %v3926, 16
        %v4119 = vor.u32 %v4117, %v4107
        %v4121 = vshll.u32 %v3928, 16
        %v4123 = vrot.slane %v4121, 1
        %v4124 = vsel %vm3996, %v4119, %v4123
        %v4125 = vshrl.u32 %v3927, 16
        %v4127 = vor.u32 %v4125, %v4115
        %v4129 = vshll.u32 %v3929, 16
        %v4131 = vrot.slane %v4129, 1
        %v4132 = vsel %vm3996, %v4127, %v4131
        %v4133 = vshrl.u32 %v3928, 16
        %v4135 = vor.u32 %v4133, %v4123
        %v4137 = vshll.u32 %v3930, 16
        %v4139 = vrot.slane %v4137, 1
        %v4140 = vsel %vm3996, %v4135, %v4139
        %v4141 = vshrl.u32 %v3929, 16
        %v4143 = vor.u32 %v4141, %v4131
        %v4145 = vshll.u32 %v3931, 16
        %v4147 = vrot.slane %v4145, 1
        %v4148 = vsel %vm3996, %v4143, %v4147
        %v4149 = vshrl.u32 %v3930, 16
        %v4151 = vor.u32 %v4149, %v4139
        %v4153 = vshll.u32 %v3932, 16
        %v4155 = vrot.slane %v4153, 1
        %v4156 = vsel %vm3996, %v4151, %v4155
        %v4157 = vshrl.u32 %v3931, 16
        %v4159 = vor.u32 %v4157, %v4147
        %v4161 = vshll.u32 %v3933, 16
        %v4163 = vrot.slane %v4161, 1
        %v4164 = vsel %vm3996, %v4159, %v4163
        %v4165 = vshrl.u32 %v3932, 16
        %v4167 = vor.u32 %v4165, %v4155
        %v4169 = vshll.u32 %v3934, 16
        %v4171 = vrot.slane %v4169, 1
        %v4172 = vsel %vm3996, %v4167, %v4171
        %v4173 = vshrl.u32 %v3933, 16
        %v4175 = vor.u32 %v4173, %v4163
        %v4177 = vshll.u32 %v3935, 16
        %v4179 = vrot.slane %v4177, 1
        %v4180 = vsel %vm3996, %v4175, %v4179
        %v4181 = vshrl.u32 %v3934, 16
        %v4183 = vor.u32 %v4181, %v4171
        %v4185 = vshll.u32 %v3936, 16
        %v4187 = vrot.slane %v4185, 1
        %v4188 = vsel %vm3996, %v4183, %v4187
        %v4189 = vshrl.u32 %v3935, 16
        %v4191 = vor.u32 %v4189, %v4179
        %v4193 = vshll.u32 %v3937, 16
        %v4195 = vrot.slane %v4193, 1
        %v4196 = vsel %vm3996, %v4191, %v4195
        %v4197 = vshrl.u32 %v3936, 16
        %v4199 = vor.u32 %v4197, %v4187
        %v4201 = vshll.u32 %v3938, 16
        %v4203 = vrot.slane %v4201, 1
        %v4204 = vsel %vm3996, %v4199, %v4203
        %v4205 = vshrl.u32 %v3937, 16
        %v4207 = vor.u32 %v4205, %v4195
        %v4209 = vshll.u32 %v3939, 16
        %v4211 = vrot.slane %v4209, 1
        %v4212 = vsel %vm3996, %v4207, %v4211
        %v4213 = vshrl.u32 %v3938, 16
        %v4215 = vor.u32 %v4213, %v4203
        %v4217 = vshll.u32 %v3940, 16
        %v4219 = vrot.slane %v4217, 1
        %v4220 = vsel %vm3996, %v4215, %v4219
        %v4221 = vshrl.u32 %v3939, 16
        %v4223 = vor.u32 %v4221, %v4211
        %v4225 = vshll.u32 %v3941, 16
        %v4227 = vrot.slane %v4225, 1
        %v4228 = vsel %vm3996, %v4223, %v4227
        %v4229 = vshrl.u32 %v3940, 16
        %v4231 = vor.u32 %v4229, %v4219
        %v4233 = vshll.u32 %v3942, 16
        %v4235 = vrot.slane %v4233, 1
        %v4236 = vsel %vm3996, %v4231, %v4235
        %v4237 = vshrl.u32 %v3941, 16
        %v4239 = vor.u32 %v4237, %v4227
        %v4241 = vshll.u32 %v3943, 16
        %v4243 = vrot.slane %v4241, 1
        %v4244 = vsel %vm3996, %v4239, %v4243
        %v4245 = vshrl.u32 %v3942, 16
        %v4247 = vor.u32 %v4245, %v4235
        %v4249 = vshll.u32 %v3944, 16
        %v4251 = vrot.slane %v4249, 1
        %v4252 = vsel %vm3996, %v4247, %v4251
        %v4253 = vshrl.u32 %v3943, 16
        %v4255 = vor.u32 %v4253, %v4243
        %v4257 = vshll.u32 %v3945, 16
        %v4259 = vrot.slane %v4257, 1
        %v4260 = vsel %vm3996, %v4255, %v4259
        %v4301 = vunpack.c.l.b16 %v3972
        %v4302 = vunpack.c.l.b16 %v3973
        %v4303 = vunpack.c.l.b16 %v3974
        %v4304 = vunpack.c.l.b16 %v3975
        %v4305 = vunpack.c.l.b16 %v3976
        %v4306 = vunpack.c.l.b16 %v3977
        %v4307 = vunpack.c.l.b16 %v3978
        %v4308 = vunpack.c.l.b16 %v3979
        %v4309 = vunpack.c.l.b16 %v3980
        %v4310 = vunpack.c.l.b16 %v3981
        %v4311 = vunpack.c.l.b16 %v3982
        %v4312 = vunpack.c.l.b16 %v3983
        %v4313 = vunpack.c.l.b16 %v3984
        %v4314 = vunpack.c.l.b16 %v3985
        %v4315 = vunpack.c.l.b16 %v3986
        %v4316 = vunpack.c.l.b16 %v3987
        %v4317 = vunpack.c.l.b16 %v3988
        %v4318 = vunpack.c.l.b16 %v3989
        %v4319 = vunpack.c.l.b16 %v3990
        %v4320 = vunpack.c.l.b16 %v3991
        %v4321 = vunpack.c.l.b16 %v3992
        %v4322 = vunpack.c.l.b16 %v3993
        %v4323 = vunpack.c.l.b16 %v3994
        %v4324 = vunpack.c.l.b16 %v3995
        %v4325 = vpack.c.b16 %v4302, %v4301
        %v4326 = vpack.c.b16 %v4304, %v4303
        %v4327 = vpack.c.b16 %v4306, %v4305
        %v4328 = vpack.c.b16 %v4308, %v4307
        %v4329 = vpack.c.b16 %v4310, %v4309
        %v4330 = vpack.c.b16 %v4312, %v4311
        %v4331 = vpack.c.b16 %v4314, %v4313
        %v4332 = vpack.c.b16 %v4316, %v4315
        %v4333 = vpack.c.b16 %v4318, %v4317
        %v4334 = vpack.c.b16 %v4320, %v4319
        %v4335 = vpack.c.b16 %v4322, %v4321
        %v4336 = vpack.c.b16 %v4324, %v4323
        %v4350 = vsel %vm410, %v4020, 0
        %v4353 = vsel %vm410, %v4036, 0
        %v4356 = vsel %vm410, %v4052, 0
        %v4359 = vsel %vm410, %v4068, 0
        %v4362 = vsel %vm410, %v4084, 0
        %v4365 = vsel %vm410, %v4100, 0
        %v4368 = vsel %vm410, %v4116, 0
        %v4371 = vsel %vm410, %v4132, 0
        %v4374 = vsel %vm410, %v4148, 0
        %v4377 = vsel %vm410, %v4164, 0
        %v4380 = vsel %vm410, %v4180, 0
        %v4383 = vsel %vm410, %v4196, 0
        %v4386 = vsel %vm410, %v4212, 0
        %v4389 = vsel %vm410, %v4228, 0
        %v4392 = vsel %vm410, %v4244, 0
        %v4395 = vsel %vm410, %v4260, 0
        %4397 = vmatprep.subr.bf16.mxu0 0
        %4398 = vmatpush1.bf16.msra.mxu0 %v4325
        %4399 = vmatprep.subr.bf16.mxu0 0
        %4400 = vmatpush1.bf16.msra.mxu0 %v4326
        %4401 = vmatprep.subr.bf16.mxu0 0
        %4402 = vmatpush1.bf16.msra.mxu0 %v4327
        %4403 = vmatprep.subr.bf16.mxu0 0
        %4404 = vmatpush1.bf16.msra.mxu0 %v4328
        %4405 = vmatprep.subr.bf16.mxu0 0
        %4406 = vmatpush1.bf16.msra.mxu0 %v4329
        %4407 = vmatprep.subr.bf16.mxu0 0
        %4408 = vmatpush1.bf16.msra.mxu0 %v4330
        %4409 = vmatprep.subr.bf16.mxu0 0
        %4410 = vmatpush1.bf16.msra.mxu0 %v4331
        %4411 = vmatprep.subr.bf16.mxu0 0
        %4412 = vmatpush1.bf16.msra.mxu0 %v4332
        %4413 = vmatprep.subr.bf16.mxu0 0
        %4414 = vmatpush1.bf16.msra.mxu0 %v4333
        %4415 = vmatprep.subr.bf16.mxu0 0
        %4416 = vmatpush1.bf16.msra.mxu0 %v4334
        %4417 = vmatprep.subr.bf16.mxu0 0
        %4418 = vmatpush1.bf16.msra.mxu0 %v4335
        %4419 = vmatprep.subr.bf16.mxu0 0
        %4420 = vmatpush1.bf16.msra.mxu0 %v4336
        %4421 = vmatprep.subr.bf16.mxu0 0
        %4422 = vmatpush1.bf16.msra.mxu0 0
        %4423 = vmatprep.subr.bf16.mxu0 0
        %4424 = vmatpush1.bf16.msra.mxu0 0
        %4425 = vmatprep.subr.bf16.mxu0 0
        %4426 = vmatpush1.bf16.msra.mxu0 0
        %4427 = vmatprep.subr.bf16.mxu0 0
        %4428 = vmatpush1.bf16.msra.mxu0 0
        %4429 = vmatprep.mubr.bf16.mxu0 %v4350
        %4430 = vmatmul.mubr.bf16.gmra.mrb[0].mxu0 %v4008
        %v4431 = vpop.f32.mrb[0].mxu0
        %v4432 = vadd.f32 0.0, %v4431
        %v4433 = vpop.f32.mrb[0].mxu0
        %v4434 = vpop.f32.mrb[0].mxu0
        %v4435 = vadd.f32 0.0, %v4434
        %v4436 = vpop.f32.mrb[0].mxu0
        %4437 = vmatprep.mubr.bf16.mxu0 %v4353
        %4438 = vmatmul.mubr.bf16.gmra.mrb[0].mxu0 %v4028
        %v4439 = vpop.f32.mrb[0].mxu0
        %v4440 = vadd.f32 0.0, %v4439
        %v4441 = vpop.f32.mrb[0].mxu0
        %v4442 = vpop.f32.mrb[0].mxu0
        %v4443 = vadd.f32 0.0, %v4442
        %v4444 = vpop.f32.mrb[0].mxu0
        %4445 = vmatprep.mubr.bf16.mxu0 %v4356
        %4446 = vmatmul.mubr.bf16.gmra.mrb[0].mxu0 %v4044
        %v4447 = vpop.f32.mrb[0].mxu0
        %v4448 = vadd.f32 0.0, %v4447
        %v4449 = vpop.f32.mrb[0].mxu0
        %v4450 = vpop.f32.mrb[0].mxu0
        %v4451 = vadd.f32 0.0, %v4450
        %v4452 = vpop.f32.mrb[0].mxu0
        %4453 = vmatprep.mubr.bf16.mxu0 %v4359
        %4454 = vmatmul.mubr.bf16.gmra.mrb[0].mxu0 %v4060
        %v4455 = vpop.f32.mrb[0].mxu0
        %v4456 = vadd.f32 0.0, %v4455
        %v4457 = vpop.f32.mrb[0].mxu0
        %v4458 = vpop.f32.mrb[0].mxu0
        %v4459 = vadd.f32 0.0, %v4458
        %v4460 = vpop.f32.mrb[0].mxu0
        %4461 = vmatprep.mubr.bf16.mxu0 %v4362
        %4462 = vmatmul.mubr.bf16.gmra.mrb[0].mxu0 %v4076
        %v4463 = vpop.f32.mrb[0].mxu0
        %v4464 = vadd.f32 0.0, %v4463
        %v4465 = vpop.f32.mrb[0].mxu0
        %v4466 = vpop.f32.mrb[0].mxu0
        %v4467 = vadd.f32 0.0, %v4466
        %v4468 = vpop.f32.mrb[0].mxu0
        %4469 = vmatprep.mubr.bf16.mxu0 %v4365
        %4470 = vmatmul.mubr.bf16.gmra.mrb[0].mxu0 %v4092
        %v4471 = vpop.f32.mrb[0].mxu0
        %v4472 = vadd.f32 0.0, %v4471
        %v4473 = vpop.f32.mrb[0].mxu0
        %v4474 = vpop.f32.mrb[0].mxu0
        %v4475 = vadd.f32 0.0, %v4474
        %v4476 = vpop.f32.mrb[0].mxu0
        %4477 = vmatprep.mubr.bf16.mxu0 %v4368
        %4478 = vmatmul.mubr.bf16.gmra.mrb[0].mxu0 %v4108
        %v4479 = vpop.f32.mrb[0].mxu0
        %v4480 = vadd.f32 0.0, %v4479
        %v4481 = vpop.f32.mrb[0].mxu0
        %v4482 = vpop.f32.mrb[0].mxu0
        %v4483 = vadd.f32 0.0, %v4482
        %v4484 = vpop.f32.mrb[0].mxu0
        %4485 = vmatprep.mubr.bf16.mxu0 %v4371
        %4486 = vmatmul.mubr.bf16.gmra.mrb[0].mxu0 %v4124
        %v4487 = vpop.f32.mrb[0].mxu0
        %v4488 = vadd.f32 0.0, %v4487
        %v4489 = vpop.f32.mrb[0].mxu0
        %v4490 = vpop.f32.mrb[0].mxu0
        %v4491 = vadd.f32 0.0, %v4490
        %v4492 = vpop.f32.mrb[0].mxu0
        %4493 = vmatprep.mubr.bf16.mxu0 %v4374
        %4494 = vmatmul.mubr.bf16.gmra.mrb[0].mxu0 %v4140
        %v4495 = vpop.f32.mrb[0].mxu0
        %v4496 = vadd.f32 0.0, %v4495
        %v4497 = vpop.f32.mrb[0].mxu0
        %v4498 = vpop.f32.mrb[0].mxu0
        %v4499 = vadd.f32 0.0, %v4498
        %v4500 = vpop.f32.mrb[0].mxu0
        %4501 = vmatprep.mubr.bf16.mxu0 %v4377
        %4502 = vmatmul.mubr.bf16.gmra.mrb[0].mxu0 %v4156
        %v4503 = vpop.f32.mrb[0].mxu0
        %v4504 = vadd.f32 0.0, %v4503
        %v4505 = vpop.f32.mrb[0].mxu0
        %v4506 = vpop.f32.mrb[0].mxu0
        %v4507 = vadd.f32 0.0, %v4506
        %v4508 = vpop.f32.mrb[0].mxu0
        %4509 = vmatprep.mubr.bf16.mxu0 %v4380
        %4510 = vmatmul.mubr.bf16.gmra.mrb[0].mxu0 %v4172
        %v4511 = vpop.f32.mrb[0].mxu0
        %v4512 = vadd.f32 0.0, %v4511
        %v4513 = vpop.f32.mrb[0].mxu0
        %v4514 = vpop.f32.mrb[0].mxu0
        %v4515 = vadd.f32 0.0, %v4514
        %v4516 = vpop.f32.mrb[0].mxu0
        %4517 = vmatprep.mubr.bf16.mxu0 %v4383
        %4518 = vmatmul.mubr.bf16.gmra.mrb[0].mxu0 %v4188
        %v4519 = vpop.f32.mrb[0].mxu0
        %v4520 = vadd.f32 0.0, %v4519
        %v4521 = vpop.f32.mrb[0].mxu0
        %v4522 = vpop.f32.mrb[0].mxu0
        %v4523 = vadd.f32 0.0, %v4522
        %v4524 = vpop.f32.mrb[0].mxu0
        %4525 = vmatprep.mubr.bf16.mxu0 %v4386
        %4526 = vmatmul.mubr.bf16.gmra.mrb[0].mxu0 %v4204
        %v4527 = vpop.f32.mrb[0].mxu0
        %v4528 = vadd.f32 0.0, %v4527
        %v4529 = vpop.f32.mrb[0].mxu0
        %v4530 = vpop.f32.mrb[0].mxu0
        %v4531 = vadd.f32 0.0, %v4530
        %v4532 = vpop.f32.mrb[0].mxu0
        %4533 = vmatprep.mubr.bf16.mxu0 %v4389
        %4534 = vmatmul.mubr.bf16.gmra.mrb[0].mxu0 %v4220
        %v4535 = vpop.f32.mrb[0].mxu0
        %v4536 = vadd.f32 0.0, %v4535
        %v4537 = vpop.f32.mrb[0].mxu0
        %v4538 = vpop.f32.mrb[0].mxu0
        %v4539 = vadd.f32 0.0, %v4538
        %v4540 = vpop.f32.mrb[0].mxu0
        %4541 = vmatprep.mubr.bf16.mxu0 %v4392
        %4542 = vmatmul.mubr.bf16.gmra.mrb[0].mxu0 %v4236
        %v4543 = vpop.f32.mrb[0].mxu0
        %v4544 = vadd.f32 0.0, %v4543
        %v4545 = vpop.f32.mrb[0].mxu0
        %v4546 = vpop.f32.mrb[0].mxu0
        %v4547 = vadd.f32 0.0, %v4546
        %v4548 = vpop.f32.mrb[0].mxu0
        %4549 = vmatprep.mubr.bf16.mxu0 %v4395
        %4550 = vmatmul.mubr.bf16.gmra.mrb[0].mxu0 %v4252
        %v4551 = vpop.f32.mrb[0].mxu0
        %v4552 = vadd.f32 0.0, %v4551
        %v4553 = vpop.f32.mrb[0].mxu0
        %v4554 = vpop.f32.mrb[0].mxu0
        %v4555 = vadd.f32 0.0, %v4554
        %v4556 = vpop.f32.mrb[0].mxu0
        %4557 = vdwg.mxu0
        %v4559 = vshrl.u32 %v3878, 16
        %v4561 = vshll.u32 %v3878, 16
        %v4563 = vrot.slane %v4561, 1
        %v4564 = vor.u32 %v4559, %v4563
        %v4566 = vshll.u32 %v3880, 16
        %v4568 = vrot.slane %v4566, 1
        %v4569 = vsel %vm3996, %v4564, %v4568
        %v4571 = vshrl.u32 %v3879, 16
        %v4573 = vshll.u32 %v3879, 16
        %v4575 = vrot.slane %v4573, 1
        %v4576 = vor.u32 %v4571, %v4575
        %v4578 = vshll.u32 %v3881, 16
        %v4580 = vrot.slane %v4578, 1
        %v4581 = vsel %vm3996, %v4576, %v4580
        %v4582 = vshrl.u32 %v3880, 16
        %v4584 = vor.u32 %v4582, %v4568
        %v4586 = vshll.u32 %v3882, 16
        %v4588 = vrot.slane %v4586, 1
        %v4589 = vsel %vm3996, %v4584, %v4588
        %v4590 = vshrl.u32 %v3881, 16
        %v4592 = vor.u32 %v4590, %v4580
        %v4594 = vshll.u32 %v3883, 16
        %v4596 = vrot.slane %v4594, 1
        %v4597 = vsel %vm3996, %v4592, %v4596
        %v4598 = vshrl.u32 %v3882, 16
        %v4600 = vor.u32 %v4598, %v4588
        %v4602 = vshll.u32 %v3884, 16
        %v4604 = vrot.slane %v4602, 1
        %v4605 = vsel %vm3996, %v4600, %v4604
        %v4606 = vshrl.u32 %v3883, 16
        %v4608 = vor.u32 %v4606, %v4596
        %v4610 = vshll.u32 %v3885, 16
        %v4612 = vrot.slane %v4610, 1
        %v4613 = vsel %vm3996, %v4608, %v4612
        %v4614 = vshrl.u32 %v3884, 16
        %v4616 = vor.u32 %v4614, %v4604
        %v4618 = vshll.u32 %v3886, 16
        %v4620 = vrot.slane %v4618, 1
        %v4621 = vsel %vm3996, %v4616, %v4620
        %v4622 = vshrl.u32 %v3885, 16
        %v4624 = vor.u32 %v4622, %v4612
        %v4626 = vshll.u32 %v3887, 16
        %v4628 = vrot.slane %v4626, 1
        %v4629 = vsel %vm3996, %v4624, %v4628
        %v4630 = vshrl.u32 %v3886, 16
        %v4632 = vor.u32 %v4630, %v4620
        %v4634 = vshll.u32 %v3888, 16
        %v4636 = vrot.slane %v4634, 1
        %v4637 = vsel %vm3996, %v4632, %v4636
        %v4638 = vshrl.u32 %v3887, 16
        %v4640 = vor.u32 %v4638, %v4628
        %v4642 = vshll.u32 %v3889, 16
        %v4644 = vrot.slane %v4642, 1
        %v4645 = vsel %vm3996, %v4640, %v4644
        %v4646 = vshrl.u32 %v3888, 16
        %v4648 = vor.u32 %v4646, %v4636
        %v4650 = vshll.u32 %v3890, 16
        %v4652 = vrot.slane %v4650, 1
        %v4653 = vsel %vm3996, %v4648, %v4652
        %v4654 = vshrl.u32 %v3889, 16
        %v4656 = vor.u32 %v4654, %v4644
        %v4658 = vshll.u32 %v3891, 16
        %v4660 = vrot.slane %v4658, 1
        %v4661 = vsel %vm3996, %v4656, %v4660
        %v4662 = vshrl.u32 %v3890, 16
        %v4664 = vor.u32 %v4662, %v4652
        %v4666 = vshll.u32 %v3892, 16
        %v4668 = vrot.slane %v4666, 1
        %v4669 = vsel %vm3996, %v4664, %v4668
        %v4670 = vshrl.u32 %v3891, 16
        %v4672 = vor.u32 %v4670, %v4660
        %v4674 = vshll.u32 %v3893, 16
        %v4676 = vrot.slane %v4674, 1
        %v4677 = vsel %vm3996, %v4672, %v4676
        %v4678 = vshrl.u32 %v3892, 16
        %v4680 = vor.u32 %v4678, %v4668
        %v4682 = vshll.u32 %v3894, 16
        %v4684 = vrot.slane %v4682, 1
        %v4685 = vsel %vm3996, %v4680, %v4684
        %v4686 = vshrl.u32 %v3893, 16
        %v4688 = vor.u32 %v4686, %v4676
        %v4690 = vshll.u32 %v3895, 16
        %v4692 = vrot.slane %v4690, 1
        %v4693 = vsel %vm3996, %v4688, %v4692
        %v4694 = vshrl.u32 %v3894, 16
        %v4696 = vor.u32 %v4694, %v4684
        %v4698 = vshll.u32 %v3896, 16
        %v4700 = vrot.slane %v4698, 1
        %v4701 = vsel %vm3996, %v4696, %v4700
        %v4702 = vshrl.u32 %v3895, 16
        %v4704 = vor.u32 %v4702, %v4692
        %v4706 = vshll.u32 %v3897, 16
        %v4708 = vrot.slane %v4706, 1
        %v4709 = vsel %vm3996, %v4704, %v4708
        %v4710 = vshrl.u32 %v3896, 16
        %v4712 = vor.u32 %v4710, %v4700
        %v4714 = vshll.u32 %v3898, 16
        %v4716 = vrot.slane %v4714, 1
        %v4717 = vsel %vm3996, %v4712, %v4716
        %v4718 = vshrl.u32 %v3897, 16
        %v4720 = vor.u32 %v4718, %v4708
        %v4722 = vshll.u32 %v3899, 16
        %v4724 = vrot.slane %v4722, 1
        %v4725 = vsel %vm3996, %v4720, %v4724
        %v4726 = vshrl.u32 %v3898, 16
        %v4728 = vor.u32 %v4726, %v4716
        %v4730 = vshll.u32 %v3900, 16
        %v4732 = vrot.slane %v4730, 1
        %v4733 = vsel %vm3996, %v4728, %v4732
        %v4734 = vshrl.u32 %v3899, 16
        %v4736 = vor.u32 %v4734, %v4724
        %v4738 = vshll.u32 %v3901, 16
        %v4740 = vrot.slane %v4738, 1
        %v4741 = vsel %vm3996, %v4736, %v4740
        %v4742 = vshrl.u32 %v3900, 16
        %v4744 = vor.u32 %v4742, %v4732
        %v4746 = vshll.u32 %v3902, 16
        %v4748 = vrot.slane %v4746, 1
        %v4749 = vsel %vm3996, %v4744, %v4748
        %v4750 = vshrl.u32 %v3901, 16
        %v4752 = vor.u32 %v4750, %v4740
        %v4754 = vshll.u32 %v3903, 16
        %v4756 = vrot.slane %v4754, 1
        %v4757 = vsel %vm3996, %v4752, %v4756
        %v4758 = vshrl.u32 %v3902, 16
        %v4760 = vor.u32 %v4758, %v4748
        %v4762 = vshll.u32 %v3904, 16
        %v4764 = vrot.slane %v4762, 1
        %v4765 = vsel %vm3996, %v4760, %v4764
        %v4766 = vshrl.u32 %v3903, 16
        %v4768 = vor.u32 %v4766, %v4756
        %v4770 = vshll.u32 %v3905, 16
        %v4772 = vrot.slane %v4770, 1
        %v4773 = vsel %vm3996, %v4768, %v4772
        %v4774 = vshrl.u32 %v3904, 16
        %v4776 = vor.u32 %v4774, %v4764
        %v4778 = vshll.u32 %v3906, 16
        %v4780 = vrot.slane %v4778, 1
        %v4781 = vsel %vm3996, %v4776, %v4780
        %v4782 = vshrl.u32 %v3905, 16
        %v4784 = vor.u32 %v4782, %v4772
        %v4786 = vshll.u32 %v3907, 16
        %v4788 = vrot.slane %v4786, 1
        %v4789 = vsel %vm3996, %v4784, %v4788
        %v4790 = vshrl.u32 %v3906, 16
        %v4792 = vor.u32 %v4790, %v4780
        %v4794 = vshll.u32 %v3908, 16
        %v4796 = vrot.slane %v4794, 1
        %v4797 = vsel %vm3996, %v4792, %v4796
        %v4798 = vshrl.u32 %v3907, 16
        %v4800 = vor.u32 %v4798, %v4788
        %v4802 = vshll.u32 %v3909, 16
        %v4804 = vrot.slane %v4802, 1
        %v4805 = vsel %vm3996, %v4800, %v4804
        %v4806 = vshrl.u32 %v3908, 16
        %v4808 = vor.u32 %v4806, %v4796
        %v4810 = vshll.u32 %v3910, 16
        %v4812 = vrot.slane %v4810, 1
        %v4813 = vsel %vm3996, %v4808, %v4812
        %v4814 = vshrl.u32 %v3909, 16
        %v4816 = vor.u32 %v4814, %v4804
        %v4818 = vshll.u32 %v3911, 16
        %v4820 = vrot.slane %v4818, 1
        %v4821 = vsel %vm3996, %v4816, %v4820
        %v4862 = vunpack.c.l.b16 %v3947
        %v4863 = vunpack.c.l.b16 %v3948
        %v4864 = vunpack.c.l.b16 %v3949
        %v4865 = vunpack.c.l.b16 %v3950
        %v4866 = vunpack.c.l.b16 %v3951
        %v4867 = vunpack.c.l.b16 %v3952
        %v4868 = vunpack.c.l.b16 %v3953
        %v4869 = vunpack.c.l.b16 %v3954
        %v4870 = vunpack.c.l.b16 %v3955
        %v4871 = vunpack.c.l.b16 %v3956
        %v4872 = vunpack.c.l.b16 %v3957
        %v4873 = vunpack.c.l.b16 %v3958
        %v4874 = vunpack.c.l.b16 %v3959
        %v4875 = vunpack.c.l.b16 %v3960
        %v4876 = vunpack.c.l.b16 %v3961
        %v4877 = vunpack.c.l.b16 %v3962
        %v4878 = vunpack.c.l.b16 %v3963
        %v4879 = vunpack.c.l.b16 %v3964
        %v4880 = vunpack.c.l.b16 %v3965
        %v4881 = vunpack.c.l.b16 %v3966
        %v4882 = vunpack.c.l.b16 %v3967
        %v4883 = vunpack.c.l.b16 %v3968
        %v4884 = vunpack.c.l.b16 %v3969
        %v4885 = vunpack.c.l.b16 %v3970
        %v4886 = vpack.c.b16 %v4863, %v4862
        %v4887 = vpack.c.b16 %v4865, %v4864
        %v4888 = vpack.c.b16 %v4867, %v4866
        %v4889 = vpack.c.b16 %v4869, %v4868
        %v4890 = vpack.c.b16 %v4871, %v4870
        %v4891 = vpack.c.b16 %v4873, %v4872
        %v4892 = vpack.c.b16 %v4875, %v4874
        %v4893 = vpack.c.b16 %v4877, %v4876
        %v4894 = vpack.c.b16 %v4879, %v4878
        %v4895 = vpack.c.b16 %v4881, %v4880
        %v4896 = vpack.c.b16 %v4883, %v4882
        %v4897 = vpack.c.b16 %v4885, %v4884
        %v4911 = vsel %vm410, %v4581, 0
        %v4914 = vsel %vm410, %v4597, 0
        %v4917 = vsel %vm410, %v4613, 0
        %v4920 = vsel %vm410, %v4629, 0
        %v4923 = vsel %vm410, %v4645, 0
        %v4926 = vsel %vm410, %v4661, 0
        %v4929 = vsel %vm410, %v4677, 0
        %v4932 = vsel %vm410, %v4693, 0
        %v4935 = vsel %vm410, %v4709, 0
        %v4938 = vsel %vm410, %v4725, 0
        %v4941 = vsel %vm410, %v4741, 0
        %v4944 = vsel %vm410, %v4757, 0
        %v4947 = vsel %vm410, %v4773, 0
        %v4950 = vsel %vm410, %v4789, 0
        %v4953 = vsel %vm410, %v4805, 0
        %v4956 = vsel %vm410, %v4821, 0
        %4958 = vmatprep.subr.bf16.mxu0 0
        %4959 = vmatpush1.bf16.msra.mxu0 %v4886
        %4960 = vmatprep.subr.bf16.mxu0 0
        %4961 = vmatpush1.bf16.msra.mxu0 %v4887
        %4962 = vmatprep.subr.bf16.mxu0 0
        %4963 = vmatpush1.bf16.msra.mxu0 %v4888
        %4964 = vmatprep.subr.bf16.mxu0 0
        %4965 = vmatpush1.bf16.msra.mxu0 %v4889
        %4966 = vmatprep.subr.bf16.mxu0 0
        %4967 = vmatpush1.bf16.msra.mxu0 %v4890
        %4968 = vmatprep.subr.bf16.mxu0 0
        %4969 = vmatpush1.bf16.msra.mxu0 %v4891
        %4970 = vmatprep.subr.bf16.mxu0 0
        %4971 = vmatpush1.bf16.msra.mxu0 %v4892
        %4972 = vmatprep.subr.bf16.mxu0 0
        %4973 = vmatpush1.bf16.msra.mxu0 %v4893
        %4974 = vmatprep.subr.bf16.mxu0 0
        %4975 = vmatpush1.bf16.msra.mxu0 %v4894
        %4976 = vmatprep.subr.bf16.mxu0 0
        %4977 = vmatpush1.bf16.msra.mxu0 %v4895
        %4978 = vmatprep.subr.bf16.mxu0 0
        %4979 = vmatpush1.bf16.msra.mxu0 %v4896
        %4980 = vmatprep.subr.bf16.mxu0 0
        %4981 = vmatpush1.bf16.msra.mxu0 %v4897
        %4982 = vmatprep.subr.bf16.mxu0 0
        %4983 = vmatpush1.bf16.msra.mxu0 0
        %4984 = vmatprep.subr.bf16.mxu0 0
        %4985 = vmatpush1.bf16.msra.mxu0 0
        %4986 = vmatprep.subr.bf16.mxu0 0
        %4987 = vmatpush1.bf16.msra.mxu0 0
        %4988 = vmatprep.subr.bf16.mxu0 0
        %4989 = vmatpush1.bf16.msra.mxu0 0
        %4990 = vmatprep.mubr.bf16.mxu0 %v4911
        %4991 = vmatmul.mubr.bf16.gmra.mrb[0].mxu0 %v4569
        %v4992 = vpop.f32.mrb[0].mxu0
        %v4993 = vadd.f32 %v4432, %v4992
        %v4994 = vpop.f32.mrb[0].mxu0
        %v4995 = vpop.f32.mrb[0].mxu0
        %v4996 = vadd.f32 %v4435, %v4995
        %v4997 = vpop.f32.mrb[0].mxu0
        %4998 = vmatprep.mubr.bf16.mxu0 %v4914
        %4999 = vmatmul.mubr.bf16.gmra.mrb[0].mxu0 %v4589
        %v5000 = vpop.f32.mrb[0].mxu0
        %v5001 = vadd.f32 %v4440, %v5000
        %v5002 = vpop.f32.mrb[0].mxu0
        %v5003 = vpop.f32.mrb[0].mxu0
        %v5004 = vadd.f32 %v4443, %v5003
        %v5005 = vpop.f32.mrb[0].mxu0
        %5006 = vmatprep.mubr.bf16.mxu0 %v4917
        %5007 = vmatmul.mubr.bf16.gmra.mrb[0].mxu0 %v4605
        %v5008 = vpop.f32.mrb[0].mxu0
        %v5009 = vadd.f32 %v4448, %v5008
        %v5010 = vpop.f32.mrb[0].mxu0
        %v5011 = vpop.f32.mrb[0].mxu0
        %v5012 = vadd.f32 %v4451, %v5011
        %v5013 = vpop.f32.mrb[0].mxu0
        %5014 = vmatprep.mubr.bf16.mxu0 %v4920
        %5015 = vmatmul.mubr.bf16.gmra.mrb[0].mxu0 %v4621
        %v5016 = vpop.f32.mrb[0].mxu0
        %v5017 = vadd.f32 %v4456, %v5016
        %v5018 = vpop.f32.mrb[0].mxu0
        %v5019 = vpop.f32.mrb[0].mxu0
        %v5020 = vadd.f32 %v4459, %v5019
        %v5021 = vpop.f32.mrb[0].mxu0
        %5022 = vmatprep.mubr.bf16.mxu0 %v4923
        %5023 = vmatmul.mubr.bf16.gmra.mrb[0].mxu0 %v4637
        %v5024 = vpop.f32.mrb[0].mxu0
        %v5025 = vadd.f32 %v4464, %v5024
        %v5026 = vpop.f32.mrb[0].mxu0
        %v5027 = vpop.f32.mrb[0].mxu0
        %v5028 = vadd.f32 %v4467, %v5027
        %v5029 = vpop.f32.mrb[0].mxu0
        %5030 = vmatprep.mubr.bf16.mxu0 %v4926
        %5031 = vmatmul.mubr.bf16.gmra.mrb[0].mxu0 %v4653
        %v5032 = vpop.f32.mrb[0].mxu0
        %v5033 = vadd.f32 %v4472, %v5032
        %v5034 = vpop.f32.mrb[0].mxu0
        %v5035 = vpop.f32.mrb[0].mxu0
        %v5036 = vadd.f32 %v4475, %v5035
        %v5037 = vpop.f32.mrb[0].mxu0
        %5038 = vmatprep.mubr.bf16.mxu0 %v4929
        %5039 = vmatmul.mubr.bf16.gmra.mrb[0].mxu0 %v4669
        %v5040 = vpop.f32.mrb[0].mxu0
        %v5041 = vadd.f32 %v4480, %v5040
        %v5042 = vpop.f32.mrb[0].mxu0
        %v5043 = vpop.f32.mrb[0].mxu0
        %v5044 = vadd.f32 %v4483, %v5043
        %v5045 = vpop.f32.mrb[0].mxu0
        %5046 = vmatprep.mubr.bf16.mxu0 %v4932
        %5047 = vmatmul.mubr.bf16.gmra.mrb[0].mxu0 %v4685
        %v5048 = vpop.f32.mrb[0].mxu0
        %v5049 = vadd.f32 %v4488, %v5048
        %v5050 = vpop.f32.mrb[0].mxu0
        %v5051 = vpop.f32.mrb[0].mxu0
        %v5052 = vadd.f32 %v4491, %v5051
        %v5053 = vpop.f32.mrb[0].mxu0
        %5054 = vmatprep.mubr.bf16.mxu0 %v4935
        %5055 = vmatmul.mubr.bf16.gmra.mrb[0].mxu0 %v4701
        %v5056 = vpop.f32.mrb[0].mxu0
        %v5057 = vadd.f32 %v4496, %v5056
        %v5058 = vpop.f32.mrb[0].mxu0
        %v5059 = vpop.f32.mrb[0].mxu0
        %v5060 = vadd.f32 %v4499, %v5059
        %v5061 = vpop.f32.mrb[0].mxu0
        %5062 = vmatprep.mubr.bf16.mxu0 %v4938
        %5063 = vmatmul.mubr.bf16.gmra.mrb[0].mxu0 %v4717
        %v5064 = vpop.f32.mrb[0].mxu0
        %v5065 = vadd.f32 %v4504, %v5064
        %v5066 = vpop.f32.mrb[0].mxu0
        %v5067 = vpop.f32.mrb[0].mxu0
        %v5068 = vadd.f32 %v4507, %v5067
        %v5069 = vpop.f32.mrb[0].mxu0
        %5070 = vmatprep.mubr.bf16.mxu0 %v4941
        %5071 = vmatmul.mubr.bf16.gmra.mrb[0].mxu0 %v4733
        %v5072 = vpop.f32.mrb[0].mxu0
        %v5073 = vadd.f32 %v4512, %v5072
        %v5074 = vpop.f32.mrb[0].mxu0
        %v5075 = vpop.f32.mrb[0].mxu0
        %v5076 = vadd.f32 %v4515, %v5075
        %v5077 = vpop.f32.mrb[0].mxu0
        %5078 = vmatprep.mubr.bf16.mxu0 %v4944
        %5079 = vmatmul.mubr.bf16.gmra.mrb[0].mxu0 %v4749
        %v5080 = vpop.f32.mrb[0].mxu0
        %v5081 = vadd.f32 %v4520, %v5080
        %v5082 = vpop.f32.mrb[0].mxu0
        %v5083 = vpop.f32.mrb[0].mxu0
        %v5084 = vadd.f32 %v4523, %v5083
        %v5085 = vpop.f32.mrb[0].mxu0
        %5086 = vmatprep.mubr.bf16.mxu0 %v4947
        %5087 = vmatmul.mubr.bf16.gmra.mrb[0].mxu0 %v4765
        %v5088 = vpop.f32.mrb[0].mxu0
        %v5089 = vadd.f32 %v4528, %v5088
        %v5090 = vpop.f32.mrb[0].mxu0
        %v5091 = vpop.f32.mrb[0].mxu0
        %v5092 = vadd.f32 %v4531, %v5091
        %v5093 = vpop.f32.mrb[0].mxu0
        %5094 = vmatprep.mubr.bf16.mxu0 %v4950
        %5095 = vmatmul.mubr.bf16.gmra.mrb[0].mxu0 %v4781
        %v5096 = vpop.f32.mrb[0].mxu0
        %v5097 = vadd.f32 %v4536, %v5096
        %v5098 = vpop.f32.mrb[0].mxu0
        %v5099 = vpop.f32.mrb[0].mxu0
        %v5100 = vadd.f32 %v4539, %v5099
        %v5101 = vpop.f32.mrb[0].mxu0
        %5102 = vmatprep.mubr.bf16.mxu0 %v4953
        %5103 = vmatmul.mubr.bf16.gmra.mrb[0].mxu0 %v4797
        %v5104 = vpop.f32.mrb[0].mxu0
        %v5105 = vadd.f32 %v4544, %v5104
        %v5106 = vpop.f32.mrb[0].mxu0
        %v5107 = vpop.f32.mrb[0].mxu0
        %v5108 = vadd.f32 %v4547, %v5107
        %v5109 = vpop.f32.mrb[0].mxu0
        %5110 = vmatprep.mubr.bf16.mxu0 %v4956
        %5111 = vmatmul.mubr.bf16.gmra.mrb[0].mxu0 %v4813
        %v5112 = vpop.f32.mrb[0].mxu0
        %v5113 = vadd.f32 %v4552, %v5112
        %v5114 = vpop.f32.mrb[0].mxu0
        %v5115 = vpop.f32.mrb[0].mxu0
        %v5116 = vadd.f32 %v4555, %v5115
        %v5117 = vpop.f32.mrb[0].mxu0
        %5118 = vdwg.mxu0
        %v5119 = vsel %vm1924, %v4993, 0.0
        %v5120 = vsel %vm1925, %v4996, 0.0
        %v5121 = vsel %vm1926, %v5001, 0.0
        %v5122 = vsel %vm1927, %v5004, 0.0
        %v5123 = vsel %vm1928, %v5009, 0.0
        %v5124 = vsel %vm1929, %v5012, 0.0
        %v5125 = vsel %vm1930, %v5017, 0.0
        %v5126 = vsel %vm1931, %v5020, 0.0
        %v5127 = vsel %vm1932, %v5025, 0.0
        %v5128 = vsel %vm1933, %v5028, 0.0
        %v5129 = vsel %vm1934, %v5033, 0.0
        %v5130 = vsel %vm1935, %v5036, 0.0
        %v5131 = vsel %vm1936, %v5041, 0.0
        %v5132 = vsel %vm1937, %v5044, 0.0
        %v5133 = vsel %vm1938, %v5049, 0.0
        %v5134 = vsel %vm1939, %v5052, 0.0
        %v5135 = vsel %vm1940, %v5057, 0.0
        %v5136 = vsel %vm1941, %v5060, 0.0
        %v5137 = vsel %vm1942, %v5065, 0.0
        %v5138 = vsel %vm1943, %v5068, 0.0
        %v5139 = vsel %vm1944, %v5073, 0.0
        %v5140 = vsel %vm1945, %v5076, 0.0
        %v5141 = vsel %vm1946, %v5081, 0.0
        %v5142 = vsel %vm1947, %v5084, 0.0
        %v5143 = vsel %vm1948, %v5089, 0.0
        %v5144 = vsel %vm1949, %v5092, 0.0
        %v5145 = vsel %vm1950, %v5097, 0.0
        %v5146 = vsel %vm1951, %v5100, 0.0
        %v5147 = vsel %vm1952, %v5105, 0.0
        %v5148 = vsel %vm1953, %v5108, 0.0
        %v5149 = vsel %vm1954, %v5113, 0.0
        %v5150 = vsel %vm1955, %v5116, 0.0
        %v5151 = vadd.f32 %v3846, %v5119
        %v5152 = vadd.f32 %v3847, %v5120
        %v5153 = vadd.f32 %v3848, %v5121
        %v5154 = vadd.f32 %v3849, %v5122
        %v5155 = vadd.f32 %v3850, %v5123
        %v5156 = vadd.f32 %v3851, %v5124
        %v5157 = vadd.f32 %v3852, %v5125
        %v5158 = vadd.f32 %v3853, %v5126
        %v5159 = vadd.f32 %v3854, %v5127
        %v5160 = vadd.f32 %v3855, %v5128
        %v5161 = vadd.f32 %v3856, %v5129
        %v5162 = vadd.f32 %v3857, %v5130
        %v5163 = vadd.f32 %v3858, %v5131
        %v5164 = vadd.f32 %v3859, %v5132
        %v5165 = vadd.f32 %v3860, %v5133
        %v5166 = vadd.f32 %v3861, %v5134
        %v5167 = vadd.f32 %v3862, %v5135
        %v5168 = vadd.f32 %v3863, %v5136
        %v5169 = vadd.f32 %v3864, %v5137
        %v5170 = vadd.f32 %v3865, %v5138
        %v5171 = vadd.f32 %v3866, %v5139
        %v5172 = vadd.f32 %v3867, %v5140
        %v5173 = vadd.f32 %v3868, %v5141
        %v5174 = vadd.f32 %v3869, %v5142
        %v5175 = vadd.f32 %v3870, %v5143
        %v5176 = vadd.f32 %v3871, %v5144
        %v5177 = vadd.f32 %v3872, %v5145
        %v5178 = vadd.f32 %v3873, %v5146
        %v5179 = vadd.f32 %v3874, %v5147
        %v5180 = vadd.f32 %v3875, %v5148
        %v5181 = vadd.f32 %v3876, %v5149
        %v5182 = vadd.f32 %v3877, %v5150
        %v5183 = vld [vmem:[#allocation2 + $0x10] sm:$0x80]
        %v5184 = vld [vmem:[#allocation2 + $0x18] sm:$0x80]
        %v5185 = vld [vmem:[#allocation2 + $0x110] sm:$0xff]
        %v5186 = vld [vmem:[#allocation2 + $0x118] sm:$0xff]
        %v5187 = vld [vmem:[#allocation3 + $0x10] sm:$0x80]
        %v5188 = vld [vmem:[#allocation3 + $0x18] sm:$0x80]
        %v5189 = vld [vmem:[#allocation3 + $0x110] sm:$0xff]
        %v5190 = vld [vmem:[#allocation3 + $0x118] sm:$0xff]
        %s5191 = scalar_lea.vmem [#allocation4], 288
        %v5192 = vld [vmem:[%s5191] sm:$0xf]
        %v5193 = vld [vmem:[%s5191 + $0x4] sm:$0xf]
        %v5194 = vld [vmem:[%s5191 + $0x8] sm:$0xf]
        %v5195 = vld [vmem:[%s5191 + $0xc] sm:$0xf]
        %v5196 = vld [vmem:[%s5191 + $0x10] sm:$0xf]
        %v5197 = vld [vmem:[%s5191 + $0x14] sm:$0xf]
        %v5198 = vld [vmem:[%s5191 + $0x18] sm:$0xf]
        %v5199 = vld [vmem:[%s5191 + $0x1c] sm:$0xf]
        %v5200 = vld [vmem:[%s5191 + $0x20] sm:$0xf]
        %v5201 = vld [vmem:[%s5191 + $0x24] sm:$0xf]
        %v5202 = vld [vmem:[%s5191 + $0x28] sm:$0xf]
        %v5203 = vld [vmem:[%s5191 + $0x2c] sm:$0xf]
        %v5204 = vld [vmem:[%s5191 + $0x30] sm:$0xf]
        %v5205 = vld [vmem:[%s5191 + $0x34] sm:$0xf]
        %v5206 = vld [vmem:[%s5191 + $0x38] sm:$0xf]
        %v5207 = vld [vmem:[%s5191 + $0x3c] sm:$0xf]
        %v5208 = vld [vmem:[%s5191 + $0x40] sm:$0xf]
        %v5209 = vld [vmem:[%s5191 + $0x44] sm:$0xf]
        %v5210 = vld [vmem:[%s5191 + $0x48] sm:$0xf]
        %v5211 = vld [vmem:[%s5191 + $0x4c] sm:$0xf]
        %v5212 = vld [vmem:[%s5191 + $0x50] sm:$0xf]
        %v5213 = vld [vmem:[%s5191 + $0x54] sm:$0xf]
        %v5214 = vld [vmem:[%s5191 + $0x58] sm:$0xf]
        %v5215 = vld [vmem:[%s5191 + $0x5c] sm:$0xf]
        %s5216 = scalar_lea.vmem [#allocation7], 288
        %v5217 = vld [vmem:[%s5216] sm:$0xf]
        %v5218 = vld [vmem:[%s5216 + $0x4] sm:$0xf]
        %v5219 = vld [vmem:[%s5216 + $0x8] sm:$0xf]
        %v5220 = vld [vmem:[%s5216 + $0xc] sm:$0xf]
        %v5221 = vld [vmem:[%s5216 + $0x10] sm:$0xf]
        %v5222 = vld [vmem:[%s5216 + $0x14] sm:$0xf]
        %v5223 = vld [vmem:[%s5216 + $0x18] sm:$0xf]
        %v5224 = vld [vmem:[%s5216 + $0x1c] sm:$0xf]
        %v5225 = vld [vmem:[%s5216 + $0x20] sm:$0xf]
        %v5226 = vld [vmem:[%s5216 + $0x24] sm:$0xf]
        %v5227 = vld [vmem:[%s5216 + $0x28] sm:$0xf]
        %v5228 = vld [vmem:[%s5216 + $0x2c] sm:$0xf]
        %v5229 = vld [vmem:[%s5216 + $0x30] sm:$0xf]
        %v5230 = vld [vmem:[%s5216 + $0x34] sm:$0xf]
        %v5231 = vld [vmem:[%s5216 + $0x38] sm:$0xf]
        %v5232 = vld [vmem:[%s5216 + $0x3c] sm:$0xf]
        %v5233 = vld [vmem:[%s5216 + $0x40] sm:$0xf]
        %v5234 = vld [vmem:[%s5216 + $0x44] sm:$0xf]
        %v5235 = vld [vmem:[%s5216 + $0x48] sm:$0xf]
        %v5236 = vld [vmem:[%s5216 + $0x4c] sm:$0xf]
        %v5237 = vld [vmem:[%s5216 + $0x50] sm:$0xf]
        %v5238 = vld [vmem:[%s5216 + $0x54] sm:$0xf]
        %v5239 = vld [vmem:[%s5216 + $0x58] sm:$0xf]
        %v5240 = vld [vmem:[%s5216 + $0x5c] sm:$0xf]
        %v5242 = vshrl.u32 %v5187, 16
        %v5244 = vrot.slane %v5242, 7
        %v5245 = vrot.slane %v4021, 7
        %v5246 = vor.u32 %v5245, %v4005
        %v5247 = vsel %vm2079, %v5244, %v5246
        %v5249 = vshrl.u32 %v5188, 16
        %v5251 = vrot.slane %v5249, 7
        %v5252 = vrot.slane %v4029, 7
        %v5253 = vor.u32 %v5252, %v4017
        %v5254 = vsel %vm2079, %v5251, %v5253
        %v5255 = vrot.slane %v4037, 7
        %v5256 = vor.u32 %v5255, %v4025
        %v5257 = vsel %vm2079, %v5245, %v5256
        %v5258 = vrot.slane %v4045, 7
        %v5259 = vor.u32 %v5258, %v4033
        %v5260 = vsel %vm2079, %v5252, %v5259
        %v5261 = vrot.slane %v4053, 7
        %v5262 = vor.u32 %v5261, %v4041
        %v5263 = vsel %vm2079, %v5255, %v5262
        %v5264 = vrot.slane %v4061, 7
        %v5265 = vor.u32 %v5264, %v4049
        %v5266 = vsel %vm2079, %v5258, %v5265
        %v5267 = vrot.slane %v4069, 7
        %v5268 = vor.u32 %v5267, %v4057
        %v5269 = vsel %vm2079, %v5261, %v5268
        %v5270 = vrot.slane %v4077, 7
        %v5271 = vor.u32 %v5270, %v4065
        %v5272 = vsel %vm2079, %v5264, %v5271
        %v5273 = vrot.slane %v4085, 7
        %v5274 = vor.u32 %v5273, %v4073
        %v5275 = vsel %vm2079, %v5267, %v5274
        %v5276 = vrot.slane %v4093, 7
        %v5277 = vor.u32 %v5276, %v4081
        %v5278 = vsel %vm2079, %v5270, %v5277
        %v5279 = vrot.slane %v4101, 7
        %v5280 = vor.u32 %v5279, %v4089
        %v5281 = vsel %vm2079, %v5273, %v5280
        %v5282 = vrot.slane %v4109, 7
        %v5283 = vor.u32 %v5282, %v4097
        %v5284 = vsel %vm2079, %v5276, %v5283
        %v5285 = vrot.slane %v4117, 7
        %v5286 = vor.u32 %v5285, %v4105
        %v5287 = vsel %vm2079, %v5279, %v5286
        %v5288 = vrot.slane %v4125, 7
        %v5289 = vor.u32 %v5288, %v4113
        %v5290 = vsel %vm2079, %v5282, %v5289
        %v5291 = vrot.slane %v4133, 7
        %v5292 = vor.u32 %v5291, %v4121
        %v5293 = vsel %vm2079, %v5285, %v5292
        %v5294 = vrot.slane %v4141, 7
        %v5295 = vor.u32 %v5294, %v4129
        %v5296 = vsel %vm2079, %v5288, %v5295
        %v5297 = vrot.slane %v4149, 7
        %v5298 = vor.u32 %v5297, %v4137
        %v5299 = vsel %vm2079, %v5291, %v5298
        %v5300 = vrot.slane %v4157, 7
        %v5301 = vor.u32 %v5300, %v4145
        %v5302 = vsel %vm2079, %v5294, %v5301
        %v5303 = vrot.slane %v4165, 7
        %v5304 = vor.u32 %v5303, %v4153
        %v5305 = vsel %vm2079, %v5297, %v5304
        %v5306 = vrot.slane %v4173, 7
        %v5307 = vor.u32 %v5306, %v4161
        %v5308 = vsel %vm2079, %v5300, %v5307
        %v5309 = vrot.slane %v4181, 7
        %v5310 = vor.u32 %v5309, %v4169
        %v5311 = vsel %vm2079, %v5303, %v5310
        %v5312 = vrot.slane %v4189, 7
        %v5313 = vor.u32 %v5312, %v4177
        %v5314 = vsel %vm2079, %v5306, %v5313
        %v5315 = vrot.slane %v4197, 7
        %v5316 = vor.u32 %v5315, %v4185
        %v5317 = vsel %vm2079, %v5309, %v5316
        %v5318 = vrot.slane %v4205, 7
        %v5319 = vor.u32 %v5318, %v4193
        %v5320 = vsel %vm2079, %v5312, %v5319
        %v5321 = vrot.slane %v4213, 7
        %v5322 = vor.u32 %v5321, %v4201
        %v5323 = vsel %vm2079, %v5315, %v5322
        %v5324 = vrot.slane %v4221, 7
        %v5325 = vor.u32 %v5324, %v4209
        %v5326 = vsel %vm2079, %v5318, %v5325
        %v5327 = vrot.slane %v4229, 7
        %v5328 = vor.u32 %v5327, %v4217
        %v5329 = vsel %vm2079, %v5321, %v5328
        %v5330 = vrot.slane %v4237, 7
        %v5331 = vor.u32 %v5330, %v4225
        %v5332 = vsel %vm2079, %v5324, %v5331
        %v5333 = vrot.slane %v4245, 7
        %v5334 = vor.u32 %v5333, %v4233
        %v5335 = vsel %vm2079, %v5327, %v5334
        %v5336 = vrot.slane %v4253, 7
        %v5337 = vor.u32 %v5336, %v4241
        %v5338 = vsel %vm2079, %v5330, %v5337
        %v5340 = vshrl.u32 %v5189, 16
        %v5342 = vrot.slane %v5340, 7
        %v5343 = vshll.u32 %v5189, 16
        %v5345 = vor.u32 %v5342, %v5343
        %v5346 = vsel %vm2079, %v5333, %v5345
        %v5348 = vshrl.u32 %v5190, 16
        %v5350 = vrot.slane %v5348, 7
        %v5351 = vshll.u32 %v5190, 16
        %v5353 = vor.u32 %v5350, %v5351
        %v5354 = vsel %vm2079, %v5336, %v5353
        %v5395 = vunpack.c.l.b16 %v5217
        %v5396 = vunpack.c.l.b16 %v5218
        %v5397 = vunpack.c.l.b16 %v5219
        %v5398 = vunpack.c.l.b16 %v5220
        %v5399 = vunpack.c.l.b16 %v5221
        %v5400 = vunpack.c.l.b16 %v5222
        %v5401 = vunpack.c.l.b16 %v5223
        %v5402 = vunpack.c.l.b16 %v5224
        %v5403 = vunpack.c.l.b16 %v5225
        %v5404 = vunpack.c.l.b16 %v5226
        %v5405 = vunpack.c.l.b16 %v5227
        %v5406 = vunpack.c.l.b16 %v5228
        %v5407 = vunpack.c.l.b16 %v5229
        %v5408 = vunpack.c.l.b16 %v5230
        %v5409 = vunpack.c.l.b16 %v5231
        %v5410 = vunpack.c.l.b16 %v5232
        %v5411 = vunpack.c.l.b16 %v5233
        %v5412 = vunpack.c.l.b16 %v5234
        %v5413 = vunpack.c.l.b16 %v5235
        %v5414 = vunpack.c.l.b16 %v5236
        %v5415 = vunpack.c.l.b16 %v5237
        %v5416 = vunpack.c.l.b16 %v5238
        %v5417 = vunpack.c.l.b16 %v5239
        %v5418 = vunpack.c.l.b16 %v5240
        %v5419 = vpack.c.b16 %v5396, %v5395
        %v5420 = vpack.c.b16 %v5398, %v5397
        %v5421 = vpack.c.b16 %v5400, %v5399
        %v5422 = vpack.c.b16 %v5402, %v5401
        %v5423 = vpack.c.b16 %v5404, %v5403
        %v5424 = vpack.c.b16 %v5406, %v5405
        %v5425 = vpack.c.b16 %v5408, %v5407
        %v5426 = vpack.c.b16 %v5410, %v5409
        %v5427 = vpack.c.b16 %v5412, %v5411
        %v5428 = vpack.c.b16 %v5414, %v5413
        %v5429 = vpack.c.b16 %v5416, %v5415
        %v5430 = vpack.c.b16 %v5418, %v5417
        %v5444 = vsel %vm410, %v5254, 0
        %v5447 = vsel %vm410, %v5260, 0
        %v5450 = vsel %vm410, %v5266, 0
        %v5453 = vsel %vm410, %v5272, 0
        %v5456 = vsel %vm410, %v5278, 0
        %v5459 = vsel %vm410, %v5284, 0
        %v5462 = vsel %vm410, %v5290, 0
        %v5465 = vsel %vm410, %v5296, 0
        %v5468 = vsel %vm410, %v5302, 0
        %v5471 = vsel %vm410, %v5308, 0
        %v5474 = vsel %vm410, %v5314, 0
        %v5477 = vsel %vm410, %v5320, 0
        %v5480 = vsel %vm410, %v5326, 0
        %v5483 = vsel %vm410, %v5332, 0
        %v5486 = vsel %vm410, %v5338, 0
        %v5489 = vsel %vm410, %v5354, 0
        %5491 = vmatprep.subr.bf16.mxu0 0
        %5492 = vmatpush1.bf16.msra.mxu0 %v5419
        %5493 = vmatprep.subr.bf16.mxu0 0
        %5494 = vmatpush1.bf16.msra.mxu0 %v5420
        %5495 = vmatprep.subr.bf16.mxu0 0
        %5496 = vmatpush1.bf16.msra.mxu0 %v5421
        %5497 = vmatprep.subr.bf16.mxu0 0
        %5498 = vmatpush1.bf16.msra.mxu0 %v5422
        %5499 = vmatprep.subr.bf16.mxu0 0
        %5500 = vmatpush1.bf16.msra.mxu0 %v5423
        %5501 = vmatprep.subr.bf16.mxu0 0
        %5502 = vmatpush1.bf16.msra.mxu0 %v5424
        %5503 = vmatprep.subr.bf16.mxu0 0
        %5504 = vmatpush1.bf16.msra.mxu0 %v5425
        %5505 = vmatprep.subr.bf16.mxu0 0
        %5506 = vmatpush1.bf16.msra.mxu0 %v5426
        %5507 = vmatprep.subr.bf16.mxu0 0
        %5508 = vmatpush1.bf16.msra.mxu0 %v5427
        %5509 = vmatprep.subr.bf16.mxu0 0
        %5510 = vmatpush1.bf16.msra.mxu0 %v5428
        %5511 = vmatprep.subr.bf16.mxu0 0
        %5512 = vmatpush1.bf16.msra.mxu0 %v5429
        %5513 = vmatprep.subr.bf16.mxu0 0
        %5514 = vmatpush1.bf16.msra.mxu0 %v5430
        %5515 = vmatprep.subr.bf16.mxu0 0
        %5516 = vmatpush1.bf16.msra.mxu0 0
        %5517 = vmatprep.subr.bf16.mxu0 0
        %5518 = vmatpush1.bf16.msra.mxu0 0
        %5519 = vmatprep.subr.bf16.mxu0 0
        %5520 = vmatpush1.bf16.msra.mxu0 0
        %5521 = vmatprep.subr.bf16.mxu0 0
        %5522 = vmatpush1.bf16.msra.mxu0 0
        %5523 = vmatprep.mubr.bf16.mxu0 %v5444
        %5524 = vmatmul.mubr.bf16.gmra.mrb[0].mxu0 %v5247
        %v5525 = vpop.f32.mrb[0].mxu0
        %v5526 = vadd.f32 0.0, %v5525
        %v5527 = vpop.f32.mrb[0].mxu0
        %v5528 = vpop.f32.mrb[0].mxu0
        %v5529 = vadd.f32 0.0, %v5528
        %v5530 = vpop.f32.mrb[0].mxu0
        %5531 = vmatprep.mubr.bf16.mxu0 %v5447
        %5532 = vmatmul.mubr.bf16.gmra.mrb[0].mxu0 %v5257
        %v5533 = vpop.f32.mrb[0].mxu0
        %v5534 = vadd.f32 0.0, %v5533
        %v5535 = vpop.f32.mrb[0].mxu0
        %v5536 = vpop.f32.mrb[0].mxu0
        %v5537 = vadd.f32 0.0, %v5536
        %v5538 = vpop.f32.mrb[0].mxu0
        %5539 = vmatprep.mubr.bf16.mxu0 %v5450
        %5540 = vmatmul.mubr.bf16.gmra.mrb[0].mxu0 %v5263
        %v5541 = vpop.f32.mrb[0].mxu0
        %v5542 = vadd.f32 0.0, %v5541
        %v5543 = vpop.f32.mrb[0].mxu0
        %v5544 = vpop.f32.mrb[0].mxu0
        %v5545 = vadd.f32 0.0, %v5544
        %v5546 = vpop.f32.mrb[0].mxu0
        %5547 = vmatprep.mubr.bf16.mxu0 %v5453
        %5548 = vmatmul.mubr.bf16.gmra.mrb[0].mxu0 %v5269
        %v5549 = vpop.f32.mrb[0].mxu0
        %v5550 = vadd.f32 0.0, %v5549
        %v5551 = vpop.f32.mrb[0].mxu0
        %v5552 = vpop.f32.mrb[0].mxu0
        %v5553 = vadd.f32 0.0, %v5552
        %v5554 = vpop.f32.mrb[0].mxu0
        %5555 = vmatprep.mubr.bf16.mxu0 %v5456
        %5556 = vmatmul.mubr.bf16.gmra.mrb[0].mxu0 %v5275
        %v5557 = vpop.f32.mrb[0].mxu0
        %v5558 = vadd.f32 0.0, %v5557
        %v5559 = vpop.f32.mrb[0].mxu0
        %v5560 = vpop.f32.mrb[0].mxu0
        %v5561 = vadd.f32 0.0, %v5560
        %v5562 = vpop.f32.mrb[0].mxu0
        %5563 = vmatprep.mubr.bf16.mxu0 %v5459
        %5564 = vmatmul.mubr.bf16.gmra.mrb[0].mxu0 %v5281
        %v5565 = vpop.f32.mrb[0].mxu0
        %v5566 = vadd.f32 0.0, %v5565
        %v5567 = vpop.f32.mrb[0].mxu0
        %v5568 = vpop.f32.mrb[0].mxu0
        %v5569 = vadd.f32 0.0, %v5568
        %v5570 = vpop.f32.mrb[0].mxu0
        %5571 = vmatprep.mubr.bf16.mxu0 %v5462
        %5572 = vmatmul.mubr.bf16.gmra.mrb[0].mxu0 %v5287
        %v5573 = vpop.f32.mrb[0].mxu0
        %v5574 = vadd.f32 0.0, %v5573
        %v5575 = vpop.f32.mrb[0].mxu0
        %v5576 = vpop.f32.mrb[0].mxu0
        %v5577 = vadd.f32 0.0, %v5576
        %v5578 = vpop.f32.mrb[0].mxu0
        %5579 = vmatprep.mubr.bf16.mxu0 %v5465
        %5580 = vmatmul.mubr.bf16.gmra.mrb[0].mxu0 %v5293
        %v5581 = vpop.f32.mrb[0].mxu0
        %v5582 = vadd.f32 0.0, %v5581
        %v5583 = vpop.f32.mrb[0].mxu0
        %v5584 = vpop.f32.mrb[0].mxu0
        %v5585 = vadd.f32 0.0, %v5584
        %v5586 = vpop.f32.mrb[0].mxu0
        %5587 = vmatprep.mubr.bf16.mxu0 %v5468
        %5588 = vmatmul.mubr.bf16.gmra.mrb[0].mxu0 %v5299
        %v5589 = vpop.f32.mrb[0].mxu0
        %v5590 = vadd.f32 0.0, %v5589
        %v5591 = vpop.f32.mrb[0].mxu0
        %v5592 = vpop.f32.mrb[0].mxu0
        %v5593 = vadd.f32 0.0, %v5592
        %v5594 = vpop.f32.mrb[0].mxu0
        %5595 = vmatprep.mubr.bf16.mxu0 %v5471
        %5596 = vmatmul.mubr.bf16.gmra.mrb[0].mxu0 %v5305
        %v5597 = vpop.f32.mrb[0].mxu0
        %v5598 = vadd.f32 0.0, %v5597
        %v5599 = vpop.f32.mrb[0].mxu0
        %v5600 = vpop.f32.mrb[0].mxu0
        %v5601 = vadd.f32 0.0, %v5600
        %v5602 = vpop.f32.mrb[0].mxu0
        %5603 = vmatprep.mubr.bf16.mxu0 %v5474
        %5604 = vmatmul.mubr.bf16.gmra.mrb[0].mxu0 %v5311
        %v5605 = vpop.f32.mrb[0].mxu0
        %v5606 = vadd.f32 0.0, %v5605
        %v5607 = vpop.f32.mrb[0].mxu0
        %v5608 = vpop.f32.mrb[0].mxu0
        %v5609 = vadd.f32 0.0, %v5608
        %v5610 = vpop.f32.mrb[0].mxu0
        %5611 = vmatprep.mubr.bf16.mxu0 %v5477
        %5612 = vmatmul.mubr.bf16.gmra.mrb[0].mxu0 %v5317
        %v5613 = vpop.f32.mrb[0].mxu0
        %v5614 = vadd.f32 0.0, %v5613
        %v5615 = vpop.f32.mrb[0].mxu0
        %v5616 = vpop.f32.mrb[0].mxu0
        %v5617 = vadd.f32 0.0, %v5616
        %v5618 = vpop.f32.mrb[0].mxu0
        %5619 = vmatprep.mubr.bf16.mxu0 %v5480
        %5620 = vmatmul.mubr.bf16.gmra.mrb[0].mxu0 %v5323
        %v5621 = vpop.f32.mrb[0].mxu0
        %v5622 = vadd.f32 0.0, %v5621
        %v5623 = vpop.f32.mrb[0].mxu0
        %v5624 = vpop.f32.mrb[0].mxu0
        %v5625 = vadd.f32 0.0, %v5624
        %v5626 = vpop.f32.mrb[0].mxu0
        %5627 = vmatprep.mubr.bf16.mxu0 %v5483
        %5628 = vmatmul.mubr.bf16.gmra.mrb[0].mxu0 %v5329
        %v5629 = vpop.f32.mrb[0].mxu0
        %v5630 = vadd.f32 0.0, %v5629
        %v5631 = vpop.f32.mrb[0].mxu0
        %v5632 = vpop.f32.mrb[0].mxu0
        %v5633 = vadd.f32 0.0, %v5632
        %v5634 = vpop.f32.mrb[0].mxu0
        %5635 = vmatprep.mubr.bf16.mxu0 %v5486
        %5636 = vmatmul.mubr.bf16.gmra.mrb[0].mxu0 %v5335
        %v5637 = vpop.f32.mrb[0].mxu0
        %v5638 = vadd.f32 0.0, %v5637
        %v5639 = vpop.f32.mrb[0].mxu0
        %v5640 = vpop.f32.mrb[0].mxu0
        %v5641 = vadd.f32 0.0, %v5640
        %v5642 = vpop.f32.mrb[0].mxu0
        %5643 = vmatprep.mubr.bf16.mxu0 %v5489
        %5644 = vmatmul.mubr.bf16.gmra.mrb[0].mxu0 %v5346
        %v5645 = vpop.f32.mrb[0].mxu0
        %v5646 = vadd.f32 0.0, %v5645
        %v5647 = vpop.f32.mrb[0].mxu0
        %v5648 = vpop.f32.mrb[0].mxu0
        %v5649 = vadd.f32 0.0, %v5648
        %v5650 = vpop.f32.mrb[0].mxu0
        %5651 = vdwg.mxu0
        %v5653 = vshrl.u32 %v5183, 16
        %v5655 = vrot.slane %v5653, 7
        %v5656 = vrot.slane %v4582, 7
        %v5657 = vor.u32 %v5656, %v4566
        %v5658 = vsel %vm2079, %v5655, %v5657
        %v5660 = vshrl.u32 %v5184, 16
        %v5662 = vrot.slane %v5660, 7
        %v5663 = vrot.slane %v4590, 7
        %v5664 = vor.u32 %v5663, %v4578
        %v5665 = vsel %vm2079, %v5662, %v5664
        %v5666 = vrot.slane %v4598, 7
        %v5667 = vor.u32 %v5666, %v4586
        %v5668 = vsel %vm2079, %v5656, %v5667
        %v5669 = vrot.slane %v4606, 7
        %v5670 = vor.u32 %v5669, %v4594
        %v5671 = vsel %vm2079, %v5663, %v5670
        %v5672 = vrot.slane %v4614, 7
        %v5673 = vor.u32 %v5672, %v4602
        %v5674 = vsel %vm2079, %v5666, %v5673
        %v5675 = vrot.slane %v4622, 7
        %v5676 = vor.u32 %v5675, %v4610
        %v5677 = vsel %vm2079, %v5669, %v5676
        %v5678 = vrot.slane %v4630, 7
        %v5679 = vor.u32 %v5678, %v4618
        %v5680 = vsel %vm2079, %v5672, %v5679
        %v5681 = vrot.slane %v4638, 7
        %v5682 = vor.u32 %v5681, %v4626
        %v5683 = vsel %vm2079, %v5675, %v5682
        %v5684 = vrot.slane %v4646, 7
        %v5685 = vor.u32 %v5684, %v4634
        %v5686 = vsel %vm2079, %v5678, %v5685
        %v5687 = vrot.slane %v4654, 7
        %v5688 = vor.u32 %v5687, %v4642
        %v5689 = vsel %vm2079, %v5681, %v5688
        %v5690 = vrot.slane %v4662, 7
        %v5691 = vor.u32 %v5690, %v4650
        %v5692 = vsel %vm2079, %v5684, %v5691
        %v5693 = vrot.slane %v4670, 7
        %v5694 = vor.u32 %v5693, %v4658
        %v5695 = vsel %vm2079, %v5687, %v5694
        %v5696 = vrot.slane %v4678, 7
        %v5697 = vor.u32 %v5696, %v4666
        %v5698 = vsel %vm2079, %v5690, %v5697
        %v5699 = vrot.slane %v4686, 7
        %v5700 = vor.u32 %v5699, %v4674
        %v5701 = vsel %vm2079, %v5693, %v5700
        %v5702 = vrot.slane %v4694, 7
        %v5703 = vor.u32 %v5702, %v4682
        %v5704 = vsel %vm2079, %v5696, %v5703
        %v5705 = vrot.slane %v4702, 7
        %v5706 = vor.u32 %v5705, %v4690
        %v5707 = vsel %vm2079, %v5699, %v5706
        %v5708 = vrot.slane %v4710, 7
        %v5709 = vor.u32 %v5708, %v4698
        %v5710 = vsel %vm2079, %v5702, %v5709
        %v5711 = vrot.slane %v4718, 7
        %v5712 = vor.u32 %v5711, %v4706
        %v5713 = vsel %vm2079, %v5705, %v5712
        %v5714 = vrot.slane %v4726, 7
        %v5715 = vor.u32 %v5714, %v4714
        %v5716 = vsel %vm2079, %v5708, %v5715
        %v5717 = vrot.slane %v4734, 7
        %v5718 = vor.u32 %v5717, %v4722
        %v5719 = vsel %vm2079, %v5711, %v5718
        %v5720 = vrot.slane %v4742, 7
        %v5721 = vor.u32 %v5720, %v4730
        %v5722 = vsel %vm2079, %v5714, %v5721
        %v5723 = vrot.slane %v4750, 7
        %v5724 = vor.u32 %v5723, %v4738
        %v5725 = vsel %vm2079, %v5717, %v5724
        %v5726 = vrot.slane %v4758, 7
        %v5727 = vor.u32 %v5726, %v4746
        %v5728 = vsel %vm2079, %v5720, %v5727
        %v5729 = vrot.slane %v4766, 7
        %v5730 = vor.u32 %v5729, %v4754
        %v5731 = vsel %vm2079, %v5723, %v5730
        %v5732 = vrot.slane %v4774, 7
        %v5733 = vor.u32 %v5732, %v4762
        %v5734 = vsel %vm2079, %v5726, %v5733
        %v5735 = vrot.slane %v4782, 7
        %v5736 = vor.u32 %v5735, %v4770
        %v5737 = vsel %vm2079, %v5729, %v5736
        %v5738 = vrot.slane %v4790, 7
        %v5739 = vor.u32 %v5738, %v4778
        %v5740 = vsel %vm2079, %v5732, %v5739
        %v5741 = vrot.slane %v4798, 7
        %v5742 = vor.u32 %v5741, %v4786
        %v5743 = vsel %vm2079, %v5735, %v5742
        %v5744 = vrot.slane %v4806, 7
        %v5745 = vor.u32 %v5744, %v4794
        %v5746 = vsel %vm2079, %v5738, %v5745
        %v5747 = vrot.slane %v4814, 7
        %v5748 = vor.u32 %v5747, %v4802
        %v5749 = vsel %vm2079, %v5741, %v5748
        %v5751 = vshrl.u32 %v5185, 16
        %v5753 = vrot.slane %v5751, 7
        %v5754 = vshll.u32 %v5185, 16
        %v5756 = vor.u32 %v5753, %v5754
        %v5757 = vsel %vm2079, %v5744, %v5756
        %v5759 = vshrl.u32 %v5186, 16
        %v5761 = vrot.slane %v5759, 7
        %v5762 = vshll.u32 %v5186, 16
        %v5764 = vor.u32 %v5761, %v5762
        %v5765 = vsel %vm2079, %v5747, %v5764
        %v5806 = vunpack.c.l.b16 %v5192
        %v5807 = vunpack.c.l.b16 %v5193
        %v5808 = vunpack.c.l.b16 %v5194
        %v5809 = vunpack.c.l.b16 %v5195
        %v5810 = vunpack.c.l.b16 %v5196
        %v5811 = vunpack.c.l.b16 %v5197
        %v5812 = vunpack.c.l.b16 %v5198
        %v5813 = vunpack.c.l.b16 %v5199
        %v5814 = vunpack.c.l.b16 %v5200
        %v5815 = vunpack.c.l.b16 %v5201
        %v5816 = vunpack.c.l.b16 %v5202
        %v5817 = vunpack.c.l.b16 %v5203
        %v5818 = vunpack.c.l.b16 %v5204
        %v5819 = vunpack.c.l.b16 %v5205
        %v5820 = vunpack.c.l.b16 %v5206
        %v5821 = vunpack.c.l.b16 %v5207
        %v5822 = vunpack.c.l.b16 %v5208
        %v5823 = vunpack.c.l.b16 %v5209
        %v5824 = vunpack.c.l.b16 %v5210
        %v5825 = vunpack.c.l.b16 %v5211
        %v5826 = vunpack.c.l.b16 %v5212
        %v5827 = vunpack.c.l.b16 %v5213
        %v5828 = vunpack.c.l.b16 %v5214
        %v5829 = vunpack.c.l.b16 %v5215
        %v5830 = vpack.c.b16 %v5807, %v5806
        %v5831 = vpack.c.b16 %v5809, %v5808
        %v5832 = vpack.c.b16 %v5811, %v5810
        %v5833 = vpack.c.b16 %v5813, %v5812
        %v5834 = vpack.c.b16 %v5815, %v5814
        %v5835 = vpack.c.b16 %v5817, %v5816
        %v5836 = vpack.c.b16 %v5819, %v5818
        %v5837 = vpack.c.b16 %v5821, %v5820
        %v5838 = vpack.c.b16 %v5823, %v5822
        %v5839 = vpack.c.b16 %v5825, %v5824
        %v5840 = vpack.c.b16 %v5827, %v5826
        %v5841 = vpack.c.b16 %v5829, %v5828
        %v5855 = vsel %vm410, %v5665, 0
        %v5858 = vsel %vm410, %v5671, 0
        %v5861 = vsel %vm410, %v5677, 0
        %v5864 = vsel %vm410, %v5683, 0
        %v5867 = vsel %vm410, %v5689, 0
        %v5870 = vsel %vm410, %v5695, 0
        %v5873 = vsel %vm410, %v5701, 0
        %v5876 = vsel %vm410, %v5707, 0
        %v5879 = vsel %vm410, %v5713, 0
        %v5882 = vsel %vm410, %v5719, 0
        %v5885 = vsel %vm410, %v5725, 0
        %v5888 = vsel %vm410, %v5731, 0
        %v5891 = vsel %vm410, %v5737, 0
        %v5894 = vsel %vm410, %v5743, 0
        %v5897 = vsel %vm410, %v5749, 0
        %v5900 = vsel %vm410, %v5765, 0
        %5902 = vmatprep.subr.bf16.mxu0 0
        %5903 = vmatpush1.bf16.msra.mxu0 %v5830
        %5904 = vmatprep.subr.bf16.mxu0 0
        %5905 = vmatpush1.bf16.msra.mxu0 %v5831
        %5906 = vmatprep.subr.bf16.mxu0 0
        %5907 = vmatpush1.bf16.msra.mxu0 %v5832
        %5908 = vmatprep.subr.bf16.mxu0 0
        %5909 = vmatpush1.bf16.msra.mxu0 %v5833
        %5910 = vmatprep.subr.bf16.mxu0 0
        %5911 = vmatpush1.bf16.msra.mxu0 %v5834
        %5912 = vmatprep.subr.bf16.mxu0 0
        %5913 = vmatpush1.bf16.msra.mxu0 %v5835
        %5914 = vmatprep.subr.bf16.mxu0 0
        %5915 = vmatpush1.bf16.msra.mxu0 %v5836
        %5916 = vmatprep.subr.bf16.mxu0 0
        %5917 = vmatpush1.bf16.msra.mxu0 %v5837
        %5918 = vmatprep.subr.bf16.mxu0 0
        %5919 = vmatpush1.bf16.msra.mxu0 %v5838
        %5920 = vmatprep.subr.bf16.mxu0 0
        %5921 = vmatpush1.bf16.msra.mxu0 %v5839
        %5922 = vmatprep.subr.bf16.mxu0 0
        %5923 = vmatpush1.bf16.msra.mxu0 %v5840
        %5924 = vmatprep.subr.bf16.mxu0 0
        %5925 = vmatpush1.bf16.msra.mxu0 %v5841
        %5926 = vmatprep.subr.bf16.mxu0 0
        %5927 = vmatpush1.bf16.msra.mxu0 0
        %5928 = vmatprep.subr.bf16.mxu0 0
        %5929 = vmatpush1.bf16.msra.mxu0 0
        %5930 = vmatprep.subr.bf16.mxu0 0
        %5931 = vmatpush1.bf16.msra.mxu0 0
        %5932 = vmatprep.subr.bf16.mxu0 0
        %5933 = vmatpush1.bf16.msra.mxu0 0
        %5934 = vmatprep.mubr.bf16.mxu0 %v5855
        %5935 = vmatmul.mubr.bf16.gmra.mrb[0].mxu0 %v5658
        %v5936 = vpop.f32.mrb[0].mxu0
        %v5937 = vadd.f32 %v5526, %v5936
        %v5938 = vpop.f32.mrb[0].mxu0
        %v5939 = vpop.f32.mrb[0].mxu0
        %v5940 = vadd.f32 %v5529, %v5939
        %v5941 = vpop.f32.mrb[0].mxu0
        %5942 = vmatprep.mubr.bf16.mxu0 %v5858
        %5943 = vmatmul.mubr.bf16.gmra.mrb[0].mxu0 %v5668
        %v5944 = vpop.f32.mrb[0].mxu0
        %v5945 = vadd.f32 %v5534, %v5944
        %v5946 = vpop.f32.mrb[0].mxu0
        %v5947 = vpop.f32.mrb[0].mxu0
        %v5948 = vadd.f32 %v5537, %v5947
        %v5949 = vpop.f32.mrb[0].mxu0
        %5950 = vmatprep.mubr.bf16.mxu0 %v5861
        %5951 = vmatmul.mubr.bf16.gmra.mrb[0].mxu0 %v5674
        %v5952 = vpop.f32.mrb[0].mxu0
        %v5953 = vadd.f32 %v5542, %v5952
        %v5954 = vpop.f32.mrb[0].mxu0
        %v5955 = vpop.f32.mrb[0].mxu0
        %v5956 = vadd.f32 %v5545, %v5955
        %v5957 = vpop.f32.mrb[0].mxu0
        %5958 = vmatprep.mubr.bf16.mxu0 %v5864
        %5959 = vmatmul.mubr.bf16.gmra.mrb[0].mxu0 %v5680
        %v5960 = vpop.f32.mrb[0].mxu0
        %v5961 = vadd.f32 %v5550, %v5960
        %v5962 = vpop.f32.mrb[0].mxu0
        %v5963 = vpop.f32.mrb[0].mxu0
        %v5964 = vadd.f32 %v5553, %v5963
        %v5965 = vpop.f32.mrb[0].mxu0
        %5966 = vmatprep.mubr.bf16.mxu0 %v5867
        %5967 = vmatmul.mubr.bf16.gmra.mrb[0].mxu0 %v5686
        %v5968 = vpop.f32.mrb[0].mxu0
        %v5969 = vadd.f32 %v5558, %v5968
        %v5970 = vpop.f32.mrb[0].mxu0
        %v5971 = vpop.f32.mrb[0].mxu0
        %v5972 = vadd.f32 %v5561, %v5971
        %v5973 = vpop.f32.mrb[0].mxu0
        %5974 = vmatprep.mubr.bf16.mxu0 %v5870
        %5975 = vmatmul.mubr.bf16.gmra.mrb[0].mxu0 %v5692
        %v5976 = vpop.f32.mrb[0].mxu0
        %v5977 = vadd.f32 %v5566, %v5976
        %v5978 = vpop.f32.mrb[0].mxu0
        %v5979 = vpop.f32.mrb[0].mxu0
        %v5980 = vadd.f32 %v5569, %v5979
        %v5981 = vpop.f32.mrb[0].mxu0
        %5982 = vmatprep.mubr.bf16.mxu0 %v5873
        %5983 = vmatmul.mubr.bf16.gmra.mrb[0].mxu0 %v5698
        %v5984 = vpop.f32.mrb[0].mxu0
        %v5985 = vadd.f32 %v5574, %v5984
        %v5986 = vpop.f32.mrb[0].mxu0
        %v5987 = vpop.f32.mrb[0].mxu0
        %v5988 = vadd.f32 %v5577, %v5987
        %v5989 = vpop.f32.mrb[0].mxu0
        %5990 = vmatprep.mubr.bf16.mxu0 %v5876
        %5991 = vmatmul.mubr.bf16.gmra.mrb[0].mxu0 %v5704
        %v5992 = vpop.f32.mrb[0].mxu0
        %v5993 = vadd.f32 %v5582, %v5992
        %v5994 = vpop.f32.mrb[0].mxu0
        %v5995 = vpop.f32.mrb[0].mxu0
        %v5996 = vadd.f32 %v5585, %v5995
        %v5997 = vpop.f32.mrb[0].mxu0
        %5998 = vmatprep.mubr.bf16.mxu0 %v5879
        %5999 = vmatmul.mubr.bf16.gmra.mrb[0].mxu0 %v5710
        %v6000 = vpop.f32.mrb[0].mxu0
        %v6001 = vadd.f32 %v5590, %v6000
        %v6002 = vpop.f32.mrb[0].mxu0
        %v6003 = vpop.f32.mrb[0].mxu0
        %v6004 = vadd.f32 %v5593, %v6003
        %v6005 = vpop.f32.mrb[0].mxu0
        %6006 = vmatprep.mubr.bf16.mxu0 %v5882
        %6007 = vmatmul.mubr.bf16.gmra.mrb[0].mxu0 %v5716
        %v6008 = vpop.f32.mrb[0].mxu0
        %v6009 = vadd.f32 %v5598, %v6008
        %v6010 = vpop.f32.mrb[0].mxu0
        %v6011 = vpop.f32.mrb[0].mxu0
        %v6012 = vadd.f32 %v5601, %v6011
        %v6013 = vpop.f32.mrb[0].mxu0
        %6014 = vmatprep.mubr.bf16.mxu0 %v5885
        %6015 = vmatmul.mubr.bf16.gmra.mrb[0].mxu0 %v5722
        %v6016 = vpop.f32.mrb[0].mxu0
        %v6017 = vadd.f32 %v5606, %v6016
        %v6018 = vpop.f32.mrb[0].mxu0
        %v6019 = vpop.f32.mrb[0].mxu0
        %v6020 = vadd.f32 %v5609, %v6019
        %v6021 = vpop.f32.mrb[0].mxu0
        %6022 = vmatprep.mubr.bf16.mxu0 %v5888
        %6023 = vmatmul.mubr.bf16.gmra.mrb[0].mxu0 %v5728
        %v6024 = vpop.f32.mrb[0].mxu0
        %v6025 = vadd.f32 %v5614, %v6024
        %v6026 = vpop.f32.mrb[0].mxu0
        %v6027 = vpop.f32.mrb[0].mxu0
        %v6028 = vadd.f32 %v5617, %v6027
        %v6029 = vpop.f32.mrb[0].mxu0
        %6030 = vmatprep.mubr.bf16.mxu0 %v5891
        %6031 = vmatmul.mubr.bf16.gmra.mrb[0].mxu0 %v5734
        %v6032 = vpop.f32.mrb[0].mxu0
        %v6033 = vadd.f32 %v5622, %v6032
        %v6034 = vpop.f32.mrb[0].mxu0
        %v6035 = vpop.f32.mrb[0].mxu0
        %v6036 = vadd.f32 %v5625, %v6035
        %v6037 = vpop.f32.mrb[0].mxu0
        %6038 = vmatprep.mubr.bf16.mxu0 %v5894
        %6039 = vmatmul.mubr.bf16.gmra.mrb[0].mxu0 %v5740
        %v6040 = vpop.f32.mrb[0].mxu0
        %v6041 = vadd.f32 %v5630, %v6040
        %v6042 = vpop.f32.mrb[0].mxu0
        %v6043 = vpop.f32.mrb[0].mxu0
        %v6044 = vadd.f32 %v5633, %v6043
        %v6045 = vpop.f32.mrb[0].mxu0
        %6046 = vmatprep.mubr.bf16.mxu0 %v5897
        %6047 = vmatmul.mubr.bf16.gmra.mrb[0].mxu0 %v5746
        %v6048 = vpop.f32.mrb[0].mxu0
        %v6049 = vadd.f32 %v5638, %v6048
        %v6050 = vpop.f32.mrb[0].mxu0
        %v6051 = vpop.f32.mrb[0].mxu0
        %v6052 = vadd.f32 %v5641, %v6051
        %v6053 = vpop.f32.mrb[0].mxu0
        %6054 = vmatprep.mubr.bf16.mxu0 %v5900
        %6055 = vmatmul.mubr.bf16.gmra.mrb[0].mxu0 %v5757
        %v6056 = vpop.f32.mrb[0].mxu0
        %v6057 = vadd.f32 %v5646, %v6056
        %v6058 = vpop.f32.mrb[0].mxu0
        %v6059 = vpop.f32.mrb[0].mxu0
        %v6060 = vadd.f32 %v5649, %v6059
        %v6061 = vpop.f32.mrb[0].mxu0
        %6062 = vdwg.mxu0
        %v6063 = vsel %vm1732, %v5937, 0.0
        %v6064 = vsel %vm1733, %v5940, 0.0
        %v6065 = vsel %vm1734, %v5945, 0.0
        %v6066 = vsel %vm1735, %v5948, 0.0
        %v6067 = vsel %vm1736, %v5953, 0.0
        %v6068 = vsel %vm1737, %v5956, 0.0
        %v6069 = vsel %vm1738, %v5961, 0.0
        %v6070 = vsel %vm1739, %v5964, 0.0
        %v6071 = vsel %vm1740, %v5969, 0.0
        %v6072 = vsel %vm1741, %v5972, 0.0
        %v6073 = vsel %vm1742, %v5977, 0.0
        %v6074 = vsel %vm1743, %v5980, 0.0
        %v6075 = vsel %vm1744, %v5985, 0.0
        %v6076 = vsel %vm1745, %v5988, 0.0
        %v6077 = vsel %vm1746, %v5993, 0.0
        %v6078 = vsel %vm1747, %v5996, 0.0
        %v6079 = vsel %vm1748, %v6001, 0.0
        %v6080 = vsel %vm1749, %v6004, 0.0
        %v6081 = vsel %vm1750, %v6009, 0.0
        %v6082 = vsel %vm1751, %v6012, 0.0
        %v6083 = vsel %vm1752, %v6017, 0.0
        %v6084 = vsel %vm1753, %v6020, 0.0
        %v6085 = vsel %vm1754, %v6025, 0.0
        %v6086 = vsel %vm1755, %v6028, 0.0
        %v6087 = vsel %vm1756, %v6033, 0.0
        %v6088 = vsel %vm1757, %v6036, 0.0
        %v6089 = vsel %vm1758, %v6041, 0.0
        %v6090 = vsel %vm1759, %v6044, 0.0
        %v6091 = vsel %vm1760, %v6049, 0.0
        %v6092 = vsel %vm1761, %v6052, 0.0
        %v6093 = vsel %vm1762, %v6057, 0.0
        %v6094 = vsel %vm1763, %v6060, 0.0
        %v6095 = vadd.f32 %v5151, %v6063
        %v6096 = vadd.f32 %v5152, %v6064
        %v6097 = vadd.f32 %v5153, %v6065
        %v6098 = vadd.f32 %v5154, %v6066
        %v6099 = vadd.f32 %v5155, %v6067
        %v6100 = vadd.f32 %v5156, %v6068
        %v6101 = vadd.f32 %v5157, %v6069
        %v6102 = vadd.f32 %v5158, %v6070
        %v6103 = vadd.f32 %v5159, %v6071
        %v6104 = vadd.f32 %v5160, %v6072
        %v6105 = vadd.f32 %v5161, %v6073
        %v6106 = vadd.f32 %v5162, %v6074
        %v6107 = vadd.f32 %v5163, %v6075
        %v6108 = vadd.f32 %v5164, %v6076
        %v6109 = vadd.f32 %v5165, %v6077
        %v6110 = vadd.f32 %v5166, %v6078
        %v6111 = vadd.f32 %v5167, %v6079
        %v6112 = vadd.f32 %v5168, %v6080
        %v6113 = vadd.f32 %v5169, %v6081
        %v6114 = vadd.f32 %v5170, %v6082
        %v6115 = vadd.f32 %v5171, %v6083
        %v6116 = vadd.f32 %v5172, %v6084
        %v6117 = vadd.f32 %v5173, %v6085
        %v6118 = vadd.f32 %v5174, %v6086
        %v6119 = vadd.f32 %v5175, %v6087
        %v6120 = vadd.f32 %v5176, %v6088
        %v6121 = vadd.f32 %v5177, %v6089
        %v6122 = vadd.f32 %v5178, %v6090
        %v6123 = vadd.f32 %v5179, %v6091
        %v6124 = vadd.f32 %v5180, %v6092
        %v6125 = vadd.f32 %v5181, %v6093
        %v6126 = vadd.f32 %v5182, %v6094
        %s6127 = scalar_lea.vmem [#allocation4], 384
        %v6128 = vld [vmem:[%s6127] sm:$0xf]
        %v6129 = vld [vmem:[%s6127 + $0x4] sm:$0xf]
        %v6130 = vld [vmem:[%s6127 + $0x8] sm:$0xf]
        %v6131 = vld [vmem:[%s6127 + $0xc] sm:$0xf]
        %v6132 = vld [vmem:[%s6127 + $0x10] sm:$0xf]
        %v6133 = vld [vmem:[%s6127 + $0x14] sm:$0xf]
        %v6134 = vld [vmem:[%s6127 + $0x18] sm:$0xf]
        %v6135 = vld [vmem:[%s6127 + $0x1c] sm:$0xf]
        %v6136 = vld [vmem:[%s6127 + $0x20] sm:$0xf]
        %v6137 = vld [vmem:[%s6127 + $0x24] sm:$0xf]
        %v6138 = vld [vmem:[%s6127 + $0x28] sm:$0xf]
        %v6139 = vld [vmem:[%s6127 + $0x2c] sm:$0xf]
        %v6140 = vld [vmem:[%s6127 + $0x30] sm:$0xf]
        %v6141 = vld [vmem:[%s6127 + $0x34] sm:$0xf]
        %v6142 = vld [vmem:[%s6127 + $0x38] sm:$0xf]
        %v6143 = vld [vmem:[%s6127 + $0x3c] sm:$0xf]
        %v6144 = vld [vmem:[%s6127 + $0x40] sm:$0xf]
        %v6145 = vld [vmem:[%s6127 + $0x44] sm:$0xf]
        %v6146 = vld [vmem:[%s6127 + $0x48] sm:$0xf]
        %v6147 = vld [vmem:[%s6127 + $0x4c] sm:$0xf]
        %v6148 = vld [vmem:[%s6127 + $0x50] sm:$0xf]
        %v6149 = vld [vmem:[%s6127 + $0x54] sm:$0xf]
        %v6150 = vld [vmem:[%s6127 + $0x58] sm:$0xf]
        %v6151 = vld [vmem:[%s6127 + $0x5c] sm:$0xf]
        %s6152 = scalar_lea.vmem [#allocation7], 384
        %v6153 = vld [vmem:[%s6152] sm:$0xf]
        %v6154 = vld [vmem:[%s6152 + $0x4] sm:$0xf]
        %v6155 = vld [vmem:[%s6152 + $0x8] sm:$0xf]
        %v6156 = vld [vmem:[%s6152 + $0xc] sm:$0xf]
        %v6157 = vld [vmem:[%s6152 + $0x10] sm:$0xf]
        %v6158 = vld [vmem:[%s6152 + $0x14] sm:$0xf]
        %v6159 = vld [vmem:[%s6152 + $0x18] sm:$0xf]
        %v6160 = vld [vmem:[%s6152 + $0x1c] sm:$0xf]
        %v6161 = vld [vmem:[%s6152 + $0x20] sm:$0xf]
        %v6162 = vld [vmem:[%s6152 + $0x24] sm:$0xf]
        %v6163 = vld [vmem:[%s6152 + $0x28] sm:$0xf]
        %v6164 = vld [vmem:[%s6152 + $0x2c] sm:$0xf]
        %v6165 = vld [vmem:[%s6152 + $0x30] sm:$0xf]
        %v6166 = vld [vmem:[%s6152 + $0x34] sm:$0xf]
        %v6167 = vld [vmem:[%s6152 + $0x38] sm:$0xf]
        %v6168 = vld [vmem:[%s6152 + $0x3c] sm:$0xf]
        %v6169 = vld [vmem:[%s6152 + $0x40] sm:$0xf]
        %v6170 = vld [vmem:[%s6152 + $0x44] sm:$0xf]
        %v6171 = vld [vmem:[%s6152 + $0x48] sm:$0xf]
        %v6172 = vld [vmem:[%s6152 + $0x4c] sm:$0xf]
        %v6173 = vld [vmem:[%s6152 + $0x50] sm:$0xf]
        %v6174 = vld [vmem:[%s6152 + $0x54] sm:$0xf]
        %v6175 = vld [vmem:[%s6152 + $0x58] sm:$0xf]
        %v6176 = vld [vmem:[%s6152 + $0x5c] sm:$0xf]
        %v6201 = vunpack.c.l.b16 %v6153
        %v6202 = vunpack.c.l.b16 %v6154
        %v6203 = vunpack.c.l.b16 %v6155
        %v6204 = vunpack.c.l.b16 %v6156
        %v6205 = vunpack.c.l.b16 %v6157
        %v6206 = vunpack.c.l.b16 %v6158
        %v6207 = vunpack.c.l.b16 %v6159
        %v6208 = vunpack.c.l.b16 %v6160
        %v6209 = vunpack.c.l.b16 %v6161
        %v6210 = vunpack.c.l.b16 %v6162
        %v6211 = vunpack.c.l.b16 %v6163
        %v6212 = vunpack.c.l.b16 %v6164
        %v6213 = vunpack.c.l.b16 %v6165
        %v6214 = vunpack.c.l.b16 %v6166
        %v6215 = vunpack.c.l.b16 %v6167
        %v6216 = vunpack.c.l.b16 %v6168
        %v6217 = vunpack.c.l.b16 %v6169
        %v6218 = vunpack.c.l.b16 %v6170
        %v6219 = vunpack.c.l.b16 %v6171
        %v6220 = vunpack.c.l.b16 %v6172
        %v6221 = vunpack.c.l.b16 %v6173
        %v6222 = vunpack.c.l.b16 %v6174
        %v6223 = vunpack.c.l.b16 %v6175
        %v6224 = vunpack.c.l.b16 %v6176
        %v6225 = vpack.c.b16 %v6202, %v6201
        %v6226 = vpack.c.b16 %v6204, %v6203
        %v6227 = vpack.c.b16 %v6206, %v6205
        %v6228 = vpack.c.b16 %v6208, %v6207
        %v6229 = vpack.c.b16 %v6210, %v6209
        %v6230 = vpack.c.b16 %v6212, %v6211
        %v6231 = vpack.c.b16 %v6214, %v6213
        %v6232 = vpack.c.b16 %v6216, %v6215
        %v6233 = vpack.c.b16 %v6218, %v6217
        %v6234 = vpack.c.b16 %v6220, %v6219
        %v6235 = vpack.c.b16 %v6222, %v6221
        %v6236 = vpack.c.b16 %v6224, %v6223
        %v6249 = vsel %vm410, %v3915, 0
        %v6251 = vsel %vm410, %v3917, 0
        %v6253 = vsel %vm410, %v3919, 0
        %v6255 = vsel %vm410, %v3921, 0
        %v6257 = vsel %vm410, %v3923, 0
        %v6259 = vsel %vm410, %v3925, 0
        %v6261 = vsel %vm410, %v3927, 0
        %v6263 = vsel %vm410, %v3929, 0
        %v6265 = vsel %vm410, %v3931, 0
        %v6267 = vsel %vm410, %v3933, 0
        %v6269 = vsel %vm410, %v3935, 0
        %v6271 = vsel %vm410, %v3937, 0
        %v6273 = vsel %vm410, %v3939, 0
        %v6275 = vsel %vm410, %v3941, 0
        %v6277 = vsel %vm410, %v3943, 0
        %v6279 = vsel %vm410, %v5190, 0
        %6281 = vmatprep.subr.bf16.mxu0 0
        %6282 = vmatpush1.bf16.msra.mxu0 %v6225
        %6283 = vmatprep.subr.bf16.mxu0 0
        %6284 = vmatpush1.bf16.msra.mxu0 %v6226
        %6285 = vmatprep.subr.bf16.mxu0 0
        %6286 = vmatpush1.bf16.msra.mxu0 %v6227
        %6287 = vmatprep.subr.bf16.mxu0 0
        %6288 = vmatpush1.bf16.msra.mxu0 %v6228
        %6289 = vmatprep.subr.bf16.mxu0 0
        %6290 = vmatpush1.bf16.msra.mxu0 %v6229
        %6291 = vmatprep.subr.bf16.mxu0 0
        %6292 = vmatpush1.bf16.msra.mxu0 %v6230
        %6293 = vmatprep.subr.bf16.mxu0 0
        %6294 = vmatpush1.bf16.msra.mxu0 %v6231
        %6295 = vmatprep.subr.bf16.mxu0 0
        %6296 = vmatpush1.bf16.msra.mxu0 %v6232
        %6297 = vmatprep.subr.bf16.mxu0 0
        %6298 = vmatpush1.bf16.msra.mxu0 %v6233
        %6299 = vmatprep.subr.bf16.mxu0 0
        %6300 = vmatpush1.bf16.msra.mxu0 %v6234
        %6301 = vmatprep.subr.bf16.mxu0 0
        %6302 = vmatpush1.bf16.msra.mxu0 %v6235
        %6303 = vmatprep.subr.bf16.mxu0 0
        %6304 = vmatpush1.bf16.msra.mxu0 %v6236
        %6305 = vmatprep.subr.bf16.mxu0 0
        %6306 = vmatpush1.bf16.msra.mxu0 0
        %6307 = vmatprep.subr.bf16.mxu0 0
        %6308 = vmatpush1.bf16.msra.mxu0 0
        %6309 = vmatprep.subr.bf16.mxu0 0
        %6310 = vmatpush1.bf16.msra.mxu0 0
        %6311 = vmatprep.subr.bf16.mxu0 0
        %6312 = vmatpush1.bf16.msra.mxu0 0
        %6313 = vmatprep.mubr.bf16.mxu0 %v6249
        %6314 = vmatmul.mubr.bf16.gmra.mrb[0].mxu0 %v3914
        %v6315 = vpop.f32.mrb[0].mxu0
        %v6316 = vadd.f32 0.0, %v6315
        %v6317 = vpop.f32.mrb[0].mxu0
        %v6318 = vpop.f32.mrb[0].mxu0
        %v6319 = vadd.f32 0.0, %v6318
        %v6320 = vpop.f32.mrb[0].mxu0
        %6321 = vmatprep.mubr.bf16.mxu0 %v6251
        %6322 = vmatmul.mubr.bf16.gmra.mrb[0].mxu0 %v3916
        %v6323 = vpop.f32.mrb[0].mxu0
        %v6324 = vadd.f32 0.0, %v6323
        %v6325 = vpop.f32.mrb[0].mxu0
        %v6326 = vpop.f32.mrb[0].mxu0
        %v6327 = vadd.f32 0.0, %v6326
        %v6328 = vpop.f32.mrb[0].mxu0
        %6329 = vmatprep.mubr.bf16.mxu0 %v6253
        %6330 = vmatmul.mubr.bf16.gmra.mrb[0].mxu0 %v3918
        %v6331 = vpop.f32.mrb[0].mxu0
        %v6332 = vadd.f32 0.0, %v6331
        %v6333 = vpop.f32.mrb[0].mxu0
        %v6334 = vpop.f32.mrb[0].mxu0
        %v6335 = vadd.f32 0.0, %v6334
        %v6336 = vpop.f32.mrb[0].mxu0
        %6337 = vmatprep.mubr.bf16.mxu0 %v6255
        %6338 = vmatmul.mubr.bf16.gmra.mrb[0].mxu0 %v3920
        %v6339 = vpop.f32.mrb[0].mxu0
        %v6340 = vadd.f32 0.0, %v6339
        %v6341 = vpop.f32.mrb[0].mxu0
        %v6342 = vpop.f32.mrb[0].mxu0
        %v6343 = vadd.f32 0.0, %v6342
        %v6344 = vpop.f32.mrb[0].mxu0
        %6345 = vmatprep.mubr.bf16.mxu0 %v6257
        %6346 = vmatmul.mubr.bf16.gmra.mrb[0].mxu0 %v3922
        %v6347 = vpop.f32.mrb[0].mxu0
        %v6348 = vadd.f32 0.0, %v6347
        %v6349 = vpop.f32.mrb[0].mxu0
        %v6350 = vpop.f32.mrb[0].mxu0
        %v6351 = vadd.f32 0.0, %v6350
        %v6352 = vpop.f32.mrb[0].mxu0
        %6353 = vmatprep.mubr.bf16.mxu0 %v6259
        %6354 = vmatmul.mubr.bf16.gmra.mrb[0].mxu0 %v3924
        %v6355 = vpop.f32.mrb[0].mxu0
        %v6356 = vadd.f32 0.0, %v6355
        %v6357 = vpop.f32.mrb[0].mxu0
        %v6358 = vpop.f32.mrb[0].mxu0
        %v6359 = vadd.f32 0.0, %v6358
        %v6360 = vpop.f32.mrb[0].mxu0
        %6361 = vmatprep.mubr.bf16.mxu0 %v6261
        %6362 = vmatmul.mubr.bf16.gmra.mrb[0].mxu0 %v3926
        %v6363 = vpop.f32.mrb[0].mxu0
        %v6364 = vadd.f32 0.0, %v6363
        %v6365 = vpop.f32.mrb[0].mxu0
        %v6366 = vpop.f32.mrb[0].mxu0
        %v6367 = vadd.f32 0.0, %v6366
        %v6368 = vpop.f32.mrb[0].mxu0
        %6369 = vmatprep.mubr.bf16.mxu0 %v6263
        %6370 = vmatmul.mubr.bf16.gmra.mrb[0].mxu0 %v3928
        %v6371 = vpop.f32.mrb[0].mxu0
        %v6372 = vadd.f32 0.0, %v6371
        %v6373 = vpop.f32.mrb[0].mxu0
        %v6374 = vpop.f32.mrb[0].mxu0
        %v6375 = vadd.f32 0.0, %v6374
        %v6376 = vpop.f32.mrb[0].mxu0
        %6377 = vmatprep.mubr.bf16.mxu0 %v6265
        %6378 = vmatmul.mubr.bf16.gmra.mrb[0].mxu0 %v3930
        %v6379 = vpop.f32.mrb[0].mxu0
        %v6380 = vadd.f32 0.0, %v6379
        %v6381 = vpop.f32.mrb[0].mxu0
        %v6382 = vpop.f32.mrb[0].mxu0
        %v6383 = vadd.f32 0.0, %v6382
        %v6384 = vpop.f32.mrb[0].mxu0
        %6385 = vmatprep.mubr.bf16.mxu0 %v6267
        %6386 = vmatmul.mubr.bf16.gmra.mrb[0].mxu0 %v3932
        %v6387 = vpop.f32.mrb[0].mxu0
        %v6388 = vadd.f32 0.0, %v6387
        %v6389 = vpop.f32.mrb[0].mxu0
        %v6390 = vpop.f32.mrb[0].mxu0
        %v6391 = vadd.f32 0.0, %v6390
        %v6392 = vpop.f32.mrb[0].mxu0
        %6393 = vmatprep.mubr.bf16.mxu0 %v6269
        %6394 = vmatmul.mubr.bf16.gmra.mrb[0].mxu0 %v3934
        %v6395 = vpop.f32.mrb[0].mxu0
        %v6396 = vadd.f32 0.0, %v6395
        %v6397 = vpop.f32.mrb[0].mxu0
        %v6398 = vpop.f32.mrb[0].mxu0
        %v6399 = vadd.f32 0.0, %v6398
        %v6400 = vpop.f32.mrb[0].mxu0
        %6401 = vmatprep.mubr.bf16.mxu0 %v6271
        %6402 = vmatmul.mubr.bf16.gmra.mrb[0].mxu0 %v3936
        %v6403 = vpop.f32.mrb[0].mxu0
        %v6404 = vadd.f32 0.0, %v6403
        %v6405 = vpop.f32.mrb[0].mxu0
        %v6406 = vpop.f32.mrb[0].mxu0
        %v6407 = vadd.f32 0.0, %v6406
        %v6408 = vpop.f32.mrb[0].mxu0
        %6409 = vmatprep.mubr.bf16.mxu0 %v6273
        %6410 = vmatmul.mubr.bf16.gmra.mrb[0].mxu0 %v3938
        %v6411 = vpop.f32.mrb[0].mxu0
        %v6412 = vadd.f32 0.0, %v6411
        %v6413 = vpop.f32.mrb[0].mxu0
        %v6414 = vpop.f32.mrb[0].mxu0
        %v6415 = vadd.f32 0.0, %v6414
        %v6416 = vpop.f32.mrb[0].mxu0
        %6417 = vmatprep.mubr.bf16.mxu0 %v6275
        %6418 = vmatmul.mubr.bf16.gmra.mrb[0].mxu0 %v3940
        %v6419 = vpop.f32.mrb[0].mxu0
        %v6420 = vadd.f32 0.0, %v6419
        %v6421 = vpop.f32.mrb[0].mxu0
        %v6422 = vpop.f32.mrb[0].mxu0
        %v6423 = vadd.f32 0.0, %v6422
        %v6424 = vpop.f32.mrb[0].mxu0
        %6425 = vmatprep.mubr.bf16.mxu0 %v6277
        %6426 = vmatmul.mubr.bf16.gmra.mrb[0].mxu0 %v3942
        %v6427 = vpop.f32.mrb[0].mxu0
        %v6428 = vadd.f32 0.0, %v6427
        %v6429 = vpop.f32.mrb[0].mxu0
        %v6430 = vpop.f32.mrb[0].mxu0
        %v6431 = vadd.f32 0.0, %v6430
        %v6432 = vpop.f32.mrb[0].mxu0
        %6433 = vmatprep.mubr.bf16.mxu0 %v6279
        %6434 = vmatmul.mubr.bf16.gmra.mrb[0].mxu0 %v5189
        %v6435 = vpop.f32.mrb[0].mxu0
        %v6436 = vadd.f32 0.0, %v6435
        %v6437 = vpop.f32.mrb[0].mxu0
        %v6438 = vpop.f32.mrb[0].mxu0
        %v6439 = vadd.f32 0.0, %v6438
        %v6440 = vpop.f32.mrb[0].mxu0
        %6441 = vdwg.mxu0
        %v6466 = vunpack.c.l.b16 %v6128
        %v6467 = vunpack.c.l.b16 %v6129
        %v6468 = vunpack.c.l.b16 %v6130
        %v6469 = vunpack.c.l.b16 %v6131
        %v6470 = vunpack.c.l.b16 %v6132
        %v6471 = vunpack.c.l.b16 %v6133
        %v6472 = vunpack.c.l.b16 %v6134
        %v6473 = vunpack.c.l.b16 %v6135
        %v6474 = vunpack.c.l.b16 %v6136
        %v6475 = vunpack.c.l.b16 %v6137
        %v6476 = vunpack.c.l.b16 %v6138
        %v6477 = vunpack.c.l.b16 %v6139
        %v6478 = vunpack.c.l.b16 %v6140
        %v6479 = vunpack.c.l.b16 %v6141
        %v6480 = vunpack.c.l.b16 %v6142
        %v6481 = vunpack.c.l.b16 %v6143
        %v6482 = vunpack.c.l.b16 %v6144
        %v6483 = vunpack.c.l.b16 %v6145
        %v6484 = vunpack.c.l.b16 %v6146
        %v6485 = vunpack.c.l.b16 %v6147
        %v6486 = vunpack.c.l.b16 %v6148
        %v6487 = vunpack.c.l.b16 %v6149
        %v6488 = vunpack.c.l.b16 %v6150
        %v6489 = vunpack.c.l.b16 %v6151
        %v6490 = vpack.c.b16 %v6467, %v6466
        %v6491 = vpack.c.b16 %v6469, %v6468
        %v6492 = vpack.c.b16 %v6471, %v6470
        %v6493 = vpack.c.b16 %v6473, %v6472
        %v6494 = vpack.c.b16 %v6475, %v6474
        %v6495 = vpack.c.b16 %v6477, %v6476
        %v6496 = vpack.c.b16 %v6479, %v6478
        %v6497 = vpack.c.b16 %v6481, %v6480
        %v6498 = vpack.c.b16 %v6483, %v6482
        %v6499 = vpack.c.b16 %v6485, %v6484
        %v6500 = vpack.c.b16 %v6487, %v6486
        %v6501 = vpack.c.b16 %v6489, %v6488
        %v6514 = vsel %vm410, %v3881, 0
        %v6516 = vsel %vm410, %v3883, 0
        %v6518 = vsel %vm410, %v3885, 0
        %v6520 = vsel %vm410, %v3887, 0
        %v6522 = vsel %vm410, %v3889, 0
        %v6524 = vsel %vm410, %v3891, 0
        %v6526 = vsel %vm410, %v3893, 0
        %v6528 = vsel %vm410, %v3895, 0
        %v6530 = vsel %vm410, %v3897, 0
        %v6532 = vsel %vm410, %v3899, 0
        %v6534 = vsel %vm410, %v3901, 0
        %v6536 = vsel %vm410, %v3903, 0
        %v6538 = vsel %vm410, %v3905, 0
        %v6540 = vsel %vm410, %v3907, 0
        %v6542 = vsel %vm410, %v3909, 0
        %v6544 = vsel %vm410, %v5186, 0
        %6546 = vmatprep.subr.bf16.mxu0 0
        %6547 = vmatpush1.bf16.msra.mxu0 %v6490
        %6548 = vmatprep.subr.bf16.mxu0 0
        %6549 = vmatpush1.bf16.msra.mxu0 %v6491
        %6550 = vmatprep.subr.bf16.mxu0 0
        %6551 = vmatpush1.bf16.msra.mxu0 %v6492
        %6552 = vmatprep.subr.bf16.mxu0 0
        %6553 = vmatpush1.bf16.msra.mxu0 %v6493
        %6554 = vmatprep.subr.bf16.mxu0 0
        %6555 = vmatpush1.bf16.msra.mxu0 %v6494
        %6556 = vmatprep.subr.bf16.mxu0 0
        %6557 = vmatpush1.bf16.msra.mxu0 %v6495
        %6558 = vmatprep.subr.bf16.mxu0 0
        %6559 = vmatpush1.bf16.msra.mxu0 %v6496
        %6560 = vmatprep.subr.bf16.mxu0 0
        %6561 = vmatpush1.bf16.msra.mxu0 %v6497
        %6562 = vmatprep.subr.bf16.mxu0 0
        %6563 = vmatpush1.bf16.msra.mxu0 %v6498
        %6564 = vmatprep.subr.bf16.mxu0 0
        %6565 = vmatpush1.bf16.msra.mxu0 %v6499
        %6566 = vmatprep.subr.bf16.mxu0 0
        %6567 = vmatpush1.bf16.msra.mxu0 %v6500
        %6568 = vmatprep.subr.bf16.mxu0 0
        %6569 = vmatpush1.bf16.msra.mxu0 %v6501
        %6570 = vmatprep.subr.bf16.mxu0 0
        %6571 = vmatpush1.bf16.msra.mxu0 0
        %6572 = vmatprep.subr.bf16.mxu0 0
        %6573 = vmatpush1.bf16.msra.mxu0 0
        %6574 = vmatprep.subr.bf16.mxu0 0
        %6575 = vmatpush1.bf16.msra.mxu0 0
        %6576 = vmatprep.subr.bf16.mxu0 0
        %6577 = vmatpush1.bf16.msra.mxu0 0
        %6578 = vmatprep.mubr.bf16.mxu0 %v6514
        %6579 = vmatmul.mubr.bf16.gmra.mrb[0].mxu0 %v3880
        %v6580 = vpop.f32.mrb[0].mxu0
        %v6581 = vadd.f32 %v6316, %v6580
        %v6582 = vpop.f32.mrb[0].mxu0
        %v6583 = vpop.f32.mrb[0].mxu0
        %v6584 = vadd.f32 %v6319, %v6583
        %v6585 = vpop.f32.mrb[0].mxu0
        %6586 = vmatprep.mubr.bf16.mxu0 %v6516
        %6587 = vmatmul.mubr.bf16.gmra.mrb[0].mxu0 %v3882
        %v6588 = vpop.f32.mrb[0].mxu0
        %v6589 = vadd.f32 %v6324, %v6588
        %v6590 = vpop.f32.mrb[0].mxu0
        %v6591 = vpop.f32.mrb[0].mxu0
        %v6592 = vadd.f32 %v6327, %v6591
        %v6593 = vpop.f32.mrb[0].mxu0
        %6594 = vmatprep.mubr.bf16.mxu0 %v6518
        %6595 = vmatmul.mubr.bf16.gmra.mrb[0].mxu0 %v3884
        %v6596 = vpop.f32.mrb[0].mxu0
        %v6597 = vadd.f32 %v6332, %v6596
        %v6598 = vpop.f32.mrb[0].mxu0
        %v6599 = vpop.f32.mrb[0].mxu0
        %v6600 = vadd.f32 %v6335, %v6599
        %v6601 = vpop.f32.mrb[0].mxu0
        %6602 = vmatprep.mubr.bf16.mxu0 %v6520
        %6603 = vmatmul.mubr.bf16.gmra.mrb[0].mxu0 %v3886
        %v6604 = vpop.f32.mrb[0].mxu0
        %v6605 = vadd.f32 %v6340, %v6604
        %v6606 = vpop.f32.mrb[0].mxu0
        %v6607 = vpop.f32.mrb[0].mxu0
        %v6608 = vadd.f32 %v6343, %v6607
        %v6609 = vpop.f32.mrb[0].mxu0
        %6610 = vmatprep.mubr.bf16.mxu0 %v6522
        %6611 = vmatmul.mubr.bf16.gmra.mrb[0].mxu0 %v3888
        %v6612 = vpop.f32.mrb[0].mxu0
        %v6613 = vadd.f32 %v6348, %v6612
        %v6614 = vpop.f32.mrb[0].mxu0
        %v6615 = vpop.f32.mrb[0].mxu0
        %v6616 = vadd.f32 %v6351, %v6615
        %v6617 = vpop.f32.mrb[0].mxu0
        %6618 = vmatprep.mubr.bf16.mxu0 %v6524
        %6619 = vmatmul.mubr.bf16.gmra.mrb[0].mxu0 %v3890
        %v6620 = vpop.f32.mrb[0].mxu0
        %v6621 = vadd.f32 %v6356, %v6620
        %v6622 = vpop.f32.mrb[0].mxu0
        %v6623 = vpop.f32.mrb[0].mxu0
        %v6624 = vadd.f32 %v6359, %v6623
        %v6625 = vpop.f32.mrb[0].mxu0
        %6626 = vmatprep.mubr.bf16.mxu0 %v6526
        %6627 = vmatmul.mubr.bf16.gmra.mrb[0].mxu0 %v3892
        %v6628 = vpop.f32.mrb[0].mxu0
        %v6629 = vadd.f32 %v6364, %v6628
        %v6630 = vpop.f32.mrb[0].mxu0
        %v6631 = vpop.f32.mrb[0].mxu0
        %v6632 = vadd.f32 %v6367, %v6631
        %v6633 = vpop.f32.mrb[0].mxu0
        %6634 = vmatprep.mubr.bf16.mxu0 %v6528
        %6635 = vmatmul.mubr.bf16.gmra.mrb[0].mxu0 %v3894
        %v6636 = vpop.f32.mrb[0].mxu0
        %v6637 = vadd.f32 %v6372, %v6636
        %v6638 = vpop.f32.mrb[0].mxu0
        %v6639 = vpop.f32.mrb[0].mxu0
        %v6640 = vadd.f32 %v6375, %v6639
        %v6641 = vpop.f32.mrb[0].mxu0
        %6642 = vmatprep.mubr.bf16.mxu0 %v6530
        %6643 = vmatmul.mubr.bf16.gmra.mrb[0].mxu0 %v3896
        %v6644 = vpop.f32.mrb[0].mxu0
        %v6645 = vadd.f32 %v6380, %v6644
        %v6646 = vpop.f32.mrb[0].mxu0
        %v6647 = vpop.f32.mrb[0].mxu0
        %v6648 = vadd.f32 %v6383, %v6647
        %v6649 = vpop.f32.mrb[0].mxu0
        %6650 = vmatprep.mubr.bf16.mxu0 %v6532
        %6651 = vmatmul.mubr.bf16.gmra.mrb[0].mxu0 %v3898
        %v6652 = vpop.f32.mrb[0].mxu0
        %v6653 = vadd.f32 %v6388, %v6652
        %v6654 = vpop.f32.mrb[0].mxu0
        %v6655 = vpop.f32.mrb[0].mxu0
        %v6656 = vadd.f32 %v6391, %v6655
        %v6657 = vpop.f32.mrb[0].mxu0
        %6658 = vmatprep.mubr.bf16.mxu0 %v6534
        %6659 = vmatmul.mubr.bf16.gmra.mrb[0].mxu0 %v3900
        %v6660 = vpop.f32.mrb[0].mxu0
        %v6661 = vadd.f32 %v6396, %v6660
        %v6662 = vpop.f32.mrb[0].mxu0
        %v6663 = vpop.f32.mrb[0].mxu0
        %v6664 = vadd.f32 %v6399, %v6663
        %v6665 = vpop.f32.mrb[0].mxu0
        %6666 = vmatprep.mubr.bf16.mxu0 %v6536
        %6667 = vmatmul.mubr.bf16.gmra.mrb[0].mxu0 %v3902
        %v6668 = vpop.f32.mrb[0].mxu0
        %v6669 = vadd.f32 %v6404, %v6668
        %v6670 = vpop.f32.mrb[0].mxu0
        %v6671 = vpop.f32.mrb[0].mxu0
        %v6672 = vadd.f32 %v6407, %v6671
        %v6673 = vpop.f32.mrb[0].mxu0
        %6674 = vmatprep.mubr.bf16.mxu0 %v6538
        %6675 = vmatmul.mubr.bf16.gmra.mrb[0].mxu0 %v3904
        %v6676 = vpop.f32.mrb[0].mxu0
        %v6677 = vadd.f32 %v6412, %v6676
        %v6678 = vpop.f32.mrb[0].mxu0
        %v6679 = vpop.f32.mrb[0].mxu0
        %v6680 = vadd.f32 %v6415, %v6679
        %v6681 = vpop.f32.mrb[0].mxu0
        %6682 = vmatprep.mubr.bf16.mxu0 %v6540
        %6683 = vmatmul.mubr.bf16.gmra.mrb[0].mxu0 %v3906
        %v6684 = vpop.f32.mrb[0].mxu0
        %v6685 = vadd.f32 %v6420, %v6684
        %v6686 = vpop.f32.mrb[0].mxu0
        %v6687 = vpop.f32.mrb[0].mxu0
        %v6688 = vadd.f32 %v6423, %v6687
        %v6689 = vpop.f32.mrb[0].mxu0
        %6690 = vmatprep.mubr.bf16.mxu0 %v6542
        %6691 = vmatmul.mubr.bf16.gmra.mrb[0].mxu0 %v3908
        %v6692 = vpop.f32.mrb[0].mxu0
        %v6693 = vadd.f32 %v6428, %v6692
        %v6694 = vpop.f32.mrb[0].mxu0
        %v6695 = vpop.f32.mrb[0].mxu0
        %v6696 = vadd.f32 %v6431, %v6695
        %v6697 = vpop.f32.mrb[0].mxu0
        %6698 = vmatprep.mubr.bf16.mxu0 %v6544
        %6699 = vmatmul.mubr.bf16.gmra.mrb[0].mxu0 %v5185
        %v6700 = vpop.f32.mrb[0].mxu0
        %v6701 = vadd.f32 %v6436, %v6700
        %v6702 = vpop.f32.mrb[0].mxu0
        %v6703 = vpop.f32.mrb[0].mxu0
        %v6704 = vadd.f32 %v6439, %v6703
        %v6705 = vpop.f32.mrb[0].mxu0
        %6706 = vdwg.mxu0
        %v6707 = vadd.f32 %v6095, %v6581
        %v6708 = vadd.f32 %v6096, %v6584
        %v6709 = vadd.f32 %v6097, %v6589
        %v6710 = vadd.f32 %v6098, %v6592
        %v6711 = vadd.f32 %v6099, %v6597
        %v6712 = vadd.f32 %v6100, %v6600
        %v6713 = vadd.f32 %v6101, %v6605
        %v6714 = vadd.f32 %v6102, %v6608
        %v6715 = vadd.f32 %v6103, %v6613
        %v6716 = vadd.f32 %v6104, %v6616
        %v6717 = vadd.f32 %v6105, %v6621
        %v6718 = vadd.f32 %v6106, %v6624
        %v6719 = vadd.f32 %v6107, %v6629
        %v6720 = vadd.f32 %v6108, %v6632
        %v6721 = vadd.f32 %v6109, %v6637
        %v6722 = vadd.f32 %v6110, %v6640
        %v6723 = vadd.f32 %v6111, %v6645
        %v6724 = vadd.f32 %v6112, %v6648
        %v6725 = vadd.f32 %v6113, %v6653
        %v6726 = vadd.f32 %v6114, %v6656
        %v6727 = vadd.f32 %v6115, %v6661
        %v6728 = vadd.f32 %v6116, %v6664
        %v6729 = vadd.f32 %v6117, %v6669
        %v6730 = vadd.f32 %v6118, %v6672
        %v6731 = vadd.f32 %v6119, %v6677
        %v6732 = vadd.f32 %v6120, %v6680
        %v6733 = vadd.f32 %v6121, %v6685
        %v6734 = vadd.f32 %v6122, %v6688
        %v6735 = vadd.f32 %v6123, %v6693
        %v6736 = vadd.f32 %v6124, %v6696
        %v6737 = vadd.f32 %v6125, %v6701
        %v6738 = vadd.f32 %v6126, %v6704
        %v6739 = vld [vmem:[#allocation2 + $0x20] sm:$0xff]
        %v6740 = vld [vmem:[#allocation2 + $0x28] sm:$0xff]
        %v6741 = vld [vmem:[#allocation2 + $0x30] sm:$0xff]
        %v6742 = vld [vmem:[#allocation2 + $0x38] sm:$0xff]
        %v6743 = vld [vmem:[#allocation2 + $0x40] sm:$0xff]
        %v6744 = vld [vmem:[#allocation2 + $0x48] sm:$0xff]
        %v6745 = vld [vmem:[#allocation2 + $0x50] sm:$0xff]
        %v6746 = vld [vmem:[#allocation2 + $0x58] sm:$0xff]
        %v6747 = vld [vmem:[#allocation2 + $0x60] sm:$0xff]
        %v6748 = vld [vmem:[#allocation2 + $0x68] sm:$0xff]
        %v6749 = vld [vmem:[#allocation2 + $0x70] sm:$0xff]
        %v6750 = vld [vmem:[#allocation2 + $0x78] sm:$0xff]
        %v6751 = vld [vmem:[#allocation2 + $0x80] sm:$0xff]
        %v6752 = vld [vmem:[#allocation2 + $0x88] sm:$0xff]
        %v6753 = vld [vmem:[#allocation2 + $0x90] sm:$0xff]
        %v6754 = vld [vmem:[#allocation2 + $0x98] sm:$0xff]
        %v6755 = vld [vmem:[#allocation2 + $0xa0] sm:$0xff]
        %v6756 = vld [vmem:[#allocation2 + $0xa8] sm:$0xff]
        %v6757 = vld [vmem:[#allocation2 + $0xb0] sm:$0xff]
        %v6758 = vld [vmem:[#allocation2 + $0xb8] sm:$0xff]
        %v6759 = vld [vmem:[#allocation2 + $0xc0] sm:$0xff]
        %v6760 = vld [vmem:[#allocation2 + $0xc8] sm:$0xff]
        %v6761 = vld [vmem:[#allocation2 + $0xd0] sm:$0xff]
        %v6762 = vld [vmem:[#allocation2 + $0xd8] sm:$0xff]
        %v6763 = vld [vmem:[#allocation2 + $0xe0] sm:$0xff]
        %v6764 = vld [vmem:[#allocation2 + $0xe8] sm:$0xff]
        %v6765 = vld [vmem:[#allocation2 + $0xf0] sm:$0xff]
        %v6766 = vld [vmem:[#allocation2 + $0xf8] sm:$0xff]
        %v6767 = vld [vmem:[#allocation2 + $0x100] sm:$0xff]
        %v6768 = vld [vmem:[#allocation2 + $0x108] sm:$0xff]
        %v6769 = vld [vmem:[#allocation2 + $0x110] sm:$0xff]
        %v6770 = vld [vmem:[#allocation2 + $0x118] sm:$0xff]
        %v6771 = vld [vmem:[#allocation2 + $0x120] sm:$0x1]
        %v6772 = vld [vmem:[#allocation2 + $0x128] sm:$0x1]
        %v6773 = vld [vmem:[#allocation3 + $0x20] sm:$0xff]
        %v6774 = vld [vmem:[#allocation3 + $0x28] sm:$0xff]
        %v6775 = vld [vmem:[#allocation3 + $0x30] sm:$0xff]
        %v6776 = vld [vmem:[#allocation3 + $0x38] sm:$0xff]
        %v6777 = vld [vmem:[#allocation3 + $0x40] sm:$0xff]
        %v6778 = vld [vmem:[#allocation3 + $0x48] sm:$0xff]
        %v6779 = vld [vmem:[#allocation3 + $0x50] sm:$0xff]
        %v6780 = vld [vmem:[#allocation3 + $0x58] sm:$0xff]
        %v6781 = vld [vmem:[#allocation3 + $0x60] sm:$0xff]
        %v6782 = vld [vmem:[#allocation3 + $0x68] sm:$0xff]
        %v6783 = vld [vmem:[#allocation3 + $0x70] sm:$0xff]
        %v6784 = vld [vmem:[#allocation3 + $0x78] sm:$0xff]
        %v6785 = vld [vmem:[#allocation3 + $0x80] sm:$0xff]
        %v6786 = vld [vmem:[#allocation3 + $0x88] sm:$0xff]
        %v6787 = vld [vmem:[#allocation3 + $0x90] sm:$0xff]
        %v6788 = vld [vmem:[#allocation3 + $0x98] sm:$0xff]
        %v6789 = vld [vmem:[#allocation3 + $0xa0] sm:$0xff]
        %v6790 = vld [vmem:[#allocation3 + $0xa8] sm:$0xff]
        %v6791 = vld [vmem:[#allocation3 + $0xb0] sm:$0xff]
        %v6792 = vld [vmem:[#allocation3 + $0xb8] sm:$0xff]
        %v6793 = vld [vmem:[#allocation3 + $0xc0] sm:$0xff]
        %v6794 = vld [vmem:[#allocation3 + $0xc8] sm:$0xff]
        %v6795 = vld [vmem:[#allocation3 + $0xd0] sm:$0xff]
        %v6796 = vld [vmem:[#allocation3 + $0xd8] sm:$0xff]
        %v6797 = vld [vmem:[#allocation3 + $0xe0] sm:$0xff]
        %v6798 = vld [vmem:[#allocation3 + $0xe8] sm:$0xff]
        %v6799 = vld [vmem:[#allocation3 + $0xf0] sm:$0xff]
        %v6800 = vld [vmem:[#allocation3 + $0xf8] sm:$0xff]
        %v6801 = vld [vmem:[#allocation3 + $0x100] sm:$0xff]
        %v6802 = vld [vmem:[#allocation3 + $0x108] sm:$0xff]
        %v6803 = vld [vmem:[#allocation3 + $0x110] sm:$0xff]
        %v6804 = vld [vmem:[#allocation3 + $0x118] sm:$0xff]
        %v6805 = vld [vmem:[#allocation3 + $0x120] sm:$0x1]
        %v6806 = vld [vmem:[#allocation3 + $0x128] sm:$0x1]
        %s6807 = scalar_lea.vmem [#allocation4], 480
        %v6808 = vld [vmem:[%s6807] sm:$0xf]
        %v6809 = vld [vmem:[%s6807 + $0x4] sm:$0xf]
        %v6810 = vld [vmem:[%s6807 + $0x8] sm:$0xf]
        %v6811 = vld [vmem:[%s6807 + $0xc] sm:$0xf]
        %v6812 = vld [vmem:[%s6807 + $0x10] sm:$0xf]
        %v6813 = vld [vmem:[%s6807 + $0x14] sm:$0xf]
        %v6814 = vld [vmem:[%s6807 + $0x18] sm:$0xf]
        %v6815 = vld [vmem:[%s6807 + $0x1c] sm:$0xf]
        %v6816 = vld [vmem:[%s6807 + $0x20] sm:$0xf]
        %v6817 = vld [vmem:[%s6807 + $0x24] sm:$0xf]
        %v6818 = vld [vmem:[%s6807 + $0x28] sm:$0xf]
        %v6819 = vld [vmem:[%s6807 + $0x2c] sm:$0xf]
        %v6820 = vld [vmem:[%s6807 + $0x30] sm:$0xf]
        %v6821 = vld [vmem:[%s6807 + $0x34] sm:$0xf]
        %v6822 = vld [vmem:[%s6807 + $0x38] sm:$0xf]
        %v6823 = vld [vmem:[%s6807 + $0x3c] sm:$0xf]
        %v6824 = vld [vmem:[%s6807 + $0x40] sm:$0xf]
        %v6825 = vld [vmem:[%s6807 + $0x44] sm:$0xf]
        %v6826 = vld [vmem:[%s6807 + $0x48] sm:$0xf]
        %v6827 = vld [vmem:[%s6807 + $0x4c] sm:$0xf]
        %v6828 = vld [vmem:[%s6807 + $0x50] sm:$0xf]
        %v6829 = vld [vmem:[%s6807 + $0x54] sm:$0xf]
        %v6830 = vld [vmem:[%s6807 + $0x58] sm:$0xf]
        %v6831 = vld [vmem:[%s6807 + $0x5c] sm:$0xf]
        %s6832 = scalar_lea.vmem [#allocation7], 480
        %v6833 = vld [vmem:[%s6832] sm:$0xf]
        %v6834 = vld [vmem:[%s6832 + $0x4] sm:$0xf]
        %v6835 = vld [vmem:[%s6832 + $0x8] sm:$0xf]
        %v6836 = vld [vmem:[%s6832 + $0xc] sm:$0xf]
        %v6837 = vld [vmem:[%s6832 + $0x10] sm:$0xf]
        %v6838 = vld [vmem:[%s6832 + $0x14] sm:$0xf]
        %v6839 = vld [vmem:[%s6832 + $0x18] sm:$0xf]
        %v6840 = vld [vmem:[%s6832 + $0x1c] sm:$0xf]
        %v6841 = vld [vmem:[%s6832 + $0x20] sm:$0xf]
        %v6842 = vld [vmem:[%s6832 + $0x24] sm:$0xf]
        %v6843 = vld [vmem:[%s6832 + $0x28] sm:$0xf]
        %v6844 = vld [vmem:[%s6832 + $0x2c] sm:$0xf]
        %v6845 = vld [vmem:[%s6832 + $0x30] sm:$0xf]
        %v6846 = vld [vmem:[%s6832 + $0x34] sm:$0xf]
        %v6847 = vld [vmem:[%s6832 + $0x38] sm:$0xf]
        %v6848 = vld [vmem:[%s6832 + $0x3c] sm:$0xf]
        %v6849 = vld [vmem:[%s6832 + $0x40] sm:$0xf]
        %v6850 = vld [vmem:[%s6832 + $0x44] sm:$0xf]
        %v6851 = vld [vmem:[%s6832 + $0x48] sm:$0xf]
        %v6852 = vld [vmem:[%s6832 + $0x4c] sm:$0xf]
        %v6853 = vld [vmem:[%s6832 + $0x50] sm:$0xf]
        %v6854 = vld [vmem:[%s6832 + $0x54] sm:$0xf]
        %v6855 = vld [vmem:[%s6832 + $0x58] sm:$0xf]
        %v6856 = vld [vmem:[%s6832 + $0x5c] sm:$0xf]
        %v6858 = vshrl.u32 %v6773, 16
        %v6860 = vshll.u32 %v6773, 16
        %v6862 = vrot.slane %v6860, 1
        %v6863 = vor.u32 %v6858, %v6862
        %v6865 = vshll.u32 %v6775, 16
        %v6867 = vrot.slane %v6865, 1
        %v6868 = vsel %vm3996, %v6863, %v6867
        %v6870 = vshrl.u32 %v6774, 16
        %v6872 = vshll.u32 %v6774, 16
        %v6874 = vrot.slane %v6872, 1
        %v6875 = vor.u32 %v6870, %v6874
        %v6877 = vshll.u32 %v6776, 16
        %v6879 = vrot.slane %v6877, 1
        %v6880 = vsel %vm3996, %v6875, %v6879
        %v6881 = vshrl.u32 %v6775, 16
        %v6883 = vor.u32 %v6881, %v6867
        %v6885 = vshll.u32 %v6777, 16
        %v6887 = vrot.slane %v6885, 1
        %v6888 = vsel %vm3996, %v6883, %v6887
        %v6889 = vshrl.u32 %v6776, 16
        %v6891 = vor.u32 %v6889, %v6879
        %v6893 = vshll.u32 %v6778, 16
        %v6895 = vrot.slane %v6893, 1
        %v6896 = vsel %vm3996, %v6891, %v6895
        %v6897 = vshrl.u32 %v6777, 16
        %v6899 = vor.u32 %v6897, %v6887
        %v6901 = vshll.u32 %v6779, 16
        %v6903 = vrot.slane %v6901, 1
        %v6904 = vsel %vm3996, %v6899, %v6903
        %v6905 = vshrl.u32 %v6778, 16
        %v6907 = vor.u32 %v6905, %v6895
        %v6909 = vshll.u32 %v6780, 16
        %v6911 = vrot.slane %v6909, 1
        %v6912 = vsel %vm3996, %v6907, %v6911
        %v6913 = vshrl.u32 %v6779, 16
        %v6915 = vor.u32 %v6913, %v6903
        %v6917 = vshll.u32 %v6781, 16
        %v6919 = vrot.slane %v6917, 1
        %v6920 = vsel %vm3996, %v6915, %v6919
        %v6921 = vshrl.u32 %v6780, 16
        %v6923 = vor.u32 %v6921, %v6911
        %v6925 = vshll.u32 %v6782, 16
        %v6927 = vrot.slane %v6925, 1
        %v6928 = vsel %vm3996, %v6923, %v6927
        %v6929 = vshrl.u32 %v6781, 16
        %v6931 = vor.u32 %v6929, %v6919
        %v6933 = vshll.u32 %v6783, 16
        %v6935 = vrot.slane %v6933, 1
        %v6936 = vsel %vm3996, %v6931, %v6935
        %v6937 = vshrl.u32 %v6782, 16
        %v6939 = vor.u32 %v6937, %v6927
        %v6941 = vshll.u32 %v6784, 16
        %v6943 = vrot.slane %v6941, 1
        %v6944 = vsel %vm3996, %v6939, %v6943
        %v6945 = vshrl.u32 %v6783, 16
        %v6947 = vor.u32 %v6945, %v6935
        %v6949 = vshll.u32 %v6785, 16
        %v6951 = vrot.slane %v6949, 1
        %v6952 = vsel %vm3996, %v6947, %v6951
        %v6953 = vshrl.u32 %v6784, 16
        %v6955 = vor.u32 %v6953, %v6943
        %v6957 = vshll.u32 %v6786, 16
        %v6959 = vrot.slane %v6957, 1
        %v6960 = vsel %vm3996, %v6955, %v6959
        %v6961 = vshrl.u32 %v6785, 16
        %v6963 = vor.u32 %v6961, %v6951
        %v6965 = vshll.u32 %v6787, 16
        %v6967 = vrot.slane %v6965, 1
        %v6968 = vsel %vm3996, %v6963, %v6967
        %v6969 = vshrl.u32 %v6786, 16
        %v6971 = vor.u32 %v6969, %v6959
        %v6973 = vshll.u32 %v6788, 16
        %v6975 = vrot.slane %v6973, 1
        %v6976 = vsel %vm3996, %v6971, %v6975
        %v6977 = vshrl.u32 %v6787, 16
        %v6979 = vor.u32 %v6977, %v6967
        %v6981 = vshll.u32 %v6789, 16
        %v6983 = vrot.slane %v6981, 1
        %v6984 = vsel %vm3996, %v6979, %v6983
        %v6985 = vshrl.u32 %v6788, 16
        %v6987 = vor.u32 %v6985, %v6975
        %v6989 = vshll.u32 %v6790, 16
        %v6991 = vrot.slane %v6989, 1
        %v6992 = vsel %vm3996, %v6987, %v6991
        %v6993 = vshrl.u32 %v6789, 16
        %v6995 = vor.u32 %v6993, %v6983
        %v6997 = vshll.u32 %v6791, 16
        %v6999 = vrot.slane %v6997, 1
        %v7000 = vsel %vm3996, %v6995, %v6999
        %v7001 = vshrl.u32 %v6790, 16
        %v7003 = vor.u32 %v7001, %v6991
        %v7005 = vshll.u32 %v6792, 16
        %v7007 = vrot.slane %v7005, 1
        %v7008 = vsel %vm3996, %v7003, %v7007
        %v7009 = vshrl.u32 %v6791, 16
        %v7011 = vor.u32 %v7009, %v6999
        %v7013 = vshll.u32 %v6793, 16
        %v7015 = vrot.slane %v7013, 1
        %v7016 = vsel %vm3996, %v7011, %v7015
        %v7017 = vshrl.u32 %v6792, 16
        %v7019 = vor.u32 %v7017, %v7007
        %v7021 = vshll.u32 %v6794, 16
        %v7023 = vrot.slane %v7021, 1
        %v7024 = vsel %vm3996, %v7019, %v7023
        %v7025 = vshrl.u32 %v6793, 16
        %v7027 = vor.u32 %v7025, %v7015
        %v7029 = vshll.u32 %v6795, 16
        %v7031 = vrot.slane %v7029, 1
        %v7032 = vsel %vm3996, %v7027, %v7031
        %v7033 = vshrl.u32 %v6794, 16
        %v7035 = vor.u32 %v7033, %v7023
        %v7037 = vshll.u32 %v6796, 16
        %v7039 = vrot.slane %v7037, 1
        %v7040 = vsel %vm3996, %v7035, %v7039
        %v7041 = vshrl.u32 %v6795, 16
        %v7043 = vor.u32 %v7041, %v7031
        %v7045 = vshll.u32 %v6797, 16
        %v7047 = vrot.slane %v7045, 1
        %v7048 = vsel %vm3996, %v7043, %v7047
        %v7049 = vshrl.u32 %v6796, 16
        %v7051 = vor.u32 %v7049, %v7039
        %v7053 = vshll.u32 %v6798, 16
        %v7055 = vrot.slane %v7053, 1
        %v7056 = vsel %vm3996, %v7051, %v7055
        %v7057 = vshrl.u32 %v6797, 16
        %v7059 = vor.u32 %v7057, %v7047
        %v7061 = vshll.u32 %v6799, 16
        %v7063 = vrot.slane %v7061, 1
        %v7064 = vsel %vm3996, %v7059, %v7063
        %v7065 = vshrl.u32 %v6798, 16
        %v7067 = vor.u32 %v7065, %v7055
        %v7069 = vshll.u32 %v6800, 16
        %v7071 = vrot.slane %v7069, 1
        %v7072 = vsel %vm3996, %v7067, %v7071
        %v7073 = vshrl.u32 %v6799, 16
        %v7075 = vor.u32 %v7073, %v7063
        %v7077 = vshll.u32 %v6801, 16
        %v7079 = vrot.slane %v7077, 1
        %v7080 = vsel %vm3996, %v7075, %v7079
        %v7081 = vshrl.u32 %v6800, 16
        %v7083 = vor.u32 %v7081, %v7071
        %v7085 = vshll.u32 %v6802, 16
        %v7087 = vrot.slane %v7085, 1
        %v7088 = vsel %vm3996, %v7083, %v7087
        %v7089 = vshrl.u32 %v6801, 16
        %v7091 = vor.u32 %v7089, %v7079
        %v7093 = vshll.u32 %v6803, 16
        %v7095 = vrot.slane %v7093, 1
        %v7096 = vsel %vm3996, %v7091, %v7095
        %v7097 = vshrl.u32 %v6802, 16
        %v7099 = vor.u32 %v7097, %v7087
        %v7101 = vshll.u32 %v6804, 16
        %v7103 = vrot.slane %v7101, 1
        %v7104 = vsel %vm3996, %v7099, %v7103
        %v7105 = vshrl.u32 %v6803, 16
        %v7107 = vor.u32 %v7105, %v7095
        %v7109 = vshll.u32 %v6805, 16
        %v7111 = vrot.slane %v7109, 1
        %v7112 = vsel %vm3996, %v7107, %v7111
        %v7113 = vshrl.u32 %v6804, 16
        %v7115 = vor.u32 %v7113, %v7103
        %v7117 = vshll.u32 %v6806, 16
        %v7119 = vrot.slane %v7117, 1
        %v7120 = vsel %vm3996, %v7115, %v7119
        %v7161 = vunpack.c.l.b16 %v6833
        %v7162 = vunpack.c.l.b16 %v6834
        %v7163 = vunpack.c.l.b16 %v6835
        %v7164 = vunpack.c.l.b16 %v6836
        %v7165 = vunpack.c.l.b16 %v6837
        %v7166 = vunpack.c.l.b16 %v6838
        %v7167 = vunpack.c.l.b16 %v6839
        %v7168 = vunpack.c.l.b16 %v6840
        %v7169 = vunpack.c.l.b16 %v6841
        %v7170 = vunpack.c.l.b16 %v6842
        %v7171 = vunpack.c.l.b16 %v6843
        %v7172 = vunpack.c.l.b16 %v6844
        %v7173 = vunpack.c.l.b16 %v6845
        %v7174 = vunpack.c.l.b16 %v6846
        %v7175 = vunpack.c.l.b16 %v6847
        %v7176 = vunpack.c.l.b16 %v6848
        %v7177 = vunpack.c.l.b16 %v6849
        %v7178 = vunpack.c.l.b16 %v6850
        %v7179 = vunpack.c.l.b16 %v6851
        %v7180 = vunpack.c.l.b16 %v6852
        %v7181 = vunpack.c.l.b16 %v6853
        %v7182 = vunpack.c.l.b16 %v6854
        %v7183 = vunpack.c.l.b16 %v6855
        %v7184 = vunpack.c.l.b16 %v6856
        %v7185 = vpack.c.b16 %v7162, %v7161
        %v7186 = vpack.c.b16 %v7164, %v7163
        %v7187 = vpack.c.b16 %v7166, %v7165
        %v7188 = vpack.c.b16 %v7168, %v7167
        %v7189 = vpack.c.b16 %v7170, %v7169
        %v7190 = vpack.c.b16 %v7172, %v7171
        %v7191 = vpack.c.b16 %v7174, %v7173
        %v7192 = vpack.c.b16 %v7176, %v7175
        %v7193 = vpack.c.b16 %v7178, %v7177
        %v7194 = vpack.c.b16 %v7180, %v7179
        %v7195 = vpack.c.b16 %v7182, %v7181
        %v7196 = vpack.c.b16 %v7184, %v7183
        %v7210 = vsel %vm410, %v6880, 0
        %v7213 = vsel %vm410, %v6896, 0
        %v7216 = vsel %vm410, %v6912, 0
        %v7219 = vsel %vm410, %v6928, 0
        %v7222 = vsel %vm410, %v6944, 0
        %v7225 = vsel %vm410, %v6960, 0
        %v7228 = vsel %vm410, %v6976, 0
        %v7231 = vsel %vm410, %v6992, 0
        %v7234 = vsel %vm410, %v7008, 0
        %v7237 = vsel %vm410, %v7024, 0
        %v7240 = vsel %vm410, %v7040, 0
        %v7243 = vsel %vm410, %v7056, 0
        %v7246 = vsel %vm410, %v7072, 0
        %v7249 = vsel %vm410, %v7088, 0
        %v7252 = vsel %vm410, %v7104, 0
        %v7255 = vsel %vm410, %v7120, 0
        %7257 = vmatprep.subr.bf16.mxu0 0
        %7258 = vmatpush1.bf16.msra.mxu0 %v7185
        %7259 = vmatprep.subr.bf16.mxu0 0
        %7260 = vmatpush1.bf16.msra.mxu0 %v7186
        %7261 = vmatprep.subr.bf16.mxu0 0
        %7262 = vmatpush1.bf16.msra.mxu0 %v7187
        %7263 = vmatprep.subr.bf16.mxu0 0
        %7264 = vmatpush1.bf16.msra.mxu0 %v7188
        %7265 = vmatprep.subr.bf16.mxu0 0
        %7266 = vmatpush1.bf16.msra.mxu0 %v7189
        %7267 = vmatprep.subr.bf16.mxu0 0
        %7268 = vmatpush1.bf16.msra.mxu0 %v7190
        %7269 = vmatprep.subr.bf16.mxu0 0
        %7270 = vmatpush1.bf16.msra.mxu0 %v7191
        %7271 = vmatprep.subr.bf16.mxu0 0
        %7272 = vmatpush1.bf16.msra.mxu0 %v7192
        %7273 = vmatprep.subr.bf16.mxu0 0
        %7274 = vmatpush1.bf16.msra.mxu0 %v7193
        %7275 = vmatprep.subr.bf16.mxu0 0
        %7276 = vmatpush1.bf16.msra.mxu0 %v7194
        %7277 = vmatprep.subr.bf16.mxu0 0
        %7278 = vmatpush1.bf16.msra.mxu0 %v7195
        %7279 = vmatprep.subr.bf16.mxu0 0
        %7280 = vmatpush1.bf16.msra.mxu0 %v7196
        %7281 = vmatprep.subr.bf16.mxu0 0
        %7282 = vmatpush1.bf16.msra.mxu0 0
        %7283 = vmatprep.subr.bf16.mxu0 0
        %7284 = vmatpush1.bf16.msra.mxu0 0
        %7285 = vmatprep.subr.bf16.mxu0 0
        %7286 = vmatpush1.bf16.msra.mxu0 0
        %7287 = vmatprep.subr.bf16.mxu0 0
        %7288 = vmatpush1.bf16.msra.mxu0 0
        %7289 = vmatprep.mubr.bf16.mxu0 %v7210
        %7290 = vmatmul.mubr.bf16.gmra.mrb[0].mxu0 %v6868
        %v7291 = vpop.f32.mrb[0].mxu0
        %v7292 = vadd.f32 0.0, %v7291
        %v7293 = vpop.f32.mrb[0].mxu0
        %v7294 = vpop.f32.mrb[0].mxu0
        %v7295 = vadd.f32 0.0, %v7294
        %v7296 = vpop.f32.mrb[0].mxu0
        %7297 = vmatprep.mubr.bf16.mxu0 %v7213
        %7298 = vmatmul.mubr.bf16.gmra.mrb[0].mxu0 %v6888
        %v7299 = vpop.f32.mrb[0].mxu0
        %v7300 = vadd.f32 0.0, %v7299
        %v7301 = vpop.f32.mrb[0].mxu0
        %v7302 = vpop.f32.mrb[0].mxu0
        %v7303 = vadd.f32 0.0, %v7302
        %v7304 = vpop.f32.mrb[0].mxu0
        %7305 = vmatprep.mubr.bf16.mxu0 %v7216
        %7306 = vmatmul.mubr.bf16.gmra.mrb[0].mxu0 %v6904
        %v7307 = vpop.f32.mrb[0].mxu0
        %v7308 = vadd.f32 0.0, %v7307
        %v7309 = vpop.f32.mrb[0].mxu0
        %v7310 = vpop.f32.mrb[0].mxu0
        %v7311 = vadd.f32 0.0, %v7310
        %v7312 = vpop.f32.mrb[0].mxu0
        %7313 = vmatprep.mubr.bf16.mxu0 %v7219
        %7314 = vmatmul.mubr.bf16.gmra.mrb[0].mxu0 %v6920
        %v7315 = vpop.f32.mrb[0].mxu0
        %v7316 = vadd.f32 0.0, %v7315
        %v7317 = vpop.f32.mrb[0].mxu0
        %v7318 = vpop.f32.mrb[0].mxu0
        %v7319 = vadd.f32 0.0, %v7318
        %v7320 = vpop.f32.mrb[0].mxu0
        %7321 = vmatprep.mubr.bf16.mxu0 %v7222
        %7322 = vmatmul.mubr.bf16.gmra.mrb[0].mxu0 %v6936
        %v7323 = vpop.f32.mrb[0].mxu0
        %v7324 = vadd.f32 0.0, %v7323
        %v7325 = vpop.f32.mrb[0].mxu0
        %v7326 = vpop.f32.mrb[0].mxu0
        %v7327 = vadd.f32 0.0, %v7326
        %v7328 = vpop.f32.mrb[0].mxu0
        %7329 = vmatprep.mubr.bf16.mxu0 %v7225
        %7330 = vmatmul.mubr.bf16.gmra.mrb[0].mxu0 %v6952
        %v7331 = vpop.f32.mrb[0].mxu0
        %v7332 = vadd.f32 0.0, %v7331
        %v7333 = vpop.f32.mrb[0].mxu0
        %v7334 = vpop.f32.mrb[0].mxu0
        %v7335 = vadd.f32 0.0, %v7334
        %v7336 = vpop.f32.mrb[0].mxu0
        %7337 = vmatprep.mubr.bf16.mxu0 %v7228
        %7338 = vmatmul.mubr.bf16.gmra.mrb[0].mxu0 %v6968
        %v7339 = vpop.f32.mrb[0].mxu0
        %v7340 = vadd.f32 0.0, %v7339
        %v7341 = vpop.f32.mrb[0].mxu0
        %v7342 = vpop.f32.mrb[0].mxu0
        %v7343 = vadd.f32 0.0, %v7342
        %v7344 = vpop.f32.mrb[0].mxu0
        %7345 = vmatprep.mubr.bf16.mxu0 %v7231
        %7346 = vmatmul.mubr.bf16.gmra.mrb[0].mxu0 %v6984
        %v7347 = vpop.f32.mrb[0].mxu0
        %v7348 = vadd.f32 0.0, %v7347
        %v7349 = vpop.f32.mrb[0].mxu0
        %v7350 = vpop.f32.mrb[0].mxu0
        %v7351 = vadd.f32 0.0, %v7350
        %v7352 = vpop.f32.mrb[0].mxu0
        %7353 = vmatprep.mubr.bf16.mxu0 %v7234
        %7354 = vmatmul.mubr.bf16.gmra.mrb[0].mxu0 %v7000
        %v7355 = vpop.f32.mrb[0].mxu0
        %v7356 = vadd.f32 0.0, %v7355
        %v7357 = vpop.f32.mrb[0].mxu0
        %v7358 = vpop.f32.mrb[0].mxu0
        %v7359 = vadd.f32 0.0, %v7358
        %v7360 = vpop.f32.mrb[0].mxu0
        %7361 = vmatprep.mubr.bf16.mxu0 %v7237
        %7362 = vmatmul.mubr.bf16.gmra.mrb[0].mxu0 %v7016
        %v7363 = vpop.f32.mrb[0].mxu0
        %v7364 = vadd.f32 0.0, %v7363
        %v7365 = vpop.f32.mrb[0].mxu0
        %v7366 = vpop.f32.mrb[0].mxu0
        %v7367 = vadd.f32 0.0, %v7366
        %v7368 = vpop.f32.mrb[0].mxu0
        %7369 = vmatprep.mubr.bf16.mxu0 %v7240
        %7370 = vmatmul.mubr.bf16.gmra.mrb[0].mxu0 %v7032
        %v7371 = vpop.f32.mrb[0].mxu0
        %v7372 = vadd.f32 0.0, %v7371
        %v7373 = vpop.f32.mrb[0].mxu0
        %v7374 = vpop.f32.mrb[0].mxu0
        %v7375 = vadd.f32 0.0, %v7374
        %v7376 = vpop.f32.mrb[0].mxu0
        %7377 = vmatprep.mubr.bf16.mxu0 %v7243
        %7378 = vmatmul.mubr.bf16.gmra.mrb[0].mxu0 %v7048
        %v7379 = vpop.f32.mrb[0].mxu0
        %v7380 = vadd.f32 0.0, %v7379
        %v7381 = vpop.f32.mrb[0].mxu0
        %v7382 = vpop.f32.mrb[0].mxu0
        %v7383 = vadd.f32 0.0, %v7382
        %v7384 = vpop.f32.mrb[0].mxu0
        %7385 = vmatprep.mubr.bf16.mxu0 %v7246
        %7386 = vmatmul.mubr.bf16.gmra.mrb[0].mxu0 %v7064
        %v7387 = vpop.f32.mrb[0].mxu0
        %v7388 = vadd.f32 0.0, %v7387
        %v7389 = vpop.f32.mrb[0].mxu0
        %v7390 = vpop.f32.mrb[0].mxu0
        %v7391 = vadd.f32 0.0, %v7390
        %v7392 = vpop.f32.mrb[0].mxu0
        %7393 = vmatprep.mubr.bf16.mxu0 %v7249
        %7394 = vmatmul.mubr.bf16.gmra.mrb[0].mxu0 %v7080
        %v7395 = vpop.f32.mrb[0].mxu0
        %v7396 = vadd.f32 0.0, %v7395
        %v7397 = vpop.f32.mrb[0].mxu0
        %v7398 = vpop.f32.mrb[0].mxu0
        %v7399 = vadd.f32 0.0, %v7398
        %v7400 = vpop.f32.mrb[0].mxu0
        %7401 = vmatprep.mubr.bf16.mxu0 %v7252
        %7402 = vmatmul.mubr.bf16.gmra.mrb[0].mxu0 %v7096
        %v7403 = vpop.f32.mrb[0].mxu0
        %v7404 = vadd.f32 0.0, %v7403
        %v7405 = vpop.f32.mrb[0].mxu0
        %v7406 = vpop.f32.mrb[0].mxu0
        %v7407 = vadd.f32 0.0, %v7406
        %v7408 = vpop.f32.mrb[0].mxu0
        %7409 = vmatprep.mubr.bf16.mxu0 %v7255
        %7410 = vmatmul.mubr.bf16.gmra.mrb[0].mxu0 %v7112
        %v7411 = vpop.f32.mrb[0].mxu0
        %v7412 = vadd.f32 0.0, %v7411
        %v7413 = vpop.f32.mrb[0].mxu0
        %v7414 = vpop.f32.mrb[0].mxu0
        %v7415 = vadd.f32 0.0, %v7414
        %v7416 = vpop.f32.mrb[0].mxu0
        %7417 = vdwg.mxu0
        %v7419 = vshrl.u32 %v6739, 16
        %v7421 = vshll.u32 %v6739, 16
        %v7423 = vrot.slane %v7421, 1
        %v7424 = vor.u32 %v7419, %v7423
        %v7426 = vshll.u32 %v6741, 16
        %v7428 = vrot.slane %v7426, 1
        %v7429 = vsel %vm3996, %v7424, %v7428
        %v7431 = vshrl.u32 %v6740, 16
        %v7433 = vshll.u32 %v6740, 16
        %v7435 = vrot.slane %v7433, 1
        %v7436 = vor.u32 %v7431, %v7435
        %v7438 = vshll.u32 %v6742, 16
        %v7440 = vrot.slane %v7438, 1
        %v7441 = vsel %vm3996, %v7436, %v7440
        %v7442 = vshrl.u32 %v6741, 16
        %v7444 = vor.u32 %v7442, %v7428
        %v7446 = vshll.u32 %v6743, 16
        %v7448 = vrot.slane %v7446, 1
        %v7449 = vsel %vm3996, %v7444, %v7448
        %v7450 = vshrl.u32 %v6742, 16
        %v7452 = vor.u32 %v7450, %v7440
        %v7454 = vshll.u32 %v6744, 16
        %v7456 = vrot.slane %v7454, 1
        %v7457 = vsel %vm3996, %v7452, %v7456
        %v7458 = vshrl.u32 %v6743, 16
        %v7460 = vor.u32 %v7458, %v7448
        %v7462 = vshll.u32 %v6745, 16
        %v7464 = vrot.slane %v7462, 1
        %v7465 = vsel %vm3996, %v7460, %v7464
        %v7466 = vshrl.u32 %v6744, 16
        %v7468 = vor.u32 %v7466, %v7456
        %v7470 = vshll.u32 %v6746, 16
        %v7472 = vrot.slane %v7470, 1
        %v7473 = vsel %vm3996, %v7468, %v7472
        %v7474 = vshrl.u32 %v6745, 16
        %v7476 = vor.u32 %v7474, %v7464
        %v7478 = vshll.u32 %v6747, 16
        %v7480 = vrot.slane %v7478, 1
        %v7481 = vsel %vm3996, %v7476, %v7480
        %v7482 = vshrl.u32 %v6746, 16
        %v7484 = vor.u32 %v7482, %v7472
        %v7486 = vshll.u32 %v6748, 16
        %v7488 = vrot.slane %v7486, 1
        %v7489 = vsel %vm3996, %v7484, %v7488
        %v7490 = vshrl.u32 %v6747, 16
        %v7492 = vor.u32 %v7490, %v7480
        %v7494 = vshll.u32 %v6749, 16
        %v7496 = vrot.slane %v7494, 1
        %v7497 = vsel %vm3996, %v7492, %v7496
        %v7498 = vshrl.u32 %v6748, 16
        %v7500 = vor.u32 %v7498, %v7488
        %v7502 = vshll.u32 %v6750, 16
        %v7504 = vrot.slane %v7502, 1
        %v7505 = vsel %vm3996, %v7500, %v7504
        %v7506 = vshrl.u32 %v6749, 16
        %v7508 = vor.u32 %v7506, %v7496
        %v7510 = vshll.u32 %v6751, 16
        %v7512 = vrot.slane %v7510, 1
        %v7513 = vsel %vm3996, %v7508, %v7512
        %v7514 = vshrl.u32 %v6750, 16
        %v7516 = vor.u32 %v7514, %v7504
        %v7518 = vshll.u32 %v6752, 16
        %v7520 = vrot.slane %v7518, 1
        %v7521 = vsel %vm3996, %v7516, %v7520
        %v7522 = vshrl.u32 %v6751, 16
        %v7524 = vor.u32 %v7522, %v7512
        %v7526 = vshll.u32 %v6753, 16
        %v7528 = vrot.slane %v7526, 1
        %v7529 = vsel %vm3996, %v7524, %v7528
        %v7530 = vshrl.u32 %v6752, 16
        %v7532 = vor.u32 %v7530, %v7520
        %v7534 = vshll.u32 %v6754, 16
        %v7536 = vrot.slane %v7534, 1
        %v7537 = vsel %vm3996, %v7532, %v7536
        %v7538 = vshrl.u32 %v6753, 16
        %v7540 = vor.u32 %v7538, %v7528
        %v7542 = vshll.u32 %v6755, 16
        %v7544 = vrot.slane %v7542, 1
        %v7545 = vsel %vm3996, %v7540, %v7544
        %v7546 = vshrl.u32 %v6754, 16
        %v7548 = vor.u32 %v7546, %v7536
        %v7550 = vshll.u32 %v6756, 16
        %v7552 = vrot.slane %v7550, 1
        %v7553 = vsel %vm3996, %v7548, %v7552
        %v7554 = vshrl.u32 %v6755, 16
        %v7556 = vor.u32 %v7554, %v7544
        %v7558 = vshll.u32 %v6757, 16
        %v7560 = vrot.slane %v7558, 1
        %v7561 = vsel %vm3996, %v7556, %v7560
        %v7562 = vshrl.u32 %v6756, 16
        %v7564 = vor.u32 %v7562, %v7552
        %v7566 = vshll.u32 %v6758, 16
        %v7568 = vrot.slane %v7566, 1
        %v7569 = vsel %vm3996, %v7564, %v7568
        %v7570 = vshrl.u32 %v6757, 16
        %v7572 = vor.u32 %v7570, %v7560
        %v7574 = vshll.u32 %v6759, 16
        %v7576 = vrot.slane %v7574, 1
        %v7577 = vsel %vm3996, %v7572, %v7576
        %v7578 = vshrl.u32 %v6758, 16
        %v7580 = vor.u32 %v7578, %v7568
        %v7582 = vshll.u32 %v6760, 16
        %v7584 = vrot.slane %v7582, 1
        %v7585 = vsel %vm3996, %v7580, %v7584
        %v7586 = vshrl.u32 %v6759, 16
        %v7588 = vor.u32 %v7586, %v7576
        %v7590 = vshll.u32 %v6761, 16
        %v7592 = vrot.slane %v7590, 1
        %v7593 = vsel %vm3996, %v7588, %v7592
        %v7594 = vshrl.u32 %v6760, 16
        %v7596 = vor.u32 %v7594, %v7584
        %v7598 = vshll.u32 %v6762, 16
        %v7600 = vrot.slane %v7598, 1
        %v7601 = vsel %vm3996, %v7596, %v7600
        %v7602 = vshrl.u32 %v6761, 16
        %v7604 = vor.u32 %v7602, %v7592
        %v7606 = vshll.u32 %v6763, 16
        %v7608 = vrot.slane %v7606, 1
        %v7609 = vsel %vm3996, %v7604, %v7608
        %v7610 = vshrl.u32 %v6762, 16
        %v7612 = vor.u32 %v7610, %v7600
        %v7614 = vshll.u32 %v6764, 16
        %v7616 = vrot.slane %v7614, 1
        %v7617 = vsel %vm3996, %v7612, %v7616
        %v7618 = vshrl.u32 %v6763, 16
        %v7620 = vor.u32 %v7618, %v7608
        %v7622 = vshll.u32 %v6765, 16
        %v7624 = vrot.slane %v7622, 1
        %v7625 = vsel %vm3996, %v7620, %v7624
        %v7626 = vshrl.u32 %v6764, 16
        %v7628 = vor.u32 %v7626, %v7616
        %v7630 = vshll.u32 %v6766, 16
        %v7632 = vrot.slane %v7630, 1
        %v7633 = vsel %vm3996, %v7628, %v7632
        %v7634 = vshrl.u32 %v6765, 16
        %v7636 = vor.u32 %v7634, %v7624
        %v7638 = vshll.u32 %v6767, 16
        %v7640 = vrot.slane %v7638, 1
        %v7641 = vsel %vm3996, %v7636, %v7640
        %v7642 = vshrl.u32 %v6766, 16
        %v7644 = vor.u32 %v7642, %v7632
        %v7646 = vshll.u32 %v6768, 16
        %v7648 = vrot.slane %v7646, 1
        %v7649 = vsel %vm3996, %v7644, %v7648
        %v7650 = vshrl.u32 %v6767, 16
        %v7652 = vor.u32 %v7650, %v7640
        %v7654 = vshll.u32 %v6769, 16
        %v7656 = vrot.slane %v7654, 1
        %v7657 = vsel %vm3996, %v7652, %v7656
        %v7658 = vshrl.u32 %v6768, 16
        %v7660 = vor.u32 %v7658, %v7648
        %v7662 = vshll.u32 %v6770, 16
        %v7664 = vrot.slane %v7662, 1
        %v7665 = vsel %vm3996, %v7660, %v7664
        %v7666 = vshrl.u32 %v6769, 16
        %v7668 = vor.u32 %v7666, %v7656
        %v7670 = vshll.u32 %v6771, 16
        %v7672 = vrot.slane %v7670, 1
        %v7673 = vsel %vm3996, %v7668, %v7672
        %v7674 = vshrl.u32 %v6770, 16
        %v7676 = vor.u32 %v7674, %v7664
        %v7678 = vshll.u32 %v6772, 16
        %v7680 = vrot.slane %v7678, 1
        %v7681 = vsel %vm3996, %v7676, %v7680
        %v7722 = vunpack.c.l.b16 %v6808
        %v7723 = vunpack.c.l.b16 %v6809
        %v7724 = vunpack.c.l.b16 %v6810
        %v7725 = vunpack.c.l.b16 %v6811
        %v7726 = vunpack.c.l.b16 %v6812
        %v7727 = vunpack.c.l.b16 %v6813
        %v7728 = vunpack.c.l.b16 %v6814
        %v7729 = vunpack.c.l.b16 %v6815
        %v7730 = vunpack.c.l.b16 %v6816
        %v7731 = vunpack.c.l.b16 %v6817
        %v7732 = vunpack.c.l.b16 %v6818
        %v7733 = vunpack.c.l.b16 %v6819
        %v7734 = vunpack.c.l.b16 %v6820
        %v7735 = vunpack.c.l.b16 %v6821
        %v7736 = vunpack.c.l.b16 %v6822
        %v7737 = vunpack.c.l.b16 %v6823
        %v7738 = vunpack.c.l.b16 %v6824
        %v7739 = vunpack.c.l.b16 %v6825
        %v7740 = vunpack.c.l.b16 %v6826
        %v7741 = vunpack.c.l.b16 %v6827
        %v7742 = vunpack.c.l.b16 %v6828
        %v7743 = vunpack.c.l.b16 %v6829
        %v7744 = vunpack.c.l.b16 %v6830
        %v7745 = vunpack.c.l.b16 %v6831
        %v7746 = vpack.c.b16 %v7723, %v7722
        %v7747 = vpack.c.b16 %v7725, %v7724
        %v7748 = vpack.c.b16 %v7727, %v7726
        %v7749 = vpack.c.b16 %v7729, %v7728
        %v7750 = vpack.c.b16 %v7731, %v7730
        %v7751 = vpack.c.b16 %v7733, %v7732
        %v7752 = vpack.c.b16 %v7735, %v7734
        %v7753 = vpack.c.b16 %v7737, %v7736
        %v7754 = vpack.c.b16 %v7739, %v7738
        %v7755 = vpack.c.b16 %v7741, %v7740
        %v7756 = vpack.c.b16 %v7743, %v7742
        %v7757 = vpack.c.b16 %v7745, %v7744
        %v7771 = vsel %vm410, %v7441, 0
        %v7774 = vsel %vm410, %v7457, 0
        %v7777 = vsel %vm410, %v7473, 0
        %v7780 = vsel %vm410, %v7489, 0
        %v7783 = vsel %vm410, %v7505, 0
        %v7786 = vsel %vm410, %v7521, 0
        %v7789 = vsel %vm410, %v7537, 0
        %v7792 = vsel %vm410, %v7553, 0
        %v7795 = vsel %vm410, %v7569, 0
        %v7798 = vsel %vm410, %v7585, 0
        %v7801 = vsel %vm410, %v7601, 0
        %v7804 = vsel %vm410, %v7617, 0
        %v7807 = vsel %vm410, %v7633, 0
        %v7810 = vsel %vm410, %v7649, 0
        %v7813 = vsel %vm410, %v7665, 0
        %v7816 = vsel %vm410, %v7681, 0
        %7818 = vmatprep.subr.bf16.mxu0 0
        %7819 = vmatpush1.bf16.msra.mxu0 %v7746
        %7820 = vmatprep.subr.bf16.mxu0 0
        %7821 = vmatpush1.bf16.msra.mxu0 %v7747
        %7822 = vmatprep.subr.bf16.mxu0 0
        %7823 = vmatpush1.bf16.msra.mxu0 %v7748
        %7824 = vmatprep.subr.bf16.mxu0 0
        %7825 = vmatpush1.bf16.msra.mxu0 %v7749
        %7826 = vmatprep.subr.bf16.mxu0 0
        %7827 = vmatpush1.bf16.msra.mxu0 %v7750
        %7828 = vmatprep.subr.bf16.mxu0 0
        %7829 = vmatpush1.bf16.msra.mxu0 %v7751
        %7830 = vmatprep.subr.bf16.mxu0 0
        %7831 = vmatpush1.bf16.msra.mxu0 %v7752
        %7832 = vmatprep.subr.bf16.mxu0 0
        %7833 = vmatpush1.bf16.msra.mxu0 %v7753
        %7834 = vmatprep.subr.bf16.mxu0 0
        %7835 = vmatpush1.bf16.msra.mxu0 %v7754
        %7836 = vmatprep.subr.bf16.mxu0 0
        %7837 = vmatpush1.bf16.msra.mxu0 %v7755
        %7838 = vmatprep.subr.bf16.mxu0 0
        %7839 = vmatpush1.bf16.msra.mxu0 %v7756
        %7840 = vmatprep.subr.bf16.mxu0 0
        %7841 = vmatpush1.bf16.msra.mxu0 %v7757
        %7842 = vmatprep.subr.bf16.mxu0 0
        %7843 = vmatpush1.bf16.msra.mxu0 0
        %7844 = vmatprep.subr.bf16.mxu0 0
        %7845 = vmatpush1.bf16.msra.mxu0 0
        %7846 = vmatprep.subr.bf16.mxu0 0
        %7847 = vmatpush1.bf16.msra.mxu0 0
        %7848 = vmatprep.subr.bf16.mxu0 0
        %7849 = vmatpush1.bf16.msra.mxu0 0
        %7850 = vmatprep.mubr.bf16.mxu0 %v7771
        %7851 = vmatmul.mubr.bf16.gmra.mrb[0].mxu0 %v7429
        %v7852 = vpop.f32.mrb[0].mxu0
        %v7853 = vadd.f32 %v7292, %v7852
        %v7854 = vpop.f32.mrb[0].mxu0
        %v7855 = vpop.f32.mrb[0].mxu0
        %v7856 = vadd.f32 %v7295, %v7855
        %v7857 = vpop.f32.mrb[0].mxu0
        %7858 = vmatprep.mubr.bf16.mxu0 %v7774
        %7859 = vmatmul.mubr.bf16.gmra.mrb[0].mxu0 %v7449
        %v7860 = vpop.f32.mrb[0].mxu0
        %v7861 = vadd.f32 %v7300, %v7860
        %v7862 = vpop.f32.mrb[0].mxu0
        %v7863 = vpop.f32.mrb[0].mxu0
        %v7864 = vadd.f32 %v7303, %v7863
        %v7865 = vpop.f32.mrb[0].mxu0
        %7866 = vmatprep.mubr.bf16.mxu0 %v7777
        %7867 = vmatmul.mubr.bf16.gmra.mrb[0].mxu0 %v7465
        %v7868 = vpop.f32.mrb[0].mxu0
        %v7869 = vadd.f32 %v7308, %v7868
        %v7870 = vpop.f32.mrb[0].mxu0
        %v7871 = vpop.f32.mrb[0].mxu0
        %v7872 = vadd.f32 %v7311, %v7871
        %v7873 = vpop.f32.mrb[0].mxu0
        %7874 = vmatprep.mubr.bf16.mxu0 %v7780
        %7875 = vmatmul.mubr.bf16.gmra.mrb[0].mxu0 %v7481
        %v7876 = vpop.f32.mrb[0].mxu0
        %v7877 = vadd.f32 %v7316, %v7876
        %v7878 = vpop.f32.mrb[0].mxu0
        %v7879 = vpop.f32.mrb[0].mxu0
        %v7880 = vadd.f32 %v7319, %v7879
        %v7881 = vpop.f32.mrb[0].mxu0
        %7882 = vmatprep.mubr.bf16.mxu0 %v7783
        %7883 = vmatmul.mubr.bf16.gmra.mrb[0].mxu0 %v7497
        %v7884 = vpop.f32.mrb[0].mxu0
        %v7885 = vadd.f32 %v7324, %v7884
        %v7886 = vpop.f32.mrb[0].mxu0
        %v7887 = vpop.f32.mrb[0].mxu0
        %v7888 = vadd.f32 %v7327, %v7887
        %v7889 = vpop.f32.mrb[0].mxu0
        %7890 = vmatprep.mubr.bf16.mxu0 %v7786
        %7891 = vmatmul.mubr.bf16.gmra.mrb[0].mxu0 %v7513
        %v7892 = vpop.f32.mrb[0].mxu0
        %v7893 = vadd.f32 %v7332, %v7892
        %v7894 = vpop.f32.mrb[0].mxu0
        %v7895 = vpop.f32.mrb[0].mxu0
        %v7896 = vadd.f32 %v7335, %v7895
        %v7897 = vpop.f32.mrb[0].mxu0
        %7898 = vmatprep.mubr.bf16.mxu0 %v7789
        %7899 = vmatmul.mubr.bf16.gmra.mrb[0].mxu0 %v7529
        %v7900 = vpop.f32.mrb[0].mxu0
        %v7901 = vadd.f32 %v7340, %v7900
        %v7902 = vpop.f32.mrb[0].mxu0
        %v7903 = vpop.f32.mrb[0].mxu0
        %v7904 = vadd.f32 %v7343, %v7903
        %v7905 = vpop.f32.mrb[0].mxu0
        %7906 = vmatprep.mubr.bf16.mxu0 %v7792
        %7907 = vmatmul.mubr.bf16.gmra.mrb[0].mxu0 %v7545
        %v7908 = vpop.f32.mrb[0].mxu0
        %v7909 = vadd.f32 %v7348, %v7908
        %v7910 = vpop.f32.mrb[0].mxu0
        %v7911 = vpop.f32.mrb[0].mxu0
        %v7912 = vadd.f32 %v7351, %v7911
        %v7913 = vpop.f32.mrb[0].mxu0
        %7914 = vmatprep.mubr.bf16.mxu0 %v7795
        %7915 = vmatmul.mubr.bf16.gmra.mrb[0].mxu0 %v7561
        %v7916 = vpop.f32.mrb[0].mxu0
        %v7917 = vadd.f32 %v7356, %v7916
        %v7918 = vpop.f32.mrb[0].mxu0
        %v7919 = vpop.f32.mrb[0].mxu0
        %v7920 = vadd.f32 %v7359, %v7919
        %v7921 = vpop.f32.mrb[0].mxu0
        %7922 = vmatprep.mubr.bf16.mxu0 %v7798
        %7923 = vmatmul.mubr.bf16.gmra.mrb[0].mxu0 %v7577
        %v7924 = vpop.f32.mrb[0].mxu0
        %v7925 = vadd.f32 %v7364, %v7924
        %v7926 = vpop.f32.mrb[0].mxu0
        %v7927 = vpop.f32.mrb[0].mxu0
        %v7928 = vadd.f32 %v7367, %v7927
        %v7929 = vpop.f32.mrb[0].mxu0
        %7930 = vmatprep.mubr.bf16.mxu0 %v7801
        %7931 = vmatmul.mubr.bf16.gmra.mrb[0].mxu0 %v7593
        %v7932 = vpop.f32.mrb[0].mxu0
        %v7933 = vadd.f32 %v7372, %v7932
        %v7934 = vpop.f32.mrb[0].mxu0
        %v7935 = vpop.f32.mrb[0].mxu0
        %v7936 = vadd.f32 %v7375, %v7935
        %v7937 = vpop.f32.mrb[0].mxu0
        %7938 = vmatprep.mubr.bf16.mxu0 %v7804
        %7939 = vmatmul.mubr.bf16.gmra.mrb[0].mxu0 %v7609
        %v7940 = vpop.f32.mrb[0].mxu0
        %v7941 = vadd.f32 %v7380, %v7940
        %v7942 = vpop.f32.mrb[0].mxu0
        %v7943 = vpop.f32.mrb[0].mxu0
        %v7944 = vadd.f32 %v7383, %v7943
        %v7945 = vpop.f32.mrb[0].mxu0
        %7946 = vmatprep.mubr.bf16.mxu0 %v7807
        %7947 = vmatmul.mubr.bf16.gmra.mrb[0].mxu0 %v7625
        %v7948 = vpop.f32.mrb[0].mxu0
        %v7949 = vadd.f32 %v7388, %v7948
        %v7950 = vpop.f32.mrb[0].mxu0
        %v7951 = vpop.f32.mrb[0].mxu0
        %v7952 = vadd.f32 %v7391, %v7951
        %v7953 = vpop.f32.mrb[0].mxu0
        %7954 = vmatprep.mubr.bf16.mxu0 %v7810
        %7955 = vmatmul.mubr.bf16.gmra.mrb[0].mxu0 %v7641
        %v7956 = vpop.f32.mrb[0].mxu0
        %v7957 = vadd.f32 %v7396, %v7956
        %v7958 = vpop.f32.mrb[0].mxu0
        %v7959 = vpop.f32.mrb[0].mxu0
        %v7960 = vadd.f32 %v7399, %v7959
        %v7961 = vpop.f32.mrb[0].mxu0
        %7962 = vmatprep.mubr.bf16.mxu0 %v7813
        %7963 = vmatmul.mubr.bf16.gmra.mrb[0].mxu0 %v7657
        %v7964 = vpop.f32.mrb[0].mxu0
        %v7965 = vadd.f32 %v7404, %v7964
        %v7966 = vpop.f32.mrb[0].mxu0
        %v7967 = vpop.f32.mrb[0].mxu0
        %v7968 = vadd.f32 %v7407, %v7967
        %v7969 = vpop.f32.mrb[0].mxu0
        %7970 = vmatprep.mubr.bf16.mxu0 %v7816
        %7971 = vmatmul.mubr.bf16.gmra.mrb[0].mxu0 %v7673
        %v7972 = vpop.f32.mrb[0].mxu0
        %v7973 = vadd.f32 %v7412, %v7972
        %v7974 = vpop.f32.mrb[0].mxu0
        %v7975 = vpop.f32.mrb[0].mxu0
        %v7976 = vadd.f32 %v7415, %v7975
        %v7977 = vpop.f32.mrb[0].mxu0
        %7978 = vdwg.mxu0
        %v7979 = vsel %vm1924, %v7853, 0.0
        %v7980 = vsel %vm1925, %v7856, 0.0
        %v7981 = vsel %vm1926, %v7861, 0.0
        %v7982 = vsel %vm1927, %v7864, 0.0
        %v7983 = vsel %vm1928, %v7869, 0.0
        %v7984 = vsel %vm1929, %v7872, 0.0
        %v7985 = vsel %vm1930, %v7877, 0.0
        %v7986 = vsel %vm1931, %v7880, 0.0
        %v7987 = vsel %vm1932, %v7885, 0.0
        %v7988 = vsel %vm1933, %v7888, 0.0
        %v7989 = vsel %vm1934, %v7893, 0.0
        %v7990 = vsel %vm1935, %v7896, 0.0
        %v7991 = vsel %vm1936, %v7901, 0.0
        %v7992 = vsel %vm1937, %v7904, 0.0
        %v7993 = vsel %vm1938, %v7909, 0.0
        %v7994 = vsel %vm1939, %v7912, 0.0
        %v7995 = vsel %vm1940, %v7917, 0.0
        %v7996 = vsel %vm1941, %v7920, 0.0
        %v7997 = vsel %vm1942, %v7925, 0.0
        %v7998 = vsel %vm1943, %v7928, 0.0
        %v7999 = vsel %vm1944, %v7933, 0.0
        %v8000 = vsel %vm1945, %v7936, 0.0
        %v8001 = vsel %vm1946, %v7941, 0.0
        %v8002 = vsel %vm1947, %v7944, 0.0
        %v8003 = vsel %vm1948, %v7949, 0.0
        %v8004 = vsel %vm1949, %v7952, 0.0
        %v8005 = vsel %vm1950, %v7957, 0.0
        %v8006 = vsel %vm1951, %v7960, 0.0
        %v8007 = vsel %vm1952, %v7965, 0.0
        %v8008 = vsel %vm1953, %v7968, 0.0
        %v8009 = vsel %vm1954, %v7973, 0.0
        %v8010 = vsel %vm1955, %v7976, 0.0
        %v8011 = vadd.f32 %v6707, %v7979
        %v8012 = vadd.f32 %v6708, %v7980
        %v8013 = vadd.f32 %v6709, %v7981
        %v8014 = vadd.f32 %v6710, %v7982
        %v8015 = vadd.f32 %v6711, %v7983
        %v8016 = vadd.f32 %v6712, %v7984
        %v8017 = vadd.f32 %v6713, %v7985
        %v8018 = vadd.f32 %v6714, %v7986
        %v8019 = vadd.f32 %v6715, %v7987
        %v8020 = vadd.f32 %v6716, %v7988
        %v8021 = vadd.f32 %v6717, %v7989
        %v8022 = vadd.f32 %v6718, %v7990
        %v8023 = vadd.f32 %v6719, %v7991
        %v8024 = vadd.f32 %v6720, %v7992
        %v8025 = vadd.f32 %v6721, %v7993
        %v8026 = vadd.f32 %v6722, %v7994
        %v8027 = vadd.f32 %v6723, %v7995
        %v8028 = vadd.f32 %v6724, %v7996
        %v8029 = vadd.f32 %v6725, %v7997
        %v8030 = vadd.f32 %v6726, %v7998
        %v8031 = vadd.f32 %v6727, %v7999
        %v8032 = vadd.f32 %v6728, %v8000
        %v8033 = vadd.f32 %v6729, %v8001
        %v8034 = vadd.f32 %v6730, %v8002
        %v8035 = vadd.f32 %v6731, %v8003
        %v8036 = vadd.f32 %v6732, %v8004
        %v8037 = vadd.f32 %v6733, %v8005
        %v8038 = vadd.f32 %v6734, %v8006
        %v8039 = vadd.f32 %v6735, %v8007
        %v8040 = vadd.f32 %v6736, %v8008
        %v8041 = vadd.f32 %v6737, %v8009
        %v8042 = vadd.f32 %v6738, %v8010
        %v8043 = vld [vmem:[#allocation2 + $0x20] sm:$0x80]
        %v8044 = vld [vmem:[#allocation2 + $0x28] sm:$0x80]
        %v8045 = vld [vmem:[#allocation2 + $0x120] sm:$0xff]
        %v8046 = vld [vmem:[#allocation2 + $0x128] sm:$0xff]
        %v8047 = vld [vmem:[#allocation3 + $0x20] sm:$0x80]
        %v8048 = vld [vmem:[#allocation3 + $0x28] sm:$0x80]
        %v8049 = vld [vmem:[#allocation3 + $0x120] sm:$0xff]
        %v8050 = vld [vmem:[#allocation3 + $0x128] sm:$0xff]
        %s8051 = scalar_lea.vmem [#allocation4], 576
        %v8052 = vld [vmem:[%s8051] sm:$0xf]
        %v8053 = vld [vmem:[%s8051 + $0x4] sm:$0xf]
        %v8054 = vld [vmem:[%s8051 + $0x8] sm:$0xf]
        %v8055 = vld [vmem:[%s8051 + $0xc] sm:$0xf]
        %v8056 = vld [vmem:[%s8051 + $0x10] sm:$0xf]
        %v8057 = vld [vmem:[%s8051 + $0x14] sm:$0xf]
        %v8058 = vld [vmem:[%s8051 + $0x18] sm:$0xf]
        %v8059 = vld [vmem:[%s8051 + $0x1c] sm:$0xf]
        %v8060 = vld [vmem:[%s8051 + $0x20] sm:$0xf]
        %v8061 = vld [vmem:[%s8051 + $0x24] sm:$0xf]
        %v8062 = vld [vmem:[%s8051 + $0x28] sm:$0xf]
        %v8063 = vld [vmem:[%s8051 + $0x2c] sm:$0xf]
        %v8064 = vld [vmem:[%s8051 + $0x30] sm:$0xf]
        %v8065 = vld [vmem:[%s8051 + $0x34] sm:$0xf]
        %v8066 = vld [vmem:[%s8051 + $0x38] sm:$0xf]
        %v8067 = vld [vmem:[%s8051 + $0x3c] sm:$0xf]
        %v8068 = vld [vmem:[%s8051 + $0x40] sm:$0xf]
        %v8069 = vld [vmem:[%s8051 + $0x44] sm:$0xf]
        %v8070 = vld [vmem:[%s8051 + $0x48] sm:$0xf]
        %v8071 = vld [vmem:[%s8051 + $0x4c] sm:$0xf]
        %v8072 = vld [vmem:[%s8051 + $0x50] sm:$0xf]
        %v8073 = vld [vmem:[%s8051 + $0x54] sm:$0xf]
        %v8074 = vld [vmem:[%s8051 + $0x58] sm:$0xf]
        %v8075 = vld [vmem:[%s8051 + $0x5c] sm:$0xf]
        %s8076 = scalar_lea.vmem [#allocation7], 576
        %v8077 = vld [vmem:[%s8076] sm:$0xf]
        %v8078 = vld [vmem:[%s8076 + $0x4] sm:$0xf]
        %v8079 = vld [vmem:[%s8076 + $0x8] sm:$0xf]
        %v8080 = vld [vmem:[%s8076 + $0xc] sm:$0xf]
        %v8081 = vld [vmem:[%s8076 + $0x10] sm:$0xf]
        %v8082 = vld [vmem:[%s8076 + $0x14] sm:$0xf]
        %v8083 = vld [vmem:[%s8076 + $0x18] sm:$0xf]
        %v8084 = vld [vmem:[%s8076 + $0x1c] sm:$0xf]
        %v8085 = vld [vmem:[%s8076 + $0x20] sm:$0xf]
        %v8086 = vld [vmem:[%s8076 + $0x24] sm:$0xf]
        %v8087 = vld [vmem:[%s8076 + $0x28] sm:$0xf]
        %v8088 = vld [vmem:[%s8076 + $0x2c] sm:$0xf]
        %v8089 = vld [vmem:[%s8076 + $0x30] sm:$0xf]
        %v8090 = vld [vmem:[%s8076 + $0x34] sm:$0xf]
        %v8091 = vld [vmem:[%s8076 + $0x38] sm:$0xf]
        %v8092 = vld [vmem:[%s8076 + $0x3c] sm:$0xf]
        %v8093 = vld [vmem:[%s8076 + $0x40] sm:$0xf]
        %v8094 = vld [vmem:[%s8076 + $0x44] sm:$0xf]
        %v8095 = vld [vmem:[%s8076 + $0x48] sm:$0xf]
        %v8096 = vld [vmem:[%s8076 + $0x4c] sm:$0xf]
        %v8097 = vld [vmem:[%s8076 + $0x50] sm:$0xf]
        %v8098 = vld [vmem:[%s8076 + $0x54] sm:$0xf]
        %v8099 = vld [vmem:[%s8076 + $0x58] sm:$0xf]
        %v8100 = vld [vmem:[%s8076 + $0x5c] sm:$0xf]
        %v8102 = vshrl.u32 %v8047, 16
        %v8104 = vrot.slane %v8102, 7
        %v8105 = vrot.slane %v6881, 7
        %v8106 = vor.u32 %v8105, %v6865
        %v8107 = vsel %vm2079, %v8104, %v8106
        %v8109 = vshrl.u32 %v8048, 16
        %v8111 = vrot.slane %v8109, 7
        %v8112 = vrot.slane %v6889, 7
        %v8113 = vor.u32 %v8112, %v6877
        %v8114 = vsel %vm2079, %v8111, %v8113
        %v8115 = vrot.slane %v6897, 7
        %v8116 = vor.u32 %v8115, %v6885
        %v8117 = vsel %vm2079, %v8105, %v8116
        %v8118 = vrot.slane %v6905, 7
        %v8119 = vor.u32 %v8118, %v6893
        %v8120 = vsel %vm2079, %v8112, %v8119
        %v8121 = vrot.slane %v6913, 7
        %v8122 = vor.u32 %v8121, %v6901
        %v8123 = vsel %vm2079, %v8115, %v8122
        %v8124 = vrot.slane %v6921, 7
        %v8125 = vor.u32 %v8124, %v6909
        %v8126 = vsel %vm2079, %v8118, %v8125
        %v8127 = vrot.slane %v6929, 7
        %v8128 = vor.u32 %v8127, %v6917
        %v8129 = vsel %vm2079, %v8121, %v8128
        %v8130 = vrot.slane %v6937, 7
        %v8131 = vor.u32 %v8130, %v6925
        %v8132 = vsel %vm2079, %v8124, %v8131
        %v8133 = vrot.slane %v6945, 7
        %v8134 = vor.u32 %v8133, %v6933
        %v8135 = vsel %vm2079, %v8127, %v8134
        %v8136 = vrot.slane %v6953, 7
        %v8137 = vor.u32 %v8136, %v6941
        %v8138 = vsel %vm2079, %v8130, %v8137
        %v8139 = vrot.slane %v6961, 7
        %v8140 = vor.u32 %v8139, %v6949
        %v8141 = vsel %vm2079, %v8133, %v8140
        %v8142 = vrot.slane %v6969, 7
        %v8143 = vor.u32 %v8142, %v6957
        %v8144 = vsel %vm2079, %v8136, %v8143
        %v8145 = vrot.slane %v6977, 7
        %v8146 = vor.u32 %v8145, %v6965
        %v8147 = vsel %vm2079, %v8139, %v8146
        %v8148 = vrot.slane %v6985, 7
        %v8149 = vor.u32 %v8148, %v6973
        %v8150 = vsel %vm2079, %v8142, %v8149
        %v8151 = vrot.slane %v6993, 7
        %v8152 = vor.u32 %v8151, %v6981
        %v8153 = vsel %vm2079, %v8145, %v8152
        %v8154 = vrot.slane %v7001, 7
        %v8155 = vor.u32 %v8154, %v6989
        %v8156 = vsel %vm2079, %v8148, %v8155
        %v8157 = vrot.slane %v7009, 7
        %v8158 = vor.u32 %v8157, %v6997
        %v8159 = vsel %vm2079, %v8151, %v8158
        %v8160 = vrot.slane %v7017, 7
        %v8161 = vor.u32 %v8160, %v7005
        %v8162 = vsel %vm2079, %v8154, %v8161
        %v8163 = vrot.slane %v7025, 7
        %v8164 = vor.u32 %v8163, %v7013
        %v8165 = vsel %vm2079, %v8157, %v8164
        %v8166 = vrot.slane %v7033, 7
        %v8167 = vor.u32 %v8166, %v7021
        %v8168 = vsel %vm2079, %v8160, %v8167
        %v8169 = vrot.slane %v7041, 7
        %v8170 = vor.u32 %v8169, %v7029
        %v8171 = vsel %vm2079, %v8163, %v8170
        %v8172 = vrot.slane %v7049, 7
        %v8173 = vor.u32 %v8172, %v7037
        %v8174 = vsel %vm2079, %v8166, %v8173
        %v8175 = vrot.slane %v7057, 7
        %v8176 = vor.u32 %v8175, %v7045
        %v8177 = vsel %vm2079, %v8169, %v8176
        %v8178 = vrot.slane %v7065, 7
        %v8179 = vor.u32 %v8178, %v7053
        %v8180 = vsel %vm2079, %v8172, %v8179
        %v8181 = vrot.slane %v7073, 7
        %v8182 = vor.u32 %v8181, %v7061
        %v8183 = vsel %vm2079, %v8175, %v8182
        %v8184 = vrot.slane %v7081, 7
        %v8185 = vor.u32 %v8184, %v7069
        %v8186 = vsel %vm2079, %v8178, %v8185
        %v8187 = vrot.slane %v7089, 7
        %v8188 = vor.u32 %v8187, %v7077
        %v8189 = vsel %vm2079, %v8181, %v8188
        %v8190 = vrot.slane %v7097, 7
        %v8191 = vor.u32 %v8190, %v7085
        %v8192 = vsel %vm2079, %v8184, %v8191
        %v8193 = vrot.slane %v7105, 7
        %v8194 = vor.u32 %v8193, %v7093
        %v8195 = vsel %vm2079, %v8187, %v8194
        %v8196 = vrot.slane %v7113, 7
        %v8197 = vor.u32 %v8196, %v7101
        %v8198 = vsel %vm2079, %v8190, %v8197
        %v8200 = vshrl.u32 %v8049, 16
        %v8202 = vrot.slane %v8200, 7
        %v8203 = vshll.u32 %v8049, 16
        %v8205 = vor.u32 %v8202, %v8203
        %v8206 = vsel %vm2079, %v8193, %v8205
        %v8208 = vshrl.u32 %v8050, 16
        %v8210 = vrot.slane %v8208, 7
        %v8211 = vshll.u32 %v8050, 16
        %v8213 = vor.u32 %v8210, %v8211
        %v8214 = vsel %vm2079, %v8196, %v8213
        %v8255 = vunpack.c.l.b16 %v8077
        %v8256 = vunpack.c.l.b16 %v8078
        %v8257 = vunpack.c.l.b16 %v8079
        %v8258 = vunpack.c.l.b16 %v8080
        %v8259 = vunpack.c.l.b16 %v8081
        %v8260 = vunpack.c.l.b16 %v8082
        %v8261 = vunpack.c.l.b16 %v8083
        %v8262 = vunpack.c.l.b16 %v8084
        %v8263 = vunpack.c.l.b16 %v8085
        %v8264 = vunpack.c.l.b16 %v8086
        %v8265 = vunpack.c.l.b16 %v8087
        %v8266 = vunpack.c.l.b16 %v8088
        %v8267 = vunpack.c.l.b16 %v8089
        %v8268 = vunpack.c.l.b16 %v8090
        %v8269 = vunpack.c.l.b16 %v8091
        %v8270 = vunpack.c.l.b16 %v8092
        %v8271 = vunpack.c.l.b16 %v8093
        %v8272 = vunpack.c.l.b16 %v8094
        %v8273 = vunpack.c.l.b16 %v8095
        %v8274 = vunpack.c.l.b16 %v8096
        %v8275 = vunpack.c.l.b16 %v8097
        %v8276 = vunpack.c.l.b16 %v8098
        %v8277 = vunpack.c.l.b16 %v8099
        %v8278 = vunpack.c.l.b16 %v8100
        %v8279 = vpack.c.b16 %v8256, %v8255
        %v8280 = vpack.c.b16 %v8258, %v8257
        %v8281 = vpack.c.b16 %v8260, %v8259
        %v8282 = vpack.c.b16 %v8262, %v8261
        %v8283 = vpack.c.b16 %v8264, %v8263
        %v8284 = vpack.c.b16 %v8266, %v8265
        %v8285 = vpack.c.b16 %v8268, %v8267
        %v8286 = vpack.c.b16 %v8270, %v8269
        %v8287 = vpack.c.b16 %v8272, %v8271
        %v8288 = vpack.c.b16 %v8274, %v8273
        %v8289 = vpack.c.b16 %v8276, %v8275
        %v8290 = vpack.c.b16 %v8278, %v8277
        %v8304 = vsel %vm410, %v8114, 0
        %v8307 = vsel %vm410, %v8120, 0
        %v8310 = vsel %vm410, %v8126, 0
        %v8313 = vsel %vm410, %v8132, 0
        %v8316 = vsel %vm410, %v8138, 0
        %v8319 = vsel %vm410, %v8144, 0
        %v8322 = vsel %vm410, %v8150, 0
        %v8325 = vsel %vm410, %v8156, 0
        %v8328 = vsel %vm410, %v8162, 0
        %v8331 = vsel %vm410, %v8168, 0
        %v8334 = vsel %vm410, %v8174, 0
        %v8337 = vsel %vm410, %v8180, 0
        %v8340 = vsel %vm410, %v8186, 0
        %v8343 = vsel %vm410, %v8192, 0
        %v8346 = vsel %vm410, %v8198, 0
        %v8349 = vsel %vm410, %v8214, 0
        %8351 = vmatprep.subr.bf16.mxu0 0
        %8352 = vmatpush1.bf16.msra.mxu0 %v8279
        %8353 = vmatprep.subr.bf16.mxu0 0
        %8354 = vmatpush1.bf16.msra.mxu0 %v8280
        %8355 = vmatprep.subr.bf16.mxu0 0
        %8356 = vmatpush1.bf16.msra.mxu0 %v8281
        %8357 = vmatprep.subr.bf16.mxu0 0
        %8358 = vmatpush1.bf16.msra.mxu0 %v8282
        %8359 = vmatprep.subr.bf16.mxu0 0
        %8360 = vmatpush1.bf16.msra.mxu0 %v8283
        %8361 = vmatprep.subr.bf16.mxu0 0
        %8362 = vmatpush1.bf16.msra.mxu0 %v8284
        %8363 = vmatprep.subr.bf16.mxu0 0
        %8364 = vmatpush1.bf16.msra.mxu0 %v8285
        %8365 = vmatprep.subr.bf16.mxu0 0
        %8366 = vmatpush1.bf16.msra.mxu0 %v8286
        %8367 = vmatprep.subr.bf16.mxu0 0
        %8368 = vmatpush1.bf16.msra.mxu0 %v8287
        %8369 = vmatprep.subr.bf16.mxu0 0
        %8370 = vmatpush1.bf16.msra.mxu0 %v8288
        %8371 = vmatprep.subr.bf16.mxu0 0
        %8372 = vmatpush1.bf16.msra.mxu0 %v8289
        %8373 = vmatprep.subr.bf16.mxu0 0
        %8374 = vmatpush1.bf16.msra.mxu0 %v8290
        %8375 = vmatprep.subr.bf16.mxu0 0
        %8376 = vmatpush1.bf16.msra.mxu0 0
        %8377 = vmatprep.subr.bf16.mxu0 0
        %8378 = vmatpush1.bf16.msra.mxu0 0
        %8379 = vmatprep.subr.bf16.mxu0 0
        %8380 = vmatpush1.bf16.msra.mxu0 0
        %8381 = vmatprep.subr.bf16.mxu0 0
        %8382 = vmatpush1.bf16.msra.mxu0 0
        %8383 = vmatprep.mubr.bf16.mxu0 %v8304
        %8384 = vmatmul.mubr.bf16.gmra.mrb[0].mxu0 %v8107
        %v8385 = vpop.f32.mrb[0].mxu0
        %v8386 = vadd.f32 0.0, %v8385
        %v8387 = vpop.f32.mrb[0].mxu0
        %v8388 = vpop.f32.mrb[0].mxu0
        %v8389 = vadd.f32 0.0, %v8388
        %v8390 = vpop.f32.mrb[0].mxu0
        %8391 = vmatprep.mubr.bf16.mxu0 %v8307
        %8392 = vmatmul.mubr.bf16.gmra.mrb[0].mxu0 %v8117
        %v8393 = vpop.f32.mrb[0].mxu0
        %v8394 = vadd.f32 0.0, %v8393
        %v8395 = vpop.f32.mrb[0].mxu0
        %v8396 = vpop.f32.mrb[0].mxu0
        %v8397 = vadd.f32 0.0, %v8396
        %v8398 = vpop.f32.mrb[0].mxu0
        %8399 = vmatprep.mubr.bf16.mxu0 %v8310
        %8400 = vmatmul.mubr.bf16.gmra.mrb[0].mxu0 %v8123
        %v8401 = vpop.f32.mrb[0].mxu0
        %v8402 = vadd.f32 0.0, %v8401
        %v8403 = vpop.f32.mrb[0].mxu0
        %v8404 = vpop.f32.mrb[0].mxu0
        %v8405 = vadd.f32 0.0, %v8404
        %v8406 = vpop.f32.mrb[0].mxu0
        %8407 = vmatprep.mubr.bf16.mxu0 %v8313
        %8408 = vmatmul.mubr.bf16.gmra.mrb[0].mxu0 %v8129
        %v8409 = vpop.f32.mrb[0].mxu0
        %v8410 = vadd.f32 0.0, %v8409
        %v8411 = vpop.f32.mrb[0].mxu0
        %v8412 = vpop.f32.mrb[0].mxu0
        %v8413 = vadd.f32 0.0, %v8412
        %v8414 = vpop.f32.mrb[0].mxu0
        %8415 = vmatprep.mubr.bf16.mxu0 %v8316
        %8416 = vmatmul.mubr.bf16.gmra.mrb[0].mxu0 %v8135
        %v8417 = vpop.f32.mrb[0].mxu0
        %v8418 = vadd.f32 0.0, %v8417
        %v8419 = vpop.f32.mrb[0].mxu0
        %v8420 = vpop.f32.mrb[0].mxu0
        %v8421 = vadd.f32 0.0, %v8420
        %v8422 = vpop.f32.mrb[0].mxu0
        %8423 = vmatprep.mubr.bf16.mxu0 %v8319
        %8424 = vmatmul.mubr.bf16.gmra.mrb[0].mxu0 %v8141
        %v8425 = vpop.f32.mrb[0].mxu0
        %v8426 = vadd.f32 0.0, %v8425
        %v8427 = vpop.f32.mrb[0].mxu0
        %v8428 = vpop.f32.mrb[0].mxu0
        %v8429 = vadd.f32 0.0, %v8428
        %v8430 = vpop.f32.mrb[0].mxu0
        %8431 = vmatprep.mubr.bf16.mxu0 %v8322
        %8432 = vmatmul.mubr.bf16.gmra.mrb[0].mxu0 %v8147
        %v8433 = vpop.f32.mrb[0].mxu0
        %v8434 = vadd.f32 0.0, %v8433
        %v8435 = vpop.f32.mrb[0].mxu0
        %v8436 = vpop.f32.mrb[0].mxu0
        %v8437 = vadd.f32 0.0, %v8436
        %v8438 = vpop.f32.mrb[0].mxu0
        %8439 = vmatprep.mubr.bf16.mxu0 %v8325
        %8440 = vmatmul.mubr.bf16.gmra.mrb[0].mxu0 %v8153
        %v8441 = vpop.f32.mrb[0].mxu0
        %v8442 = vadd.f32 0.0, %v8441
        %v8443 = vpop.f32.mrb[0].mxu0
        %v8444 = vpop.f32.mrb[0].mxu0
        %v8445 = vadd.f32 0.0, %v8444
        %v8446 = vpop.f32.mrb[0].mxu0
        %8447 = vmatprep.mubr.bf16.mxu0 %v8328
        %8448 = vmatmul.mubr.bf16.gmra.mrb[0].mxu0 %v8159
        %v8449 = vpop.f32.mrb[0].mxu0
        %v8450 = vadd.f32 0.0, %v8449
        %v8451 = vpop.f32.mrb[0].mxu0
        %v8452 = vpop.f32.mrb[0].mxu0
        %v8453 = vadd.f32 0.0, %v8452
        %v8454 = vpop.f32.mrb[0].mxu0
        %8455 = vmatprep.mubr.bf16.mxu0 %v8331
        %8456 = vmatmul.mubr.bf16.gmra.mrb[0].mxu0 %v8165
        %v8457 = vpop.f32.mrb[0].mxu0
        %v8458 = vadd.f32 0.0, %v8457
        %v8459 = vpop.f32.mrb[0].mxu0
        %v8460 = vpop.f32.mrb[0].mxu0
        %v8461 = vadd.f32 0.0, %v8460
        %v8462 = vpop.f32.mrb[0].mxu0
        %8463 = vmatprep.mubr.bf16.mxu0 %v8334
        %8464 = vmatmul.mubr.bf16.gmra.mrb[0].mxu0 %v8171
        %v8465 = vpop.f32.mrb[0].mxu0
        %v8466 = vadd.f32 0.0, %v8465
        %v8467 = vpop.f32.mrb[0].mxu0
        %v8468 = vpop.f32.mrb[0].mxu0
        %v8469 = vadd.f32 0.0, %v8468
        %v8470 = vpop.f32.mrb[0].mxu0
        %8471 = vmatprep.mubr.bf16.mxu0 %v8337
        %8472 = vmatmul.mubr.bf16.gmra.mrb[0].mxu0 %v8177
        %v8473 = vpop.f32.mrb[0].mxu0
        %v8474 = vadd.f32 0.0, %v8473
        %v8475 = vpop.f32.mrb[0].mxu0
        %v8476 = vpop.f32.mrb[0].mxu0
        %v8477 = vadd.f32 0.0, %v8476
        %v8478 = vpop.f32.mrb[0].mxu0
        %8479 = vmatprep.mubr.bf16.mxu0 %v8340
        %8480 = vmatmul.mubr.bf16.gmra.mrb[0].mxu0 %v8183
        %v8481 = vpop.f32.mrb[0].mxu0
        %v8482 = vadd.f32 0.0, %v8481
        %v8483 = vpop.f32.mrb[0].mxu0
        %v8484 = vpop.f32.mrb[0].mxu0
        %v8485 = vadd.f32 0.0, %v8484
        %v8486 = vpop.f32.mrb[0].mxu0
        %8487 = vmatprep.mubr.bf16.mxu0 %v8343
        %8488 = vmatmul.mubr.bf16.gmra.mrb[0].mxu0 %v8189
        %v8489 = vpop.f32.mrb[0].mxu0
        %v8490 = vadd.f32 0.0, %v8489
        %v8491 = vpop.f32.mrb[0].mxu0
        %v8492 = vpop.f32.mrb[0].mxu0
        %v8493 = vadd.f32 0.0, %v8492
        %v8494 = vpop.f32.mrb[0].mxu0
        %8495 = vmatprep.mubr.bf16.mxu0 %v8346
        %8496 = vmatmul.mubr.bf16.gmra.mrb[0].mxu0 %v8195
        %v8497 = vpop.f32.mrb[0].mxu0
        %v8498 = vadd.f32 0.0, %v8497
        %v8499 = vpop.f32.mrb[0].mxu0
        %v8500 = vpop.f32.mrb[0].mxu0
        %v8501 = vadd.f32 0.0, %v8500
        %v8502 = vpop.f32.mrb[0].mxu0
        %8503 = vmatprep.mubr.bf16.mxu0 %v8349
        %8504 = vmatmul.mubr.bf16.gmra.mrb[0].mxu0 %v8206
        %v8505 = vpop.f32.mrb[0].mxu0
        %v8506 = vadd.f32 0.0, %v8505
        %v8507 = vpop.f32.mrb[0].mxu0
        %v8508 = vpop.f32.mrb[0].mxu0
        %v8509 = vadd.f32 0.0, %v8508
        %v8510 = vpop.f32.mrb[0].mxu0
        %8511 = vdwg.mxu0
        %v8513 = vshrl.u32 %v8043, 16
        %v8515 = vrot.slane %v8513, 7
        %v8516 = vrot.slane %v7442, 7
        %v8517 = vor.u32 %v8516, %v7426
        %v8518 = vsel %vm2079, %v8515, %v8517
        %v8520 = vshrl.u32 %v8044, 16
        %v8522 = vrot.slane %v8520, 7
        %v8523 = vrot.slane %v7450, 7
        %v8524 = vor.u32 %v8523, %v7438
        %v8525 = vsel %vm2079, %v8522, %v8524
        %v8526 = vrot.slane %v7458, 7
        %v8527 = vor.u32 %v8526, %v7446
        %v8528 = vsel %vm2079, %v8516, %v8527
        %v8529 = vrot.slane %v7466, 7
        %v8530 = vor.u32 %v8529, %v7454
        %v8531 = vsel %vm2079, %v8523, %v8530
        %v8532 = vrot.slane %v7474, 7
        %v8533 = vor.u32 %v8532, %v7462
        %v8534 = vsel %vm2079, %v8526, %v8533
        %v8535 = vrot.slane %v7482, 7
        %v8536 = vor.u32 %v8535, %v7470
        %v8537 = vsel %vm2079, %v8529, %v8536
        %v8538 = vrot.slane %v7490, 7
        %v8539 = vor.u32 %v8538, %v7478
        %v8540 = vsel %vm2079, %v8532, %v8539
        %v8541 = vrot.slane %v7498, 7
        %v8542 = vor.u32 %v8541, %v7486
        %v8543 = vsel %vm2079, %v8535, %v8542
        %v8544 = vrot.slane %v7506, 7
        %v8545 = vor.u32 %v8544, %v7494
        %v8546 = vsel %vm2079, %v8538, %v8545
        %v8547 = vrot.slane %v7514, 7
        %v8548 = vor.u32 %v8547, %v7502
        %v8549 = vsel %vm2079, %v8541, %v8548
        %v8550 = vrot.slane %v7522, 7
        %v8551 = vor.u32 %v8550, %v7510
        %v8552 = vsel %vm2079, %v8544, %v8551
        %v8553 = vrot.slane %v7530, 7
        %v8554 = vor.u32 %v8553, %v7518
        %v8555 = vsel %vm2079, %v8547, %v8554
        %v8556 = vrot.slane %v7538, 7
        %v8557 = vor.u32 %v8556, %v7526
        %v8558 = vsel %vm2079, %v8550, %v8557
        %v8559 = vrot.slane %v7546, 7
        %v8560 = vor.u32 %v8559, %v7534
        %v8561 = vsel %vm2079, %v8553, %v8560
        %v8562 = vrot.slane %v7554, 7
        %v8563 = vor.u32 %v8562, %v7542
        %v8564 = vsel %vm2079, %v8556, %v8563
        %v8565 = vrot.slane %v7562, 7
        %v8566 = vor.u32 %v8565, %v7550
        %v8567 = vsel %vm2079, %v8559, %v8566
        %v8568 = vrot.slane %v7570, 7
        %v8569 = vor.u32 %v8568, %v7558
        %v8570 = vsel %vm2079, %v8562, %v8569
        %v8571 = vrot.slane %v7578, 7
        %v8572 = vor.u32 %v8571, %v7566
        %v8573 = vsel %vm2079, %v8565, %v8572
        %v8574 = vrot.slane %v7586, 7
        %v8575 = vor.u32 %v8574, %v7574
        %v8576 = vsel %vm2079, %v8568, %v8575
        %v8577 = vrot.slane %v7594, 7
        %v8578 = vor.u32 %v8577, %v7582
        %v8579 = vsel %vm2079, %v8571, %v8578
        %v8580 = vrot.slane %v7602, 7
        %v8581 = vor.u32 %v8580, %v7590
        %v8582 = vsel %vm2079, %v8574, %v8581
        %v8583 = vrot.slane %v7610, 7
        %v8584 = vor.u32 %v8583, %v7598
        %v8585 = vsel %vm2079, %v8577, %v8584
        %v8586 = vrot.slane %v7618, 7
        %v8587 = vor.u32 %v8586, %v7606
        %v8588 = vsel %vm2079, %v8580, %v8587
        %v8589 = vrot.slane %v7626, 7
        %v8590 = vor.u32 %v8589, %v7614
        %v8591 = vsel %vm2079, %v8583, %v8590
        %v8592 = vrot.slane %v7634, 7
        %v8593 = vor.u32 %v8592, %v7622
        %v8594 = vsel %vm2079, %v8586, %v8593
        %v8595 = vrot.slane %v7642, 7
        %v8596 = vor.u32 %v8595, %v7630
        %v8597 = vsel %vm2079, %v8589, %v8596
        %v8598 = vrot.slane %v7650, 7
        %v8599 = vor.u32 %v8598, %v7638
        %v8600 = vsel %vm2079, %v8592, %v8599
        %v8601 = vrot.slane %v7658, 7
        %v8602 = vor.u32 %v8601, %v7646
        %v8603 = vsel %vm2079, %v8595, %v8602
        %v8604 = vrot.slane %v7666, 7
        %v8605 = vor.u32 %v8604, %v7654
        %v8606 = vsel %vm2079, %v8598, %v8605
        %v8607 = vrot.slane %v7674, 7
        %v8608 = vor.u32 %v8607, %v7662
        %v8609 = vsel %vm2079, %v8601, %v8608
        %v8611 = vshrl.u32 %v8045, 16
        %v8613 = vrot.slane %v8611, 7
        %v8614 = vshll.u32 %v8045, 16
        %v8616 = vor.u32 %v8613, %v8614
        %v8617 = vsel %vm2079, %v8604, %v8616
        %v8619 = vshrl.u32 %v8046, 16
        %v8621 = vrot.slane %v8619, 7
        %v8622 = vshll.u32 %v8046, 16
        %v8624 = vor.u32 %v8621, %v8622
        %v8625 = vsel %vm2079, %v8607, %v8624
        %v8666 = vunpack.c.l.b16 %v8052
        %v8667 = vunpack.c.l.b16 %v8053
        %v8668 = vunpack.c.l.b16 %v8054
        %v8669 = vunpack.c.l.b16 %v8055
        %v8670 = vunpack.c.l.b16 %v8056
        %v8671 = vunpack.c.l.b16 %v8057
        %v8672 = vunpack.c.l.b16 %v8058
        %v8673 = vunpack.c.l.b16 %v8059
        %v8674 = vunpack.c.l.b16 %v8060
        %v8675 = vunpack.c.l.b16 %v8061
        %v8676 = vunpack.c.l.b16 %v8062
        %v8677 = vunpack.c.l.b16 %v8063
        %v8678 = vunpack.c.l.b16 %v8064
        %v8679 = vunpack.c.l.b16 %v8065
        %v8680 = vunpack.c.l.b16 %v8066
        %v8681 = vunpack.c.l.b16 %v8067
        %v8682 = vunpack.c.l.b16 %v8068
        %v8683 = vunpack.c.l.b16 %v8069
        %v8684 = vunpack.c.l.b16 %v8070
        %v8685 = vunpack.c.l.b16 %v8071
        %v8686 = vunpack.c.l.b16 %v8072
        %v8687 = vunpack.c.l.b16 %v8073
        %v8688 = vunpack.c.l.b16 %v8074
        %v8689 = vunpack.c.l.b16 %v8075
        %v8690 = vpack.c.b16 %v8667, %v8666
        %v8691 = vpack.c.b16 %v8669, %v8668
        %v8692 = vpack.c.b16 %v8671, %v8670
        %v8693 = vpack.c.b16 %v8673, %v8672
        %v8694 = vpack.c.b16 %v8675, %v8674
        %v8695 = vpack.c.b16 %v8677, %v8676
        %v8696 = vpack.c.b16 %v8679, %v8678
        %v8697 = vpack.c.b16 %v8681, %v8680
        %v8698 = vpack.c.b16 %v8683, %v8682
        %v8699 = vpack.c.b16 %v8685, %v8684
        %v8700 = vpack.c.b16 %v8687, %v8686
        %v8701 = vpack.c.b16 %v8689, %v8688
        %v8715 = vsel %vm410, %v8525, 0
        %v8718 = vsel %vm410, %v8531, 0
        %v8721 = vsel %vm410, %v8537, 0
        %v8724 = vsel %vm410, %v8543, 0
        %v8727 = vsel %vm410, %v8549, 0
        %v8730 = vsel %vm410, %v8555, 0
        %v8733 = vsel %vm410, %v8561, 0
        %v8736 = vsel %vm410, %v8567, 0
        %v8739 = vsel %vm410, %v8573, 0
        %v8742 = vsel %vm410, %v8579, 0
        %v8745 = vsel %vm410, %v8585, 0
        %v8748 = vsel %vm410, %v8591, 0
        %v8751 = vsel %vm410, %v8597, 0
        %v8754 = vsel %vm410, %v8603, 0
        %v8757 = vsel %vm410, %v8609, 0
        %v8760 = vsel %vm410, %v8625, 0
        %8762 = vmatprep.subr.bf16.mxu0 0
        %8763 = vmatpush1.bf16.msra.mxu0 %v8690
        %8764 = vmatprep.subr.bf16.mxu0 0
        %8765 = vmatpush1.bf16.msra.mxu0 %v8691
        %8766 = vmatprep.subr.bf16.mxu0 0
        %8767 = vmatpush1.bf16.msra.mxu0 %v8692
        %8768 = vmatprep.subr.bf16.mxu0 0
        %8769 = vmatpush1.bf16.msra.mxu0 %v8693
        %8770 = vmatprep.subr.bf16.mxu0 0
        %8771 = vmatpush1.bf16.msra.mxu0 %v8694
        %8772 = vmatprep.subr.bf16.mxu0 0
        %8773 = vmatpush1.bf16.msra.mxu0 %v8695
        %8774 = vmatprep.subr.bf16.mxu0 0
        %8775 = vmatpush1.bf16.msra.mxu0 %v8696
        %8776 = vmatprep.subr.bf16.mxu0 0
        %8777 = vmatpush1.bf16.msra.mxu0 %v8697
        %8778 = vmatprep.subr.bf16.mxu0 0
        %8779 = vmatpush1.bf16.msra.mxu0 %v8698
        %8780 = vmatprep.subr.bf16.mxu0 0
        %8781 = vmatpush1.bf16.msra.mxu0 %v8699
        %8782 = vmatprep.subr.bf16.mxu0 0
        %8783 = vmatpush1.bf16.msra.mxu0 %v8700
        %8784 = vmatprep.subr.bf16.mxu0 0
        %8785 = vmatpush1.bf16.msra.mxu0 %v8701
        %8786 = vmatprep.subr.bf16.mxu0 0
        %8787 = vmatpush1.bf16.msra.mxu0 0
        %8788 = vmatprep.subr.bf16.mxu0 0
        %8789 = vmatpush1.bf16.msra.mxu0 0
        %8790 = vmatprep.subr.bf16.mxu0 0
        %8791 = vmatpush1.bf16.msra.mxu0 0
        %8792 = vmatprep.subr.bf16.mxu0 0
        %8793 = vmatpush1.bf16.msra.mxu0 0
        %8794 = vmatprep.mubr.bf16.mxu0 %v8715
        %8795 = vmatmul.mubr.bf16.gmra.mrb[0].mxu0 %v8518
        %v8796 = vpop.f32.mrb[0].mxu0
        %v8797 = vadd.f32 %v8386, %v8796
        %v8798 = vpop.f32.mrb[0].mxu0
        %v8799 = vpop.f32.mrb[0].mxu0
        %v8800 = vadd.f32 %v8389, %v8799
        %v8801 = vpop.f32.mrb[0].mxu0
        %8802 = vmatprep.mubr.bf16.mxu0 %v8718
        %8803 = vmatmul.mubr.bf16.gmra.mrb[0].mxu0 %v8528
        %v8804 = vpop.f32.mrb[0].mxu0
        %v8805 = vadd.f32 %v8394, %v8804
        %v8806 = vpop.f32.mrb[0].mxu0
        %v8807 = vpop.f32.mrb[0].mxu0
        %v8808 = vadd.f32 %v8397, %v8807
        %v8809 = vpop.f32.mrb[0].mxu0
        %8810 = vmatprep.mubr.bf16.mxu0 %v8721
        %8811 = vmatmul.mubr.bf16.gmra.mrb[0].mxu0 %v8534
        %v8812 = vpop.f32.mrb[0].mxu0
        %v8813 = vadd.f32 %v8402, %v8812
        %v8814 = vpop.f32.mrb[0].mxu0
        %v8815 = vpop.f32.mrb[0].mxu0
        %v8816 = vadd.f32 %v8405, %v8815
        %v8817 = vpop.f32.mrb[0].mxu0
        %8818 = vmatprep.mubr.bf16.mxu0 %v8724
        %8819 = vmatmul.mubr.bf16.gmra.mrb[0].mxu0 %v8540
        %v8820 = vpop.f32.mrb[0].mxu0
        %v8821 = vadd.f32 %v8410, %v8820
        %v8822 = vpop.f32.mrb[0].mxu0
        %v8823 = vpop.f32.mrb[0].mxu0
        %v8824 = vadd.f32 %v8413, %v8823
        %v8825 = vpop.f32.mrb[0].mxu0
        %8826 = vmatprep.mubr.bf16.mxu0 %v8727
        %8827 = vmatmul.mubr.bf16.gmra.mrb[0].mxu0 %v8546
        %v8828 = vpop.f32.mrb[0].mxu0
        %v8829 = vadd.f32 %v8418, %v8828
        %v8830 = vpop.f32.mrb[0].mxu0
        %v8831 = vpop.f32.mrb[0].mxu0
        %v8832 = vadd.f32 %v8421, %v8831
        %v8833 = vpop.f32.mrb[0].mxu0
        %8834 = vmatprep.mubr.bf16.mxu0 %v8730
        %8835 = vmatmul.mubr.bf16.gmra.mrb[0].mxu0 %v8552
        %v8836 = vpop.f32.mrb[0].mxu0
        %v8837 = vadd.f32 %v8426, %v8836
        %v8838 = vpop.f32.mrb[0].mxu0
        %v8839 = vpop.f32.mrb[0].mxu0
        %v8840 = vadd.f32 %v8429, %v8839
        %v8841 = vpop.f32.mrb[0].mxu0
        %8842 = vmatprep.mubr.bf16.mxu0 %v8733
        %8843 = vmatmul.mubr.bf16.gmra.mrb[0].mxu0 %v8558
        %v8844 = vpop.f32.mrb[0].mxu0
        %v8845 = vadd.f32 %v8434, %v8844
        %v8846 = vpop.f32.mrb[0].mxu0
        %v8847 = vpop.f32.mrb[0].mxu0
        %v8848 = vadd.f32 %v8437, %v8847
        %v8849 = vpop.f32.mrb[0].mxu0
        %8850 = vmatprep.mubr.bf16.mxu0 %v8736
        %8851 = vmatmul.mubr.bf16.gmra.mrb[0].mxu0 %v8564
        %v8852 = vpop.f32.mrb[0].mxu0
        %v8853 = vadd.f32 %v8442, %v8852
        %v8854 = vpop.f32.mrb[0].mxu0
        %v8855 = vpop.f32.mrb[0].mxu0
        %v8856 = vadd.f32 %v8445, %v8855
        %v8857 = vpop.f32.mrb[0].mxu0
        %8858 = vmatprep.mubr.bf16.mxu0 %v8739
        %8859 = vmatmul.mubr.bf16.gmra.mrb[0].mxu0 %v8570
        %v8860 = vpop.f32.mrb[0].mxu0
        %v8861 = vadd.f32 %v8450, %v8860
        %v8862 = vpop.f32.mrb[0].mxu0
        %v8863 = vpop.f32.mrb[0].mxu0
        %v8864 = vadd.f32 %v8453, %v8863
        %v8865 = vpop.f32.mrb[0].mxu0
        %8866 = vmatprep.mubr.bf16.mxu0 %v8742
        %8867 = vmatmul.mubr.bf16.gmra.mrb[0].mxu0 %v8576
        %v8868 = vpop.f32.mrb[0].mxu0
        %v8869 = vadd.f32 %v8458, %v8868
        %v8870 = vpop.f32.mrb[0].mxu0
        %v8871 = vpop.f32.mrb[0].mxu0
        %v8872 = vadd.f32 %v8461, %v8871
        %v8873 = vpop.f32.mrb[0].mxu0
        %8874 = vmatprep.mubr.bf16.mxu0 %v8745
        %8875 = vmatmul.mubr.bf16.gmra.mrb[0].mxu0 %v8582
        %v8876 = vpop.f32.mrb[0].mxu0
        %v8877 = vadd.f32 %v8466, %v8876
        %v8878 = vpop.f32.mrb[0].mxu0
        %v8879 = vpop.f32.mrb[0].mxu0
        %v8880 = vadd.f32 %v8469, %v8879
        %v8881 = vpop.f32.mrb[0].mxu0
        %8882 = vmatprep.mubr.bf16.mxu0 %v8748
        %8883 = vmatmul.mubr.bf16.gmra.mrb[0].mxu0 %v8588
        %v8884 = vpop.f32.mrb[0].mxu0
        %v8885 = vadd.f32 %v8474, %v8884
        %v8886 = vpop.f32.mrb[0].mxu0
        %v8887 = vpop.f32.mrb[0].mxu0
        %v8888 = vadd.f32 %v8477, %v8887
        %v8889 = vpop.f32.mrb[0].mxu0
        %8890 = vmatprep.mubr.bf16.mxu0 %v8751
        %8891 = vmatmul.mubr.bf16.gmra.mrb[0].mxu0 %v8594
        %v8892 = vpop.f32.mrb[0].mxu0
        %v8893 = vadd.f32 %v8482, %v8892
        %v8894 = vpop.f32.mrb[0].mxu0
        %v8895 = vpop.f32.mrb[0].mxu0
        %v8896 = vadd.f32 %v8485, %v8895
        %v8897 = vpop.f32.mrb[0].mxu0
        %8898 = vmatprep.mubr.bf16.mxu0 %v8754
        %8899 = vmatmul.mubr.bf16.gmra.mrb[0].mxu0 %v8600
        %v8900 = vpop.f32.mrb[0].mxu0
        %v8901 = vadd.f32 %v8490, %v8900
        %v8902 = vpop.f32.mrb[0].mxu0
        %v8903 = vpop.f32.mrb[0].mxu0
        %v8904 = vadd.f32 %v8493, %v8903
        %v8905 = vpop.f32.mrb[0].mxu0
        %8906 = vmatprep.mubr.bf16.mxu0 %v8757
        %8907 = vmatmul.mubr.bf16.gmra.mrb[0].mxu0 %v8606
        %v8908 = vpop.f32.mrb[0].mxu0
        %v8909 = vadd.f32 %v8498, %v8908
        %v8910 = vpop.f32.mrb[0].mxu0
        %v8911 = vpop.f32.mrb[0].mxu0
        %v8912 = vadd.f32 %v8501, %v8911
        %v8913 = vpop.f32.mrb[0].mxu0
        %8914 = vmatprep.mubr.bf16.mxu0 %v8760
        %8915 = vmatmul.mubr.bf16.gmra.mrb[0].mxu0 %v8617
        %v8916 = vpop.f32.mrb[0].mxu0
        %v8917 = vadd.f32 %v8506, %v8916
        %v8918 = vpop.f32.mrb[0].mxu0
        %v8919 = vpop.f32.mrb[0].mxu0
        %v8920 = vadd.f32 %v8509, %v8919
        %v8921 = vpop.f32.mrb[0].mxu0
        %8922 = vdwg.mxu0
        %v8923 = vsel %vm1732, %v8797, 0.0
        %v8924 = vsel %vm1733, %v8800, 0.0
        %v8925 = vsel %vm1734, %v8805, 0.0
        %v8926 = vsel %vm1735, %v8808, 0.0
        %v8927 = vsel %vm1736, %v8813, 0.0
        %v8928 = vsel %vm1737, %v8816, 0.0
        %v8929 = vsel %vm1738, %v8821, 0.0
        %v8930 = vsel %vm1739, %v8824, 0.0
        %v8931 = vsel %vm1740, %v8829, 0.0
        %v8932 = vsel %vm1741, %v8832, 0.0
        %v8933 = vsel %vm1742, %v8837, 0.0
        %v8934 = vsel %vm1743, %v8840, 0.0
        %v8935 = vsel %vm1744, %v8845, 0.0
        %v8936 = vsel %vm1745, %v8848, 0.0
        %v8937 = vsel %vm1746, %v8853, 0.0
        %v8938 = vsel %vm1747, %v8856, 0.0
        %v8939 = vsel %vm1748, %v8861, 0.0
        %v8940 = vsel %vm1749, %v8864, 0.0
        %v8941 = vsel %vm1750, %v8869, 0.0
        %v8942 = vsel %vm1751, %v8872, 0.0
        %v8943 = vsel %vm1752, %v8877, 0.0
        %v8944 = vsel %vm1753, %v8880, 0.0
        %v8945 = vsel %vm1754, %v8885, 0.0
        %v8946 = vsel %vm1755, %v8888, 0.0
        %v8947 = vsel %vm1756, %v8893, 0.0
        %v8948 = vsel %vm1757, %v8896, 0.0
        %v8949 = vsel %vm1758, %v8901, 0.0
        %v8950 = vsel %vm1759, %v8904, 0.0
        %v8951 = vsel %vm1760, %v8909, 0.0
        %v8952 = vsel %vm1761, %v8912, 0.0
        %v8953 = vsel %vm1762, %v8917, 0.0
        %v8954 = vsel %vm1763, %v8920, 0.0
        %v8955 = vadd.f32 %v8011, %v8923
        %v8956 = vadd.f32 %v8012, %v8924
        %v8957 = vadd.f32 %v8013, %v8925
        %v8958 = vadd.f32 %v8014, %v8926
        %v8959 = vadd.f32 %v8015, %v8927
        %v8960 = vadd.f32 %v8016, %v8928
        %v8961 = vadd.f32 %v8017, %v8929
        %v8962 = vadd.f32 %v8018, %v8930
        %v8963 = vadd.f32 %v8019, %v8931
        %v8964 = vadd.f32 %v8020, %v8932
        %v8965 = vadd.f32 %v8021, %v8933
        %v8966 = vadd.f32 %v8022, %v8934
        %v8967 = vadd.f32 %v8023, %v8935
        %v8968 = vadd.f32 %v8024, %v8936
        %v8969 = vadd.f32 %v8025, %v8937
        %v8970 = vadd.f32 %v8026, %v8938
        %v8971 = vadd.f32 %v8027, %v8939
        %v8972 = vadd.f32 %v8028, %v8940
        %v8973 = vadd.f32 %v8029, %v8941
        %v8974 = vadd.f32 %v8030, %v8942
        %v8975 = vadd.f32 %v8031, %v8943
        %v8976 = vadd.f32 %v8032, %v8944
        %v8977 = vadd.f32 %v8033, %v8945
        %v8978 = vadd.f32 %v8034, %v8946
        %v8979 = vadd.f32 %v8035, %v8947
        %v8980 = vadd.f32 %v8036, %v8948
        %v8981 = vadd.f32 %v8037, %v8949
        %v8982 = vadd.f32 %v8038, %v8950
        %v8983 = vadd.f32 %v8039, %v8951
        %v8984 = vadd.f32 %v8040, %v8952
        %v8985 = vadd.f32 %v8041, %v8953
        %v8986 = vadd.f32 %v8042, %v8954
        %s8987 = scalar_lea.vmem [#allocation4], 672
        %v8988 = vld [vmem:[%s8987] sm:$0xf]
        %v8989 = vld [vmem:[%s8987 + $0x4] sm:$0xf]
        %v8990 = vld [vmem:[%s8987 + $0x8] sm:$0xf]
        %v8991 = vld [vmem:[%s8987 + $0xc] sm:$0xf]
        %v8992 = vld [vmem:[%s8987 + $0x10] sm:$0xf]
        %v8993 = vld [vmem:[%s8987 + $0x14] sm:$0xf]
        %v8994 = vld [vmem:[%s8987 + $0x18] sm:$0xf]
        %v8995 = vld [vmem:[%s8987 + $0x1c] sm:$0xf]
        %v8996 = vld [vmem:[%s8987 + $0x20] sm:$0xf]
        %v8997 = vld [vmem:[%s8987 + $0x24] sm:$0xf]
        %v8998 = vld [vmem:[%s8987 + $0x28] sm:$0xf]
        %v8999 = vld [vmem:[%s8987 + $0x2c] sm:$0xf]
        %v9000 = vld [vmem:[%s8987 + $0x30] sm:$0xf]
        %v9001 = vld [vmem:[%s8987 + $0x34] sm:$0xf]
        %v9002 = vld [vmem:[%s8987 + $0x38] sm:$0xf]
        %v9003 = vld [vmem:[%s8987 + $0x3c] sm:$0xf]
        %v9004 = vld [vmem:[%s8987 + $0x40] sm:$0xf]
        %v9005 = vld [vmem:[%s8987 + $0x44] sm:$0xf]
        %v9006 = vld [vmem:[%s8987 + $0x48] sm:$0xf]
        %v9007 = vld [vmem:[%s8987 + $0x4c] sm:$0xf]
        %v9008 = vld [vmem:[%s8987 + $0x50] sm:$0xf]
        %v9009 = vld [vmem:[%s8987 + $0x54] sm:$0xf]
        %v9010 = vld [vmem:[%s8987 + $0x58] sm:$0xf]
        %v9011 = vld [vmem:[%s8987 + $0x5c] sm:$0xf]
        %s9012 = scalar_lea.vmem [#allocation7], 672
        %v9013 = vld [vmem:[%s9012] sm:$0xf]
        %v9014 = vld [vmem:[%s9012 + $0x4] sm:$0xf]
        %v9015 = vld [vmem:[%s9012 + $0x8] sm:$0xf]
        %v9016 = vld [vmem:[%s9012 + $0xc] sm:$0xf]
        %v9017 = vld [vmem:[%s9012 + $0x10] sm:$0xf]
        %v9018 = vld [vmem:[%s9012 + $0x14] sm:$0xf]
        %v9019 = vld [vmem:[%s9012 + $0x18] sm:$0xf]
        %v9020 = vld [vmem:[%s9012 + $0x1c] sm:$0xf]
        %v9021 = vld [vmem:[%s9012 + $0x20] sm:$0xf]
        %v9022 = vld [vmem:[%s9012 + $0x24] sm:$0xf]
        %v9023 = vld [vmem:[%s9012 + $0x28] sm:$0xf]
        %v9024 = vld [vmem:[%s9012 + $0x2c] sm:$0xf]
        %v9025 = vld [vmem:[%s9012 + $0x30] sm:$0xf]
        %v9026 = vld [vmem:[%s9012 + $0x34] sm:$0xf]
        %v9027 = vld [vmem:[%s9012 + $0x38] sm:$0xf]
        %v9028 = vld [vmem:[%s9012 + $0x3c] sm:$0xf]
        %v9029 = vld [vmem:[%s9012 + $0x40] sm:$0xf]
        %v9030 = vld [vmem:[%s9012 + $0x44] sm:$0xf]
        %v9031 = vld [vmem:[%s9012 + $0x48] sm:$0xf]
        %v9032 = vld [vmem:[%s9012 + $0x4c] sm:$0xf]
        %v9033 = vld [vmem:[%s9012 + $0x50] sm:$0xf]
        %v9034 = vld [vmem:[%s9012 + $0x54] sm:$0xf]
        %v9035 = vld [vmem:[%s9012 + $0x58] sm:$0xf]
        %v9036 = vld [vmem:[%s9012 + $0x5c] sm:$0xf]
        %v9061 = vunpack.c.l.b16 %v9013
        %v9062 = vunpack.c.l.b16 %v9014
        %v9063 = vunpack.c.l.b16 %v9015
        %v9064 = vunpack.c.l.b16 %v9016
        %v9065 = vunpack.c.l.b16 %v9017
        %v9066 = vunpack.c.l.b16 %v9018
        %v9067 = vunpack.c.l.b16 %v9019
        %v9068 = vunpack.c.l.b16 %v9020
        %v9069 = vunpack.c.l.b16 %v9021
        %v9070 = vunpack.c.l.b16 %v9022
        %v9071 = vunpack.c.l.b16 %v9023
        %v9072 = vunpack.c.l.b16 %v9024
        %v9073 = vunpack.c.l.b16 %v9025
        %v9074 = vunpack.c.l.b16 %v9026
        %v9075 = vunpack.c.l.b16 %v9027
        %v9076 = vunpack.c.l.b16 %v9028
        %v9077 = vunpack.c.l.b16 %v9029
        %v9078 = vunpack.c.l.b16 %v9030
        %v9079 = vunpack.c.l.b16 %v9031
        %v9080 = vunpack.c.l.b16 %v9032
        %v9081 = vunpack.c.l.b16 %v9033
        %v9082 = vunpack.c.l.b16 %v9034
        %v9083 = vunpack.c.l.b16 %v9035
        %v9084 = vunpack.c.l.b16 %v9036
        %v9085 = vpack.c.b16 %v9062, %v9061
        %v9086 = vpack.c.b16 %v9064, %v9063
        %v9087 = vpack.c.b16 %v9066, %v9065
        %v9088 = vpack.c.b16 %v9068, %v9067
        %v9089 = vpack.c.b16 %v9070, %v9069
        %v9090 = vpack.c.b16 %v9072, %v9071
        %v9091 = vpack.c.b16 %v9074, %v9073
        %v9092 = vpack.c.b16 %v9076, %v9075
        %v9093 = vpack.c.b16 %v9078, %v9077
        %v9094 = vpack.c.b16 %v9080, %v9079
        %v9095 = vpack.c.b16 %v9082, %v9081
        %v9096 = vpack.c.b16 %v9084, %v9083
        %v9109 = vsel %vm410, %v6776, 0
        %v9111 = vsel %vm410, %v6778, 0
        %v9113 = vsel %vm410, %v6780, 0
        %v9115 = vsel %vm410, %v6782, 0
        %v9117 = vsel %vm410, %v6784, 0
        %v9119 = vsel %vm410, %v6786, 0
        %v9121 = vsel %vm410, %v6788, 0
        %v9123 = vsel %vm410, %v6790, 0
        %v9125 = vsel %vm410, %v6792, 0
        %v9127 = vsel %vm410, %v6794, 0
        %v9129 = vsel %vm410, %v6796, 0
        %v9131 = vsel %vm410, %v6798, 0
        %v9133 = vsel %vm410, %v6800, 0
        %v9135 = vsel %vm410, %v6802, 0
        %v9137 = vsel %vm410, %v6804, 0
        %v9139 = vsel %vm410, %v8050, 0
        %9141 = vmatprep.subr.bf16.mxu0 0
        %9142 = vmatpush1.bf16.msra.mxu0 %v9085
        %9143 = vmatprep.subr.bf16.mxu0 0
        %9144 = vmatpush1.bf16.msra.mxu0 %v9086
        %9145 = vmatprep.subr.bf16.mxu0 0
        %9146 = vmatpush1.bf16.msra.mxu0 %v9087
        %9147 = vmatprep.subr.bf16.mxu0 0
        %9148 = vmatpush1.bf16.msra.mxu0 %v9088
        %9149 = vmatprep.subr.bf16.mxu0 0
        %9150 = vmatpush1.bf16.msra.mxu0 %v9089
        %9151 = vmatprep.subr.bf16.mxu0 0
        %9152 = vmatpush1.bf16.msra.mxu0 %v9090
        %9153 = vmatprep.subr.bf16.mxu0 0
        %9154 = vmatpush1.bf16.msra.mxu0 %v9091
        %9155 = vmatprep.subr.bf16.mxu0 0
        %9156 = vmatpush1.bf16.msra.mxu0 %v9092
        %9157 = vmatprep.subr.bf16.mxu0 0
        %9158 = vmatpush1.bf16.msra.mxu0 %v9093
        %9159 = vmatprep.subr.bf16.mxu0 0
        %9160 = vmatpush1.bf16.msra.mxu0 %v9094
        %9161 = vmatprep.subr.bf16.mxu0 0
        %9162 = vmatpush1.bf16.msra.mxu0 %v9095
        %9163 = vmatprep.subr.bf16.mxu0 0
        %9164 = vmatpush1.bf16.msra.mxu0 %v9096
        %9165 = vmatprep.subr.bf16.mxu0 0
        %9166 = vmatpush1.bf16.msra.mxu0 0
        %9167 = vmatprep.subr.bf16.mxu0 0
        %9168 = vmatpush1.bf16.msra.mxu0 0
        %9169 = vmatprep.subr.bf16.mxu0 0
        %9170 = vmatpush1.bf16.msra.mxu0 0
        %9171 = vmatprep.subr.bf16.mxu0 0
        %9172 = vmatpush1.bf16.msra.mxu0 0
        %9173 = vmatprep.mubr.bf16.mxu0 %v9109
        %9174 = vmatmul.mubr.bf16.gmra.mrb[0].mxu0 %v6775
        %v9175 = vpop.f32.mrb[0].mxu0
        %v9176 = vadd.f32 0.0, %v9175
        %v9177 = vpop.f32.mrb[0].mxu0
        %v9178 = vpop.f32.mrb[0].mxu0
        %v9179 = vadd.f32 0.0, %v9178
        %v9180 = vpop.f32.mrb[0].mxu0
        %9181 = vmatprep.mubr.bf16.mxu0 %v9111
        %9182 = vmatmul.mubr.bf16.gmra.mrb[0].mxu0 %v6777
        %v9183 = vpop.f32.mrb[0].mxu0
        %v9184 = vadd.f32 0.0, %v9183
        %v9185 = vpop.f32.mrb[0].mxu0
        %v9186 = vpop.f32.mrb[0].mxu0
        %v9187 = vadd.f32 0.0, %v9186
        %v9188 = vpop.f32.mrb[0].mxu0
        %9189 = vmatprep.mubr.bf16.mxu0 %v9113
        %9190 = vmatmul.mubr.bf16.gmra.mrb[0].mxu0 %v6779
        %v9191 = vpop.f32.mrb[0].mxu0
        %v9192 = vadd.f32 0.0, %v9191
        %v9193 = vpop.f32.mrb[0].mxu0
        %v9194 = vpop.f32.mrb[0].mxu0
        %v9195 = vadd.f32 0.0, %v9194
        %v9196 = vpop.f32.mrb[0].mxu0
        %9197 = vmatprep.mubr.bf16.mxu0 %v9115
        %9198 = vmatmul.mubr.bf16.gmra.mrb[0].mxu0 %v6781
        %v9199 = vpop.f32.mrb[0].mxu0
        %v9200 = vadd.f32 0.0, %v9199
        %v9201 = vpop.f32.mrb[0].mxu0
        %v9202 = vpop.f32.mrb[0].mxu0
        %v9203 = vadd.f32 0.0, %v9202
        %v9204 = vpop.f32.mrb[0].mxu0
        %9205 = vmatprep.mubr.bf16.mxu0 %v9117
        %9206 = vmatmul.mubr.bf16.gmra.mrb[0].mxu0 %v6783
        %v9207 = vpop.f32.mrb[0].mxu0
        %v9208 = vadd.f32 0.0, %v9207
        %v9209 = vpop.f32.mrb[0].mxu0
        %v9210 = vpop.f32.mrb[0].mxu0
        %v9211 = vadd.f32 0.0, %v9210
        %v9212 = vpop.f32.mrb[0].mxu0
        %9213 = vmatprep.mubr.bf16.mxu0 %v9119
        %9214 = vmatmul.mubr.bf16.gmra.mrb[0].mxu0 %v6785
        %v9215 = vpop.f32.mrb[0].mxu0
        %v9216 = vadd.f32 0.0, %v9215
        %v9217 = vpop.f32.mrb[0].mxu0
        %v9218 = vpop.f32.mrb[0].mxu0
        %v9219 = vadd.f32 0.0, %v9218
        %v9220 = vpop.f32.mrb[0].mxu0
        %9221 = vmatprep.mubr.bf16.mxu0 %v9121
        %9222 = vmatmul.mubr.bf16.gmra.mrb[0].mxu0 %v6787
        %v9223 = vpop.f32.mrb[0].mxu0
        %v9224 = vadd.f32 0.0, %v9223
        %v9225 = vpop.f32.mrb[0].mxu0
        %v9226 = vpop.f32.mrb[0].mxu0
        %v9227 = vadd.f32 0.0, %v9226
        %v9228 = vpop.f32.mrb[0].mxu0
        %9229 = vmatprep.mubr.bf16.mxu0 %v9123
        %9230 = vmatmul.mubr.bf16.gmra.mrb[0].mxu0 %v6789
        %v9231 = vpop.f32.mrb[0].mxu0
        %v9232 = vadd.f32 0.0, %v9231
        %v9233 = vpop.f32.mrb[0].mxu0
        %v9234 = vpop.f32.mrb[0].mxu0
        %v9235 = vadd.f32 0.0, %v9234
        %v9236 = vpop.f32.mrb[0].mxu0
        %9237 = vmatprep.mubr.bf16.mxu0 %v9125
        %9238 = vmatmul.mubr.bf16.gmra.mrb[0].mxu0 %v6791
        %v9239 = vpop.f32.mrb[0].mxu0
        %v9240 = vadd.f32 0.0, %v9239
        %v9241 = vpop.f32.mrb[0].mxu0
        %v9242 = vpop.f32.mrb[0].mxu0
        %v9243 = vadd.f32 0.0, %v9242
        %v9244 = vpop.f32.mrb[0].mxu0
        %9245 = vmatprep.mubr.bf16.mxu0 %v9127
        %9246 = vmatmul.mubr.bf16.gmra.mrb[0].mxu0 %v6793
        %v9247 = vpop.f32.mrb[0].mxu0
        %v9248 = vadd.f32 0.0, %v9247
        %v9249 = vpop.f32.mrb[0].mxu0
        %v9250 = vpop.f32.mrb[0].mxu0
        %v9251 = vadd.f32 0.0, %v9250
        %v9252 = vpop.f32.mrb[0].mxu0
        %9253 = vmatprep.mubr.bf16.mxu0 %v9129
        %9254 = vmatmul.mubr.bf16.gmra.mrb[0].mxu0 %v6795
        %v9255 = vpop.f32.mrb[0].mxu0
        %v9256 = vadd.f32 0.0, %v9255
        %v9257 = vpop.f32.mrb[0].mxu0
        %v9258 = vpop.f32.mrb[0].mxu0
        %v9259 = vadd.f32 0.0, %v9258
        %v9260 = vpop.f32.mrb[0].mxu0
        %9261 = vmatprep.mubr.bf16.mxu0 %v9131
        %9262 = vmatmul.mubr.bf16.gmra.mrb[0].mxu0 %v6797
        %v9263 = vpop.f32.mrb[0].mxu0
        %v9264 = vadd.f32 0.0, %v9263
        %v9265 = vpop.f32.mrb[0].mxu0
        %v9266 = vpop.f32.mrb[0].mxu0
        %v9267 = vadd.f32 0.0, %v9266
        %v9268 = vpop.f32.mrb[0].mxu0
        %9269 = vmatprep.mubr.bf16.mxu0 %v9133
        %9270 = vmatmul.mubr.bf16.gmra.mrb[0].mxu0 %v6799
        %v9271 = vpop.f32.mrb[0].mxu0
        %v9272 = vadd.f32 0.0, %v9271
        %v9273 = vpop.f32.mrb[0].mxu0
        %v9274 = vpop.f32.mrb[0].mxu0
        %v9275 = vadd.f32 0.0, %v9274
        %v9276 = vpop.f32.mrb[0].mxu0
        %9277 = vmatprep.mubr.bf16.mxu0 %v9135
        %9278 = vmatmul.mubr.bf16.gmra.mrb[0].mxu0 %v6801
        %v9279 = vpop.f32.mrb[0].mxu0
        %v9280 = vadd.f32 0.0, %v9279
        %v9281 = vpop.f32.mrb[0].mxu0
        %v9282 = vpop.f32.mrb[0].mxu0
        %v9283 = vadd.f32 0.0, %v9282
        %v9284 = vpop.f32.mrb[0].mxu0
        %9285 = vmatprep.mubr.bf16.mxu0 %v9137
        %9286 = vmatmul.mubr.bf16.gmra.mrb[0].mxu0 %v6803
        %v9287 = vpop.f32.mrb[0].mxu0
        %v9288 = vadd.f32 0.0, %v9287
        %v9289 = vpop.f32.mrb[0].mxu0
        %v9290 = vpop.f32.mrb[0].mxu0
        %v9291 = vadd.f32 0.0, %v9290
        %v9292 = vpop.f32.mrb[0].mxu0
        %9293 = vmatprep.mubr.bf16.mxu0 %v9139
        %9294 = vmatmul.mubr.bf16.gmra.mrb[0].mxu0 %v8049
        %v9295 = vpop.f32.mrb[0].mxu0
        %v9296 = vadd.f32 0.0, %v9295
        %v9297 = vpop.f32.mrb[0].mxu0
        %v9298 = vpop.f32.mrb[0].mxu0
        %v9299 = vadd.f32 0.0, %v9298
        %v9300 = vpop.f32.mrb[0].mxu0
        %9301 = vdwg.mxu0
        %v9326 = vunpack.c.l.b16 %v8988
        %v9327 = vunpack.c.l.b16 %v8989
        %v9328 = vunpack.c.l.b16 %v8990
        %v9329 = vunpack.c.l.b16 %v8991
        %v9330 = vunpack.c.l.b16 %v8992
        %v9331 = vunpack.c.l.b16 %v8993
        %v9332 = vunpack.c.l.b16 %v8994
        %v9333 = vunpack.c.l.b16 %v8995
        %v9334 = vunpack.c.l.b16 %v8996
        %v9335 = vunpack.c.l.b16 %v8997
        %v9336 = vunpack.c.l.b16 %v8998
        %v9337 = vunpack.c.l.b16 %v8999
        %v9338 = vunpack.c.l.b16 %v9000
        %v9339 = vunpack.c.l.b16 %v9001
        %v9340 = vunpack.c.l.b16 %v9002
        %v9341 = vunpack.c.l.b16 %v9003
        %v9342 = vunpack.c.l.b16 %v9004
        %v9343 = vunpack.c.l.b16 %v9005
        %v9344 = vunpack.c.l.b16 %v9006
        %v9345 = vunpack.c.l.b16 %v9007
        %v9346 = vunpack.c.l.b16 %v9008
        %v9347 = vunpack.c.l.b16 %v9009
        %v9348 = vunpack.c.l.b16 %v9010
        %v9349 = vunpack.c.l.b16 %v9011
        %v9350 = vpack.c.b16 %v9327, %v9326
        %v9351 = vpack.c.b16 %v9329, %v9328
        %v9352 = vpack.c.b16 %v9331, %v9330
        %v9353 = vpack.c.b16 %v9333, %v9332
        %v9354 = vpack.c.b16 %v9335, %v9334
        %v9355 = vpack.c.b16 %v9337, %v9336
        %v9356 = vpack.c.b16 %v9339, %v9338
        %v9357 = vpack.c.b16 %v9341, %v9340
        %v9358 = vpack.c.b16 %v9343, %v9342
        %v9359 = vpack.c.b16 %v9345, %v9344
        %v9360 = vpack.c.b16 %v9347, %v9346
        %v9361 = vpack.c.b16 %v9349, %v9348
        %v9374 = vsel %vm410, %v6742, 0
        %v9376 = vsel %vm410, %v6744, 0
        %v9378 = vsel %vm410, %v6746, 0
        %v9380 = vsel %vm410, %v6748, 0
        %v9382 = vsel %vm410, %v6750, 0
        %v9384 = vsel %vm410, %v6752, 0
        %v9386 = vsel %vm410, %v6754, 0
        %v9388 = vsel %vm410, %v6756, 0
        %v9390 = vsel %vm410, %v6758, 0
        %v9392 = vsel %vm410, %v6760, 0
        %v9394 = vsel %vm410, %v6762, 0
        %v9396 = vsel %vm410, %v6764, 0
        %v9398 = vsel %vm410, %v6766, 0
        %v9400 = vsel %vm410, %v6768, 0
        %v9402 = vsel %vm410, %v6770, 0
        %v9404 = vsel %vm410, %v8046, 0
        %9406 = vmatprep.subr.bf16.mxu0 0
        %9407 = vmatpush1.bf16.msra.mxu0 %v9350
        %9408 = vmatprep.subr.bf16.mxu0 0
        %9409 = vmatpush1.bf16.msra.mxu0 %v9351
        %9410 = vmatprep.subr.bf16.mxu0 0
        %9411 = vmatpush1.bf16.msra.mxu0 %v9352
        %9412 = vmatprep.subr.bf16.mxu0 0
        %9413 = vmatpush1.bf16.msra.mxu0 %v9353
        %9414 = vmatprep.subr.bf16.mxu0 0
        %9415 = vmatpush1.bf16.msra.mxu0 %v9354
        %9416 = vmatprep.subr.bf16.mxu0 0
        %9417 = vmatpush1.bf16.msra.mxu0 %v9355
        %9418 = vmatprep.subr.bf16.mxu0 0
        %9419 = vmatpush1.bf16.msra.mxu0 %v9356
        %9420 = vmatprep.subr.bf16.mxu0 0
        %9421 = vmatpush1.bf16.msra.mxu0 %v9357
        %9422 = vmatprep.subr.bf16.mxu0 0
        %9423 = vmatpush1.bf16.msra.mxu0 %v9358
        %9424 = vmatprep.subr.bf16.mxu0 0
        %9425 = vmatpush1.bf16.msra.mxu0 %v9359
        %9426 = vmatprep.subr.bf16.mxu0 0
        %9427 = vmatpush1.bf16.msra.mxu0 %v9360
        %9428 = vmatprep.subr.bf16.mxu0 0
        %9429 = vmatpush1.bf16.msra.mxu0 %v9361
        %9430 = vmatprep.subr.bf16.mxu0 0
        %9431 = vmatpush1.bf16.msra.mxu0 0
        %9432 = vmatprep.subr.bf16.mxu0 0
        %9433 = vmatpush1.bf16.msra.mxu0 0
        %9434 = vmatprep.subr.bf16.mxu0 0
        %9435 = vmatpush1.bf16.msra.mxu0 0
        %9436 = vmatprep.subr.bf16.mxu0 0
        %9437 = vmatpush1.bf16.msra.mxu0 0
        %9438 = vmatprep.mubr.bf16.mxu0 %v9374
        %9439 = vmatmul.mubr.bf16.gmra.mrb[0].mxu0 %v6741
        %v9440 = vpop.f32.mrb[0].mxu0
        %v9441 = vadd.f32 %v9176, %v9440
        %v9442 = vpop.f32.mrb[0].mxu0
        %v9443 = vpop.f32.mrb[0].mxu0
        %v9444 = vadd.f32 %v9179, %v9443
        %v9445 = vpop.f32.mrb[0].mxu0
        %9446 = vmatprep.mubr.bf16.mxu0 %v9376
        %9447 = vmatmul.mubr.bf16.gmra.mrb[0].mxu0 %v6743
        %v9448 = vpop.f32.mrb[0].mxu0
        %v9449 = vadd.f32 %v9184, %v9448
        %v9450 = vpop.f32.mrb[0].mxu0
        %v9451 = vpop.f32.mrb[0].mxu0
        %v9452 = vadd.f32 %v9187, %v9451
        %v9453 = vpop.f32.mrb[0].mxu0
        %9454 = vmatprep.mubr.bf16.mxu0 %v9378
        %9455 = vmatmul.mubr.bf16.gmra.mrb[0].mxu0 %v6745
        %v9456 = vpop.f32.mrb[0].mxu0
        %v9457 = vadd.f32 %v9192, %v9456
        %v9458 = vpop.f32.mrb[0].mxu0
        %v9459 = vpop.f32.mrb[0].mxu0
        %v9460 = vadd.f32 %v9195, %v9459
        %v9461 = vpop.f32.mrb[0].mxu0
        %9462 = vmatprep.mubr.bf16.mxu0 %v9380
        %9463 = vmatmul.mubr.bf16.gmra.mrb[0].mxu0 %v6747
        %v9464 = vpop.f32.mrb[0].mxu0
        %v9465 = vadd.f32 %v9200, %v9464
        %v9466 = vpop.f32.mrb[0].mxu0
        %v9467 = vpop.f32.mrb[0].mxu0
        %v9468 = vadd.f32 %v9203, %v9467
        %v9469 = vpop.f32.mrb[0].mxu0
        %9470 = vmatprep.mubr.bf16.mxu0 %v9382
        %9471 = vmatmul.mubr.bf16.gmra.mrb[0].mxu0 %v6749
        %v9472 = vpop.f32.mrb[0].mxu0
        %v9473 = vadd.f32 %v9208, %v9472
        %v9474 = vpop.f32.mrb[0].mxu0
        %v9475 = vpop.f32.mrb[0].mxu0
        %v9476 = vadd.f32 %v9211, %v9475
        %v9477 = vpop.f32.mrb[0].mxu0
        %9478 = vmatprep.mubr.bf16.mxu0 %v9384
        %9479 = vmatmul.mubr.bf16.gmra.mrb[0].mxu0 %v6751
        %v9480 = vpop.f32.mrb[0].mxu0
        %v9481 = vadd.f32 %v9216, %v9480
        %v9482 = vpop.f32.mrb[0].mxu0
        %v9483 = vpop.f32.mrb[0].mxu0
        %v9484 = vadd.f32 %v9219, %v9483
        %v9485 = vpop.f32.mrb[0].mxu0
        %9486 = vmatprep.mubr.bf16.mxu0 %v9386
        %9487 = vmatmul.mubr.bf16.gmra.mrb[0].mxu0 %v6753
        %v9488 = vpop.f32.mrb[0].mxu0
        %v9489 = vadd.f32 %v9224, %v9488
        %v9490 = vpop.f32.mrb[0].mxu0
        %v9491 = vpop.f32.mrb[0].mxu0
        %v9492 = vadd.f32 %v9227, %v9491
        %v9493 = vpop.f32.mrb[0].mxu0
        %9494 = vmatprep.mubr.bf16.mxu0 %v9388
        %9495 = vmatmul.mubr.bf16.gmra.mrb[0].mxu0 %v6755
        %v9496 = vpop.f32.mrb[0].mxu0
        %v9497 = vadd.f32 %v9232, %v9496
        %v9498 = vpop.f32.mrb[0].mxu0
        %v9499 = vpop.f32.mrb[0].mxu0
        %v9500 = vadd.f32 %v9235, %v9499
        %v9501 = vpop.f32.mrb[0].mxu0
        %9502 = vmatprep.mubr.bf16.mxu0 %v9390
        %9503 = vmatmul.mubr.bf16.gmra.mrb[0].mxu0 %v6757
        %v9504 = vpop.f32.mrb[0].mxu0
        %v9505 = vadd.f32 %v9240, %v9504
        %v9506 = vpop.f32.mrb[0].mxu0
        %v9507 = vpop.f32.mrb[0].mxu0
        %v9508 = vadd.f32 %v9243, %v9507
        %v9509 = vpop.f32.mrb[0].mxu0
        %9510 = vmatprep.mubr.bf16.mxu0 %v9392
        %9511 = vmatmul.mubr.bf16.gmra.mrb[0].mxu0 %v6759
        %v9512 = vpop.f32.mrb[0].mxu0
        %v9513 = vadd.f32 %v9248, %v9512
        %v9514 = vpop.f32.mrb[0].mxu0
        %v9515 = vpop.f32.mrb[0].mxu0
        %v9516 = vadd.f32 %v9251, %v9515
        %v9517 = vpop.f32.mrb[0].mxu0
        %9518 = vmatprep.mubr.bf16.mxu0 %v9394
        %9519 = vmatmul.mubr.bf16.gmra.mrb[0].mxu0 %v6761
        %v9520 = vpop.f32.mrb[0].mxu0
        %v9521 = vadd.f32 %v9256, %v9520
        %v9522 = vpop.f32.mrb[0].mxu0
        %v9523 = vpop.f32.mrb[0].mxu0
        %v9524 = vadd.f32 %v9259, %v9523
        %v9525 = vpop.f32.mrb[0].mxu0
        %9526 = vmatprep.mubr.bf16.mxu0 %v9396
        %9527 = vmatmul.mubr.bf16.gmra.mrb[0].mxu0 %v6763
        %v9528 = vpop.f32.mrb[0].mxu0
        %v9529 = vadd.f32 %v9264, %v9528
        %v9530 = vpop.f32.mrb[0].mxu0
        %v9531 = vpop.f32.mrb[0].mxu0
        %v9532 = vadd.f32 %v9267, %v9531
        %v9533 = vpop.f32.mrb[0].mxu0
        %9534 = vmatprep.mubr.bf16.mxu0 %v9398
        %9535 = vmatmul.mubr.bf16.gmra.mrb[0].mxu0 %v6765
        %v9536 = vpop.f32.mrb[0].mxu0
        %v9537 = vadd.f32 %v9272, %v9536
        %v9538 = vpop.f32.mrb[0].mxu0
        %v9539 = vpop.f32.mrb[0].mxu0
        %v9540 = vadd.f32 %v9275, %v9539
        %v9541 = vpop.f32.mrb[0].mxu0
        %9542 = vmatprep.mubr.bf16.mxu0 %v9400
        %9543 = vmatmul.mubr.bf16.gmra.mrb[0].mxu0 %v6767
        %v9544 = vpop.f32.mrb[0].mxu0
        %v9545 = vadd.f32 %v9280, %v9544
        %v9546 = vpop.f32.mrb[0].mxu0
        %v9547 = vpop.f32.mrb[0].mxu0
        %v9548 = vadd.f32 %v9283, %v9547
        %v9549 = vpop.f32.mrb[0].mxu0
        %9550 = vmatprep.mubr.bf16.mxu0 %v9402
        %9551 = vmatmul.mubr.bf16.gmra.mrb[0].mxu0 %v6769
        %v9552 = vpop.f32.mrb[0].mxu0
        %v9553 = vadd.f32 %v9288, %v9552
        %v9554 = vpop.f32.mrb[0].mxu0
        %v9555 = vpop.f32.mrb[0].mxu0
        %v9556 = vadd.f32 %v9291, %v9555
        %v9557 = vpop.f32.mrb[0].mxu0
        %9558 = vmatprep.mubr.bf16.mxu0 %v9404
        %9559 = vmatmul.mubr.bf16.gmra.mrb[0].mxu0 %v8045
        %v9560 = vpop.f32.mrb[0].mxu0
        %v9561 = vadd.f32 %v9296, %v9560
        %v9562 = vpop.f32.mrb[0].mxu0
        %v9563 = vpop.f32.mrb[0].mxu0
        %v9564 = vadd.f32 %v9299, %v9563
        %v9565 = vpop.f32.mrb[0].mxu0
        %9566 = vdwg.mxu0
        %v9567 = vadd.f32 %v8955, %v9441
        %v9568 = vadd.f32 %v8956, %v9444
        %v9569 = vadd.f32 %v8957, %v9449
        %v9570 = vadd.f32 %v8958, %v9452
        %v9571 = vadd.f32 %v8959, %v9457
        %v9572 = vadd.f32 %v8960, %v9460
        %v9573 = vadd.f32 %v8961, %v9465
        %v9574 = vadd.f32 %v8962, %v9468
        %v9575 = vadd.f32 %v8963, %v9473
        %v9576 = vadd.f32 %v8964, %v9476
        %v9577 = vadd.f32 %v8965, %v9481
        %v9578 = vadd.f32 %v8966, %v9484
        %v9579 = vadd.f32 %v8967, %v9489
        %v9580 = vadd.f32 %v8968, %v9492
        %v9581 = vadd.f32 %v8969, %v9497
        %v9582 = vadd.f32 %v8970, %v9500
        %v9583 = vadd.f32 %v8971, %v9505
        %v9584 = vadd.f32 %v8972, %v9508
        %v9585 = vadd.f32 %v8973, %v9513
        %v9586 = vadd.f32 %v8974, %v9516
        %v9587 = vadd.f32 %v8975, %v9521
        %v9588 = vadd.f32 %v8976, %v9524
        %v9589 = vadd.f32 %v8977, %v9529
        %v9590 = vadd.f32 %v8978, %v9532
        %v9591 = vadd.f32 %v8979, %v9537
        %v9592 = vadd.f32 %v8980, %v9540
        %v9593 = vadd.f32 %v8981, %v9545
        %v9594 = vadd.f32 %v8982, %v9548
        %v9595 = vadd.f32 %v8983, %v9553
        %v9596 = vadd.f32 %v8984, %v9556
        %v9597 = vadd.f32 %v8985, %v9561
        %v9598 = vadd.f32 %v8986, %v9564
        %v9599 = vld [vmem:[#allocation2 + $0x30] sm:$0xff]
        %v9600 = vld [vmem:[#allocation2 + $0x38] sm:$0xff]
        %v9601 = vld [vmem:[#allocation2 + $0x40] sm:$0xff]
        %v9602 = vld [vmem:[#allocation2 + $0x48] sm:$0xff]
        %v9603 = vld [vmem:[#allocation2 + $0x50] sm:$0xff]
        %v9604 = vld [vmem:[#allocation2 + $0x58] sm:$0xff]
        %v9605 = vld [vmem:[#allocation2 + $0x60] sm:$0xff]
        %v9606 = vld [vmem:[#allocation2 + $0x68] sm:$0xff]
        %v9607 = vld [vmem:[#allocation2 + $0x70] sm:$0xff]
        %v9608 = vld [vmem:[#allocation2 + $0x78] sm:$0xff]
        %v9609 = vld [vmem:[#allocation2 + $0x80] sm:$0xff]
        %v9610 = vld [vmem:[#allocation2 + $0x88] sm:$0xff]
        %v9611 = vld [vmem:[#allocation2 + $0x90] sm:$0xff]
        %v9612 = vld [vmem:[#allocation2 + $0x98] sm:$0xff]
        %v9613 = vld [vmem:[#allocation2 + $0xa0] sm:$0xff]
        %v9614 = vld [vmem:[#allocation2 + $0xa8] sm:$0xff]
        %v9615 = vld [vmem:[#allocation2 + $0xb0] sm:$0xff]
        %v9616 = vld [vmem:[#allocation2 + $0xb8] sm:$0xff]
        %v9617 = vld [vmem:[#allocation2 + $0xc0] sm:$0xff]
        %v9618 = vld [vmem:[#allocation2 + $0xc8] sm:$0xff]
        %v9619 = vld [vmem:[#allocation2 + $0xd0] sm:$0xff]
        %v9620 = vld [vmem:[#allocation2 + $0xd8] sm:$0xff]
        %v9621 = vld [vmem:[#allocation2 + $0xe0] sm:$0xff]
        %v9622 = vld [vmem:[#allocation2 + $0xe8] sm:$0xff]
        %v9623 = vld [vmem:[#allocation2 + $0xf0] sm:$0xff]
        %v9624 = vld [vmem:[#allocation2 + $0xf8] sm:$0xff]
        %v9625 = vld [vmem:[#allocation2 + $0x100] sm:$0xff]
        %v9626 = vld [vmem:[#allocation2 + $0x108] sm:$0xff]
        %v9627 = vld [vmem:[#allocation2 + $0x110] sm:$0xff]
        %v9628 = vld [vmem:[#allocation2 + $0x118] sm:$0xff]
        %v9629 = vld [vmem:[#allocation2 + $0x120] sm:$0xff]
        %v9630 = vld [vmem:[#allocation2 + $0x128] sm:$0xff]
        %v9631 = vld [vmem:[#allocation2 + $0x130] sm:$0x1]
        %v9632 = vld [vmem:[#allocation2 + $0x138] sm:$0x1]
        %v9633 = vld [vmem:[#allocation3 + $0x30] sm:$0xff]
        %v9634 = vld [vmem:[#allocation3 + $0x38] sm:$0xff]
        %v9635 = vld [vmem:[#allocation3 + $0x40] sm:$0xff]
        %v9636 = vld [vmem:[#allocation3 + $0x48] sm:$0xff]
        %v9637 = vld [vmem:[#allocation3 + $0x50] sm:$0xff]
        %v9638 = vld [vmem:[#allocation3 + $0x58] sm:$0xff]
        %v9639 = vld [vmem:[#allocation3 + $0x60] sm:$0xff]
        %v9640 = vld [vmem:[#allocation3 + $0x68] sm:$0xff]
        %v9641 = vld [vmem:[#allocation3 + $0x70] sm:$0xff]
        %v9642 = vld [vmem:[#allocation3 + $0x78] sm:$0xff]
        %v9643 = vld [vmem:[#allocation3 + $0x80] sm:$0xff]
        %v9644 = vld [vmem:[#allocation3 + $0x88] sm:$0xff]
        %v9645 = vld [vmem:[#allocation3 + $0x90] sm:$0xff]
        %v9646 = vld [vmem:[#allocation3 + $0x98] sm:$0xff]
        %v9647 = vld [vmem:[#allocation3 + $0xa0] sm:$0xff]
        %v9648 = vld [vmem:[#allocation3 + $0xa8] sm:$0xff]
        %v9649 = vld [vmem:[#allocation3 + $0xb0] sm:$0xff]
        %v9650 = vld [vmem:[#allocation3 + $0xb8] sm:$0xff]
        %v9651 = vld [vmem:[#allocation3 + $0xc0] sm:$0xff]
        %v9652 = vld [vmem:[#allocation3 + $0xc8] sm:$0xff]
        %v9653 = vld [vmem:[#allocation3 + $0xd0] sm:$0xff]
        %v9654 = vld [vmem:[#allocation3 + $0xd8] sm:$0xff]
        %v9655 = vld [vmem:[#allocation3 + $0xe0] sm:$0xff]
        %v9656 = vld [vmem:[#allocation3 + $0xe8] sm:$0xff]
        %v9657 = vld [vmem:[#allocation3 + $0xf0] sm:$0xff]
        %v9658 = vld [vmem:[#allocation3 + $0xf8] sm:$0xff]
        %v9659 = vld [vmem:[#allocation3 + $0x100] sm:$0xff]
        %v9660 = vld [vmem:[#allocation3 + $0x108] sm:$0xff]
        %v9661 = vld [vmem:[#allocation3 + $0x110] sm:$0xff]
        %v9662 = vld [vmem:[#allocation3 + $0x118] sm:$0xff]
        %v9663 = vld [vmem:[#allocation3 + $0x120] sm:$0xff]
        %v9664 = vld [vmem:[#allocation3 + $0x128] sm:$0xff]
        %v9665 = vld [vmem:[#allocation3 + $0x130] sm:$0x1]
        %v9666 = vld [vmem:[#allocation3 + $0x138] sm:$0x1]
        %s9667 = scalar_lea.vmem [#allocation4], 768
        %v9668 = vld [vmem:[%s9667] sm:$0xf]
        %v9669 = vld [vmem:[%s9667 + $0x4] sm:$0xf]
        %v9670 = vld [vmem:[%s9667 + $0x8] sm:$0xf]
        %v9671 = vld [vmem:[%s9667 + $0xc] sm:$0xf]
        %v9672 = vld [vmem:[%s9667 + $0x10] sm:$0xf]
        %v9673 = vld [vmem:[%s9667 + $0x14] sm:$0xf]
        %v9674 = vld [vmem:[%s9667 + $0x18] sm:$0xf]
        %v9675 = vld [vmem:[%s9667 + $0x1c] sm:$0xf]
        %v9676 = vld [vmem:[%s9667 + $0x20] sm:$0xf]
        %v9677 = vld [vmem:[%s9667 + $0x24] sm:$0xf]
        %v9678 = vld [vmem:[%s9667 + $0x28] sm:$0xf]
        %v9679 = vld [vmem:[%s9667 + $0x2c] sm:$0xf]
        %v9680 = vld [vmem:[%s9667 + $0x30] sm:$0xf]
        %v9681 = vld [vmem:[%s9667 + $0x34] sm:$0xf]
        %v9682 = vld [vmem:[%s9667 + $0x38] sm:$0xf]
        %v9683 = vld [vmem:[%s9667 + $0x3c] sm:$0xf]
        %v9684 = vld [vmem:[%s9667 + $0x40] sm:$0xf]
        %v9685 = vld [vmem:[%s9667 + $0x44] sm:$0xf]
        %v9686 = vld [vmem:[%s9667 + $0x48] sm:$0xf]
        %v9687 = vld [vmem:[%s9667 + $0x4c] sm:$0xf]
        %v9688 = vld [vmem:[%s9667 + $0x50] sm:$0xf]
        %v9689 = vld [vmem:[%s9667 + $0x54] sm:$0xf]
        %v9690 = vld [vmem:[%s9667 + $0x58] sm:$0xf]
        %v9691 = vld [vmem:[%s9667 + $0x5c] sm:$0xf]
        %s9692 = scalar_lea.vmem [#allocation7], 768
        %v9693 = vld [vmem:[%s9692] sm:$0xf]
        %v9694 = vld [vmem:[%s9692 + $0x4] sm:$0xf]
        %v9695 = vld [vmem:[%s9692 + $0x8] sm:$0xf]
        %v9696 = vld [vmem:[%s9692 + $0xc] sm:$0xf]
        %v9697 = vld [vmem:[%s9692 + $0x10] sm:$0xf]
        %v9698 = vld [vmem:[%s9692 + $0x14] sm:$0xf]
        %v9699 = vld [vmem:[%s9692 + $0x18] sm:$0xf]
        %v9700 = vld [vmem:[%s9692 + $0x1c] sm:$0xf]
        %v9701 = vld [vmem:[%s9692 + $0x20] sm:$0xf]
        %v9702 = vld [vmem:[%s9692 + $0x24] sm:$0xf]
        %v9703 = vld [vmem:[%s9692 + $0x28] sm:$0xf]
        %v9704 = vld [vmem:[%s9692 + $0x2c] sm:$0xf]
        %v9705 = vld [vmem:[%s9692 + $0x30] sm:$0xf]
        %v9706 = vld [vmem:[%s9692 + $0x34] sm:$0xf]
        %v9707 = vld [vmem:[%s9692 + $0x38] sm:$0xf]
        %v9708 = vld [vmem:[%s9692 + $0x3c] sm:$0xf]
        %v9709 = vld [vmem:[%s9692 + $0x40] sm:$0xf]
        %v9710 = vld [vmem:[%s9692 + $0x44] sm:$0xf]
        %v9711 = vld [vmem:[%s9692 + $0x48] sm:$0xf]
        %v9712 = vld [vmem:[%s9692 + $0x4c] sm:$0xf]
        %v9713 = vld [vmem:[%s9692 + $0x50] sm:$0xf]
        %v9714 = vld [vmem:[%s9692 + $0x54] sm:$0xf]
        %v9715 = vld [vmem:[%s9692 + $0x58] sm:$0xf]
        %v9716 = vld [vmem:[%s9692 + $0x5c] sm:$0xf]
        %v9718 = vshrl.u32 %v9633, 16
        %v9720 = vshll.u32 %v9633, 16
        %v9722 = vrot.slane %v9720, 1
        %v9723 = vor.u32 %v9718, %v9722
        %v9725 = vshll.u32 %v9635, 16
        %v9727 = vrot.slane %v9725, 1
        %v9728 = vsel %vm3996, %v9723, %v9727
        %v9730 = vshrl.u32 %v9634, 16
        %v9732 = vshll.u32 %v9634, 16
        %v9734 = vrot.slane %v9732, 1
        %v9735 = vor.u32 %v9730, %v9734
        %v9737 = vshll.u32 %v9636, 16
        %v9739 = vrot.slane %v9737, 1
        %v9740 = vsel %vm3996, %v9735, %v9739
        %v9741 = vshrl.u32 %v9635, 16
        %v9743 = vor.u32 %v9741, %v9727
        %v9745 = vshll.u32 %v9637, 16
        %v9747 = vrot.slane %v9745, 1
        %v9748 = vsel %vm3996, %v9743, %v9747
        %v9749 = vshrl.u32 %v9636, 16
        %v9751 = vor.u32 %v9749, %v9739
        %v9753 = vshll.u32 %v9638, 16
        %v9755 = vrot.slane %v9753, 1
        %v9756 = vsel %vm3996, %v9751, %v9755
        %v9757 = vshrl.u32 %v9637, 16
        %v9759 = vor.u32 %v9757, %v9747
        %v9761 = vshll.u32 %v9639, 16
        %v9763 = vrot.slane %v9761, 1
        %v9764 = vsel %vm3996, %v9759, %v9763
        %v9765 = vshrl.u32 %v9638, 16
        %v9767 = vor.u32 %v9765, %v9755
        %v9769 = vshll.u32 %v9640, 16
        %v9771 = vrot.slane %v9769, 1
        %v9772 = vsel %vm3996, %v9767, %v9771
        %v9773 = vshrl.u32 %v9639, 16
        %v9775 = vor.u32 %v9773, %v9763
        %v9777 = vshll.u32 %v9641, 16
        %v9779 = vrot.slane %v9777, 1
        %v9780 = vsel %vm3996, %v9775, %v9779
        %v9781 = vshrl.u32 %v9640, 16
        %v9783 = vor.u32 %v9781, %v9771
        %v9785 = vshll.u32 %v9642, 16
        %v9787 = vrot.slane %v9785, 1
        %v9788 = vsel %vm3996, %v9783, %v9787
        %v9789 = vshrl.u32 %v9641, 16
        %v9791 = vor.u32 %v9789, %v9779
        %v9793 = vshll.u32 %v9643, 16
        %v9795 = vrot.slane %v9793, 1
        %v9796 = vsel %vm3996, %v9791, %v9795
        %v9797 = vshrl.u32 %v9642, 16
        %v9799 = vor.u32 %v9797, %v9787
        %v9801 = vshll.u32 %v9644, 16
        %v9803 = vrot.slane %v9801, 1
        %v9804 = vsel %vm3996, %v9799, %v9803
        %v9805 = vshrl.u32 %v9643, 16
        %v9807 = vor.u32 %v9805, %v9795
        %v9809 = vshll.u32 %v9645, 16
        %v9811 = vrot.slane %v9809, 1
        %v9812 = vsel %vm3996, %v9807, %v9811
        %v9813 = vshrl.u32 %v9644, 16
        %v9815 = vor.u32 %v9813, %v9803
        %v9817 = vshll.u32 %v9646, 16
        %v9819 = vrot.slane %v9817, 1
        %v9820 = vsel %vm3996, %v9815, %v9819
        %v9821 = vshrl.u32 %v9645, 16
        %v9823 = vor.u32 %v9821, %v9811
        %v9825 = vshll.u32 %v9647, 16
        %v9827 = vrot.slane %v9825, 1
        %v9828 = vsel %vm3996, %v9823, %v9827
        %v9829 = vshrl.u32 %v9646, 16
        %v9831 = vor.u32 %v9829, %v9819
        %v9833 = vshll.u32 %v9648, 16
        %v9835 = vrot.slane %v9833, 1
        %v9836 = vsel %vm3996, %v9831, %v9835
        %v9837 = vshrl.u32 %v9647, 16
        %v9839 = vor.u32 %v9837, %v9827
        %v9841 = vshll.u32 %v9649, 16
        %v9843 = vrot.slane %v9841, 1
        %v9844 = vsel %vm3996, %v9839, %v9843
        %v9845 = vshrl.u32 %v9648, 16
        %v9847 = vor.u32 %v9845, %v9835
        %v9849 = vshll.u32 %v9650, 16
        %v9851 = vrot.slane %v9849, 1
        %v9852 = vsel %vm3996, %v9847, %v9851
        %v9853 = vshrl.u32 %v9649, 16
        %v9855 = vor.u32 %v9853, %v9843
        %v9857 = vshll.u32 %v9651, 16
        %v9859 = vrot.slane %v9857, 1
        %v9860 = vsel %vm3996, %v9855, %v9859
        %v9861 = vshrl.u32 %v9650, 16
        %v9863 = vor.u32 %v9861, %v9851
        %v9865 = vshll.u32 %v9652, 16
        %v9867 = vrot.slane %v9865, 1
        %v9868 = vsel %vm3996, %v9863, %v9867
        %v9869 = vshrl.u32 %v9651, 16
        %v9871 = vor.u32 %v9869, %v9859
        %v9873 = vshll.u32 %v9653, 16
        %v9875 = vrot.slane %v9873, 1
        %v9876 = vsel %vm3996, %v9871, %v9875
        %v9877 = vshrl.u32 %v9652, 16
        %v9879 = vor.u32 %v9877, %v9867
        %v9881 = vshll.u32 %v9654, 16
        %v9883 = vrot.slane %v9881, 1
        %v9884 = vsel %vm3996, %v9879, %v9883
        %v9885 = vshrl.u32 %v9653, 16
        %v9887 = vor.u32 %v9885, %v9875
        %v9889 = vshll.u32 %v9655, 16
        %v9891 = vrot.slane %v9889, 1
        %v9892 = vsel %vm3996, %v9887, %v9891
        %v9893 = vshrl.u32 %v9654, 16
        %v9895 = vor.u32 %v9893, %v9883
        %v9897 = vshll.u32 %v9656, 16
        %v9899 = vrot.slane %v9897, 1
        %v9900 = vsel %vm3996, %v9895, %v9899
        %v9901 = vshrl.u32 %v9655, 16
        %v9903 = vor.u32 %v9901, %v9891
        %v9905 = vshll.u32 %v9657, 16
        %v9907 = vrot.slane %v9905, 1
        %v9908 = vsel %vm3996, %v9903, %v9907
        %v9909 = vshrl.u32 %v9656, 16
        %v9911 = vor.u32 %v9909, %v9899
        %v9913 = vshll.u32 %v9658, 16
        %v9915 = vrot.slane %v9913, 1
        %v9916 = vsel %vm3996, %v9911, %v9915
        %v9917 = vshrl.u32 %v9657, 16
        %v9919 = vor.u32 %v9917, %v9907
        %v9921 = vshll.u32 %v9659, 16
        %v9923 = vrot.slane %v9921, 1
        %v9924 = vsel %vm3996, %v9919, %v9923
        %v9925 = vshrl.u32 %v9658, 16
        %v9927 = vor.u32 %v9925, %v9915
        %v9929 = vshll.u32 %v9660, 16
        %v9931 = vrot.slane %v9929, 1
        %v9932 = vsel %vm3996, %v9927, %v9931
        %v9933 = vshrl.u32 %v9659, 16
        %v9935 = vor.u32 %v9933, %v9923
        %v9937 = vshll.u32 %v9661, 16
        %v9939 = vrot.slane %v9937, 1
        %v9940 = vsel %vm3996, %v9935, %v9939
        %v9941 = vshrl.u32 %v9660, 16
        %v9943 = vor.u32 %v9941, %v9931
        %v9945 = vshll.u32 %v9662, 16
        %v9947 = vrot.slane %v9945, 1
        %v9948 = vsel %vm3996, %v9943, %v9947
        %v9949 = vshrl.u32 %v9661, 16
        %v9951 = vor.u32 %v9949, %v9939
        %v9953 = vshll.u32 %v9663, 16
        %v9955 = vrot.slane %v9953, 1
        %v9956 = vsel %vm3996, %v9951, %v9955
        %v9957 = vshrl.u32 %v9662, 16
        %v9959 = vor.u32 %v9957, %v9947
        %v9961 = vshll.u32 %v9664, 16
        %v9963 = vrot.slane %v9961, 1
        %v9964 = vsel %vm3996, %v9959, %v9963
        %v9965 = vshrl.u32 %v9663, 16
        %v9967 = vor.u32 %v9965, %v9955
        %v9969 = vshll.u32 %v9665, 16
        %v9971 = vrot.slane %v9969, 1
        %v9972 = vsel %vm3996, %v9967, %v9971
        %v9973 = vshrl.u32 %v9664, 16
        %v9975 = vor.u32 %v9973, %v9963
        %v9977 = vshll.u32 %v9666, 16
        %v9979 = vrot.slane %v9977, 1
        %v9980 = vsel %vm3996, %v9975, %v9979
        %v10021 = vunpack.c.l.b16 %v9693
        %v10022 = vunpack.c.l.b16 %v9694
        %v10023 = vunpack.c.l.b16 %v9695
        %v10024 = vunpack.c.l.b16 %v9696
        %v10025 = vunpack.c.l.b16 %v9697
        %v10026 = vunpack.c.l.b16 %v9698
        %v10027 = vunpack.c.l.b16 %v9699
        %v10028 = vunpack.c.l.b16 %v9700
        %v10029 = vunpack.c.l.b16 %v9701
        %v10030 = vunpack.c.l.b16 %v9702
        %v10031 = vunpack.c.l.b16 %v9703
        %v10032 = vunpack.c.l.b16 %v9704
        %v10033 = vunpack.c.l.b16 %v9705
        %v10034 = vunpack.c.l.b16 %v9706
        %v10035 = vunpack.c.l.b16 %v9707
        %v10036 = vunpack.c.l.b16 %v9708
        %v10037 = vunpack.c.l.b16 %v9709
        %v10038 = vunpack.c.l.b16 %v9710
        %v10039 = vunpack.c.l.b16 %v9711
        %v10040 = vunpack.c.l.b16 %v9712
        %v10041 = vunpack.c.l.b16 %v9713
        %v10042 = vunpack.c.l.b16 %v9714
        %v10043 = vunpack.c.l.b16 %v9715
        %v10044 = vunpack.c.l.b16 %v9716
        %v10045 = vpack.c.b16 %v10022, %v10021
        %v10046 = vpack.c.b16 %v10024, %v10023
        %v10047 = vpack.c.b16 %v10026, %v10025
        %v10048 = vpack.c.b16 %v10028, %v10027
        %v10049 = vpack.c.b16 %v10030, %v10029
        %v10050 = vpack.c.b16 %v10032, %v10031
        %v10051 = vpack.c.b16 %v10034, %v10033
        %v10052 = vpack.c.b16 %v10036, %v10035
        %v10053 = vpack.c.b16 %v10038, %v10037
        %v10054 = vpack.c.b16 %v10040, %v10039
        %v10055 = vpack.c.b16 %v10042, %v10041
        %v10056 = vpack.c.b16 %v10044, %v10043
        %v10070 = vsel %vm410, %v9740, 0
        %v10073 = vsel %vm410, %v9756, 0
        %v10076 = vsel %vm410, %v9772, 0
        %v10079 = vsel %vm410, %v9788, 0
        %v10082 = vsel %vm410, %v9804, 0
        %v10085 = vsel %vm410, %v9820, 0
        %v10088 = vsel %vm410, %v9836, 0
        %v10091 = vsel %vm410, %v9852, 0
        %v10094 = vsel %vm410, %v9868, 0
        %v10097 = vsel %vm410, %v9884, 0
        %v10100 = vsel %vm410, %v9900, 0
        %v10103 = vsel %vm410, %v9916, 0
        %v10106 = vsel %vm410, %v9932, 0
        %v10109 = vsel %vm410, %v9948, 0
        %v10112 = vsel %vm410, %v9964, 0
        %v10115 = vsel %vm410, %v9980, 0
        %10117 = vmatprep.subr.bf16.mxu0 0
        %10118 = vmatpush1.bf16.msra.mxu0 %v10045
        %10119 = vmatprep.subr.bf16.mxu0 0
        %10120 = vmatpush1.bf16.msra.mxu0 %v10046
        %10121 = vmatprep.subr.bf16.mxu0 0
        %10122 = vmatpush1.bf16.msra.mxu0 %v10047
        %10123 = vmatprep.subr.bf16.mxu0 0
        %10124 = vmatpush1.bf16.msra.mxu0 %v10048
        %10125 = vmatprep.subr.bf16.mxu0 0
        %10126 = vmatpush1.bf16.msra.mxu0 %v10049
        %10127 = vmatprep.subr.bf16.mxu0 0
        %10128 = vmatpush1.bf16.msra.mxu0 %v10050
        %10129 = vmatprep.subr.bf16.mxu0 0
        %10130 = vmatpush1.bf16.msra.mxu0 %v10051
        %10131 = vmatprep.subr.bf16.mxu0 0
        %10132 = vmatpush1.bf16.msra.mxu0 %v10052
        %10133 = vmatprep.subr.bf16.mxu0 0
        %10134 = vmatpush1.bf16.msra.mxu0 %v10053
        %10135 = vmatprep.subr.bf16.mxu0 0
        %10136 = vmatpush1.bf16.msra.mxu0 %v10054
        %10137 = vmatprep.subr.bf16.mxu0 0
        %10138 = vmatpush1.bf16.msra.mxu0 %v10055
        %10139 = vmatprep.subr.bf16.mxu0 0
        %10140 = vmatpush1.bf16.msra.mxu0 %v10056
        %10141 = vmatprep.subr.bf16.mxu0 0
        %10142 = vmatpush1.bf16.msra.mxu0 0
        %10143 = vmatprep.subr.bf16.mxu0 0
        %10144 = vmatpush1.bf16.msra.mxu0 0
        %10145 = vmatprep.subr.bf16.mxu0 0
        %10146 = vmatpush1.bf16.msra.mxu0 0
        %10147 = vmatprep.subr.bf16.mxu0 0
        %10148 = vmatpush1.bf16.msra.mxu0 0
        %10149 = vmatprep.mubr.bf16.mxu0 %v10070
        %10150 = vmatmul.mubr.bf16.gmra.mrb[0].mxu0 %v9728
        %v10151 = vpop.f32.mrb[0].mxu0
        %v10152 = vadd.f32 0.0, %v10151
        %v10153 = vpop.f32.mrb[0].mxu0
        %v10154 = vpop.f32.mrb[0].mxu0
        %v10155 = vadd.f32 0.0, %v10154
        %v10156 = vpop.f32.mrb[0].mxu0
        %10157 = vmatprep.mubr.bf16.mxu0 %v10073
        %10158 = vmatmul.mubr.bf16.gmra.mrb[0].mxu0 %v9748
        %v10159 = vpop.f32.mrb[0].mxu0
        %v10160 = vadd.f32 0.0, %v10159
        %v10161 = vpop.f32.mrb[0].mxu0
        %v10162 = vpop.f32.mrb[0].mxu0
        %v10163 = vadd.f32 0.0, %v10162
        %v10164 = vpop.f32.mrb[0].mxu0
        %10165 = vmatprep.mubr.bf16.mxu0 %v10076
        %10166 = vmatmul.mubr.bf16.gmra.mrb[0].mxu0 %v9764
        %v10167 = vpop.f32.mrb[0].mxu0
        %v10168 = vadd.f32 0.0, %v10167
        %v10169 = vpop.f32.mrb[0].mxu0
        %v10170 = vpop.f32.mrb[0].mxu0
        %v10171 = vadd.f32 0.0, %v10170
        %v10172 = vpop.f32.mrb[0].mxu0
        %10173 = vmatprep.mubr.bf16.mxu0 %v10079
        %10174 = vmatmul.mubr.bf16.gmra.mrb[0].mxu0 %v9780
        %v10175 = vpop.f32.mrb[0].mxu0
        %v10176 = vadd.f32 0.0, %v10175
        %v10177 = vpop.f32.mrb[0].mxu0
        %v10178 = vpop.f32.mrb[0].mxu0
        %v10179 = vadd.f32 0.0, %v10178
        %v10180 = vpop.f32.mrb[0].mxu0
        %10181 = vmatprep.mubr.bf16.mxu0 %v10082
        %10182 = vmatmul.mubr.bf16.gmra.mrb[0].mxu0 %v9796
        %v10183 = vpop.f32.mrb[0].mxu0
        %v10184 = vadd.f32 0.0, %v10183
        %v10185 = vpop.f32.mrb[0].mxu0
        %v10186 = vpop.f32.mrb[0].mxu0
        %v10187 = vadd.f32 0.0, %v10186
        %v10188 = vpop.f32.mrb[0].mxu0
        %10189 = vmatprep.mubr.bf16.mxu0 %v10085
        %10190 = vmatmul.mubr.bf16.gmra.mrb[0].mxu0 %v9812
        %v10191 = vpop.f32.mrb[0].mxu0
        %v10192 = vadd.f32 0.0, %v10191
        %v10193 = vpop.f32.mrb[0].mxu0
        %v10194 = vpop.f32.mrb[0].mxu0
        %v10195 = vadd.f32 0.0, %v10194
        %v10196 = vpop.f32.mrb[0].mxu0
        %10197 = vmatprep.mubr.bf16.mxu0 %v10088
        %10198 = vmatmul.mubr.bf16.gmra.mrb[0].mxu0 %v9828
        %v10199 = vpop.f32.mrb[0].mxu0
        %v10200 = vadd.f32 0.0, %v10199
        %v10201 = vpop.f32.mrb[0].mxu0
        %v10202 = vpop.f32.mrb[0].mxu0
        %v10203 = vadd.f32 0.0, %v10202
        %v10204 = vpop.f32.mrb[0].mxu0
        %10205 = vmatprep.mubr.bf16.mxu0 %v10091
        %10206 = vmatmul.mubr.bf16.gmra.mrb[0].mxu0 %v9844
        %v10207 = vpop.f32.mrb[0].mxu0
        %v10208 = vadd.f32 0.0, %v10207
        %v10209 = vpop.f32.mrb[0].mxu0
        %v10210 = vpop.f32.mrb[0].mxu0
        %v10211 = vadd.f32 0.0, %v10210
        %v10212 = vpop.f32.mrb[0].mxu0
        %10213 = vmatprep.mubr.bf16.mxu0 %v10094
        %10214 = vmatmul.mubr.bf16.gmra.mrb[0].mxu0 %v9860
        %v10215 = vpop.f32.mrb[0].mxu0
        %v10216 = vadd.f32 0.0, %v10215
        %v10217 = vpop.f32.mrb[0].mxu0
        %v10218 = vpop.f32.mrb[0].mxu0
        %v10219 = vadd.f32 0.0, %v10218
        %v10220 = vpop.f32.mrb[0].mxu0
        %10221 = vmatprep.mubr.bf16.mxu0 %v10097
        %10222 = vmatmul.mubr.bf16.gmra.mrb[0].mxu0 %v9876
        %v10223 = vpop.f32.mrb[0].mxu0
        %v10224 = vadd.f32 0.0, %v10223
        %v10225 = vpop.f32.mrb[0].mxu0
        %v10226 = vpop.f32.mrb[0].mxu0
        %v10227 = vadd.f32 0.0, %v10226
        %v10228 = vpop.f32.mrb[0].mxu0
        %10229 = vmatprep.mubr.bf16.mxu0 %v10100
        %10230 = vmatmul.mubr.bf16.gmra.mrb[0].mxu0 %v9892
        %v10231 = vpop.f32.mrb[0].mxu0
        %v10232 = vadd.f32 0.0, %v10231
        %v10233 = vpop.f32.mrb[0].mxu0
        %v10234 = vpop.f32.mrb[0].mxu0
        %v10235 = vadd.f32 0.0, %v10234
        %v10236 = vpop.f32.mrb[0].mxu0
        %10237 = vmatprep.mubr.bf16.mxu0 %v10103
        %10238 = vmatmul.mubr.bf16.gmra.mrb[0].mxu0 %v9908
        %v10239 = vpop.f32.mrb[0].mxu0
        %v10240 = vadd.f32 0.0, %v10239
        %v10241 = vpop.f32.mrb[0].mxu0
        %v10242 = vpop.f32.mrb[0].mxu0
        %v10243 = vadd.f32 0.0, %v10242
        %v10244 = vpop.f32.mrb[0].mxu0
        %10245 = vmatprep.mubr.bf16.mxu0 %v10106
        %10246 = vmatmul.mubr.bf16.gmra.mrb[0].mxu0 %v9924
        %v10247 = vpop.f32.mrb[0].mxu0
        %v10248 = vadd.f32 0.0, %v10247
        %v10249 = vpop.f32.mrb[0].mxu0
        %v10250 = vpop.f32.mrb[0].mxu0
        %v10251 = vadd.f32 0.0, %v10250
        %v10252 = vpop.f32.mrb[0].mxu0
        %10253 = vmatprep.mubr.bf16.mxu0 %v10109
        %10254 = vmatmul.mubr.bf16.gmra.mrb[0].mxu0 %v9940
        %v10255 = vpop.f32.mrb[0].mxu0
        %v10256 = vadd.f32 0.0, %v10255
        %v10257 = vpop.f32.mrb[0].mxu0
        %v10258 = vpop.f32.mrb[0].mxu0
        %v10259 = vadd.f32 0.0, %v10258
        %v10260 = vpop.f32.mrb[0].mxu0
        %10261 = vmatprep.mubr.bf16.mxu0 %v10112
        %10262 = vmatmul.mubr.bf16.gmra.mrb[0].mxu0 %v9956
        %v10263 = vpop.f32.mrb[0].mxu0
        %v10264 = vadd.f32 0.0, %v10263
        %v10265 = vpop.f32.mrb[0].mxu0
        %v10266 = vpop.f32.mrb[0].mxu0
        %v10267 = vadd.f32 0.0, %v10266
        %v10268 = vpop.f32.mrb[0].mxu0
        %10269 = vmatprep.mubr.bf16.mxu0 %v10115
        %10270 = vmatmul.mubr.bf16.gmra.mrb[0].mxu0 %v9972
        %v10271 = vpop.f32.mrb[0].mxu0
        %v10272 = vadd.f32 0.0, %v10271
        %v10273 = vpop.f32.mrb[0].mxu0
        %v10274 = vpop.f32.mrb[0].mxu0
        %v10275 = vadd.f32 0.0, %v10274
        %v10276 = vpop.f32.mrb[0].mxu0
        %10277 = vdwg.mxu0
        %v10279 = vshrl.u32 %v9599, 16
        %v10281 = vshll.u32 %v9599, 16
        %v10283 = vrot.slane %v10281, 1
        %v10284 = vor.u32 %v10279, %v10283
        %v10286 = vshll.u32 %v9601, 16
        %v10288 = vrot.slane %v10286, 1
        %v10289 = vsel %vm3996, %v10284, %v10288
        %v10291 = vshrl.u32 %v9600, 16
        %v10293 = vshll.u32 %v9600, 16
        %v10295 = vrot.slane %v10293, 1
        %v10296 = vor.u32 %v10291, %v10295
        %v10298 = vshll.u32 %v9602, 16
        %v10300 = vrot.slane %v10298, 1
        %v10301 = vsel %vm3996, %v10296, %v10300
        %v10302 = vshrl.u32 %v9601, 16
        %v10304 = vor.u32 %v10302, %v10288
        %v10306 = vshll.u32 %v9603, 16
        %v10308 = vrot.slane %v10306, 1
        %v10309 = vsel %vm3996, %v10304, %v10308
        %v10310 = vshrl.u32 %v9602, 16
        %v10312 = vor.u32 %v10310, %v10300
        %v10314 = vshll.u32 %v9604, 16
        %v10316 = vrot.slane %v10314, 1
        %v10317 = vsel %vm3996, %v10312, %v10316
        %v10318 = vshrl.u32 %v9603, 16
        %v10320 = vor.u32 %v10318, %v10308
        %v10322 = vshll.u32 %v9605, 16
        %v10324 = vrot.slane %v10322, 1
        %v10325 = vsel %vm3996, %v10320, %v10324
        %v10326 = vshrl.u32 %v9604, 16
        %v10328 = vor.u32 %v10326, %v10316
        %v10330 = vshll.u32 %v9606, 16
        %v10332 = vrot.slane %v10330, 1
        %v10333 = vsel %vm3996, %v10328, %v10332
        %v10334 = vshrl.u32 %v9605, 16
        %v10336 = vor.u32 %v10334, %v10324
        %v10338 = vshll.u32 %v9607, 16
        %v10340 = vrot.slane %v10338, 1
        %v10341 = vsel %vm3996, %v10336, %v10340
        %v10342 = vshrl.u32 %v9606, 16
        %v10344 = vor.u32 %v10342, %v10332
        %v10346 = vshll.u32 %v9608, 16
        %v10348 = vrot.slane %v10346, 1
        %v10349 = vsel %vm3996, %v10344, %v10348
        %v10350 = vshrl.u32 %v9607, 16
        %v10352 = vor.u32 %v10350, %v10340
        %v10354 = vshll.u32 %v9609, 16
        %v10356 = vrot.slane %v10354, 1
        %v10357 = vsel %vm3996, %v10352, %v10356
        %v10358 = vshrl.u32 %v9608, 16
        %v10360 = vor.u32 %v10358, %v10348
        %v10362 = vshll.u32 %v9610, 16
        %v10364 = vrot.slane %v10362, 1
        %v10365 = vsel %vm3996, %v10360, %v10364
        %v10366 = vshrl.u32 %v9609, 16
        %v10368 = vor.u32 %v10366, %v10356
        %v10370 = vshll.u32 %v9611, 16
        %v10372 = vrot.slane %v10370, 1
        %v10373 = vsel %vm3996, %v10368, %v10372
        %v10374 = vshrl.u32 %v9610, 16
        %v10376 = vor.u32 %v10374, %v10364
        %v10378 = vshll.u32 %v9612, 16
        %v10380 = vrot.slane %v10378, 1
        %v10381 = vsel %vm3996, %v10376, %v10380
        %v10382 = vshrl.u32 %v9611, 16
        %v10384 = vor.u32 %v10382, %v10372
        %v10386 = vshll.u32 %v9613, 16
        %v10388 = vrot.slane %v10386, 1
        %v10389 = vsel %vm3996, %v10384, %v10388
        %v10390 = vshrl.u32 %v9612, 16
        %v10392 = vor.u32 %v10390, %v10380
        %v10394 = vshll.u32 %v9614, 16
        %v10396 = vrot.slane %v10394, 1
        %v10397 = vsel %vm3996, %v10392, %v10396
        %v10398 = vshrl.u32 %v9613, 16
        %v10400 = vor.u32 %v10398, %v10388
        %v10402 = vshll.u32 %v9615, 16
        %v10404 = vrot.slane %v10402, 1
        %v10405 = vsel %vm3996, %v10400, %v10404
        %v10406 = vshrl.u32 %v9614, 16
        %v10408 = vor.u32 %v10406, %v10396
        %v10410 = vshll.u32 %v9616, 16
        %v10412 = vrot.slane %v10410, 1
        %v10413 = vsel %vm3996, %v10408, %v10412
        %v10414 = vshrl.u32 %v9615, 16
        %v10416 = vor.u32 %v10414, %v10404
        %v10418 = vshll.u32 %v9617, 16
        %v10420 = vrot.slane %v10418, 1
        %v10421 = vsel %vm3996, %v10416, %v10420
        %v10422 = vshrl.u32 %v9616, 16
        %v10424 = vor.u32 %v10422, %v10412
        %v10426 = vshll.u32 %v9618, 16
        %v10428 = vrot.slane %v10426, 1
        %v10429 = vsel %vm3996, %v10424, %v10428
        %v10430 = vshrl.u32 %v9617, 16
        %v10432 = vor.u32 %v10430, %v10420
        %v10434 = vshll.u32 %v9619, 16
        %v10436 = vrot.slane %v10434, 1
        %v10437 = vsel %vm3996, %v10432, %v10436
        %v10438 = vshrl.u32 %v9618, 16
        %v10440 = vor.u32 %v10438, %v10428
        %v10442 = vshll.u32 %v9620, 16
        %v10444 = vrot.slane %v10442, 1
        %v10445 = vsel %vm3996, %v10440, %v10444
        %v10446 = vshrl.u32 %v9619, 16
        %v10448 = vor.u32 %v10446, %v10436
        %v10450 = vshll.u32 %v9621, 16
        %v10452 = vrot.slane %v10450, 1
        %v10453 = vsel %vm3996, %v10448, %v10452
        %v10454 = vshrl.u32 %v9620, 16
        %v10456 = vor.u32 %v10454, %v10444
        %v10458 = vshll.u32 %v9622, 16
        %v10460 = vrot.slane %v10458, 1
        %v10461 = vsel %vm3996, %v10456, %v10460
        %v10462 = vshrl.u32 %v9621, 16
        %v10464 = vor.u32 %v10462, %v10452
        %v10466 = vshll.u32 %v9623, 16
        %v10468 = vrot.slane %v10466, 1
        %v10469 = vsel %vm3996, %v10464, %v10468
        %v10470 = vshrl.u32 %v9622, 16
        %v10472 = vor.u32 %v10470, %v10460
        %v10474 = vshll.u32 %v9624, 16
        %v10476 = vrot.slane %v10474, 1
        %v10477 = vsel %vm3996, %v10472, %v10476
        %v10478 = vshrl.u32 %v9623, 16
        %v10480 = vor.u32 %v10478, %v10468
        %v10482 = vshll.u32 %v9625, 16
        %v10484 = vrot.slane %v10482, 1
        %v10485 = vsel %vm3996, %v10480, %v10484
        %v10486 = vshrl.u32 %v9624, 16
        %v10488 = vor.u32 %v10486, %v10476
        %v10490 = vshll.u32 %v9626, 16
        %v10492 = vrot.slane %v10490, 1
        %v10493 = vsel %vm3996, %v10488, %v10492
        %v10494 = vshrl.u32 %v9625, 16
        %v10496 = vor.u32 %v10494, %v10484
        %v10498 = vshll.u32 %v9627, 16
        %v10500 = vrot.slane %v10498, 1
        %v10501 = vsel %vm3996, %v10496, %v10500
        %v10502 = vshrl.u32 %v9626, 16
        %v10504 = vor.u32 %v10502, %v10492
        %v10506 = vshll.u32 %v9628, 16
        %v10508 = vrot.slane %v10506, 1
        %v10509 = vsel %vm3996, %v10504, %v10508
        %v10510 = vshrl.u32 %v9627, 16
        %v10512 = vor.u32 %v10510, %v10500
        %v10514 = vshll.u32 %v9629, 16
        %v10516 = vrot.slane %v10514, 1
        %v10517 = vsel %vm3996, %v10512, %v10516
        %v10518 = vshrl.u32 %v9628, 16
        %v10520 = vor.u32 %v10518, %v10508
        %v10522 = vshll.u32 %v9630, 16
        %v10524 = vrot.slane %v10522, 1
        %v10525 = vsel %vm3996, %v10520, %v10524
        %v10526 = vshrl.u32 %v9629, 16
        %v10528 = vor.u32 %v10526, %v10516
        %v10530 = vshll.u32 %v9631, 16
        %v10532 = vrot.slane %v10530, 1
        %v10533 = vsel %vm3996, %v10528, %v10532
        %v10534 = vshrl.u32 %v9630, 16
        %v10536 = vor.u32 %v10534, %v10524
        %v10538 = vshll.u32 %v9632, 16
        %v10540 = vrot.slane %v10538, 1
        %v10541 = vsel %vm3996, %v10536, %v10540
        %v10582 = vunpack.c.l.b16 %v9668
        %v10583 = vunpack.c.l.b16 %v9669
        %v10584 = vunpack.c.l.b16 %v9670
        %v10585 = vunpack.c.l.b16 %v9671
        %v10586 = vunpack.c.l.b16 %v9672
        %v10587 = vunpack.c.l.b16 %v9673
        %v10588 = vunpack.c.l.b16 %v9674
        %v10589 = vunpack.c.l.b16 %v9675
        %v10590 = vunpack.c.l.b16 %v9676
        %v10591 = vunpack.c.l.b16 %v9677
        %v10592 = vunpack.c.l.b16 %v9678
        %v10593 = vunpack.c.l.b16 %v9679
        %v10594 = vunpack.c.l.b16 %v9680
        %v10595 = vunpack.c.l.b16 %v9681
        %v10596 = vunpack.c.l.b16 %v9682
        %v10597 = vunpack.c.l.b16 %v9683
        %v10598 = vunpack.c.l.b16 %v9684
        %v10599 = vunpack.c.l.b16 %v9685
        %v10600 = vunpack.c.l.b16 %v9686
        %v10601 = vunpack.c.l.b16 %v9687
        %v10602 = vunpack.c.l.b16 %v9688
        %v10603 = vunpack.c.l.b16 %v9689
        %v10604 = vunpack.c.l.b16 %v9690
        %v10605 = vunpack.c.l.b16 %v9691
        %v10606 = vpack.c.b16 %v10583, %v10582
        %v10607 = vpack.c.b16 %v10585, %v10584
        %v10608 = vpack.c.b16 %v10587, %v10586
        %v10609 = vpack.c.b16 %v10589, %v10588
        %v10610 = vpack.c.b16 %v10591, %v10590
        %v10611 = vpack.c.b16 %v10593, %v10592
        %v10612 = vpack.c.b16 %v10595, %v10594
        %v10613 = vpack.c.b16 %v10597, %v10596
        %v10614 = vpack.c.b16 %v10599, %v10598
        %v10615 = vpack.c.b16 %v10601, %v10600
        %v10616 = vpack.c.b16 %v10603, %v10602
        %v10617 = vpack.c.b16 %v10605, %v10604
        %v10631 = vsel %vm410, %v10301, 0
        %v10634 = vsel %vm410, %v10317, 0
        %v10637 = vsel %vm410, %v10333, 0
        %v10640 = vsel %vm410, %v10349, 0
        %v10643 = vsel %vm410, %v10365, 0
        %v10646 = vsel %vm410, %v10381, 0
        %v10649 = vsel %vm410, %v10397, 0
        %v10652 = vsel %vm410, %v10413, 0
        %v10655 = vsel %vm410, %v10429, 0
        %v10658 = vsel %vm410, %v10445, 0
        %v10661 = vsel %vm410, %v10461, 0
        %v10664 = vsel %vm410, %v10477, 0
        %v10667 = vsel %vm410, %v10493, 0
        %v10670 = vsel %vm410, %v10509, 0
        %v10673 = vsel %vm410, %v10525, 0
        %v10676 = vsel %vm410, %v10541, 0
        %10678 = vmatprep.subr.bf16.mxu0 0
        %10679 = vmatpush1.bf16.msra.mxu0 %v10606
        %10680 = vmatprep.subr.bf16.mxu0 0
        %10681 = vmatpush1.bf16.msra.mxu0 %v10607
        %10682 = vmatprep.subr.bf16.mxu0 0
        %10683 = vmatpush1.bf16.msra.mxu0 %v10608
        %10684 = vmatprep.subr.bf16.mxu0 0
        %10685 = vmatpush1.bf16.msra.mxu0 %v10609
        %10686 = vmatprep.subr.bf16.mxu0 0
        %10687 = vmatpush1.bf16.msra.mxu0 %v10610
        %10688 = vmatprep.subr.bf16.mxu0 0
        %10689 = vmatpush1.bf16.msra.mxu0 %v10611
        %10690 = vmatprep.subr.bf16.mxu0 0
        %10691 = vmatpush1.bf16.msra.mxu0 %v10612
        %10692 = vmatprep.subr.bf16.mxu0 0
        %10693 = vmatpush1.bf16.msra.mxu0 %v10613
        %10694 = vmatprep.subr.bf16.mxu0 0
        %10695 = vmatpush1.bf16.msra.mxu0 %v10614
        %10696 = vmatprep.subr.bf16.mxu0 0
        %10697 = vmatpush1.bf16.msra.mxu0 %v10615
        %10698 = vmatprep.subr.bf16.mxu0 0
        %10699 = vmatpush1.bf16.msra.mxu0 %v10616
        %10700 = vmatprep.subr.bf16.mxu0 0
        %10701 = vmatpush1.bf16.msra.mxu0 %v10617
        %10702 = vmatprep.subr.bf16.mxu0 0
        %10703 = vmatpush1.bf16.msra.mxu0 0
        %10704 = vmatprep.subr.bf16.mxu0 0
        %10705 = vmatpush1.bf16.msra.mxu0 0
        %10706 = vmatprep.subr.bf16.mxu0 0
        %10707 = vmatpush1.bf16.msra.mxu0 0
        %10708 = vmatprep.subr.bf16.mxu0 0
        %10709 = vmatpush1.bf16.msra.mxu0 0
        %10710 = vmatprep.mubr.bf16.mxu0 %v10631
        %10711 = vmatmul.mubr.bf16.gmra.mrb[0].mxu0 %v10289
        %v10712 = vpop.f32.mrb[0].mxu0
        %v10713 = vadd.f32 %v10152, %v10712
        %v10714 = vpop.f32.mrb[0].mxu0
        %v10715 = vpop.f32.mrb[0].mxu0
        %v10716 = vadd.f32 %v10155, %v10715
        %v10717 = vpop.f32.mrb[0].mxu0
        %10718 = vmatprep.mubr.bf16.mxu0 %v10634
        %10719 = vmatmul.mubr.bf16.gmra.mrb[0].mxu0 %v10309
        %v10720 = vpop.f32.mrb[0].mxu0
        %v10721 = vadd.f32 %v10160, %v10720
        %v10722 = vpop.f32.mrb[0].mxu0
        %v10723 = vpop.f32.mrb[0].mxu0
        %v10724 = vadd.f32 %v10163, %v10723
        %v10725 = vpop.f32.mrb[0].mxu0
        %10726 = vmatprep.mubr.bf16.mxu0 %v10637
        %10727 = vmatmul.mubr.bf16.gmra.mrb[0].mxu0 %v10325
        %v10728 = vpop.f32.mrb[0].mxu0
        %v10729 = vadd.f32 %v10168, %v10728
        %v10730 = vpop.f32.mrb[0].mxu0
        %v10731 = vpop.f32.mrb[0].mxu0
        %v10732 = vadd.f32 %v10171, %v10731
        %v10733 = vpop.f32.mrb[0].mxu0
        %10734 = vmatprep.mubr.bf16.mxu0 %v10640
        %10735 = vmatmul.mubr.bf16.gmra.mrb[0].mxu0 %v10341
        %v10736 = vpop.f32.mrb[0].mxu0
        %v10737 = vadd.f32 %v10176, %v10736
        %v10738 = vpop.f32.mrb[0].mxu0
        %v10739 = vpop.f32.mrb[0].mxu0
        %v10740 = vadd.f32 %v10179, %v10739
        %v10741 = vpop.f32.mrb[0].mxu0
        %10742 = vmatprep.mubr.bf16.mxu0 %v10643
        %10743 = vmatmul.mubr.bf16.gmra.mrb[0].mxu0 %v10357
        %v10744 = vpop.f32.mrb[0].mxu0
        %v10745 = vadd.f32 %v10184, %v10744
        %v10746 = vpop.f32.mrb[0].mxu0
        %v10747 = vpop.f32.mrb[0].mxu0
        %v10748 = vadd.f32 %v10187, %v10747
        %v10749 = vpop.f32.mrb[0].mxu0
        %10750 = vmatprep.mubr.bf16.mxu0 %v10646
        %10751 = vmatmul.mubr.bf16.gmra.mrb[0].mxu0 %v10373
        %v10752 = vpop.f32.mrb[0].mxu0
        %v10753 = vadd.f32 %v10192, %v10752
        %v10754 = vpop.f32.mrb[0].mxu0
        %v10755 = vpop.f32.mrb[0].mxu0
        %v10756 = vadd.f32 %v10195, %v10755
        %v10757 = vpop.f32.mrb[0].mxu0
        %10758 = vmatprep.mubr.bf16.mxu0 %v10649
        %10759 = vmatmul.mubr.bf16.gmra.mrb[0].mxu0 %v10389
        %v10760 = vpop.f32.mrb[0].mxu0
        %v10761 = vadd.f32 %v10200, %v10760
        %v10762 = vpop.f32.mrb[0].mxu0
        %v10763 = vpop.f32.mrb[0].mxu0
        %v10764 = vadd.f32 %v10203, %v10763
        %v10765 = vpop.f32.mrb[0].mxu0
        %10766 = vmatprep.mubr.bf16.mxu0 %v10652
        %10767 = vmatmul.mubr.bf16.gmra.mrb[0].mxu0 %v10405
        %v10768 = vpop.f32.mrb[0].mxu0
        %v10769 = vadd.f32 %v10208, %v10768
        %v10770 = vpop.f32.mrb[0].mxu0
        %v10771 = vpop.f32.mrb[0].mxu0
        %v10772 = vadd.f32 %v10211, %v10771
        %v10773 = vpop.f32.mrb[0].mxu0
        %10774 = vmatprep.mubr.bf16.mxu0 %v10655
        %10775 = vmatmul.mubr.bf16.gmra.mrb[0].mxu0 %v10421
        %v10776 = vpop.f32.mrb[0].mxu0
        %v10777 = vadd.f32 %v10216, %v10776
        %v10778 = vpop.f32.mrb[0].mxu0
        %v10779 = vpop.f32.mrb[0].mxu0
        %v10780 = vadd.f32 %v10219, %v10779
        %v10781 = vpop.f32.mrb[0].mxu0
        %10782 = vmatprep.mubr.bf16.mxu0 %v10658
        %10783 = vmatmul.mubr.bf16.gmra.mrb[0].mxu0 %v10437
        %v10784 = vpop.f32.mrb[0].mxu0
        %v10785 = vadd.f32 %v10224, %v10784
        %v10786 = vpop.f32.mrb[0].mxu0
        %v10787 = vpop.f32.mrb[0].mxu0
        %v10788 = vadd.f32 %v10227, %v10787
        %v10789 = vpop.f32.mrb[0].mxu0
        %10790 = vmatprep.mubr.bf16.mxu0 %v10661
        %10791 = vmatmul.mubr.bf16.gmra.mrb[0].mxu0 %v10453
        %v10792 = vpop.f32.mrb[0].mxu0
        %v10793 = vadd.f32 %v10232, %v10792
        %v10794 = vpop.f32.mrb[0].mxu0
        %v10795 = vpop.f32.mrb[0].mxu0
        %v10796 = vadd.f32 %v10235, %v10795
        %v10797 = vpop.f32.mrb[0].mxu0
        %10798 = vmatprep.mubr.bf16.mxu0 %v10664
        %10799 = vmatmul.mubr.bf16.gmra.mrb[0].mxu0 %v10469
        %v10800 = vpop.f32.mrb[0].mxu0
        %v10801 = vadd.f32 %v10240, %v10800
        %v10802 = vpop.f32.mrb[0].mxu0
        %v10803 = vpop.f32.mrb[0].mxu0
        %v10804 = vadd.f32 %v10243, %v10803
        %v10805 = vpop.f32.mrb[0].mxu0
        %10806 = vmatprep.mubr.bf16.mxu0 %v10667
        %10807 = vmatmul.mubr.bf16.gmra.mrb[0].mxu0 %v10485
        %v10808 = vpop.f32.mrb[0].mxu0
        %v10809 = vadd.f32 %v10248, %v10808
        %v10810 = vpop.f32.mrb[0].mxu0
        %v10811 = vpop.f32.mrb[0].mxu0
        %v10812 = vadd.f32 %v10251, %v10811
        %v10813 = vpop.f32.mrb[0].mxu0
        %10814 = vmatprep.mubr.bf16.mxu0 %v10670
        %10815 = vmatmul.mubr.bf16.gmra.mrb[0].mxu0 %v10501
        %v10816 = vpop.f32.mrb[0].mxu0
        %v10817 = vadd.f32 %v10256, %v10816
        %v10818 = vpop.f32.mrb[0].mxu0
        %v10819 = vpop.f32.mrb[0].mxu0
        %v10820 = vadd.f32 %v10259, %v10819
        %v10821 = vpop.f32.mrb[0].mxu0
        %10822 = vmatprep.mubr.bf16.mxu0 %v10673
        %10823 = vmatmul.mubr.bf16.gmra.mrb[0].mxu0 %v10517
        %v10824 = vpop.f32.mrb[0].mxu0
        %v10825 = vadd.f32 %v10264, %v10824
        %v10826 = vpop.f32.mrb[0].mxu0
        %v10827 = vpop.f32.mrb[0].mxu0
        %v10828 = vadd.f32 %v10267, %v10827
        %v10829 = vpop.f32.mrb[0].mxu0
        %10830 = vmatprep.mubr.bf16.mxu0 %v10676
        %10831 = vmatmul.mubr.bf16.gmra.mrb[0].mxu0 %v10533
        %v10832 = vpop.f32.mrb[0].mxu0
        %v10833 = vadd.f32 %v10272, %v10832
        %v10834 = vpop.f32.mrb[0].mxu0
        %v10835 = vpop.f32.mrb[0].mxu0
        %v10836 = vadd.f32 %v10275, %v10835
        %v10837 = vpop.f32.mrb[0].mxu0
        %10838 = vdwg.mxu0
        %v10839 = vsel %vm1924, %v10713, 0.0
        %v10840 = vsel %vm1925, %v10716, 0.0
        %v10841 = vsel %vm1926, %v10721, 0.0
        %v10842 = vsel %vm1927, %v10724, 0.0
        %v10843 = vsel %vm1928, %v10729, 0.0
        %v10844 = vsel %vm1929, %v10732, 0.0
        %v10845 = vsel %vm1930, %v10737, 0.0
        %v10846 = vsel %vm1931, %v10740, 0.0
        %v10847 = vsel %vm1932, %v10745, 0.0
        %v10848 = vsel %vm1933, %v10748, 0.0
        %v10849 = vsel %vm1934, %v10753, 0.0
        %v10850 = vsel %vm1935, %v10756, 0.0
        %v10851 = vsel %vm1936, %v10761, 0.0
        %v10852 = vsel %vm1937, %v10764, 0.0
        %v10853 = vsel %vm1938, %v10769, 0.0
        %v10854 = vsel %vm1939, %v10772, 0.0
        %v10855 = vsel %vm1940, %v10777, 0.0
        %v10856 = vsel %vm1941, %v10780, 0.0
        %v10857 = vsel %vm1942, %v10785, 0.0
        %v10858 = vsel %vm1943, %v10788, 0.0
        %v10859 = vsel %vm1944, %v10793, 0.0
        %v10860 = vsel %vm1945, %v10796, 0.0
        %v10861 = vsel %vm1946, %v10801, 0.0
        %v10862 = vsel %vm1947, %v10804, 0.0
        %v10863 = vsel %vm1948, %v10809, 0.0
        %v10864 = vsel %vm1949, %v10812, 0.0
        %v10865 = vsel %vm1950, %v10817, 0.0
        %v10866 = vsel %vm1951, %v10820, 0.0
        %v10867 = vsel %vm1952, %v10825, 0.0
        %v10868 = vsel %vm1953, %v10828, 0.0
        %v10869 = vsel %vm1954, %v10833, 0.0
        %v10870 = vsel %vm1955, %v10836, 0.0
        %v10871 = vadd.f32 %v9567, %v10839
        %v10872 = vadd.f32 %v9568, %v10840
        %v10873 = vadd.f32 %v9569, %v10841
        %v10874 = vadd.f32 %v9570, %v10842
        %v10875 = vadd.f32 %v9571, %v10843
        %v10876 = vadd.f32 %v9572, %v10844
        %v10877 = vadd.f32 %v9573, %v10845
        %v10878 = vadd.f32 %v9574, %v10846
        %v10879 = vadd.f32 %v9575, %v10847
        %v10880 = vadd.f32 %v9576, %v10848
        %v10881 = vadd.f32 %v9577, %v10849
        %v10882 = vadd.f32 %v9578, %v10850
        %v10883 = vadd.f32 %v9579, %v10851
        %v10884 = vadd.f32 %v9580, %v10852
        %v10885 = vadd.f32 %v9581, %v10853
        %v10886 = vadd.f32 %v9582, %v10854
        %v10887 = vadd.f32 %v9583, %v10855
        %v10888 = vadd.f32 %v9584, %v10856
        %v10889 = vadd.f32 %v9585, %v10857
        %v10890 = vadd.f32 %v9586, %v10858
        %v10891 = vadd.f32 %v9587, %v10859
        %v10892 = vadd.f32 %v9588, %v10860
        %v10893 = vadd.f32 %v9589, %v10861
        %v10894 = vadd.f32 %v9590, %v10862
        %v10895 = vadd.f32 %v9591, %v10863
        %v10896 = vadd.f32 %v9592, %v10864
        %v10897 = vadd.f32 %v9593, %v10865
        %v10898 = vadd.f32 %v9594, %v10866
        %v10899 = vadd.f32 %v9595, %v10867
        %v10900 = vadd.f32 %v9596, %v10868
        %v10901 = vadd.f32 %v9597, %v10869
        %v10902 = vadd.f32 %v9598, %v10870
        %v10903 = vmax.f32 %v10871, 0.0
        %v10904 = vmax.f32 %v10872, 0.0
        %v10905 = vmax.f32 %v10873, 0.0
        %v10906 = vmax.f32 %v10874, 0.0
        %v10907 = vmax.f32 %v10875, 0.0
        %v10908 = vmax.f32 %v10876, 0.0
        %v10909 = vmax.f32 %v10877, 0.0
        %v10910 = vmax.f32 %v10878, 0.0
        %v10911 = vmax.f32 %v10879, 0.0
        %v10912 = vmax.f32 %v10880, 0.0
        %v10913 = vmax.f32 %v10881, 0.0
        %v10914 = vmax.f32 %v10882, 0.0
        %v10915 = vmax.f32 %v10883, 0.0
        %v10916 = vmax.f32 %v10884, 0.0
        %v10917 = vmax.f32 %v10885, 0.0
        %v10918 = vmax.f32 %v10886, 0.0
        %v10919 = vmax.f32 %v10887, 0.0
        %v10920 = vmax.f32 %v10888, 0.0
        %v10921 = vmax.f32 %v10889, 0.0
        %v10922 = vmax.f32 %v10890, 0.0
        %v10923 = vmax.f32 %v10891, 0.0
        %v10924 = vmax.f32 %v10892, 0.0
        %v10925 = vmax.f32 %v10893, 0.0
        %v10926 = vmax.f32 %v10894, 0.0
        %v10927 = vmax.f32 %v10895, 0.0
        %v10928 = vmax.f32 %v10896, 0.0
        %v10929 = vmax.f32 %v10897, 0.0
        %v10930 = vmax.f32 %v10898, 0.0
        %v10931 = vmax.f32 %v10899, 0.0
        %v10932 = vmax.f32 %v10900, 0.0
        %v10933 = vmax.f32 %v10901, 0.0
        %v10934 = vmax.f32 %v10902, 0.0
        %v10935 = vunpack.c.l.bf16 %v426
        %v10936 = vunpack.c.l.bf16 %v427
        %v10937 = vunpack.c.l.bf16 %v428
        %v10938 = vunpack.c.l.bf16 %v429
        %v10939 = vunpack.c.l.bf16 %v430
        %v10940 = vunpack.c.l.bf16 %v431
        %v10941 = vunpack.c.l.bf16 %v432
        %v10942 = vunpack.c.l.bf16 %v433
        %v10943 = vunpack.c.l.bf16 %v434
        %v10944 = vunpack.c.l.bf16 %v435
        %v10945 = vunpack.c.l.bf16 %v436
        %v10946 = vunpack.c.l.bf16 %v437
        %v10947 = vunpack.c.l.bf16 %v438
        %v10948 = vunpack.c.l.bf16 %v439
        %v10949 = vunpack.c.l.bf16 %v440
        %v10950 = vunpack.c.l.bf16 %v441
        %v10951 = vunpack.c.l.bf16 %v442
        %v10952 = vunpack.c.l.bf16 %v443
        %v10953 = vunpack.c.l.bf16 %v444
        %v10954 = vunpack.c.l.bf16 %v445
        %v10955 = vunpack.c.l.bf16 %v446
        %v10956 = vunpack.c.l.bf16 %v447
        %v10957 = vunpack.c.l.bf16 %v448
        %v10958 = vunpack.c.l.bf16 %v449
        %v10959 = vunpack.c.l.bf16 %v450
        %v10960 = vunpack.c.l.bf16 %v451
        %v10961 = vunpack.c.l.bf16 %v452
        %v10962 = vunpack.c.l.bf16 %v453
        %v10963 = vunpack.c.l.bf16 %v454
        %v10964 = vunpack.c.l.bf16 %v455
        %v10965 = vunpack.c.l.bf16 %v456
        %v10966 = vunpack.c.l.bf16 %v457
        %v10967 = vadd.f32 %v10903, %v10935
        %v10968 = vadd.f32 %v10904, %v10936
        %v10969 = vadd.f32 %v10905, %v10937
        %v10970 = vadd.f32 %v10906, %v10938
        %v10971 = vadd.f32 %v10907, %v10939
        %v10972 = vadd.f32 %v10908, %v10940
        %v10973 = vadd.f32 %v10909, %v10941
        %v10974 = vadd.f32 %v10910, %v10942
        %v10975 = vadd.f32 %v10911, %v10943
        %v10976 = vadd.f32 %v10912, %v10944
        %v10977 = vadd.f32 %v10913, %v10945
        %v10978 = vadd.f32 %v10914, %v10946
        %v10979 = vadd.f32 %v10915, %v10947
        %v10980 = vadd.f32 %v10916, %v10948
        %v10981 = vadd.f32 %v10917, %v10949
        %v10982 = vadd.f32 %v10918, %v10950
        %v10983 = vadd.f32 %v10919, %v10951
        %v10984 = vadd.f32 %v10920, %v10952
        %v10985 = vadd.f32 %v10921, %v10953
        %v10986 = vadd.f32 %v10922, %v10954
        %v10987 = vadd.f32 %v10923, %v10955
        %v10988 = vadd.f32 %v10924, %v10956
        %v10989 = vadd.f32 %v10925, %v10957
        %v10990 = vadd.f32 %v10926, %v10958
        %v10991 = vadd.f32 %v10927, %v10959
        %v10992 = vadd.f32 %v10928, %v10960
        %v10993 = vadd.f32 %v10929, %v10961
        %v10994 = vadd.f32 %v10930, %v10962
        %v10995 = vadd.f32 %v10931, %v10963
        %v10996 = vadd.f32 %v10932, %v10964
        %v10997 = vadd.f32 %v10933, %v10965
        %v10998 = vadd.f32 %v10934, %v10966
        %10999 = vst [vmem:[%s397] sm:$0xff] %v10967
        %11000 = vst [vmem:[%s397 + $0x8] sm:$0xff] %v10968
        %11001 = vst [vmem:[%s397 + $0x10] sm:$0xff] %v10969
        %11002 = vst [vmem:[%s397 + $0x18] sm:$0xff] %v10970
        %11003 = vst [vmem:[%s397 + $0x20] sm:$0xff] %v10971
        %11004 = vst [vmem:[%s397 + $0x28] sm:$0xff] %v10972
        %11005 = vst [vmem:[%s397 + $0x30] sm:$0xff] %v10973
        %11006 = vst [vmem:[%s397 + $0x38] sm:$0xff] %v10974
        %11007 = vst [vmem:[%s397 + $0x40] sm:$0xff] %v10975
        %11008 = vst [vmem:[%s397 + $0x48] sm:$0xff] %v10976
        %11009 = vst [vmem:[%s397 + $0x50] sm:$0xff] %v10977
        %11010 = vst [vmem:[%s397 + $0x58] sm:$0xff] %v10978
        %11011 = vst [vmem:[%s397 + $0x60] sm:$0xff] %v10979
        %11012 = vst [vmem:[%s397 + $0x68] sm:$0xff] %v10980
        %11013 = vst [vmem:[%s397 + $0x70] sm:$0xff] %v10981
        %11014 = vst [vmem:[%s397 + $0x78] sm:$0xff] %v10982
        %11015 = vst [vmem:[%s397 + $0x80] sm:$0xff] %v10983
        %11016 = vst [vmem:[%s397 + $0x88] sm:$0xff] %v10984
        %11017 = vst [vmem:[%s397 + $0x90] sm:$0xff] %v10985
        %11018 = vst [vmem:[%s397 + $0x98] sm:$0xff] %v10986
        %11019 = vst [vmem:[%s397 + $0xa0] sm:$0xff] %v10987
        %11020 = vst [vmem:[%s397 + $0xa8] sm:$0xff] %v10988
        %11021 = vst [vmem:[%s397 + $0xb0] sm:$0xff] %v10989
        %11022 = vst [vmem:[%s397 + $0xb8] sm:$0xff] %v10990
        %11023 = vst [vmem:[%s397 + $0xc0] sm:$0xff] %v10991
        %11024 = vst [vmem:[%s397 + $0xc8] sm:$0xff] %v10992
        %11025 = vst [vmem:[%s397 + $0xd0] sm:$0xff] %v10993
        %11026 = vst [vmem:[%s397 + $0xd8] sm:$0xff] %v10994
        %11027 = vst [vmem:[%s397 + $0xe0] sm:$0xff] %v10995
        %11028 = vst [vmem:[%s397 + $0xe8] sm:$0xff] %v10996
        %11029 = vst [vmem:[%s397 + $0xf0] sm:$0xff] %v10997
        %11030 = vst [vmem:[%s397 + $0xf8] sm:$0xff] %v10998
        %s11031 = sand.u32 %s254, 1
        %s11032 = scalar_lea.sflag [#allocation6], %s11031
        %s11033 = sand.u32 %s254, 1
        %s11034 = smul.addr %s11033, 256
        %s11035 = scalar_lea.vmem [#allocation9], %s11034
        // Predicated region
        $region69: #{tpu_custom_call.1} parent=59 // pred_check
          %p11036 = pneg %p264
        $region70: #{tpu_custom_call.1} parent=59 // pred_check_branch
          %11038 = sbr.rel (%p11036) target = $region72
        $region71: #{tpu_custom_call.1} parent=59 // pred_region
          %s11040 = ssub.s32 4096, 4096
          %11041 = vsyncadd %s11032, %s11040
          %s11042 = smul.addr %s26, 32
          %s11043 = smul.addr %s11042, 128
          %s11044 = scalar_lea.hbm %s10, %s11043
          %s11045 = sshll.u32 %s11035, 4
          %s11046 = int_to_ptr.vmem [resolvable:$true] %s11045
          %11051 = dma.vmem_to_hbm [thread:$0]  %s11046, 4096, %s11044, %s11032, 128, 128, 8
        $region72: #{tpu_custom_call.1} parent=59 // pred_fallthru
          _
      $region60: #{tpu_custom_call.1} parent=5 // pred_fallthru
        _
      %p11052 = scmp.le.s32.totalorder 2, %s21
      // Predicated region
      $region73: #{tpu_custom_call.1} parent=5 // pred_check
        %p11053 = pneg %p11052
      $region74: #{tpu_custom_call.1} parent=5 // pred_check_branch
        %11055 = sbr.rel (%p11053) target = $region76
      $region75: #{tpu_custom_call.1} parent=5 // pred_region
        %s11056 = ssub.s32 %s21, 2
        // Predicated region
        $region77: #{tpu_custom_call.1} parent=75 // pred_check
          %p11057 = pneg %p270
        $region78: #{tpu_custom_call.1} parent=75 // pred_check_branch
          %11059 = sbr.rel (%p11057) target = $region80
        $region79: #{tpu_custom_call.1} parent=75 // pred_region
          %s11060 = sand.u32 %s255, 1
          %s11061 = scalar_lea.sflag [#allocation6], %s11060
          %s11062 = sand.u32 %s255, 1
          %s11063 = smul.addr %s11062, 256
          %s11064 = scalar_lea.vmem [#allocation9], %s11063
          %11065 = dma.done %s11061, 4096
        $region80: #{tpu_custom_call.1} parent=75 // pred_fallthru
          _
      $region76: #{tpu_custom_call.1} parent=5 // pred_fallthru
        _
    $region6: #{tpu_custom_call.1} parent=1 // loop_footer
      %s25 = sadd.s32 1, %s21
    $region7: #{tpu_custom_call.1} parent=1 // loop_footer_branch
      %20 = sbr.rel target = $region3
    $region8: #{tpu_custom_call.1} parent=1 // loop_exit
      _
    %11066 = vsyncpa [#allocation5], 1
    %s11067 = scalar_lea.sflag [#allocation5], 1
    %11068 = vsyncpa %s11067, 1
    %11069 = vsyncpa [#allocation8], 1
    %11070 = vsyncpa [#allocation6], 1
    %s11071 = scalar_lea.sflag [#allocation6], 1
    %11072 = vsyncpa %s11071, 1

</llo_original>
